<compile_context>
chip_gen: v5e
topology: v5e:2x2
jax: 0.10.0
libtpu: 0.0.40
codegen_flags: <defaults>
</compile_context>

<pallas_src>
import numpy as np

import jax
import jax.numpy as jnp
from jax import lax
from jax.experimental import pallas as pl
from jax.experimental.pallas import tpu as pltpu

LEAKY_SLOPE = 0.2
BN_EPS = 1e-5
EMBED_DIM = 100
EMBED_PAD = 128


# ------------------------------ Pallas kernel ------------------------------ #
def _discriminator_kernel(img_ref, emb_ref,
                          s1_ref, m1_ref, b1_ref,
                          s2_ref, m2_ref, b2_ref,
                          s3_ref, m3_ref, b3_ref,
                          wf_ref, we_ref,
                          o_ref):
    """One batch element per grid step.  Activations live entirely in VMEM/vregs."""

    def conv_block(a_bf16, s_ref, m_ref, b_ref):
        # out = sum_kh (S_kh @ A) @ M_kh  ;  f32 accumulation, bf16 MXU inputs.
        acc = None
        for kh in range(4):                                   # unrolled: 4 row taps
            rows = jnp.dot(s_ref[kh], a_bf16,
                           preferred_element_type=jnp.float32).astype(jnp.bfloat16)
            part = jnp.dot(rows, m_ref[kh], preferred_element_type=jnp.float32)
            acc = part if acc is None else acc + part
        y = acc + b_ref[...]                                  # folded bias / BN shift
        y = jnp.where(y > 0, y, LEAKY_SLOPE * y)              # LeakyReLU(0.2) in f32
        return y.astype(jnp.bfloat16)

    a = img_ref[0]                                            # (32, 96)  = (H, W*Cin)
    a = conv_block(a, s1_ref, m1_ref, b1_ref)                 # (16, 512) = (16, 16*32)
    a = conv_block(a, s2_ref, m2_ref, b2_ref)                 # (8, 512)  = (8, 8*64)
    a = conv_block(a, s3_ref, m3_ref, b3_ref)                 # (4, 512)  = (4, 4*128)

    # Final 4x4 valid conv with 1 output channel == a dot product:
    # feature part = VPU multiply + reductions; embed part = tiny VPU dot.
    feat = a.astype(jnp.float32) * wf_ref[...]                # (4, 512)
    feat = jnp.sum(feat, axis=1, keepdims=True)               # (4, 1)
    feat = jnp.sum(feat, axis=0, keepdims=True)               # (1, 1)
    embp = jnp.sum(emb_ref[0] * we_ref[...], axis=1, keepdims=True)  # (1, 1)
    z = feat + embp

    # numerically stable sigmoid
    e = jnp.exp(-jnp.abs(z))
    p = jnp.where(z >= 0, 1.0 / (1.0 + e), e / (1.0 + e))     # (1, 1)
    o_ref[...] = jnp.broadcast_to(p.reshape(1, 1, 1), o_ref.shape).astype(o_ref.dtype)


# ------------------------- structured weight building ----------------------- #
def _build_row_select(H, Ho):
    """S[kh, oh, h] = 1 iff h == 2*oh + kh - 1 (stride 2, pad 1) and 0 <= h < H."""
    s = np.zeros((4, Ho, H), np.float32)
    for kh in range(4):
        for oh in range(Ho):
            h = 2 * oh + kh - 1
            if 0 <= h < H:
                s[kh, oh, h] = 1.0
    return s


def _build_col_weights(w_oihw_scaled, W, Wo):
    """M[kh, w*Cin+ci, ow*Cout+co] = w_scaled[co, ci, kh, kw] with w = 2*ow + kw - 1."""
    cout, cin, _, kwid = w_oihw_scaled.shape
    m = np.zeros((4, W * cin, Wo * cout), np.float32)
    for kh in range(4):
        for ow in range(Wo):
            for kw in range(kwid):
                w_in = 2 * ow + kw - 1
                if 0 <= w_in < W:
                    m[kh, w_in * cin:(w_in + 1) * cin, ow * cout:(ow + 1) * cout] = (
                        w_oihw_scaled[:, :, kh, kw].T)
    return m


def prepare_operands(params):
    """Fold bias / eval-mode BN into the structured conv operands consumed by the kernel."""
    ops = {}
    layer_dims = [("l1", 32, 16), ("l2", 16, 8), ("l3", 8, 4)]   # (name, H=W in, Ho=Wo out)
    for name, H, Ho in layer_dims:
        lp = params[name]
        w = np.asarray(lp["w"], np.float32)                      # (Cout, Cin, 4, 4)
        b = np.asarray(lp["b"], np.float32)
        if lp["bn"] is not None:
            bn = {k: np.asarray(v, np.float32) for k, v in lp["bn"].items()}
            scale = bn["gamma"] / np.sqrt(bn["var"] + BN_EPS)
            shift = (b - bn["mean"]) * scale + bn["beta"]
        else:
            scale = np.ones_like(b)
            shift = b
        w_scaled = w * scale[:, None, None, None]                # fold scale into weights
        ops[name] = {
            "s": jnp.asarray(_build_row_select(H, Ho), jnp.bfloat16),
            "m": jnp.asarray(_build_col_weights(w_scaled, H, Ho), jnp.bfloat16),
            "shift": jnp.asarray(np.tile(shift, Ho)[None, :], jnp.float32),  # (1, Wo*Cout)
        }
    # final conv: (1, 100+128, 4, 4), no bias.  Embed is spatially constant -> sum weights.
    w4 = np.asarray(params["l4_w"], np.float32)[0]               # (228, 4, 4)
    w_emb, w_feat = w4[:EMBED_DIM], w4[EMBED_DIM:]               # (100,4,4), (128,4,4)
    we = np.zeros((1, EMBED_PAD), np.float32)
    we[0, :EMBED_DIM] = w_emb.sum(axis=(1, 2))
    wf = np.transpose(w_feat, (1, 2, 0)).reshape(4, 4 * w_feat.shape[0])  # matches (oh, ow*C+c)
    ops["wf"] = jnp.asarray(wf, jnp.float32)
    ops["we"] = jnp.asarray(we, jnp.float32)
    return ops


# ------------------------------- forward pass ------------------------------- #
def discriminator_forward(inp_nchw, c_code, params, ops=None):
    """inp: (N, 3, 32, 32) NCHW, c_code: (N, 100).  Returns (N, 1, 1, 1)."""
    if ops is None:
        ops = prepare_operands(params)
    n, cin = inp_nchw.shape[0], inp_nchw.shape[1]

    # activation layout entering the kernel: (H, W*Cin); embed zero-padded to 128 lanes
    img = jnp.transpose(inp_nchw, (0, 2, 3, 1)).reshape(n, 32, 32 * cin).astype(jnp.bfloat16)
    emb = jnp.zeros((n, 1, EMBED_PAD), jnp.float32).at[:, 0, :EMBED_DIM].set(c_code)

    def batched(shape):
        nd = len(shape)
        return pl.BlockSpec((1,) + tuple(shape), lambda b: (b,) + (0,) * nd)

    def const(shape):
        nd = len(shape)
        return pl.BlockSpec(tuple(shape), lambda b: (0,) * nd)

    l1, l2, l3 = ops["l1"], ops["l2"], ops["l3"]
    const_operands = [l1["s"], l1["m"], l1["shift"],
                      l2["s"], l2["m"], l2["shift"],
                      l3["s"], l3["m"], l3["shift"],
                      ops["wf"], ops["we"]]

    out = pl.pallas_call(
        _discriminator_kernel,
        grid=(n,),
        in_specs=[batched(img.shape[1:]), batched(emb.shape[1:])]
                 + [const(x.shape) for x in const_operands],
        out_specs=pl.BlockSpec((1, 1, 128), lambda b: (b, 0, 0)),
        out_shape=jax.ShapeDtypeStruct((n, 1, 128), jnp.float32),
        compiler_params=pltpu.CompilerParams(dimension_semantics=("parallel",)),
    )(img, emb, *const_operands)

    return out[:, 0, 0].reshape(n, 1, 1, 1)


# --------------------------- params & f32 reference ------------------------- #
def make_params(key, ndf=32, input_nc=3, embed_dim=EMBED_DIM):
    keys = iter(jax.random.split(key, 20))

    def conv_w(cout, cin):
        return 0.05 * jax.random.normal(next(keys), (cout, cin, 4, 4), jnp.float32)

    def vec(c, scale=0.05):
        return scale * jax.random.normal(next(keys), (c,), jnp.float32)

    def layer(cin, cout, with_bn):
        p = {"w": conv_w(cout, cin), "b": vec(cout), "bn": None}
        if with_bn:
            p["bn"] = {"gamma": 1.0 + vec(cout, 0.1), "beta": vec(cout, 0.1),
                       "mean": vec(cout, 0.1), "var": 1.0 + jnp.abs(vec(cout, 0.1))}
        return p

    return {
        "l1": layer(input_nc, ndf, with_bn=False),
        "l2": layer(ndf, ndf * 2, with_bn=True),
        "l3": layer(ndf * 2, ndf * 4, with_bn=True),
        "l4_w": 0.05 * jax.random.normal(next(keys), (1, ndf * 4 + embed_dim, 4, 4),
                                         jnp.float32),
    }


def reference_forward(inp, c_code, params):
    """Pure-JAX f32 reference mirroring the PyTorch module (eval-mode BatchNorm)."""
    def conv(x, w, stride, pad):
        return lax.conv_general_dilated(
            x, w, window_strides=(stride, stride),
            padding=[(pad, pad), (pad, pad)],
            dimension_numbers=("NCHW", "OIHW", "NCHW"),
            precision=lax.Precision.HIGHEST)

    def block(x, lp):
        y = conv(x, lp["w"], 2, 1) + lp["b"][None, :, None, None]
        if lp["bn"] is not None:
            bn = lp["bn"]
            y = (y - bn["mean"][None, :, None, None]) / jnp.sqrt(
                bn["var"][None, :, None, None] + BN_EPS)
            y = y * bn["gamma"][None, :, None, None] + bn["beta"][None, :, None, None]
        return jnp.where(y > 0, y, LEAKY_SLOPE * y)

    x = block(inp, params["l1"])
    x = block(x, params["l2"])
    x = block(x, params["l3"])
    n = x.shape[0]
    emb = jnp.broadcast_to(c_code[:, :, None, None], (n, c_code.shape[1], 4, 4))
    xcat = jnp.concatenate([emb, x], axis=1)
    return jax.nn.sigmoid(conv(xcat, params["l4_w"], 1, 0))    # (N, 1, 1, 1)


if __name__ == "__main__":
    key = jax.random.PRNGKey(0)
    k_in, k_code, k_par = jax.random.split(key, 3)

    batch, input_nc, img_size = 2, 3, 32
    inp = jax.random.normal(k_in, (batch, input_nc, img_size, img_size), jnp.float32)
    c_code = jax.random.normal(k_code, (batch, EMBED_DIM), jnp.float32)
    params = make_params(k_par, ndf=32, input_nc=input_nc)

    ops = prepare_operands(params)
    out = discriminator_forward(inp, c_code, params, ops)
    jax.block_until_ready(out)

    assert out.shape == (batch, 1, 1, 1)
    assert bool(jnp.all((out >= 0.0) & (out <= 1.0)))

    ref = reference_forward(inp, c_code, params)
    err = float(jnp.max(jnp.abs(out - ref)))
    assert err < 3e-2, f"mismatch vs f32 reference: {err}"
    print("KERNEL_OK")
</pallas_src>

<mosaic_0001>
module attributes {stable_mosaic.version = 11 : i64} {
  func.func @_discriminator_kernel(%arg0: i32, %arg1: memref<1x32x96xbf16, #tpu.memory_space<vmem>>, %arg2: memref<1x1x128xf32, #tpu.memory_space<vmem>>, %arg3: memref<4x16x32xbf16, #tpu.memory_space<vmem>>, %arg4: memref<4x96x512xbf16, #tpu.memory_space<vmem>>, %arg5: memref<1x512xf32, #tpu.memory_space<vmem>>, %arg6: memref<4x8x16xbf16, #tpu.memory_space<vmem>>, %arg7: memref<4x512x512xbf16, #tpu.memory_space<vmem>>, %arg8: memref<1x512xf32, #tpu.memory_space<vmem>>, %arg9: memref<4x4x8xbf16, #tpu.memory_space<vmem>>, %arg10: memref<4x512x512xbf16, #tpu.memory_space<vmem>>, %arg11: memref<1x512xf32, #tpu.memory_space<vmem>>, %arg12: memref<4x512xf32, #tpu.memory_space<vmem>>, %arg13: memref<1x128xf32, #tpu.memory_space<vmem>>, %arg14: memref<1x1x128xf32, #tpu.memory_space<vmem>>) attributes {dimension_semantics = [#tpu.dimension_semantics<parallel>], iteration_bounds = array<i64: 2>, scalar_prefetch = 0 : i64, scratch_operands = 0 : i64, tpu.core_type = #tpu.core_type<tc>, window_params = [{transform_indices = @transform_0, window_bounds = array<i64: 1, 32, 96>}, {transform_indices = @transform_1, window_bounds = array<i64: 1, 1, 128>}, {pipeline_mode = #tpu.pipeline_mode<synchronous>, transform_indices = @transform_2, window_bounds = array<i64: 4, 16, 32>}, {pipeline_mode = #tpu.pipeline_mode<synchronous>, transform_indices = @transform_3, window_bounds = array<i64: 4, 96, 512>}, {pipeline_mode = #tpu.pipeline_mode<synchronous>, transform_indices = @transform_4, window_bounds = array<i64: 1, 512>}, {pipeline_mode = #tpu.pipeline_mode<synchronous>, transform_indices = @transform_5, window_bounds = array<i64: 4, 8, 16>}, {pipeline_mode = #tpu.pipeline_mode<synchronous>, transform_indices = @transform_6, window_bounds = array<i64: 4, 512, 512>}, {pipeline_mode = #tpu.pipeline_mode<synchronous>, transform_indices = @transform_7, window_bounds = array<i64: 1, 512>}, {pipeline_mode = #tpu.pipeline_mode<synchronous>, transform_indices = @transform_8, window_bounds = array<i64: 4, 4, 8>}, {pipeline_mode = #tpu.pipeline_mode<synchronous>, transform_indices = @transform_9, window_bounds = array<i64: 4, 512, 512>}, {pipeline_mode = #tpu.pipeline_mode<synchronous>, transform_indices = @transform_10, window_bounds = array<i64: 1, 512>}, {pipeline_mode = #tpu.pipeline_mode<synchronous>, transform_indices = @transform_11, window_bounds = array<i64: 4, 512>}, {pipeline_mode = #tpu.pipeline_mode<synchronous>, transform_indices = @transform_12, window_bounds = array<i64: 1, 128>}, {transform_indices = @transform_13, window_bounds = array<i64: 1, 1, 128>}]} {
    %c0 = arith.constant 0 : index
    %c0_0 = arith.constant 0 : index
    %c0_1 = arith.constant 0 : index
    %0 = vector.load %arg1[%c0, %c0_0, %c0_1] : memref<1x32x96xbf16, #tpu.memory_space<vmem>>, vector<1x32x96xbf16>
    %1 = vector.shape_cast %0 : vector<1x32x96xbf16> to vector<32x96xbf16>
    %c0_2 = arith.constant 0 : index
    %c0_3 = arith.constant 0 : index
    %c0_4 = arith.constant 0 : index
    %2 = vector.load %arg3[%c0_2, %c0_3, %c0_4] : memref<4x16x32xbf16, #tpu.memory_space<vmem>>, vector<1x16x32xbf16>
    %3 = vector.shape_cast %2 : vector<1x16x32xbf16> to vector<16x32xbf16>
    %cst = arith.constant dense<0.000000e+00> : vector<16x96xf32>
    %4 = tpu.matmul %3, %1, %cst {dimension_numbers = #tpu.dot_dimension_numbers<[1], [0], [0], [1], [0, 0, 1, 1], [], []>} : vector<16x32xbf16>, vector<32x96xbf16>, vector<16x96xf32> -> vector<16x96xf32>
    %5 = arith.truncf %4 : vector<16x96xf32> to vector<16x96xbf16>
    %c0_5 = arith.constant 0 : index
    %c0_6 = arith.constant 0 : index
    %c0_7 = arith.constant 0 : index
    %6 = vector.load %arg4[%c0_5, %c0_6, %c0_7] : memref<4x96x512xbf16, #tpu.memory_space<vmem>>, vector<1x96x512xbf16>
    %7 = vector.shape_cast %6 : vector<1x96x512xbf16> to vector<96x512xbf16>
    %cst_8 = arith.constant dense<0.000000e+00> : vector<16x512xf32>
    %8 = tpu.matmul %5, %7, %cst_8 {dimension_numbers = #tpu.dot_dimension_numbers<[1], [0], [0], [1], [0, 0, 1, 1], [], []>} : vector<16x96xbf16>, vector<96x512xbf16>, vector<16x512xf32> -> vector<16x512xf32>
    %c1 = arith.constant 1 : index
    %c0_9 = arith.constant 0 : index
    %c0_10 = arith.constant 0 : index
    %9 = vector.load %arg3[%c1, %c0_9, %c0_10] : memref<4x16x32xbf16, #tpu.memory_space<vmem>>, vector<1x16x32xbf16>
    %10 = vector.shape_cast %9 : vector<1x16x32xbf16> to vector<16x32xbf16>
    %cst_11 = arith.constant dense<0.000000e+00> : vector<16x96xf32>
    %11 = tpu.matmul %10, %1, %cst_11 {dimension_numbers = #tpu.dot_dimension_numbers<[1], [0], [0], [1], [0, 0, 1, 1], [], []>} : vector<16x32xbf16>, vector<32x96xbf16>, vector<16x96xf32> -> vector<16x96xf32>
    %12 = arith.truncf %11 : vector<16x96xf32> to vector<16x96xbf16>
    %c1_12 = arith.constant 1 : index
    %c0_13 = arith.constant 0 : index
    %c0_14 = arith.constant 0 : index
    %13 = vector.load %arg4[%c1_12, %c0_13, %c0_14] : memref<4x96x512xbf16, #tpu.memory_space<vmem>>, vector<1x96x512xbf16>
    %14 = vector.shape_cast %13 : vector<1x96x512xbf16> to vector<96x512xbf16>
    %cst_15 = arith.constant dense<0.000000e+00> : vector<16x512xf32>
    %15 = tpu.matmul %12, %14, %cst_15 {dimension_numbers = #tpu.dot_dimension_numbers<[1], [0], [0], [1], [0, 0, 1, 1], [], []>} : vector<16x96xbf16>, vector<96x512xbf16>, vector<16x512xf32> -> vector<16x512xf32>
    %16 = arith.addf %8, %15 : vector<16x512xf32>
    %c2 = arith.constant 2 : index
    %c0_16 = arith.constant 0 : index
    %c0_17 = arith.constant 0 : index
    %17 = vector.load %arg3[%c2, %c0_16, %c0_17] : memref<4x16x32xbf16, #tpu.memory_space<vmem>>, vector<1x16x32xbf16>
    %18 = vector.shape_cast %17 : vector<1x16x32xbf16> to vector<16x32xbf16>
    %cst_18 = arith.constant dense<0.000000e+00> : vector<16x96xf32>
    %19 = tpu.matmul %18, %1, %cst_18 {dimension_numbers = #tpu.dot_dimension_numbers<[1], [0], [0], [1], [0, 0, 1, 1], [], []>} : vector<16x32xbf16>, vector<32x96xbf16>, vector<16x96xf32> -> vector<16x96xf32>
    %20 = arith.truncf %19 : vector<16x96xf32> to vector<16x96xbf16>
    %c2_19 = arith.constant 2 : index
    %c0_20 = arith.constant 0 : index
    %c0_21 = arith.constant 0 : index
    %21 = vector.load %arg4[%c2_19, %c0_20, %c0_21] : memref<4x96x512xbf16, #tpu.memory_space<vmem>>, vector<1x96x512xbf16>
    %22 = vector.shape_cast %21 : vector<1x96x512xbf16> to vector<96x512xbf16>
    %cst_22 = arith.constant dense<0.000000e+00> : vector<16x512xf32>
    %23 = tpu.matmul %20, %22, %cst_22 {dimension_numbers = #tpu.dot_dimension_numbers<[1], [0], [0], [1], [0, 0, 1, 1], [], []>} : vector<16x96xbf16>, vector<96x512xbf16>, vector<16x512xf32> -> vector<16x512xf32>
    %24 = arith.addf %16, %23 : vector<16x512xf32>
    %c3 = arith.constant 3 : index
    %c0_23 = arith.constant 0 : index
    %c0_24 = arith.constant 0 : index
    %25 = vector.load %arg3[%c3, %c0_23, %c0_24] : memref<4x16x32xbf16, #tpu.memory_space<vmem>>, vector<1x16x32xbf16>
    %26 = vector.shape_cast %25 : vector<1x16x32xbf16> to vector<16x32xbf16>
    %cst_25 = arith.constant dense<0.000000e+00> : vector<16x96xf32>
    %27 = tpu.matmul %26, %1, %cst_25 {dimension_numbers = #tpu.dot_dimension_numbers<[1], [0], [0], [1], [0, 0, 1, 1], [], []>} : vector<16x32xbf16>, vector<32x96xbf16>, vector<16x96xf32> -> vector<16x96xf32>
    %28 = arith.truncf %27 : vector<16x96xf32> to vector<16x96xbf16>
    %c3_26 = arith.constant 3 : index
    %c0_27 = arith.constant 0 : index
    %c0_28 = arith.constant 0 : index
    %29 = vector.load %arg4[%c3_26, %c0_27, %c0_28] : memref<4x96x512xbf16, #tpu.memory_space<vmem>>, vector<1x96x512xbf16>
    %30 = vector.shape_cast %29 : vector<1x96x512xbf16> to vector<96x512xbf16>
    %cst_29 = arith.constant dense<0.000000e+00> : vector<16x512xf32>
    %31 = tpu.matmul %28, %30, %cst_29 {dimension_numbers = #tpu.dot_dimension_numbers<[1], [0], [0], [1], [0, 0, 1, 1], [], []>} : vector<16x96xbf16>, vector<96x512xbf16>, vector<16x512xf32> -> vector<16x512xf32>
    %32 = arith.addf %24, %31 : vector<16x512xf32>
    %c0_30 = arith.constant 0 : index
    %c0_31 = arith.constant 0 : index
    %33 = vector.load %arg5[%c0_30, %c0_31] : memref<1x512xf32, #tpu.memory_space<vmem>>, vector<1x512xf32>
    %34 = vector.broadcast %33 : vector<1x512xf32> to vector<16x512xf32>
    %35 = arith.addf %32, %34 : vector<16x512xf32>
    %cst_32 = arith.constant 0.000000e+00 : f32
    %36 = vector.broadcast %cst_32 : f32 to vector<16x512xf32>
    %37 = arith.cmpf ogt, %35, %36 : vector<16x512xf32>
    %cst_33 = arith.constant 2.000000e-01 : f32
    %38 = vector.broadcast %cst_33 : f32 to vector<16x512xf32>
    %39 = arith.mulf %38, %35 : vector<16x512xf32>
    %40 = arith.select %37, %35, %39 : vector<16x512xi1>, vector<16x512xf32>
    %41 = arith.truncf %40 : vector<16x512xf32> to vector<16x512xbf16>
    %c0_34 = arith.constant 0 : index
    %c0_35 = arith.constant 0 : index
    %c0_36 = arith.constant 0 : index
    %42 = vector.load %arg6[%c0_34, %c0_35, %c0_36] : memref<4x8x16xbf16, #tpu.memory_space<vmem>>, vector<1x8x16xbf16>
    %43 = vector.shape_cast %42 : vector<1x8x16xbf16> to vector<8x16xbf16>
    %cst_37 = arith.constant dense<0.000000e+00> : vector<8x512xf32>
    %44 = tpu.matmul %43, %41, %cst_37 {dimension_numbers = #tpu.dot_dimension_numbers<[1], [0], [0], [1], [0, 0, 1, 1], [], []>} : vector<8x16xbf16>, vector<16x512xbf16>, vector<8x512xf32> -> vector<8x512xf32>
    %45 = arith.truncf %44 : vector<8x512xf32> to vector<8x512xbf16>
    %c0_38 = arith.constant 0 : index
    %c0_39 = arith.constant 0 : index
    %c0_40 = arith.constant 0 : index
    %46 = vector.load %arg7[%c0_38, %c0_39, %c0_40] : memref<4x512x512xbf16, #tpu.memory_space<vmem>>, vector<1x512x512xbf16>
    %47 = vector.shape_cast %46 : vector<1x512x512xbf16> to vector<512x512xbf16>
    %cst_41 = arith.constant dense<0.000000e+00> : vector<8x512xf32>
    %48 = tpu.matmul %45, %47, %cst_41 {dimension_numbers = #tpu.dot_dimension_numbers<[1], [0], [0], [1], [0, 0, 1, 1], [], []>} : vector<8x512xbf16>, vector<512x512xbf16>, vector<8x512xf32> -> vector<8x512xf32>
    %c1_42 = arith.constant 1 : index
    %c0_43 = arith.constant 0 : index
    %c0_44 = arith.constant 0 : index
    %49 = vector.load %arg6[%c1_42, %c0_43, %c0_44] : memref<4x8x16xbf16, #tpu.memory_space<vmem>>, vector<1x8x16xbf16>
    %50 = vector.shape_cast %49 : vector<1x8x16xbf16> to vector<8x16xbf16>
    %cst_45 = arith.constant dense<0.000000e+00> : vector<8x512xf32>
    %51 = tpu.matmul %50, %41, %cst_45 {dimension_numbers = #tpu.dot_dimension_numbers<[1], [0], [0], [1], [0, 0, 1, 1], [], []>} : vector<8x16xbf16>, vector<16x512xbf16>, vector<8x512xf32> -> vector<8x512xf32>
    %52 = arith.truncf %51 : vector<8x512xf32> to vector<8x512xbf16>
    %c1_46 = arith.constant 1 : index
    %c0_47 = arith.constant 0 : index
    %c0_48 = arith.constant 0 : index
    %53 = vector.load %arg7[%c1_46, %c0_47, %c0_48] : memref<4x512x512xbf16, #tpu.memory_space<vmem>>, vector<1x512x512xbf16>
    %54 = vector.shape_cast %53 : vector<1x512x512xbf16> to vector<512x512xbf16>
    %cst_49 = arith.constant dense<0.000000e+00> : vector<8x512xf32>
    %55 = tpu.matmul %52, %54, %cst_49 {dimension_numbers = #tpu.dot_dimension_numbers<[1], [0], [0], [1], [0, 0, 1, 1], [], []>} : vector<8x512xbf16>, vector<512x512xbf16>, vector<8x512xf32> -> vector<8x512xf32>
    %56 = arith.addf %48, %55 : vector<8x512xf32>
    %c2_50 = arith.constant 2 : index
    %c0_51 = arith.constant 0 : index
    %c0_52 = arith.constant 0 : index
    %57 = vector.load %arg6[%c2_50, %c0_51, %c0_52] : memref<4x8x16xbf16, #tpu.memory_space<vmem>>, vector<1x8x16xbf16>
    %58 = vector.shape_cast %57 : vector<1x8x16xbf16> to vector<8x16xbf16>
    %cst_53 = arith.constant dense<0.000000e+00> : vector<8x512xf32>
    %59 = tpu.matmul %58, %41, %cst_53 {dimension_numbers = #tpu.dot_dimension_numbers<[1], [0], [0], [1], [0, 0, 1, 1], [], []>} : vector<8x16xbf16>, vector<16x512xbf16>, vector<8x512xf32> -> vector<8x512xf32>
    %60 = arith.truncf %59 : vector<8x512xf32> to vector<8x512xbf16>
    %c2_54 = arith.constant 2 : index
    %c0_55 = arith.constant 0 : index
    %c0_56 = arith.constant 0 : index
    %61 = vector.load %arg7[%c2_54, %c0_55, %c0_56] : memref<4x512x512xbf16, #tpu.memory_space<vmem>>, vector<1x512x512xbf16>
    %62 = vector.shape_cast %61 : vector<1x512x512xbf16> to vector<512x512xbf16>
    %cst_57 = arith.constant dense<0.000000e+00> : vector<8x512xf32>
    %63 = tpu.matmul %60, %62, %cst_57 {dimension_numbers = #tpu.dot_dimension_numbers<[1], [0], [0], [1], [0, 0, 1, 1], [], []>} : vector<8x512xbf16>, vector<512x512xbf16>, vector<8x512xf32> -> vector<8x512xf32>
    %64 = arith.addf %56, %63 : vector<8x512xf32>
    %c3_58 = arith.constant 3 : index
    %c0_59 = arith.constant 0 : index
    %c0_60 = arith.constant 0 : index
    %65 = vector.load %arg6[%c3_58, %c0_59, %c0_60] : memref<4x8x16xbf16, #tpu.memory_space<vmem>>, vector<1x8x16xbf16>
    %66 = vector.shape_cast %65 : vector<1x8x16xbf16> to vector<8x16xbf16>
    %cst_61 = arith.constant dense<0.000000e+00> : vector<8x512xf32>
    %67 = tpu.matmul %66, %41, %cst_61 {dimension_numbers = #tpu.dot_dimension_numbers<[1], [0], [0], [1], [0, 0, 1, 1], [], []>} : vector<8x16xbf16>, vector<16x512xbf16>, vector<8x512xf32> -> vector<8x512xf32>
    %68 = arith.truncf %67 : vector<8x512xf32> to vector<8x512xbf16>
    %c3_62 = arith.constant 3 : index
    %c0_63 = arith.constant 0 : index
    %c0_64 = arith.constant 0 : index
    %69 = vector.load %arg7[%c3_62, %c0_63, %c0_64] : memref<4x512x512xbf16, #tpu.memory_space<vmem>>, vector<1x512x512xbf16>
    %70 = vector.shape_cast %69 : vector<1x512x512xbf16> to vector<512x512xbf16>
    %cst_65 = arith.constant dense<0.000000e+00> : vector<8x512xf32>
    %71 = tpu.matmul %68, %70, %cst_65 {dimension_numbers = #tpu.dot_dimension_numbers<[1], [0], [0], [1], [0, 0, 1, 1], [], []>} : vector<8x512xbf16>, vector<512x512xbf16>, vector<8x512xf32> -> vector<8x512xf32>
    %72 = arith.addf %64, %71 : vector<8x512xf32>
    %c0_66 = arith.constant 0 : index
    %c0_67 = arith.constant 0 : index
    %73 = vector.load %arg8[%c0_66, %c0_67] : memref<1x512xf32, #tpu.memory_space<vmem>>, vector<1x512xf32>
    %74 = vector.broadcast %73 : vector<1x512xf32> to vector<8x512xf32>
    %75 = arith.addf %72, %74 : vector<8x512xf32>
    %cst_68 = arith.constant 0.000000e+00 : f32
    %76 = vector.broadcast %cst_68 : f32 to vector<8x512xf32>
    %77 = arith.cmpf ogt, %75, %76 : vector<8x512xf32>
    %cst_69 = arith.constant 2.000000e-01 : f32
    %78 = vector.broadcast %cst_69 : f32 to vector<8x512xf32>
    %79 = arith.mulf %78, %75 : vector<8x512xf32>
    %80 = arith.select %77, %75, %79 : vector<8x512xi1>, vector<8x512xf32>
    %81 = arith.truncf %80 : vector<8x512xf32> to vector<8x512xbf16>
    %c0_70 = arith.constant 0 : index
    %c0_71 = arith.constant 0 : index
    %c0_72 = arith.constant 0 : index
    %82 = vector.load %arg9[%c0_70, %c0_71, %c0_72] : memref<4x4x8xbf16, #tpu.memory_space<vmem>>, vector<1x4x8xbf16>
    %83 = vector.shape_cast %82 : vector<1x4x8xbf16> to vector<4x8xbf16>
    %cst_73 = arith.constant dense<0.000000e+00> : vector<4x512xf32>
    %84 = tpu.matmul %83, %81, %cst_73 {dimension_numbers = #tpu.dot_dimension_numbers<[1], [0], [0], [1], [0, 0, 1, 1], [], []>} : vector<4x8xbf16>, vector<8x512xbf16>, vector<4x512xf32> -> vector<4x512xf32>
    %85 = arith.truncf %84 : vector<4x512xf32> to vector<4x512xbf16>
    %c0_74 = arith.constant 0 : index
    %c0_75 = arith.constant 0 : index
    %c0_76 = arith.constant 0 : index
    %86 = vector.load %arg10[%c0_74, %c0_75, %c0_76] : memref<4x512x512xbf16, #tpu.memory_space<vmem>>, vector<1x512x512xbf16>
    %87 = vector.shape_cast %86 : vector<1x512x512xbf16> to vector<512x512xbf16>
    %cst_77 = arith.constant dense<0.000000e+00> : vector<4x512xf32>
    %88 = tpu.matmul %85, %87, %cst_77 {dimension_numbers = #tpu.dot_dimension_numbers<[1], [0], [0], [1], [0, 0, 1, 1], [], []>} : vector<4x512xbf16>, vector<512x512xbf16>, vector<4x512xf32> -> vector<4x512xf32>
    %c1_78 = arith.constant 1 : index
    %c0_79 = arith.constant 0 : index
    %c0_80 = arith.constant 0 : index
    %89 = vector.load %arg9[%c1_78, %c0_79, %c0_80] : memref<4x4x8xbf16, #tpu.memory_space<vmem>>, vector<1x4x8xbf16>
    %90 = vector.shape_cast %89 : vector<1x4x8xbf16> to vector<4x8xbf16>
    %cst_81 = arith.constant dense<0.000000e+00> : vector<4x512xf32>
    %91 = tpu.matmul %90, %81, %cst_81 {dimension_numbers = #tpu.dot_dimension_numbers<[1], [0], [0], [1], [0, 0, 1, 1], [], []>} : vector<4x8xbf16>, vector<8x512xbf16>, vector<4x512xf32> -> vector<4x512xf32>
    %92 = arith.truncf %91 : vector<4x512xf32> to vector<4x512xbf16>
    %c1_82 = arith.constant 1 : index
    %c0_83 = arith.constant 0 : index
    %c0_84 = arith.constant 0 : index
    %93 = vector.load %arg10[%c1_82, %c0_83, %c0_84] : memref<4x512x512xbf16, #tpu.memory_space<vmem>>, vector<1x512x512xbf16>
    %94 = vector.shape_cast %93 : vector<1x512x512xbf16> to vector<512x512xbf16>
    %cst_85 = arith.constant dense<0.000000e+00> : vector<4x512xf32>
    %95 = tpu.matmul %92, %94, %cst_85 {dimension_numbers = #tpu.dot_dimension_numbers<[1], [0], [0], [1], [0, 0, 1, 1], [], []>} : vector<4x512xbf16>, vector<512x512xbf16>, vector<4x512xf32> -> vector<4x512xf32>
    %96 = arith.addf %88, %95 : vector<4x512xf32>
    %c2_86 = arith.constant 2 : index
    %c0_87 = arith.constant 0 : index
    %c0_88 = arith.constant 0 : index
    %97 = vector.load %arg9[%c2_86, %c0_87, %c0_88] : memref<4x4x8xbf16, #tpu.memory_space<vmem>>, vector<1x4x8xbf16>
    %98 = vector.shape_cast %97 : vector<1x4x8xbf16> to vector<4x8xbf16>
    %cst_89 = arith.constant dense<0.000000e+00> : vector<4x512xf32>
    %99 = tpu.matmul %98, %81, %cst_89 {dimension_numbers = #tpu.dot_dimension_numbers<[1], [0], [0], [1], [0, 0, 1, 1], [], []>} : vector<4x8xbf16>, vector<8x512xbf16>, vector<4x512xf32> -> vector<4x512xf32>
    %100 = arith.truncf %99 : vector<4x512xf32> to vector<4x512xbf16>
    %c2_90 = arith.constant 2 : index
    %c0_91 = arith.constant 0 : index
    %c0_92 = arith.constant 0 : index
    %101 = vector.load %arg10[%c2_90, %c0_91, %c0_92] : memref<4x512x512xbf16, #tpu.memory_space<vmem>>, vector<1x512x512xbf16>
    %102 = vector.shape_cast %101 : vector<1x512x512xbf16> to vector<512x512xbf16>
    %cst_93 = arith.constant dense<0.000000e+00> : vector<4x512xf32>
    %103 = tpu.matmul %100, %102, %cst_93 {dimension_numbers = #tpu.dot_dimension_numbers<[1], [0], [0], [1], [0, 0, 1, 1], [], []>} : vector<4x512xbf16>, vector<512x512xbf16>, vector<4x512xf32> -> vector<4x512xf32>
    %104 = arith.addf %96, %103 : vector<4x512xf32>
    %c3_94 = arith.constant 3 : index
    %c0_95 = arith.constant 0 : index
    %c0_96 = arith.constant 0 : index
    %105 = vector.load %arg9[%c3_94, %c0_95, %c0_96] : memref<4x4x8xbf16, #tpu.memory_space<vmem>>, vector<1x4x8xbf16>
    %106 = vector.shape_cast %105 : vector<1x4x8xbf16> to vector<4x8xbf16>
    %cst_97 = arith.constant dense<0.000000e+00> : vector<4x512xf32>
    %107 = tpu.matmul %106, %81, %cst_97 {dimension_numbers = #tpu.dot_dimension_numbers<[1], [0], [0], [1], [0, 0, 1, 1], [], []>} : vector<4x8xbf16>, vector<8x512xbf16>, vector<4x512xf32> -> vector<4x512xf32>
    %108 = arith.truncf %107 : vector<4x512xf32> to vector<4x512xbf16>
    %c3_98 = arith.constant 3 : index
    %c0_99 = arith.constant 0 : index
    %c0_100 = arith.constant 0 : index
    %109 = vector.load %arg10[%c3_98, %c0_99, %c0_100] : memref<4x512x512xbf16, #tpu.memory_space<vmem>>, vector<1x512x512xbf16>
    %110 = vector.shape_cast %109 : vector<1x512x512xbf16> to vector<512x512xbf16>
    %cst_101 = arith.constant dense<0.000000e+00> : vector<4x512xf32>
    %111 = tpu.matmul %108, %110, %cst_101 {dimension_numbers = #tpu.dot_dimension_numbers<[1], [0], [0], [1], [0, 0, 1, 1], [], []>} : vector<4x512xbf16>, vector<512x512xbf16>, vector<4x512xf32> -> vector<4x512xf32>
    %112 = arith.addf %104, %111 : vector<4x512xf32>
    %c0_102 = arith.constant 0 : index
    %c0_103 = arith.constant 0 : index
    %113 = vector.load %arg11[%c0_102, %c0_103] : memref<1x512xf32, #tpu.memory_space<vmem>>, vector<1x512xf32>
    %114 = vector.broadcast %113 : vector<1x512xf32> to vector<4x512xf32>
    %115 = arith.addf %112, %114 : vector<4x512xf32>
    %cst_104 = arith.constant 0.000000e+00 : f32
    %116 = vector.broadcast %cst_104 : f32 to vector<4x512xf32>
    %117 = arith.cmpf ogt, %115, %116 : vector<4x512xf32>
    %cst_105 = arith.constant 2.000000e-01 : f32
    %118 = vector.broadcast %cst_105 : f32 to vector<4x512xf32>
    %119 = arith.mulf %118, %115 : vector<4x512xf32>
    %120 = arith.select %117, %115, %119 : vector<4x512xi1>, vector<4x512xf32>
    %121 = arith.truncf %120 : vector<4x512xf32> to vector<4x512xbf16>
    %122 = arith.extf %121 : vector<4x512xbf16> to vector<4x512xf32>
    %c0_106 = arith.constant 0 : index
    %c0_107 = arith.constant 0 : index
    %123 = vector.load %arg12[%c0_106, %c0_107] : memref<4x512xf32, #tpu.memory_space<vmem>>, vector<4x512xf32>
    %124 = arith.mulf %122, %123 : vector<4x512xf32>
    %cst_108 = arith.constant dense<0.000000e+00> : vector<4xf32>
    %125 = vector.multi_reduction <add>, %124, %cst_108 [1] : vector<4x512xf32> to vector<4xf32>
    %126 = vector.shape_cast %125 : vector<4xf32> to vector<4x1xf32>
    %cst_109 = arith.constant dense<0.000000e+00> : vector<1xf32>
    %127 = vector.multi_reduction <add>, %126, %cst_109 [0] : vector<4x1xf32> to vector<1xf32>
    %128 = vector.shape_cast %127 : vector<1xf32> to vector<1x1xf32>
    %c0_110 = arith.constant 0 : index
    %c0_111 = arith.constant 0 : index
    %c0_112 = arith.constant 0 : index
    %129 = vector.load %arg2[%c0_110, %c0_111, %c0_112] : memref<1x1x128xf32, #tpu.memory_space<vmem>>, vector<1x1x128xf32>
    %130 = vector.shape_cast %129 : vector<1x1x128xf32> to vector<1x128xf32>
    %c0_113 = arith.constant 0 : index
    %c0_114 = arith.constant 0 : index
    %131 = vector.load %arg13[%c0_113, %c0_114] : memref<1x128xf32, #tpu.memory_space<vmem>>, vector<1x128xf32>
    %132 = arith.mulf %130, %131 : vector<1x128xf32>
    %cst_115 = arith.constant dense<0.000000e+00> : vector<1xf32>
    %133 = vector.multi_reduction <add>, %132, %cst_115 [1] : vector<1x128xf32> to vector<1xf32>
    %134 = vector.shape_cast %133 : vector<1xf32> to vector<1x1xf32>
    %135 = arith.addf %128, %134 : vector<1x1xf32>
    %136 = math.absf %135 : vector<1x1xf32>
    %cst_116 = arith.constant 0.000000e+00 : f32
    %137 = vector.broadcast %cst_116 : f32 to vector<1x1xf32>
    %138 = arith.subf %137, %136 : vector<1x1xf32>
    %139 = math.exp %138 : vector<1x1xf32>
    %cst_117 = arith.constant 0.000000e+00 : f32
    %140 = vector.broadcast %cst_117 : f32 to vector<1x1xf32>
    %141 = arith.cmpf oge, %135, %140 : vector<1x1xf32>
    %cst_118 = arith.constant 1.000000e+00 : f32
    %142 = vector.broadcast %cst_118 : f32 to vector<1x1xf32>
    %143 = arith.addf %142, %139 : vector<1x1xf32>
    %cst_119 = arith.constant 1.000000e+00 : f32
    %144 = vector.broadcast %cst_119 : f32 to vector<1x1xf32>
    %145 = arith.divf %144, %143 : vector<1x1xf32>
    %cst_120 = arith.constant 1.000000e+00 : f32
    %146 = vector.broadcast %cst_120 : f32 to vector<1x1xf32>
    %147 = arith.addf %146, %139 : vector<1x1xf32>
    %148 = arith.divf %139, %147 : vector<1x1xf32>
    %149 = arith.select %141, %145, %148 : vector<1x1xi1>, vector<1x1xf32>
    %150 = vector.shape_cast %149 : vector<1x1xf32> to vector<1x1x1xf32>
    %151 = vector.shape_cast %150 : vector<1x1x1xf32> to vector<1x1x1xf32>
    %152 = vector.broadcast %151 : vector<1x1x1xf32> to vector<1x1x128xf32>
    %c0_121 = arith.constant 0 : index
    %c0_122 = arith.constant 0 : index
    %c0_123 = arith.constant 0 : index
    %153 = vector.load %arg14[%c0_121, %c0_122, %c0_123] : memref<1x1x128xf32, #tpu.memory_space<vmem>>, vector<1x1x128xf32>
    tpu.vector_store %arg14[%c0_121, %c0_122, %c0_123], %152 {strides = array<i32>} : memref<1x1x128xf32, #tpu.memory_space<vmem>>, vector<1x1x128xf32>,
    return
  }
  func.func @transform_0(%arg0: i32) -> (i32, i32, i32) {
    %c0_i32 = arith.constant 0 : i32
    %c0_i32_0 = arith.constant 0 : i32
    %c0_i32_1 = arith.constant 0 : i32
    return %arg0, %c0_i32, %c0_i32_0 : i32, i32, i32
  }
  func.func @transform_1(%arg0: i32) -> (i32, i32, i32) {
    %c0_i32 = arith.constant 0 : i32
    %c0_i32_0 = arith.constant 0 : i32
    %c0_i32_1 = arith.constant 0 : i32
    return %arg0, %c0_i32, %c0_i32_0 : i32, i32, i32
  }
  func.func @transform_2(%arg0: i32) -> (i32, i32, i32) {
    %c0_i32 = arith.constant 0 : i32
    %c0_i32_0 = arith.constant 0 : i32
    %c0_i32_1 = arith.constant 0 : i32
    %c0_i32_2 = arith.constant 0 : i32
    return %c0_i32, %c0_i32_0, %c0_i32_1 : i32, i32, i32
  }
  func.func @transform_3(%arg0: i32) -> (i32, i32, i32) {
    %c0_i32 = arith.constant 0 : i32
    %c0_i32_0 = arith.constant 0 : i32
    %c0_i32_1 = arith.constant 0 : i32
    %c0_i32_2 = arith.constant 0 : i32
    return %c0_i32, %c0_i32_0, %c0_i32_1 : i32, i32, i32
  }
  func.func @transform_4(%arg0: i32) -> (i32, i32) {
    %c0_i32 = arith.constant 0 : i32
    %c0_i32_0 = arith.constant 0 : i32
    %c0_i32_1 = arith.constant 0 : i32
    return %c0_i32, %c0_i32_0 : i32, i32
  }
  func.func @transform_5(%arg0: i32) -> (i32, i32, i32) {
    %c0_i32 = arith.constant 0 : i32
    %c0_i32_0 = arith.constant 0 : i32
    %c0_i32_1 = arith.constant 0 : i32
    %c0_i32_2 = arith.constant 0 : i32
    return %c0_i32, %c0_i32_0, %c0_i32_1 : i32, i32, i32
  }
  func.func @transform_6(%arg0: i32) -> (i32, i32, i32) {
    %c0_i32 = arith.constant 0 : i32
    %c0_i32_0 = arith.constant 0 : i32
    %c0_i32_1 = arith.constant 0 : i32
    %c0_i32_2 = arith.constant 0 : i32
    return %c0_i32, %c0_i32_0, %c0_i32_1 : i32, i32, i32
  }
  func.func @transform_7(%arg0: i32) -> (i32, i32) {
    %c0_i32 = arith.constant 0 : i32
    %c0_i32_0 = arith.constant 0 : i32
    %c0_i32_1 = arith.constant 0 : i32
    return %c0_i32, %c0_i32_0 : i32, i32
  }
  func.func @transform_8(%arg0: i32) -> (i32, i32, i32) {
    %c0_i32 = arith.constant 0 : i32
    %c0_i32_0 = arith.constant 0 : i32
    %c0_i32_1 = arith.constant 0 : i32
    %c0_i32_2 = arith.constant 0 : i32
    return %c0_i32, %c0_i32_0, %c0_i32_1 : i32, i32, i32
  }
  func.func @transform_9(%arg0: i32) -> (i32, i32, i32) {
    %c0_i32 = arith.constant 0 : i32
    %c0_i32_0 = arith.constant 0 : i32
    %c0_i32_1 = arith.constant 0 : i32
    %c0_i32_2 = arith.constant 0 : i32
    return %c0_i32, %c0_i32_0, %c0_i32_1 : i32, i32, i32
  }
  func.func @transform_10(%arg0: i32) -> (i32, i32) {
    %c0_i32 = arith.constant 0 : i32
    %c0_i32_0 = arith.constant 0 : i32
    %c0_i32_1 = arith.constant 0 : i32
    return %c0_i32, %c0_i32_0 : i32, i32
  }
  func.func @transform_11(%arg0: i32) -> (i32, i32) {
    %c0_i32 = arith.constant 0 : i32
    %c0_i32_0 = arith.constant 0 : i32
    %c0_i32_1 = arith.constant 0 : i32
    return %c0_i32, %c0_i32_0 : i32, i32
  }
  func.func @transform_12(%arg0: i32) -> (i32, i32) {
    %c0_i32 = arith.constant 0 : i32
    %c0_i32_0 = arith.constant 0 : i32
    %c0_i32_1 = arith.constant 0 : i32
    return %c0_i32, %c0_i32_0 : i32, i32
  }
  func.func @transform_13(%arg0: i32) -> (i32, i32, i32) {
    %c0_i32 = arith.constant 0 : i32
    %c0_i32_0 = arith.constant 0 : i32
    %c0_i32_1 = arith.constant 0 : i32
    return %arg0, %c0_i32, %c0_i32_0 : i32, i32, i32
  }
}

</mosaic_0001>

<llo_original>
// kernel: tpu_custom_call.1
$region0: #{tpu_custom_call.1}
  #allocation0 [shape = 'u32[]', space=smem, size = 0x4, offset = 0x4, fixed_abs, tag = 'smem constant byte address 0x4 - core index']
  #allocation1 [shape = 'u32[72,128]{1,0:T(1,128)}', space=vmem, size = 0x9000, scoped, tag = 'internal scratch']
  %s0 = inlined_call_operand.hbm [shape: bf16[2,32,96], index: 0, kind: input, shape index: {}]
  %s1 = inlined_call_operand.hbm [shape: f32[2,1,128], index: 1, kind: input, shape index: {}]
  %s2 = inlined_call_operand.hbm [shape: bf16[4,16,32], index: 2, kind: input, shape index: {}]
  %s3 = inlined_call_operand.hbm [shape: bf16[4,96,512], index: 3, kind: input, shape index: {}]
  %s4 = inlined_call_operand.hbm [shape: f32[1,512], index: 4, kind: input, shape index: {}]
  %s5 = inlined_call_operand.hbm [shape: bf16[4,8,16], index: 5, kind: input, shape index: {}]
  %s6 = inlined_call_operand.hbm [shape: bf16[4,512,512], index: 6, kind: input, shape index: {}]
  %s7 = inlined_call_operand.hbm [shape: f32[1,512], index: 7, kind: input, shape index: {}]
  %s8 = inlined_call_operand.hbm [shape: bf16[4,4,8], index: 8, kind: input, shape index: {}]
  %s9 = inlined_call_operand.hbm [shape: bf16[4,512,512], index: 9, kind: input, shape index: {}]
  %s10 = inlined_call_operand.hbm [shape: f32[1,512], index: 10, kind: input, shape index: {}]
  %s11 = inlined_call_operand.hbm [shape: f32[4,512], index: 11, kind: input, shape index: {}]
  %s12 = inlined_call_operand.hbm [shape: f32[1,128], index: 12, kind: input, shape index: {}]
  %s13 = inlined_call_operand.hbm [shape: f32[2,1,128], index: 13, kind: output, shape index: {}]
  %s14 = sld [smem:[#allocation0]]
  $region137: #{tpu_custom_call.1} parent=0
    _
  %s16 = ssub.s32 1, %s14
  %s17 = scalar_select 0, %s16, %s14
  $region1: #{tpu_custom_call.1} parent=0
    #allocation2 [shape = 'u8[16384]{0}', space=vmem, size = 0x4000, scoped, tag = 'input window, operand 0']
    #allocation3 [shape = 's32[2]{0}', space=sflag, size = 0x8, scoped, tag = 'scoped memory for tpu_custom_call.1']
    #allocation4 [shape = 's32[2]{0}', space=sflag, size = 0x8, scoped, tag = 'scoped memory for tpu_custom_call.1']
    #allocation5 [shape = 'u8[1024]{0}', space=vmem, size = 0x400, scoped, tag = 'input window, operand 1']
    #allocation6 [shape = 's32[2]{0}', space=sflag, size = 0x8, scoped, tag = 'scoped memory for tpu_custom_call.1']
    #allocation7 [shape = 'u8[16384]{0}', space=vmem, size = 0x4000, scoped, tag = 'input window, operand 2, single buffered']
    #allocation8 [shape = 'u8[393216]{0}', space=vmem, size = 0x60000, scoped, tag = 'input window, operand 3, single buffered']
    #allocation9 [shape = 's32[1]{0}', space=sflag, size = 0x4, scoped, tag = 'scoped memory for tpu_custom_call.1']
    #allocation10 [shape = 'u8[2048]{0}', space=vmem, size = 0x800, scoped, tag = 'input window, operand 4, single buffered']
    #allocation11 [shape = 'u8[8192]{0}', space=vmem, size = 0x2000, scoped, tag = 'input window, operand 5, single buffered']
    #allocation12 [shape = 's32[1]{0}', space=sflag, size = 0x4, scoped, tag = 'scoped memory for tpu_custom_call.1']
    #allocation13 [shape = 'u8[2097152]{0}', space=vmem, size = 0x200000, scoped, tag = 'input window, operand 6, single buffered']
    #allocation14 [shape = 'u8[2048]{0}', space=vmem, size = 0x800, scoped, tag = 'input window, operand 7, single buffered']
    #allocation15 [shape = 's32[1]{0}', space=sflag, size = 0x4, scoped, tag = 'scoped memory for tpu_custom_call.1']
    #allocation16 [shape = 'u8[4096]{0}', space=vmem, size = 0x1000, scoped, tag = 'input window, operand 8, single buffered']
    #allocation17 [shape = 'u8[2097152]{0}', space=vmem, size = 0x200000, scoped, tag = 'input window, operand 9, single buffered']
    #allocation18 [shape = 's32[1]{0}', space=sflag, size = 0x4, scoped, tag = 'scoped memory for tpu_custom_call.1']
    #allocation19 [shape = 'u8[2048]{0}', space=vmem, size = 0x800, scoped, tag = 'input window, operand 10, single buffered']
    #allocation20 [shape = 'u8[8192]{0}', space=vmem, size = 0x2000, scoped, tag = 'input window, operand 11, single buffered']
    #allocation21 [shape = 's32[1]{0}', space=sflag, size = 0x4, scoped, tag = 'scoped memory for tpu_custom_call.1']
    #allocation22 [shape = 'u8[512]{0}', space=vmem, size = 0x400, scoped, tag = 'input window, operand 12, single buffered']
    #allocation23 [shape = 'u8[1024]{0}', space=vmem, size = 0x400, scoped, tag = 'output window, operand 0']
    %18 = vsyncpa [#allocation3], 0
    %s19 = scalar_lea.sflag [#allocation3], 1
    %20 = vsyncpa %s19, 0
    %21 = vsyncpa [#allocation6], 0
    %s22 = scalar_lea.sflag [#allocation6], 1
    %23 = vsyncpa %s22, 0
    %24 = vsyncpa [#allocation9], 0
    %25 = vsyncpa [#allocation12], 0
    %26 = vsyncpa [#allocation15], 0
    %27 = vsyncpa [#allocation18], 0
    %28 = vsyncpa [#allocation21], 0
    %29 = vsyncpa [#allocation4], 0
    %s30 = scalar_lea.sflag [#allocation4], 1
    %31 = vsyncpa %s30, 0
    loop: start=0, step=1, limit=4
    $region2: #{tpu_custom_call.1} parent=1 // loop_pre_header
      _
    $region3: #{tpu_custom_call.1} parent=1 // loop_header
      %s33 = sphi 0, %s37
      %p34 = scmp.ge.s32.totalorder %s33, 4
      %s43 = sphi 0, %s45
      %s46 = sphi 0, %s43
      %s47 = sphi 0, %s46
      %s63 = sphi 0, %s47
      %s69 = sphi 0, %s71
      %s72 = sphi 0, %s69
      %s73 = sphi 0, %s72
      %s89 = sphi 0, %s73
      %s93 = sphi 0, %s93
      %s95 = sphi 0, %s93
      %s96 = sphi 0, %s95
      %s110 = sphi 0, %s96
      %s114 = sphi 0, %s114
      %s116 = sphi 0, %s114
      %s117 = sphi 0, %s116
      %s131 = sphi 0, %s117
      %s135 = sphi 0, %s135
      %s137 = sphi 0, %s135
      %s138 = sphi 0, %s137
      %s152 = sphi 0, %s138
      %s156 = sphi 0, %s156
      %s158 = sphi 0, %s156
      %s159 = sphi 0, %s158
      %s173 = sphi 0, %s159
      %s177 = sphi 0, %s177
      %s179 = sphi 0, %s177
      %s180 = sphi 0, %s179
      %s194 = sphi 0, %s180
      %s198 = sphi 0, %s198
      %s200 = sphi 0, %s198
      %s201 = sphi 0, %s200
      %s215 = sphi 0, %s201
      %s219 = sphi 0, %s219
      %s221 = sphi 0, %s219
      %s222 = sphi 0, %s221
      %s236 = sphi 0, %s222
      %s240 = sphi 0, %s240
      %s242 = sphi 0, %s240
      %s243 = sphi 0, %s242
      %s257 = sphi 0, %s243
      %s261 = sphi 0, %s261
      %s263 = sphi 0, %s261
      %s264 = sphi 0, %s263
      %s278 = sphi 0, %s264
      %s282 = sphi 0, %s282
      %s284 = sphi 0, %s282
      %s285 = sphi 0, %s284
      %s299 = sphi 0, %s285
      %s303 = sphi 0, %s303
      %s305 = sphi 0, %s303
      %s306 = sphi 0, %s305
      %s320 = sphi 0, %s306
      %s326 = sphi 0, %s328
      %s329 = sphi 0, %s326
      %s330 = sphi 0, %s329
      %s346 = sphi 0, %s330
    $region4: #{tpu_custom_call.1} parent=1 // loop_header_branch
      %36 = sbr.rel (%p34) target = $region8
    $region5: #{tpu_custom_call.1} parent=1 // loop_body
      %s38 = ssub.s32 %s33, 1
      %s39 = ssub.s32 %s33, 2
      %s40 = sadd.s32 %s33, 1
      %s41 = ssub.s32 %s33, %s40
      %p42 = scmp.eq.s32.totalorder %s41, 0
      %s44 = sadd.s32 %s43, 1
      %s45 = scalar_select %p42, %s43, %s44
      %p48 = pneg %p42
      %p49 = scmp.eq.s32.totalorder %s33, 1
      %p50 = por %p48, %p49
      %p51 = scmp.ne.s32.totalorder %s43, %s46
      %p52 = scmp.eq.s32.totalorder %s33, 0
      %p53 = por %p51, %p52
      %p54 = scmp.ne.s32.totalorder %s43, %s46
      %p55 = scmp.eq.s32.totalorder %s38, 1
      %p56 = por %p54, %p55
      %p57 = scmp.ne.s32.totalorder %s46, %s47
      %p58 = scmp.eq.s32.totalorder %s38, 0
      %p59 = por %p57, %p58
      %p60 = scmp.ne.s32.totalorder %s46, %s47
      %p61 = scmp.eq.s32.totalorder %s39, 1
      %p62 = por %p60, %p61
      %p64 = scmp.ne.s32.totalorder %s47, %s63
      %p65 = scmp.eq.s32.totalorder %s39, 0
      %p66 = por %p64, %p65
      %s67 = ssub.s32 %s33, %s40
      %p68 = scmp.eq.s32.totalorder %s67, 0
      %s70 = sadd.s32 %s69, 1
      %s71 = scalar_select %p68, %s69, %s70
      %p74 = pneg %p68
      %p75 = scmp.eq.s32.totalorder %s33, 1
      %p76 = por %p74, %p75
      %p77 = scmp.ne.s32.totalorder %s69, %s72
      %p78 = scmp.eq.s32.totalorder %s33, 0
      %p79 = por %p77, %p78
      %p80 = scmp.ne.s32.totalorder %s69, %s72
      %p81 = scmp.eq.s32.totalorder %s38, 1
      %p82 = por %p80, %p81
      %p83 = scmp.ne.s32.totalorder %s72, %s73
      %p84 = scmp.eq.s32.totalorder %s38, 0
      %p85 = por %p83, %p84
      %p86 = scmp.ne.s32.totalorder %s72, %s73
      %p87 = scmp.eq.s32.totalorder %s39, 1
      %p88 = por %p86, %p87
      %p90 = scmp.ne.s32.totalorder %s73, %s89
      %p91 = scmp.eq.s32.totalorder %s39, 0
      %p92 = por %p90, %p91
      %s94 = sadd.s32 %s93, 1
      %p97 = scmp.eq.s32.totalorder %s33, 1
      %p98 = scmp.ne.s32.totalorder %s93, %s95
      %p99 = scmp.eq.s32.totalorder %s33, 0
      %p100 = por %p98, %p99
      %p101 = scmp.ne.s32.totalorder %s93, %s95
      %p102 = scmp.eq.s32.totalorder %s38, 1
      %p103 = por %p101, %p102
      %p104 = scmp.ne.s32.totalorder %s95, %s96
      %p105 = scmp.eq.s32.totalorder %s38, 0
      %p106 = por %p104, %p105
      %p107 = scmp.ne.s32.totalorder %s95, %s96
      %p108 = scmp.eq.s32.totalorder %s39, 1
      %p109 = por %p107, %p108
      %p111 = scmp.ne.s32.totalorder %s96, %s110
      %p112 = scmp.eq.s32.totalorder %s39, 0
      %p113 = por %p111, %p112
      %s115 = sadd.s32 %s114, 1
      %p118 = scmp.eq.s32.totalorder %s33, 1
      %p119 = scmp.ne.s32.totalorder %s114, %s116
      %p120 = scmp.eq.s32.totalorder %s33, 0
      %p121 = por %p119, %p120
      %p122 = scmp.ne.s32.totalorder %s114, %s116
      %p123 = scmp.eq.s32.totalorder %s38, 1
      %p124 = por %p122, %p123
      %p125 = scmp.ne.s32.totalorder %s116, %s117
      %p126 = scmp.eq.s32.totalorder %s38, 0
      %p127 = por %p125, %p126
      %p128 = scmp.ne.s32.totalorder %s116, %s117
      %p129 = scmp.eq.s32.totalorder %s39, 1
      %p130 = por %p128, %p129
      %p132 = scmp.ne.s32.totalorder %s117, %s131
      %p133 = scmp.eq.s32.totalorder %s39, 0
      %p134 = por %p132, %p133
      %s136 = sadd.s32 %s135, 1
      %p139 = scmp.eq.s32.totalorder %s33, 1
      %p140 = scmp.ne.s32.totalorder %s135, %s137
      %p141 = scmp.eq.s32.totalorder %s33, 0
      %p142 = por %p140, %p141
      %p143 = scmp.ne.s32.totalorder %s135, %s137
      %p144 = scmp.eq.s32.totalorder %s38, 1
      %p145 = por %p143, %p144
      %p146 = scmp.ne.s32.totalorder %s137, %s138
      %p147 = scmp.eq.s32.totalorder %s38, 0
      %p148 = por %p146, %p147
      %p149 = scmp.ne.s32.totalorder %s137, %s138
      %p150 = scmp.eq.s32.totalorder %s39, 1
      %p151 = por %p149, %p150
      %p153 = scmp.ne.s32.totalorder %s138, %s152
      %p154 = scmp.eq.s32.totalorder %s39, 0
      %p155 = por %p153, %p154
      %s157 = sadd.s32 %s156, 1
      %p160 = scmp.eq.s32.totalorder %s33, 1
      %p161 = scmp.ne.s32.totalorder %s156, %s158
      %p162 = scmp.eq.s32.totalorder %s33, 0
      %p163 = por %p161, %p162
      %p164 = scmp.ne.s32.totalorder %s156, %s158
      %p165 = scmp.eq.s32.totalorder %s38, 1
      %p166 = por %p164, %p165
      %p167 = scmp.ne.s32.totalorder %s158, %s159
      %p168 = scmp.eq.s32.totalorder %s38, 0
      %p169 = por %p167, %p168
      %p170 = scmp.ne.s32.totalorder %s158, %s159
      %p171 = scmp.eq.s32.totalorder %s39, 1
      %p172 = por %p170, %p171
      %p174 = scmp.ne.s32.totalorder %s159, %s173
      %p175 = scmp.eq.s32.totalorder %s39, 0
      %p176 = por %p174, %p175
      %s178 = sadd.s32 %s177, 1
      %p181 = scmp.eq.s32.totalorder %s33, 1
      %p182 = scmp.ne.s32.totalorder %s177, %s179
      %p183 = scmp.eq.s32.totalorder %s33, 0
      %p184 = por %p182, %p183
      %p185 = scmp.ne.s32.totalorder %s177, %s179
      %p186 = scmp.eq.s32.totalorder %s38, 1
      %p187 = por %p185, %p186
      %p188 = scmp.ne.s32.totalorder %s179, %s180
      %p189 = scmp.eq.s32.totalorder %s38, 0
      %p190 = por %p188, %p189
      %p191 = scmp.ne.s32.totalorder %s179, %s180
      %p192 = scmp.eq.s32.totalorder %s39, 1
      %p193 = por %p191, %p192
      %p195 = scmp.ne.s32.totalorder %s180, %s194
      %p196 = scmp.eq.s32.totalorder %s39, 0
      %p197 = por %p195, %p196
      %s199 = sadd.s32 %s198, 1
      %p202 = scmp.eq.s32.totalorder %s33, 1
      %p203 = scmp.ne.s32.totalorder %s198, %s200
      %p204 = scmp.eq.s32.totalorder %s33, 0
      %p205 = por %p203, %p204
      %p206 = scmp.ne.s32.totalorder %s198, %s200
      %p207 = scmp.eq.s32.totalorder %s38, 1
      %p208 = por %p206, %p207
      %p209 = scmp.ne.s32.totalorder %s200, %s201
      %p210 = scmp.eq.s32.totalorder %s38, 0
      %p211 = por %p209, %p210
      %p212 = scmp.ne.s32.totalorder %s200, %s201
      %p213 = scmp.eq.s32.totalorder %s39, 1
      %p214 = por %p212, %p213
      %p216 = scmp.ne.s32.totalorder %s201, %s215
      %p217 = scmp.eq.s32.totalorder %s39, 0
      %p218 = por %p216, %p217
      %s220 = sadd.s32 %s219, 1
      %p223 = scmp.eq.s32.totalorder %s33, 1
      %p224 = scmp.ne.s32.totalorder %s219, %s221
      %p225 = scmp.eq.s32.totalorder %s33, 0
      %p226 = por %p224, %p225
      %p227 = scmp.ne.s32.totalorder %s219, %s221
      %p228 = scmp.eq.s32.totalorder %s38, 1
      %p229 = por %p227, %p228
      %p230 = scmp.ne.s32.totalorder %s221, %s222
      %p231 = scmp.eq.s32.totalorder %s38, 0
      %p232 = por %p230, %p231
      %p233 = scmp.ne.s32.totalorder %s221, %s222
      %p234 = scmp.eq.s32.totalorder %s39, 1
      %p235 = por %p233, %p234
      %p237 = scmp.ne.s32.totalorder %s222, %s236
      %p238 = scmp.eq.s32.totalorder %s39, 0
      %p239 = por %p237, %p238
      %s241 = sadd.s32 %s240, 1
      %p244 = scmp.eq.s32.totalorder %s33, 1
      %p245 = scmp.ne.s32.totalorder %s240, %s242
      %p246 = scmp.eq.s32.totalorder %s33, 0
      %p247 = por %p245, %p246
      %p248 = scmp.ne.s32.totalorder %s240, %s242
      %p249 = scmp.eq.s32.totalorder %s38, 1
      %p250 = por %p248, %p249
      %p251 = scmp.ne.s32.totalorder %s242, %s243
      %p252 = scmp.eq.s32.totalorder %s38, 0
      %p253 = por %p251, %p252
      %p254 = scmp.ne.s32.totalorder %s242, %s243
      %p255 = scmp.eq.s32.totalorder %s39, 1
      %p256 = por %p254, %p255
      %p258 = scmp.ne.s32.totalorder %s243, %s257
      %p259 = scmp.eq.s32.totalorder %s39, 0
      %p260 = por %p258, %p259
      %s262 = sadd.s32 %s261, 1
      %p265 = scmp.eq.s32.totalorder %s33, 1
      %p266 = scmp.ne.s32.totalorder %s261, %s263
      %p267 = scmp.eq.s32.totalorder %s33, 0
      %p268 = por %p266, %p267
      %p269 = scmp.ne.s32.totalorder %s261, %s263
      %p270 = scmp.eq.s32.totalorder %s38, 1
      %p271 = por %p269, %p270
      %p272 = scmp.ne.s32.totalorder %s263, %s264
      %p273 = scmp.eq.s32.totalorder %s38, 0
      %p274 = por %p272, %p273
      %p275 = scmp.ne.s32.totalorder %s263, %s264
      %p276 = scmp.eq.s32.totalorder %s39, 1
      %p277 = por %p275, %p276
      %p279 = scmp.ne.s32.totalorder %s264, %s278
      %p280 = scmp.eq.s32.totalorder %s39, 0
      %p281 = por %p279, %p280
      %s283 = sadd.s32 %s282, 1
      %p286 = scmp.eq.s32.totalorder %s33, 1
      %p287 = scmp.ne.s32.totalorder %s282, %s284
      %p288 = scmp.eq.s32.totalorder %s33, 0
      %p289 = por %p287, %p288
      %p290 = scmp.ne.s32.totalorder %s282, %s284
      %p291 = scmp.eq.s32.totalorder %s38, 1
      %p292 = por %p290, %p291
      %p293 = scmp.ne.s32.totalorder %s284, %s285
      %p294 = scmp.eq.s32.totalorder %s38, 0
      %p295 = por %p293, %p294
      %p296 = scmp.ne.s32.totalorder %s284, %s285
      %p297 = scmp.eq.s32.totalorder %s39, 1
      %p298 = por %p296, %p297
      %p300 = scmp.ne.s32.totalorder %s285, %s299
      %p301 = scmp.eq.s32.totalorder %s39, 0
      %p302 = por %p300, %p301
      %s304 = sadd.s32 %s303, 1
      %p307 = scmp.eq.s32.totalorder %s33, 1
      %p308 = scmp.ne.s32.totalorder %s303, %s305
      %p309 = scmp.eq.s32.totalorder %s33, 0
      %p310 = por %p308, %p309
      %p311 = scmp.ne.s32.totalorder %s303, %s305
      %p312 = scmp.eq.s32.totalorder %s38, 1
      %p313 = por %p311, %p312
      %p314 = scmp.ne.s32.totalorder %s305, %s306
      %p315 = scmp.eq.s32.totalorder %s38, 0
      %p316 = por %p314, %p315
      %p317 = scmp.ne.s32.totalorder %s305, %s306
      %p318 = scmp.eq.s32.totalorder %s39, 1
      %p319 = por %p317, %p318
      %p321 = scmp.ne.s32.totalorder %s306, %s320
      %p322 = scmp.eq.s32.totalorder %s39, 0
      %p323 = por %p321, %p322
      %s324 = ssub.s32 %s33, %s40
      %p325 = scmp.eq.s32.totalorder %s324, 0
      %s327 = sadd.s32 %s326, 1
      %s328 = scalar_select %p325, %s326, %s327
      %p331 = pneg %p325
      %p332 = scmp.eq.s32.totalorder %s33, 1
      %p333 = por %p331, %p332
      %p334 = scmp.ne.s32.totalorder %s326, %s329
      %p335 = scmp.eq.s32.totalorder %s33, 0
      %p336 = por %p334, %p335
      %p337 = scmp.ne.s32.totalorder %s326, %s329
      %p338 = scmp.eq.s32.totalorder %s38, 1
      %p339 = por %p337, %p338
      %p340 = scmp.ne.s32.totalorder %s329, %s330
      %p341 = scmp.eq.s32.totalorder %s38, 0
      %p342 = por %p340, %p341
      %p343 = scmp.ne.s32.totalorder %s329, %s330
      %p344 = scmp.eq.s32.totalorder %s39, 1
      %p345 = por %p343, %p344
      %p347 = scmp.ne.s32.totalorder %s330, %s346
      %p348 = scmp.eq.s32.totalorder %s39, 0
      %p349 = por %p347, %p348
      %p350 = scmp.le.s32.totalorder 1, %s33
      %p351 = scmp.lt.s32.totalorder %s33, 3
      %p352 = pnand %p350, %p351
      %p353 = pneg %p352
      // Predicated region
      $region9: #{tpu_custom_call.1} parent=5 // pred_check
        _
      $region10: #{tpu_custom_call.1} parent=5 // pred_check_branch
        %355 = sbr.rel (%p352) target = $region12
      $region11: #{tpu_custom_call.1} parent=5 // pred_region
        %s356 = ssub.s32 %s33, 1
        // Predicated region
        $region13: #{tpu_custom_call.1} parent=11 // pred_check
          %p357 = pneg %p106
        $region14: #{tpu_custom_call.1} parent=11 // pred_check_branch
          %359 = sbr.rel (%p357) target = $region16
        $region15: #{tpu_custom_call.1} parent=11 // pred_region
          %361 = vsyncadd [#allocation6], 0
          %s362 = sshll.u32 %s2, 4
          %s363 = int_to_ptr.hbm [resolvable:$true] %s362
          %s364 = sshll.u32 [#allocation7], 4
          %s365 = int_to_ptr.vmem [resolvable:$true] %s364
          %370 = dma.hbm_to_vmem [thread:$0]  %s363, 512, %s365, [#allocation6], 64, 64, 4
        $region16: #{tpu_custom_call.1} parent=11 // pred_fallthru
          _
        // Predicated region
        $region17: #{tpu_custom_call.1} parent=11 // pred_check
          %p371 = pneg %p127
        $region18: #{tpu_custom_call.1} parent=11 // pred_check_branch
          %373 = sbr.rel (%p371) target = $region20
        $region19: #{tpu_custom_call.1} parent=11 // pred_region
          %375 = vsyncadd [#allocation9], 0
          %s376 = sshll.u32 %s3, 4
          %s377 = int_to_ptr.hbm [resolvable:$true] %s376
          %s378 = sshll.u32 [#allocation8], 4
          %s379 = int_to_ptr.vmem [resolvable:$true] %s378
          %384 = dma.hbm_to_vmem [thread:$0]  %s377, 12288, %s379, [#allocation9], 256, 256, 16
        $region20: #{tpu_custom_call.1} parent=11 // pred_fallthru
          _
        // Predicated region
        $region21: #{tpu_custom_call.1} parent=11 // pred_check
          %p385 = pneg %p148
        $region22: #{tpu_custom_call.1} parent=11 // pred_check_branch
          %387 = sbr.rel (%p385) target = $region24
        $region23: #{tpu_custom_call.1} parent=11 // pred_region
          %389 = vsyncadd [#allocation9], 0
          %s391 = sshll.u32 %s4, 4
          %s392 = int_to_ptr.hbm [resolvable:$true] %s391
          %s393 = sshll.u32 [#allocation10], 4
          %s394 = int_to_ptr.vmem [resolvable:$true] %s393
          %396 = dma.hbm_to_vmem [thread:$0]  %s392, 64, %s394, [#allocation9]
        $region24: #{tpu_custom_call.1} parent=11 // pred_fallthru
          _
        // Predicated region
        $region25: #{tpu_custom_call.1} parent=11 // pred_check
          %p397 = pneg %p169
        $region26: #{tpu_custom_call.1} parent=11 // pred_check_branch
          %399 = sbr.rel (%p397) target = $region28
        $region27: #{tpu_custom_call.1} parent=11 // pred_region
          %401 = vsyncadd [#allocation12], 0
          %s402 = sshll.u32 %s5, 4
          %s403 = int_to_ptr.hbm [resolvable:$true] %s402
          %s404 = sshll.u32 [#allocation11], 4
          %s405 = int_to_ptr.vmem [resolvable:$true] %s404
          %410 = dma.hbm_to_vmem [thread:$0]  %s403, 256, %s405, [#allocation12], 64, 64, 4
        $region28: #{tpu_custom_call.1} parent=11 // pred_fallthru
          _
        // Predicated region
        $region29: #{tpu_custom_call.1} parent=11 // pred_check
          %p411 = pneg %p190
        $region30: #{tpu_custom_call.1} parent=11 // pred_check_branch
          %413 = sbr.rel (%p411) target = $region32
        $region31: #{tpu_custom_call.1} parent=11 // pred_region
          %415 = vsyncadd [#allocation12], 0
          %s416 = sshll.u32 %s6, 4
          %s417 = int_to_ptr.hbm [resolvable:$true] %s416
          %s418 = sshll.u32 [#allocation13], 4
          %s419 = int_to_ptr.vmem [resolvable:$true] %s418
          %424 = dma.hbm_to_vmem [thread:$0]  %s417, 65536, %s419, [#allocation12], 256, 256, 16
        $region32: #{tpu_custom_call.1} parent=11 // pred_fallthru
          _
        // Predicated region
        $region33: #{tpu_custom_call.1} parent=11 // pred_check
          %p425 = pneg %p211
        $region34: #{tpu_custom_call.1} parent=11 // pred_check_branch
          %427 = sbr.rel (%p425) target = $region36
        $region35: #{tpu_custom_call.1} parent=11 // pred_region
          %429 = vsyncadd [#allocation15], 0
          %s431 = sshll.u32 %s7, 4
          %s432 = int_to_ptr.hbm [resolvable:$true] %s431
          %s433 = sshll.u32 [#allocation14], 4
          %s434 = int_to_ptr.vmem [resolvable:$true] %s433
          %436 = dma.hbm_to_vmem [thread:$0]  %s432, 64, %s434, [#allocation15]
        $region36: #{tpu_custom_call.1} parent=11 // pred_fallthru
          _
        // Predicated region
        $region37: #{tpu_custom_call.1} parent=11 // pred_check
          %p437 = pneg %p232
        $region38: #{tpu_custom_call.1} parent=11 // pred_check_branch
          %439 = sbr.rel (%p437) target = $region40
        $region39: #{tpu_custom_call.1} parent=11 // pred_region
          %441 = vsyncadd [#allocation15], 0
          %s442 = sshll.u32 %s8, 4
          %s443 = int_to_ptr.hbm [resolvable:$true] %s442
          %s444 = sshll.u32 [#allocation16], 4
          %s445 = int_to_ptr.vmem [resolvable:$true] %s444
          %450 = dma.hbm_to_vmem [thread:$0]  %s443, 128, %s445, [#allocation15], 32, 32, 2
        $region40: #{tpu_custom_call.1} parent=11 // pred_fallthru
          _
        // Predicated region
        $region41: #{tpu_custom_call.1} parent=11 // pred_check
          %p451 = pneg %p253
        $region42: #{tpu_custom_call.1} parent=11 // pred_check_branch
          %453 = sbr.rel (%p451) target = $region44
        $region43: #{tpu_custom_call.1} parent=11 // pred_region
          %455 = vsyncadd [#allocation18], 0
          %s456 = sshll.u32 %s9, 4
          %s457 = int_to_ptr.hbm [resolvable:$true] %s456
          %s458 = sshll.u32 [#allocation17], 4
          %s459 = int_to_ptr.vmem [resolvable:$true] %s458
          %464 = dma.hbm_to_vmem [thread:$0]  %s457, 65536, %s459, [#allocation18], 256, 256, 16
        $region44: #{tpu_custom_call.1} parent=11 // pred_fallthru
          _
        // Predicated region
        $region45: #{tpu_custom_call.1} parent=11 // pred_check
          %p465 = pneg %p274
        $region46: #{tpu_custom_call.1} parent=11 // pred_check_branch
          %467 = sbr.rel (%p465) target = $region48
        $region47: #{tpu_custom_call.1} parent=11 // pred_region
          %469 = vsyncadd [#allocation18], 0
          %s471 = sshll.u32 %s10, 4
          %s472 = int_to_ptr.hbm [resolvable:$true] %s471
          %s473 = sshll.u32 [#allocation19], 4
          %s474 = int_to_ptr.vmem [resolvable:$true] %s473
          %476 = dma.hbm_to_vmem [thread:$0]  %s472, 64, %s474, [#allocation18]
        $region48: #{tpu_custom_call.1} parent=11 // pred_fallthru
          _
        // Predicated region
        $region49: #{tpu_custom_call.1} parent=11 // pred_check
          %p477 = pneg %p295
        $region50: #{tpu_custom_call.1} parent=11 // pred_check_branch
          %479 = sbr.rel (%p477) target = $region52
        $region51: #{tpu_custom_call.1} parent=11 // pred_region
          %481 = vsyncadd [#allocation21], 0
          %s483 = sshll.u32 %s11, 4
          %s484 = int_to_ptr.hbm [resolvable:$true] %s483
          %s485 = sshll.u32 [#allocation20], 4
          %s486 = int_to_ptr.vmem [resolvable:$true] %s485
          %488 = dma.hbm_to_vmem [thread:$0]  %s484, 256, %s486, [#allocation21]
        $region52: #{tpu_custom_call.1} parent=11 // pred_fallthru
          _
        // Predicated region
        $region53: #{tpu_custom_call.1} parent=11 // pred_check
          %p489 = pneg %p316
        $region54: #{tpu_custom_call.1} parent=11 // pred_check_branch
          %491 = sbr.rel (%p489) target = $region56
        $region55: #{tpu_custom_call.1} parent=11 // pred_region
          %493 = vsyncadd [#allocation21], 0
          %s495 = sshll.u32 %s12, 4
          %s496 = int_to_ptr.hbm [resolvable:$true] %s495
          %s497 = sshll.u32 [#allocation22], 4
          %s498 = int_to_ptr.vmem [resolvable:$true] %s497
          %500 = dma.hbm_to_vmem [thread:$0]  %s496, 16, %s498, [#allocation21]
        $region56: #{tpu_custom_call.1} parent=11 // pred_fallthru
          _
      $region12: #{tpu_custom_call.1} parent=5 // pred_fallthru
        _
      %p501 = scmp.lt.s32.totalorder %s33, 2
      // Predicated region
      $region57: #{tpu_custom_call.1} parent=5 // pred_check
        %p502 = pneg %p501
      $region58: #{tpu_custom_call.1} parent=5 // pred_check_branch
        %504 = sbr.rel (%p502) target = $region60
      $region59: #{tpu_custom_call.1} parent=5 // pred_region
        // Predicated region
        $region61: #{tpu_custom_call.1} parent=59 // pred_check
          %p505 = pneg %p53
        $region62: #{tpu_custom_call.1} parent=59 // pred_check_branch
          %507 = sbr.rel (%p505) target = $region64
        $region63: #{tpu_custom_call.1} parent=59 // pred_region
          %s508 = sand.u32 %s43, 1
          %s509 = scalar_lea.sflag [#allocation3], %s508
          %s510 = sand.u32 %s43, 1
          %s511 = smul.addr %s510, 16
          %s512 = scalar_lea.vmem [#allocation2], %s511
          %514 = vsyncadd %s509, 0
          %s515 = smul.addr %s33, 4
          %s516 = smul.addr %s515, 4
          %s517 = scalar_lea.hbm %s0, %s516
          %s518 = sshll.u32 %s517, 4
          %s519 = int_to_ptr.hbm [resolvable:$true] %s518
          %s520 = sshll.u32 %s512, 4
          %s521 = int_to_ptr.vmem [resolvable:$true] %s520
          %526 = dma.hbm_to_vmem [thread:$0]  %s519, 256, %s521, %s509, 64, 64, 4
        $region64: #{tpu_custom_call.1} parent=59 // pred_fallthru
          _
        // Predicated region
        $region65: #{tpu_custom_call.1} parent=59 // pred_check
          %p527 = pneg %p79
        $region66: #{tpu_custom_call.1} parent=59 // pred_check_branch
          %529 = sbr.rel (%p527) target = $region68
        $region67: #{tpu_custom_call.1} parent=59 // pred_region
          %s530 = sand.u32 %s33, 1
          %s531 = scalar_lea.sflag [#allocation6], %s530
          %s532 = sand.u32 %s69, 1
          %s533 = scalar_lea.vmem [#allocation5], %s532
          %535 = vsyncadd %s531, 0
          %s536 = scalar_lea.hbm %s1, %s33
          %s538 = sshll.u32 %s536, 4
          %s539 = int_to_ptr.hbm [resolvable:$true] %s538
          %s540 = sshll.u32 %s533, 4
          %s541 = int_to_ptr.vmem [resolvable:$true] %s540
          %543 = dma.hbm_to_vmem [thread:$0]  %s539, 16, %s541, %s531
        $region68: #{tpu_custom_call.1} parent=59 // pred_fallthru
          _
      $region60: #{tpu_custom_call.1} parent=5 // pred_fallthru
        _
      %p544 = scmp.le.s32.totalorder 1, %s33
      %p545 = scmp.lt.s32.totalorder %s33, 3
      %p546 = pnand %p544, %p545
      %p547 = pneg %p546
      // Predicated region
      $region69: #{tpu_custom_call.1} parent=5 // pred_check
        _
      $region70: #{tpu_custom_call.1} parent=5 // pred_check_branch
        %549 = sbr.rel (%p546) target = $region72
      $region71: #{tpu_custom_call.1} parent=5 // pred_region
        %s550 = ssub.s32 %s33, 1
        %s551 = sand.u32 %s46, 1
        %s552 = scalar_lea.sflag [#allocation3], %s551
        %s553 = sand.u32 %s46, 1
        %s554 = smul.addr %s553, 16
        %s555 = scalar_lea.vmem [#allocation2], %s554
        // Predicated region
        $region73: #{tpu_custom_call.1} parent=71 // pred_check
          %p556 = pneg %p59
        $region74: #{tpu_custom_call.1} parent=71 // pred_check_branch
          %558 = sbr.rel (%p556) target = $region76
        $region75: #{tpu_custom_call.1} parent=71 // pred_region
          %560 = dma.done %s552, 256
        $region76: #{tpu_custom_call.1} parent=71 // pred_fallthru
          _
        %s561 = sand.u32 %s38, 1
        %s562 = scalar_lea.sflag [#allocation6], %s561
        %s563 = sand.u32 %s72, 1
        %s564 = scalar_lea.vmem [#allocation5], %s563
        // Predicated region
        $region77: #{tpu_custom_call.1} parent=71 // pred_check
          %p565 = pneg %p85
        $region78: #{tpu_custom_call.1} parent=71 // pred_check_branch
          %567 = sbr.rel (%p565) target = $region80
        $region79: #{tpu_custom_call.1} parent=71 // pred_region
          %569 = dma.done %s562, 16
        $region80: #{tpu_custom_call.1} parent=71 // pred_fallthru
          _
        // Predicated region
        $region81: #{tpu_custom_call.1} parent=71 // pred_check
          %p570 = pneg %p106
        $region82: #{tpu_custom_call.1} parent=71 // pred_check_branch
          %572 = sbr.rel (%p570) target = $region84
        $region83: #{tpu_custom_call.1} parent=71 // pred_region
          %574 = dma.done [#allocation6], 512
        $region84: #{tpu_custom_call.1} parent=71 // pred_fallthru
          _
        // Predicated region
        $region85: #{tpu_custom_call.1} parent=71 // pred_check
          %p575 = pneg %p127
        $region86: #{tpu_custom_call.1} parent=71 // pred_check_branch
          %577 = sbr.rel (%p575) target = $region88
        $region87: #{tpu_custom_call.1} parent=71 // pred_region
          %579 = dma.done [#allocation9], 12288
        $region88: #{tpu_custom_call.1} parent=71 // pred_fallthru
          _
        // Predicated region
        $region89: #{tpu_custom_call.1} parent=71 // pred_check
          %p580 = pneg %p148
        $region90: #{tpu_custom_call.1} parent=71 // pred_check_branch
          %582 = sbr.rel (%p580) target = $region92
        $region91: #{tpu_custom_call.1} parent=71 // pred_region
          %584 = dma.done [#allocation9], 64
        $region92: #{tpu_custom_call.1} parent=71 // pred_fallthru
          _
        // Predicated region
        $region93: #{tpu_custom_call.1} parent=71 // pred_check
          %p585 = pneg %p169
        $region94: #{tpu_custom_call.1} parent=71 // pred_check_branch
          %587 = sbr.rel (%p585) target = $region96
        $region95: #{tpu_custom_call.1} parent=71 // pred_region
          %589 = dma.done [#allocation12], 256
        $region96: #{tpu_custom_call.1} parent=71 // pred_fallthru
          _
        // Predicated region
        $region97: #{tpu_custom_call.1} parent=71 // pred_check
          %p590 = pneg %p190
        $region98: #{tpu_custom_call.1} parent=71 // pred_check_branch
          %592 = sbr.rel (%p590) target = $region100
        $region99: #{tpu_custom_call.1} parent=71 // pred_region
          %594 = dma.done [#allocation12], 65536
        $region100: #{tpu_custom_call.1} parent=71 // pred_fallthru
          _
        // Predicated region
        $region101: #{tpu_custom_call.1} parent=71 // pred_check
          %p595 = pneg %p211
        $region102: #{tpu_custom_call.1} parent=71 // pred_check_branch
          %597 = sbr.rel (%p595) target = $region104
        $region103: #{tpu_custom_call.1} parent=71 // pred_region
          %599 = dma.done [#allocation15], 64
        $region104: #{tpu_custom_call.1} parent=71 // pred_fallthru
          _
        // Predicated region
        $region105: #{tpu_custom_call.1} parent=71 // pred_check
          %p600 = pneg %p232
        $region106: #{tpu_custom_call.1} parent=71 // pred_check_branch
          %602 = sbr.rel (%p600) target = $region108
        $region107: #{tpu_custom_call.1} parent=71 // pred_region
          %604 = dma.done [#allocation15], 128
        $region108: #{tpu_custom_call.1} parent=71 // pred_fallthru
          _
        // Predicated region
        $region109: #{tpu_custom_call.1} parent=71 // pred_check
          %p605 = pneg %p253
        $region110: #{tpu_custom_call.1} parent=71 // pred_check_branch
          %607 = sbr.rel (%p605) target = $region112
        $region111: #{tpu_custom_call.1} parent=71 // pred_region
          %609 = dma.done [#allocation18], 65536
        $region112: #{tpu_custom_call.1} parent=71 // pred_fallthru
          _
        // Predicated region
        $region113: #{tpu_custom_call.1} parent=71 // pred_check
          %p610 = pneg %p274
        $region114: #{tpu_custom_call.1} parent=71 // pred_check_branch
          %612 = sbr.rel (%p610) target = $region116
        $region115: #{tpu_custom_call.1} parent=71 // pred_region
          %614 = dma.done [#allocation18], 64
        $region116: #{tpu_custom_call.1} parent=71 // pred_fallthru
          _
        // Predicated region
        $region117: #{tpu_custom_call.1} parent=71 // pred_check
          %p615 = pneg %p295
        $region118: #{tpu_custom_call.1} parent=71 // pred_check_branch
          %617 = sbr.rel (%p615) target = $region120
        $region119: #{tpu_custom_call.1} parent=71 // pred_region
          %619 = dma.done [#allocation21], 256
        $region120: #{tpu_custom_call.1} parent=71 // pred_fallthru
          _
        // Predicated region
        $region121: #{tpu_custom_call.1} parent=71 // pred_check
          %p620 = pneg %p316
        $region122: #{tpu_custom_call.1} parent=71 // pred_check_branch
          %622 = sbr.rel (%p620) target = $region124
        $region123: #{tpu_custom_call.1} parent=71 // pred_region
          %624 = dma.done [#allocation21], 16
        $region124: #{tpu_custom_call.1} parent=71 // pred_fallthru
          _
        %s625 = sand.u32 %s46, 1
        %s626 = scalar_lea.sflag [#allocation3], %s625
        %s627 = sand.u32 %s46, 1
        %s628 = smul.addr %s627, 16
        %s629 = scalar_lea.vmem [#allocation2], %s628
        %p630 = pneg %p59
        %p631 = pneg %p56
        %s632 = sand.u32 %s38, 1
        %s633 = scalar_lea.sflag [#allocation6], %s632
        %s634 = sand.u32 %s72, 1
        %s635 = scalar_lea.vmem [#allocation5], %s634
        %p636 = pneg %p85
        %p637 = pneg %p82
        %p638 = pneg %p106
        %p639 = pneg %p103
        %p640 = pneg %p127
        %p641 = pneg %p124
        %p642 = pneg %p148
        %p643 = pneg %p145
        %p644 = pneg %p169
        %p645 = pneg %p166
        %p646 = pneg %p190
        %p647 = pneg %p187
        %p648 = pneg %p211
        %p649 = pneg %p208
        %p650 = pneg %p232
        %p651 = pneg %p229
        %p652 = pneg %p253
        %p653 = pneg %p250
        %p654 = pneg %p274
        %p655 = pneg %p271
        %p656 = pneg %p295
        %p657 = pneg %p292
        %p658 = pneg %p316
        %p659 = pneg %p313
        %p660 = pneg %p342
        %p661 = pneg %p339
        %s662 = sand.u32 %s329, 1
        %s663 = scalar_lea.sflag [#allocation4], %s662
        %s664 = sand.u32 %s329, 1
        %s665 = scalar_lea.vmem [#allocation23], %s664
        %v667 = vld [vmem:[%s555] sm:$0xf]
        %v668 = vld [vmem:[%s555 + $0x4] sm:$0xf]
        %v669 = vld [vmem:[%s555 + $0x8] sm:$0xf]
        %v670 = vld [vmem:[%s555 + $0xc] sm:$0xf]
        %v671 = vld [vmem:[#allocation7] sm:$0xf]
        %v672 = vld [vmem:[#allocation7 + $0x4] sm:$0xf]
        %v675 = vunpack.c.l.b16 %v671
        %v676 = vunpack.c.l.b16 %v672
        %v677 = vpack.c.b16 %v676, %v675
        %v682 = vunpack.c.l.b16 %v667
        %v683 = vunpack.c.l.b16 %v668
        %v684 = vunpack.c.l.b16 %v669
        %v685 = vunpack.c.l.b16 %v670
        %v686 = vpack.c.b16 %v683, %v682
        %v687 = vpack.c.b16 %v685, %v684
        %vm690 = vcmask 261120
        %v692 = vsel %vm690, %v677, 0
        %694 = vmatpush.bf16.msra.mxu0 0
        %695 = vmatpush.bf16.msra.mxu0 0
        %696 = vmatpush.bf16.msra.mxu0 0
        %697 = vmatpush.bf16.msra.mxu0 0
        %698 = vmatpush.bf16.msra.mxu0 0
        %699 = vmatpush.bf16.msra.mxu0 0
        %700 = vmatpush.bf16.msra.mxu0 %v687
        %701 = vmatpush.bf16.msra.mxu0 %v686
        %702 = vmatmul.bf16.gmra.mxu0 %v692
        %v703 = vpop.f32.mrf.mxu0
        %v704 = vadd.f32 0.0, %v703
        %v705 = vpop.f32.mrf.mxu0
        %v706 = vadd.f32 0.0, %v705
        %707 = vdwg.mxu0
        %v708 = vpack.c.bf16 %v706, %v704
        %v709 = vld [vmem:[#allocation8] sm:$0xff]
        %v710 = vld [vmem:[#allocation8 + $0x8] sm:$0xff]
        %v711 = vld [vmem:[#allocation8 + $0x10] sm:$0xff]
        %v712 = vld [vmem:[#allocation8 + $0x18] sm:$0xff]
        %v713 = vld [vmem:[#allocation8 + $0x20] sm:$0xff]
        %v714 = vld [vmem:[#allocation8 + $0x28] sm:$0xff]
        %v715 = vld [vmem:[#allocation8 + $0x30] sm:$0xff]
        %v716 = vld [vmem:[#allocation8 + $0x38] sm:$0xff]
        %v717 = vld [vmem:[#allocation8 + $0x40] sm:$0xff]
        %v718 = vld [vmem:[#allocation8 + $0x48] sm:$0xff]
        %v719 = vld [vmem:[#allocation8 + $0x50] sm:$0xff]
        %v720 = vld [vmem:[#allocation8 + $0x58] sm:$0xff]
        %v721 = vld [vmem:[#allocation8 + $0x60] sm:$0xff]
        %v722 = vld [vmem:[#allocation8 + $0x68] sm:$0xff]
        %v723 = vld [vmem:[#allocation8 + $0x70] sm:$0xff]
        %v724 = vld [vmem:[#allocation8 + $0x78] sm:$0xff]
        %v725 = vld [vmem:[#allocation8 + $0x80] sm:$0xff]
        %v726 = vld [vmem:[#allocation8 + $0x88] sm:$0xff]
        %v727 = vld [vmem:[#allocation8 + $0x90] sm:$0xff]
        %v728 = vld [vmem:[#allocation8 + $0x98] sm:$0xff]
        %v729 = vld [vmem:[#allocation8 + $0xa0] sm:$0xff]
        %v730 = vld [vmem:[#allocation8 + $0xa8] sm:$0xff]
        %v731 = vld [vmem:[#allocation8 + $0xb0] sm:$0xff]
        %v732 = vld [vmem:[#allocation8 + $0xb8] sm:$0xff]
        %s733 = scalar_lea.vmem [#allocation7], 8
        %v734 = vld [vmem:[%s733] sm:$0xf]
        %v735 = vld [vmem:[%s733 + $0x4] sm:$0xf]
        %v738 = vunpack.c.l.b16 %v734
        %v739 = vunpack.c.l.b16 %v735
        %v740 = vpack.c.b16 %v739, %v738
        %v742 = vsel %vm690, %v740, 0
        %744 = vmatpush.bf16.msra.mxu0 0
        %745 = vmatpush.bf16.msra.mxu0 0
        %746 = vmatpush.bf16.msra.mxu0 0
        %747 = vmatpush.bf16.msra.mxu0 0
        %748 = vmatpush.bf16.msra.mxu0 0
        %749 = vmatpush.bf16.msra.mxu0 0
        %750 = vmatpush.bf16.msra.mxu0 %v687
        %751 = vmatpush.bf16.msra.mxu0 %v686
        %752 = vmatmul.bf16.gmra.mxu0 %v742
        %v753 = vpop.f32.mrf.mxu0
        %v754 = vadd.f32 0.0, %v753
        %v755 = vpop.f32.mrf.mxu0
        %v756 = vadd.f32 0.0, %v755
        %757 = vdwg.mxu0
        %v758 = vpack.c.bf16 %v756, %v754
        %s759 = scalar_lea.vmem [#allocation8], 192
        %v760 = vld [vmem:[%s759] sm:$0xff]
        %v761 = vld [vmem:[%s759 + $0x8] sm:$0xff]
        %v762 = vld [vmem:[%s759 + $0x10] sm:$0xff]
        %v763 = vld [vmem:[%s759 + $0x18] sm:$0xff]
        %v764 = vld [vmem:[%s759 + $0x20] sm:$0xff]
        %v765 = vld [vmem:[%s759 + $0x28] sm:$0xff]
        %v766 = vld [vmem:[%s759 + $0x30] sm:$0xff]
        %v767 = vld [vmem:[%s759 + $0x38] sm:$0xff]
        %v768 = vld [vmem:[%s759 + $0x40] sm:$0xff]
        %v769 = vld [vmem:[%s759 + $0x48] sm:$0xff]
        %v770 = vld [vmem:[%s759 + $0x50] sm:$0xff]
        %v771 = vld [vmem:[%s759 + $0x58] sm:$0xff]
        %v772 = vld [vmem:[%s759 + $0x60] sm:$0xff]
        %v773 = vld [vmem:[%s759 + $0x68] sm:$0xff]
        %v774 = vld [vmem:[%s759 + $0x70] sm:$0xff]
        %v775 = vld [vmem:[%s759 + $0x78] sm:$0xff]
        %v776 = vld [vmem:[%s759 + $0x80] sm:$0xff]
        %v777 = vld [vmem:[%s759 + $0x88] sm:$0xff]
        %v778 = vld [vmem:[%s759 + $0x90] sm:$0xff]
        %v779 = vld [vmem:[%s759 + $0x98] sm:$0xff]
        %v780 = vld [vmem:[%s759 + $0xa0] sm:$0xff]
        %v781 = vld [vmem:[%s759 + $0xa8] sm:$0xff]
        %v782 = vld [vmem:[%s759 + $0xb0] sm:$0xff]
        %v783 = vld [vmem:[%s759 + $0xb8] sm:$0xff]
        %v808 = vunpack.c.l.b16 %v760
        %v809 = vunpack.c.h.b16 %v760
        %v810 = vunpack.c.l.b16 %v761
        %v811 = vunpack.c.h.b16 %v761
        %v812 = vunpack.c.l.b16 %v762
        %v813 = vunpack.c.h.b16 %v762
        %v814 = vunpack.c.l.b16 %v763
        %v815 = vunpack.c.h.b16 %v763
        %v816 = vunpack.c.l.b16 %v764
        %v817 = vunpack.c.h.b16 %v764
        %v818 = vunpack.c.l.b16 %v765
        %v819 = vunpack.c.h.b16 %v765
        %v820 = vunpack.c.l.b16 %v766
        %v821 = vunpack.c.h.b16 %v766
        %v822 = vunpack.c.l.b16 %v767
        %v823 = vunpack.c.h.b16 %v767
        %v824 = vunpack.c.l.b16 %v768
        %v825 = vunpack.c.h.b16 %v768
        %v826 = vunpack.c.l.b16 %v769
        %v827 = vunpack.c.h.b16 %v769
        %v828 = vunpack.c.l.b16 %v770
        %v829 = vunpack.c.h.b16 %v770
        %v830 = vunpack.c.l.b16 %v771
        %v831 = vunpack.c.h.b16 %v771
        %v832 = vunpack.c.l.b16 %v772
        %v833 = vunpack.c.h.b16 %v772
        %v834 = vunpack.c.l.b16 %v773
        %v835 = vunpack.c.h.b16 %v773
        %v836 = vunpack.c.l.b16 %v774
        %v837 = vunpack.c.h.b16 %v774
        %v838 = vunpack.c.l.b16 %v775
        %v839 = vunpack.c.h.b16 %v775
        %v840 = vunpack.c.l.b16 %v776
        %v841 = vunpack.c.h.b16 %v776
        %v842 = vunpack.c.l.b16 %v777
        %v843 = vunpack.c.h.b16 %v777
        %v844 = vunpack.c.l.b16 %v778
        %v845 = vunpack.c.h.b16 %v778
        %v846 = vunpack.c.l.b16 %v779
        %v847 = vunpack.c.h.b16 %v779
        %v848 = vunpack.c.l.b16 %v780
        %v849 = vunpack.c.h.b16 %v780
        %v850 = vunpack.c.l.b16 %v781
        %v851 = vunpack.c.h.b16 %v781
        %v852 = vunpack.c.l.b16 %v782
        %v853 = vunpack.c.h.b16 %v782
        %v854 = vunpack.c.l.b16 %v783
        %v855 = vunpack.c.h.b16 %v783
        %v856 = vpack.c.b16 %v812, %v808
        %v857 = vpack.c.b16 %v813, %v809
        %v858 = vpack.c.b16 %v814, %v810
        %v859 = vpack.c.b16 %v815, %v811
        %v860 = vpack.c.b16 %v820, %v816
        %v861 = vpack.c.b16 %v821, %v817
        %v862 = vpack.c.b16 %v822, %v818
        %v863 = vpack.c.b16 %v823, %v819
        %v864 = vpack.c.b16 %v828, %v824
        %v865 = vpack.c.b16 %v829, %v825
        %v866 = vpack.c.b16 %v830, %v826
        %v867 = vpack.c.b16 %v831, %v827
        %v868 = vpack.c.b16 %v836, %v832
        %v869 = vpack.c.b16 %v837, %v833
        %v870 = vpack.c.b16 %v838, %v834
        %v871 = vpack.c.b16 %v839, %v835
        %v872 = vpack.c.b16 %v844, %v840
        %v873 = vpack.c.b16 %v845, %v841
        %v874 = vpack.c.b16 %v846, %v842
        %v875 = vpack.c.b16 %v847, %v843
        %v876 = vpack.c.b16 %v852, %v848
        %v877 = vpack.c.b16 %v853, %v849
        %v878 = vpack.c.b16 %v854, %v850
        %v879 = vpack.c.b16 %v855, %v851
        %vm904 = vcmask 785408
        %v906 = vsel %vm904, %v758, 0
        %908 = vmatpush.bf16.msra.mxu0 0
        %909 = vmatpush.bf16.msra.mxu0 0
        %910 = vmatpush.bf16.msra.mxu0 %v876
        %911 = vmatpush.bf16.msra.mxu0 %v872
        %912 = vmatpush.bf16.msra.mxu0 %v868
        %913 = vmatpush.bf16.msra.mxu0 %v864
        %914 = vmatpush.bf16.msra.mxu0 %v860
        %915 = vmatpush.bf16.msra.mxu0 %v856
        %916 = vmatmul.bf16.gmra.mxu0 %v906
        %v917 = vpop.f32.mrf.mxu0
        %v918 = vadd.f32 0.0, %v917
        %v919 = vpop.f32.mrf.mxu0
        %v920 = vadd.f32 0.0, %v919
        %921 = vdwg.mxu0
        %922 = vmatpush.bf16.msra.mxu0 0
        %923 = vmatpush.bf16.msra.mxu0 0
        %924 = vmatpush.bf16.msra.mxu0 %v877
        %925 = vmatpush.bf16.msra.mxu0 %v873
        %926 = vmatpush.bf16.msra.mxu0 %v869
        %927 = vmatpush.bf16.msra.mxu0 %v865
        %928 = vmatpush.bf16.msra.mxu0 %v861
        %929 = vmatpush.bf16.msra.mxu0 %v857
        %930 = vmatmul.bf16.gmra.mxu0 %v906
        %v931 = vpop.f32.mrf.mxu0
        %v932 = vadd.f32 0.0, %v931
        %v933 = vpop.f32.mrf.mxu0
        %v934 = vadd.f32 0.0, %v933
        %935 = vdwg.mxu0
        %936 = vmatpush.bf16.msra.mxu0 0
        %937 = vmatpush.bf16.msra.mxu0 0
        %938 = vmatpush.bf16.msra.mxu0 %v878
        %939 = vmatpush.bf16.msra.mxu0 %v874
        %940 = vmatpush.bf16.msra.mxu0 %v870
        %941 = vmatpush.bf16.msra.mxu0 %v866
        %942 = vmatpush.bf16.msra.mxu0 %v862
        %943 = vmatpush.bf16.msra.mxu0 %v858
        %944 = vmatmul.bf16.gmra.mxu0 %v906
        %v945 = vpop.f32.mrf.mxu0
        %v946 = vadd.f32 0.0, %v945
        %v947 = vpop.f32.mrf.mxu0
        %v948 = vadd.f32 0.0, %v947
        %949 = vdwg.mxu0
        %950 = vmatpush.bf16.msra.mxu0 0
        %951 = vmatpush.bf16.msra.mxu0 0
        %952 = vmatpush.bf16.msra.mxu0 %v879
        %953 = vmatpush.bf16.msra.mxu0 %v875
        %954 = vmatpush.bf16.msra.mxu0 %v871
        %955 = vmatpush.bf16.msra.mxu0 %v867
        %956 = vmatpush.bf16.msra.mxu0 %v863
        %957 = vmatpush.bf16.msra.mxu0 %v859
        %958 = vmatmul.bf16.gmra.mxu0 %v906
        %v959 = vpop.f32.mrf.mxu0
        %v960 = vadd.f32 0.0, %v959
        %v961 = vpop.f32.mrf.mxu0
        %v962 = vadd.f32 0.0, %v961
        %963 = vdwg.mxu0
        %v988 = vunpack.c.l.b16 %v709
        %v989 = vunpack.c.h.b16 %v709
        %v990 = vunpack.c.l.b16 %v710
        %v991 = vunpack.c.h.b16 %v710
        %v992 = vunpack.c.l.b16 %v711
        %v993 = vunpack.c.h.b16 %v711
        %v994 = vunpack.c.l.b16 %v712
        %v995 = vunpack.c.h.b16 %v712
        %v996 = vunpack.c.l.b16 %v713
        %v997 = vunpack.c.h.b16 %v713
        %v998 = vunpack.c.l.b16 %v714
        %v999 = vunpack.c.h.b16 %v714
        %v1000 = vunpack.c.l.b16 %v715
        %v1001 = vunpack.c.h.b16 %v715
        %v1002 = vunpack.c.l.b16 %v716
        %v1003 = vunpack.c.h.b16 %v716
        %v1004 = vunpack.c.l.b16 %v717
        %v1005 = vunpack.c.h.b16 %v717
        %v1006 = vunpack.c.l.b16 %v718
        %v1007 = vunpack.c.h.b16 %v718
        %v1008 = vunpack.c.l.b16 %v719
        %v1009 = vunpack.c.h.b16 %v719
        %v1010 = vunpack.c.l.b16 %v720
        %v1011 = vunpack.c.h.b16 %v720
        %v1012 = vunpack.c.l.b16 %v721
        %v1013 = vunpack.c.h.b16 %v721
        %v1014 = vunpack.c.l.b16 %v722
        %v1015 = vunpack.c.h.b16 %v722
        %v1016 = vunpack.c.l.b16 %v723
        %v1017 = vunpack.c.h.b16 %v723
        %v1018 = vunpack.c.l.b16 %v724
        %v1019 = vunpack.c.h.b16 %v724
        %v1020 = vunpack.c.l.b16 %v725
        %v1021 = vunpack.c.h.b16 %v725
        %v1022 = vunpack.c.l.b16 %v726
        %v1023 = vunpack.c.h.b16 %v726
        %v1024 = vunpack.c.l.b16 %v727
        %v1025 = vunpack.c.h.b16 %v727
        %v1026 = vunpack.c.l.b16 %v728
        %v1027 = vunpack.c.h.b16 %v728
        %v1028 = vunpack.c.l.b16 %v729
        %v1029 = vunpack.c.h.b16 %v729
        %v1030 = vunpack.c.l.b16 %v730
        %v1031 = vunpack.c.h.b16 %v730
        %v1032 = vunpack.c.l.b16 %v731
        %v1033 = vunpack.c.h.b16 %v731
        %v1034 = vunpack.c.l.b16 %v732
        %v1035 = vunpack.c.h.b16 %v732
        %v1036 = vpack.c.b16 %v992, %v988
        %v1037 = vpack.c.b16 %v993, %v989
        %v1038 = vpack.c.b16 %v994, %v990
        %v1039 = vpack.c.b16 %v995, %v991
        %v1040 = vpack.c.b16 %v1000, %v996
        %v1041 = vpack.c.b16 %v1001, %v997
        %v1042 = vpack.c.b16 %v1002, %v998
        %v1043 = vpack.c.b16 %v1003, %v999
        %v1044 = vpack.c.b16 %v1008, %v1004
        %v1045 = vpack.c.b16 %v1009, %v1005
        %v1046 = vpack.c.b16 %v1010, %v1006
        %v1047 = vpack.c.b16 %v1011, %v1007
        %v1048 = vpack.c.b16 %v1016, %v1012
        %v1049 = vpack.c.b16 %v1017, %v1013
        %v1050 = vpack.c.b16 %v1018, %v1014
        %v1051 = vpack.c.b16 %v1019, %v1015
        %v1052 = vpack.c.b16 %v1024, %v1020
        %v1053 = vpack.c.b16 %v1025, %v1021
        %v1054 = vpack.c.b16 %v1026, %v1022
        %v1055 = vpack.c.b16 %v1027, %v1023
        %v1056 = vpack.c.b16 %v1032, %v1028
        %v1057 = vpack.c.b16 %v1033, %v1029
        %v1058 = vpack.c.b16 %v1034, %v1030
        %v1059 = vpack.c.b16 %v1035, %v1031
        %v1085 = vsel %vm904, %v708, 0
        %1087 = vmatpush.bf16.msra.mxu0 0
        %1088 = vmatpush.bf16.msra.mxu0 0
        %1089 = vmatpush.bf16.msra.mxu0 %v1056
        %1090 = vmatpush.bf16.msra.mxu0 %v1052
        %1091 = vmatpush.bf16.msra.mxu0 %v1048
        %1092 = vmatpush.bf16.msra.mxu0 %v1044
        %1093 = vmatpush.bf16.msra.mxu0 %v1040
        %1094 = vmatpush.bf16.msra.mxu0 %v1036
        %1095 = vmatmul.bf16.gmra.mxu0 %v1085
        %v1096 = vpop.f32.mrf.mxu0
        %v1097 = vadd.f32 %v918, %v1096
        %v1098 = vpop.f32.mrf.mxu0
        %v1099 = vadd.f32 %v920, %v1098
        %1100 = vdwg.mxu0
        %1101 = vmatpush.bf16.msra.mxu0 0
        %1102 = vmatpush.bf16.msra.mxu0 0
        %1103 = vmatpush.bf16.msra.mxu0 %v1057
        %1104 = vmatpush.bf16.msra.mxu0 %v1053
        %1105 = vmatpush.bf16.msra.mxu0 %v1049
        %1106 = vmatpush.bf16.msra.mxu0 %v1045
        %1107 = vmatpush.bf16.msra.mxu0 %v1041
        %1108 = vmatpush.bf16.msra.mxu0 %v1037
        %1109 = vmatmul.bf16.gmra.mxu0 %v1085
        %v1110 = vpop.f32.mrf.mxu0
        %v1111 = vadd.f32 %v932, %v1110
        %v1112 = vpop.f32.mrf.mxu0
        %v1113 = vadd.f32 %v934, %v1112
        %1114 = vdwg.mxu0
        %1115 = vmatpush.bf16.msra.mxu0 0
        %1116 = vmatpush.bf16.msra.mxu0 0
        %1117 = vmatpush.bf16.msra.mxu0 %v1058
        %1118 = vmatpush.bf16.msra.mxu0 %v1054
        %1119 = vmatpush.bf16.msra.mxu0 %v1050
        %1120 = vmatpush.bf16.msra.mxu0 %v1046
        %1121 = vmatpush.bf16.msra.mxu0 %v1042
        %1122 = vmatpush.bf16.msra.mxu0 %v1038
        %1123 = vmatmul.bf16.gmra.mxu0 %v1085
        %v1124 = vpop.f32.mrf.mxu0
        %v1125 = vadd.f32 %v946, %v1124
        %v1126 = vpop.f32.mrf.mxu0
        %v1127 = vadd.f32 %v948, %v1126
        %1128 = vdwg.mxu0
        %1129 = vmatpush.bf16.msra.mxu0 0
        %1130 = vmatpush.bf16.msra.mxu0 0
        %1131 = vmatpush.bf16.msra.mxu0 %v1059
        %1132 = vmatpush.bf16.msra.mxu0 %v1055
        %1133 = vmatpush.bf16.msra.mxu0 %v1051
        %1134 = vmatpush.bf16.msra.mxu0 %v1047
        %1135 = vmatpush.bf16.msra.mxu0 %v1043
        %1136 = vmatpush.bf16.msra.mxu0 %v1039
        %1137 = vmatmul.bf16.gmra.mxu0 %v1085
        %v1138 = vpop.f32.mrf.mxu0
        %v1139 = vadd.f32 %v960, %v1138
        %v1140 = vpop.f32.mrf.mxu0
        %v1141 = vadd.f32 %v962, %v1140
        %1142 = vdwg.mxu0
        %s1143 = scalar_lea.vmem [#allocation7], 16
        %v1144 = vld [vmem:[%s1143] sm:$0xf]
        %v1145 = vld [vmem:[%s1143 + $0x4] sm:$0xf]
        %v1148 = vunpack.c.l.b16 %v1144
        %v1149 = vunpack.c.l.b16 %v1145
        %v1150 = vpack.c.b16 %v1149, %v1148
        %v1152 = vsel %vm690, %v1150, 0
        %1154 = vmatpush.bf16.msra.mxu0 0
        %1155 = vmatpush.bf16.msra.mxu0 0
        %1156 = vmatpush.bf16.msra.mxu0 0
        %1157 = vmatpush.bf16.msra.mxu0 0
        %1158 = vmatpush.bf16.msra.mxu0 0
        %1159 = vmatpush.bf16.msra.mxu0 0
        %1160 = vmatpush.bf16.msra.mxu0 %v687
        %1161 = vmatpush.bf16.msra.mxu0 %v686
        %1162 = vmatmul.bf16.gmra.mxu0 %v1152
        %v1163 = vpop.f32.mrf.mxu0
        %v1164 = vadd.f32 0.0, %v1163
        %v1165 = vpop.f32.mrf.mxu0
        %v1166 = vadd.f32 0.0, %v1165
        %1167 = vdwg.mxu0
        %v1168 = vpack.c.bf16 %v1166, %v1164
        %s1169 = scalar_lea.vmem [#allocation8], 384
        %v1170 = vld [vmem:[%s1169] sm:$0xff]
        %v1171 = vld [vmem:[%s1169 + $0x8] sm:$0xff]
        %v1172 = vld [vmem:[%s1169 + $0x10] sm:$0xff]
        %v1173 = vld [vmem:[%s1169 + $0x18] sm:$0xff]
        %v1174 = vld [vmem:[%s1169 + $0x20] sm:$0xff]
        %v1175 = vld [vmem:[%s1169 + $0x28] sm:$0xff]
        %v1176 = vld [vmem:[%s1169 + $0x30] sm:$0xff]
        %v1177 = vld [vmem:[%s1169 + $0x38] sm:$0xff]
        %v1178 = vld [vmem:[%s1169 + $0x40] sm:$0xff]
        %v1179 = vld [vmem:[%s1169 + $0x48] sm:$0xff]
        %v1180 = vld [vmem:[%s1169 + $0x50] sm:$0xff]
        %v1181 = vld [vmem:[%s1169 + $0x58] sm:$0xff]
        %v1182 = vld [vmem:[%s1169 + $0x60] sm:$0xff]
        %v1183 = vld [vmem:[%s1169 + $0x68] sm:$0xff]
        %v1184 = vld [vmem:[%s1169 + $0x70] sm:$0xff]
        %v1185 = vld [vmem:[%s1169 + $0x78] sm:$0xff]
        %v1186 = vld [vmem:[%s1169 + $0x80] sm:$0xff]
        %v1187 = vld [vmem:[%s1169 + $0x88] sm:$0xff]
        %v1188 = vld [vmem:[%s1169 + $0x90] sm:$0xff]
        %v1189 = vld [vmem:[%s1169 + $0x98] sm:$0xff]
        %v1190 = vld [vmem:[%s1169 + $0xa0] sm:$0xff]
        %v1191 = vld [vmem:[%s1169 + $0xa8] sm:$0xff]
        %v1192 = vld [vmem:[%s1169 + $0xb0] sm:$0xff]
        %v1193 = vld [vmem:[%s1169 + $0xb8] sm:$0xff]
        %v1218 = vunpack.c.l.b16 %v1170
        %v1219 = vunpack.c.h.b16 %v1170
        %v1220 = vunpack.c.l.b16 %v1171
        %v1221 = vunpack.c.h.b16 %v1171
        %v1222 = vunpack.c.l.b16 %v1172
        %v1223 = vunpack.c.h.b16 %v1172
        %v1224 = vunpack.c.l.b16 %v1173
        %v1225 = vunpack.c.h.b16 %v1173
        %v1226 = vunpack.c.l.b16 %v1174
        %v1227 = vunpack.c.h.b16 %v1174
        %v1228 = vunpack.c.l.b16 %v1175
        %v1229 = vunpack.c.h.b16 %v1175
        %v1230 = vunpack.c.l.b16 %v1176
        %v1231 = vunpack.c.h.b16 %v1176
        %v1232 = vunpack.c.l.b16 %v1177
        %v1233 = vunpack.c.h.b16 %v1177
        %v1234 = vunpack.c.l.b16 %v1178
        %v1235 = vunpack.c.h.b16 %v1178
        %v1236 = vunpack.c.l.b16 %v1179
        %v1237 = vunpack.c.h.b16 %v1179
        %v1238 = vunpack.c.l.b16 %v1180
        %v1239 = vunpack.c.h.b16 %v1180
        %v1240 = vunpack.c.l.b16 %v1181
        %v1241 = vunpack.c.h.b16 %v1181
        %v1242 = vunpack.c.l.b16 %v1182
        %v1243 = vunpack.c.h.b16 %v1182
        %v1244 = vunpack.c.l.b16 %v1183
        %v1245 = vunpack.c.h.b16 %v1183
        %v1246 = vunpack.c.l.b16 %v1184
        %v1247 = vunpack.c.h.b16 %v1184
        %v1248 = vunpack.c.l.b16 %v1185
        %v1249 = vunpack.c.h.b16 %v1185
        %v1250 = vunpack.c.l.b16 %v1186
        %v1251 = vunpack.c.h.b16 %v1186
        %v1252 = vunpack.c.l.b16 %v1187
        %v1253 = vunpack.c.h.b16 %v1187
        %v1254 = vunpack.c.l.b16 %v1188
        %v1255 = vunpack.c.h.b16 %v1188
        %v1256 = vunpack.c.l.b16 %v1189
        %v1257 = vunpack.c.h.b16 %v1189
        %v1258 = vunpack.c.l.b16 %v1190
        %v1259 = vunpack.c.h.b16 %v1190
        %v1260 = vunpack.c.l.b16 %v1191
        %v1261 = vunpack.c.h.b16 %v1191
        %v1262 = vunpack.c.l.b16 %v1192
        %v1263 = vunpack.c.h.b16 %v1192
        %v1264 = vunpack.c.l.b16 %v1193
        %v1265 = vunpack.c.h.b16 %v1193
        %v1266 = vpack.c.b16 %v1222, %v1218
        %v1267 = vpack.c.b16 %v1223, %v1219
        %v1268 = vpack.c.b16 %v1224, %v1220
        %v1269 = vpack.c.b16 %v1225, %v1221
        %v1270 = vpack.c.b16 %v1230, %v1226
        %v1271 = vpack.c.b16 %v1231, %v1227
        %v1272 = vpack.c.b16 %v1232, %v1228
        %v1273 = vpack.c.b16 %v1233, %v1229
        %v1274 = vpack.c.b16 %v1238, %v1234
        %v1275 = vpack.c.b16 %v1239, %v1235
        %v1276 = vpack.c.b16 %v1240, %v1236
        %v1277 = vpack.c.b16 %v1241, %v1237
        %v1278 = vpack.c.b16 %v1246, %v1242
        %v1279 = vpack.c.b16 %v1247, %v1243
        %v1280 = vpack.c.b16 %v1248, %v1244
        %v1281 = vpack.c.b16 %v1249, %v1245
        %v1282 = vpack.c.b16 %v1254, %v1250
        %v1283 = vpack.c.b16 %v1255, %v1251
        %v1284 = vpack.c.b16 %v1256, %v1252
        %v1285 = vpack.c.b16 %v1257, %v1253
        %v1286 = vpack.c.b16 %v1262, %v1258
        %v1287 = vpack.c.b16 %v1263, %v1259
        %v1288 = vpack.c.b16 %v1264, %v1260
        %v1289 = vpack.c.b16 %v1265, %v1261
        %v1315 = vsel %vm904, %v1168, 0
        %1317 = vmatpush.bf16.msra.mxu0 0
        %1318 = vmatpush.bf16.msra.mxu0 0
        %1319 = vmatpush.bf16.msra.mxu0 %v1286
        %1320 = vmatpush.bf16.msra.mxu0 %v1282
        %1321 = vmatpush.bf16.msra.mxu0 %v1278
        %1322 = vmatpush.bf16.msra.mxu0 %v1274
        %1323 = vmatpush.bf16.msra.mxu0 %v1270
        %1324 = vmatpush.bf16.msra.mxu0 %v1266
        %1325 = vmatmul.bf16.gmra.mxu0 %v1315
        %v1326 = vpop.f32.mrf.mxu0
        %v1327 = vadd.f32 0.0, %v1326
        %v1328 = vpop.f32.mrf.mxu0
        %v1329 = vadd.f32 0.0, %v1328
        %1330 = vdwg.mxu0
        %1331 = vmatpush.bf16.msra.mxu0 0
        %1332 = vmatpush.bf16.msra.mxu0 0
        %1333 = vmatpush.bf16.msra.mxu0 %v1287
        %1334 = vmatpush.bf16.msra.mxu0 %v1283
        %1335 = vmatpush.bf16.msra.mxu0 %v1279
        %1336 = vmatpush.bf16.msra.mxu0 %v1275
        %1337 = vmatpush.bf16.msra.mxu0 %v1271
        %1338 = vmatpush.bf16.msra.mxu0 %v1267
        %1339 = vmatmul.bf16.gmra.mxu0 %v1315
        %v1340 = vpop.f32.mrf.mxu0
        %v1341 = vadd.f32 0.0, %v1340
        %v1342 = vpop.f32.mrf.mxu0
        %v1343 = vadd.f32 0.0, %v1342
        %1344 = vdwg.mxu0
        %1345 = vmatpush.bf16.msra.mxu0 0
        %1346 = vmatpush.bf16.msra.mxu0 0
        %1347 = vmatpush.bf16.msra.mxu0 %v1288
        %1348 = vmatpush.bf16.msra.mxu0 %v1284
        %1349 = vmatpush.bf16.msra.mxu0 %v1280
        %1350 = vmatpush.bf16.msra.mxu0 %v1276
        %1351 = vmatpush.bf16.msra.mxu0 %v1272
        %1352 = vmatpush.bf16.msra.mxu0 %v1268
        %1353 = vmatmul.bf16.gmra.mxu0 %v1315
        %v1354 = vpop.f32.mrf.mxu0
        %v1355 = vadd.f32 0.0, %v1354
        %v1356 = vpop.f32.mrf.mxu0
        %v1357 = vadd.f32 0.0, %v1356
        %1358 = vdwg.mxu0
        %1359 = vmatpush.bf16.msra.mxu0 0
        %1360 = vmatpush.bf16.msra.mxu0 0
        %1361 = vmatpush.bf16.msra.mxu0 %v1289
        %1362 = vmatpush.bf16.msra.mxu0 %v1285
        %1363 = vmatpush.bf16.msra.mxu0 %v1281
        %1364 = vmatpush.bf16.msra.mxu0 %v1277
        %1365 = vmatpush.bf16.msra.mxu0 %v1273
        %1366 = vmatpush.bf16.msra.mxu0 %v1269
        %1367 = vmatmul.bf16.gmra.mxu0 %v1315
        %v1368 = vpop.f32.mrf.mxu0
        %v1369 = vadd.f32 0.0, %v1368
        %v1370 = vpop.f32.mrf.mxu0
        %v1371 = vadd.f32 0.0, %v1370
        %1372 = vdwg.mxu0
        %v1373 = vadd.f32 %v1097, %v1327
        %v1374 = vadd.f32 %v1111, %v1341
        %v1375 = vadd.f32 %v1125, %v1355
        %v1376 = vadd.f32 %v1139, %v1369
        %v1377 = vadd.f32 %v1099, %v1329
        %v1378 = vadd.f32 %v1113, %v1343
        %v1379 = vadd.f32 %v1127, %v1357
        %v1380 = vadd.f32 %v1141, %v1371
        %s1381 = scalar_lea.vmem [#allocation7], 24
        %v1382 = vld [vmem:[%s1381] sm:$0xf]
        %v1383 = vld [vmem:[%s1381 + $0x4] sm:$0xf]
        %v1386 = vunpack.c.l.b16 %v1382
        %v1387 = vunpack.c.l.b16 %v1383
        %v1388 = vpack.c.b16 %v1387, %v1386
        %v1390 = vsel %vm690, %v1388, 0
        %1392 = vmatpush.bf16.msra.mxu0 0
        %1393 = vmatpush.bf16.msra.mxu0 0
        %1394 = vmatpush.bf16.msra.mxu0 0
        %1395 = vmatpush.bf16.msra.mxu0 0
        %1396 = vmatpush.bf16.msra.mxu0 0
        %1397 = vmatpush.bf16.msra.mxu0 0
        %1398 = vmatpush.bf16.msra.mxu0 %v687
        %1399 = vmatpush.bf16.msra.mxu0 %v686
        %1400 = vmatmul.bf16.gmra.mxu0 %v1390
        %v1401 = vpop.f32.mrf.mxu0
        %v1402 = vadd.f32 0.0, %v1401
        %v1403 = vpop.f32.mrf.mxu0
        %v1404 = vadd.f32 0.0, %v1403
        %1405 = vdwg.mxu0
        %v1406 = vpack.c.bf16 %v1404, %v1402
        %s1407 = scalar_lea.vmem [#allocation8], 576
        %v1408 = vld [vmem:[%s1407] sm:$0xff]
        %v1409 = vld [vmem:[%s1407 + $0x8] sm:$0xff]
        %v1410 = vld [vmem:[%s1407 + $0x10] sm:$0xff]
        %v1411 = vld [vmem:[%s1407 + $0x18] sm:$0xff]
        %v1412 = vld [vmem:[%s1407 + $0x20] sm:$0xff]
        %v1413 = vld [vmem:[%s1407 + $0x28] sm:$0xff]
        %v1414 = vld [vmem:[%s1407 + $0x30] sm:$0xff]
        %v1415 = vld [vmem:[%s1407 + $0x38] sm:$0xff]
        %v1416 = vld [vmem:[%s1407 + $0x40] sm:$0xff]
        %v1417 = vld [vmem:[%s1407 + $0x48] sm:$0xff]
        %v1418 = vld [vmem:[%s1407 + $0x50] sm:$0xff]
        %v1419 = vld [vmem:[%s1407 + $0x58] sm:$0xff]
        %v1420 = vld [vmem:[%s1407 + $0x60] sm:$0xff]
        %v1421 = vld [vmem:[%s1407 + $0x68] sm:$0xff]
        %v1422 = vld [vmem:[%s1407 + $0x70] sm:$0xff]
        %v1423 = vld [vmem:[%s1407 + $0x78] sm:$0xff]
        %v1424 = vld [vmem:[%s1407 + $0x80] sm:$0xff]
        %v1425 = vld [vmem:[%s1407 + $0x88] sm:$0xff]
        %v1426 = vld [vmem:[%s1407 + $0x90] sm:$0xff]
        %v1427 = vld [vmem:[%s1407 + $0x98] sm:$0xff]
        %v1428 = vld [vmem:[%s1407 + $0xa0] sm:$0xff]
        %v1429 = vld [vmem:[%s1407 + $0xa8] sm:$0xff]
        %v1430 = vld [vmem:[%s1407 + $0xb0] sm:$0xff]
        %v1431 = vld [vmem:[%s1407 + $0xb8] sm:$0xff]
        %v1456 = vunpack.c.l.b16 %v1408
        %v1457 = vunpack.c.h.b16 %v1408
        %v1458 = vunpack.c.l.b16 %v1409
        %v1459 = vunpack.c.h.b16 %v1409
        %v1460 = vunpack.c.l.b16 %v1410
        %v1461 = vunpack.c.h.b16 %v1410
        %v1462 = vunpack.c.l.b16 %v1411
        %v1463 = vunpack.c.h.b16 %v1411
        %v1464 = vunpack.c.l.b16 %v1412
        %v1465 = vunpack.c.h.b16 %v1412
        %v1466 = vunpack.c.l.b16 %v1413
        %v1467 = vunpack.c.h.b16 %v1413
        %v1468 = vunpack.c.l.b16 %v1414
        %v1469 = vunpack.c.h.b16 %v1414
        %v1470 = vunpack.c.l.b16 %v1415
        %v1471 = vunpack.c.h.b16 %v1415
        %v1472 = vunpack.c.l.b16 %v1416
        %v1473 = vunpack.c.h.b16 %v1416
        %v1474 = vunpack.c.l.b16 %v1417
        %v1475 = vunpack.c.h.b16 %v1417
        %v1476 = vunpack.c.l.b16 %v1418
        %v1477 = vunpack.c.h.b16 %v1418
        %v1478 = vunpack.c.l.b16 %v1419
        %v1479 = vunpack.c.h.b16 %v1419
        %v1480 = vunpack.c.l.b16 %v1420
        %v1481 = vunpack.c.h.b16 %v1420
        %v1482 = vunpack.c.l.b16 %v1421
        %v1483 = vunpack.c.h.b16 %v1421
        %v1484 = vunpack.c.l.b16 %v1422
        %v1485 = vunpack.c.h.b16 %v1422
        %v1486 = vunpack.c.l.b16 %v1423
        %v1487 = vunpack.c.h.b16 %v1423
        %v1488 = vunpack.c.l.b16 %v1424
        %v1489 = vunpack.c.h.b16 %v1424
        %v1490 = vunpack.c.l.b16 %v1425
        %v1491 = vunpack.c.h.b16 %v1425
        %v1492 = vunpack.c.l.b16 %v1426
        %v1493 = vunpack.c.h.b16 %v1426
        %v1494 = vunpack.c.l.b16 %v1427
        %v1495 = vunpack.c.h.b16 %v1427
        %v1496 = vunpack.c.l.b16 %v1428
        %v1497 = vunpack.c.h.b16 %v1428
        %v1498 = vunpack.c.l.b16 %v1429
        %v1499 = vunpack.c.h.b16 %v1429
        %v1500 = vunpack.c.l.b16 %v1430
        %v1501 = vunpack.c.h.b16 %v1430
        %v1502 = vunpack.c.l.b16 %v1431
        %v1503 = vunpack.c.h.b16 %v1431
        %v1504 = vpack.c.b16 %v1460, %v1456
        %v1505 = vpack.c.b16 %v1461, %v1457
        %v1506 = vpack.c.b16 %v1462, %v1458
        %v1507 = vpack.c.b16 %v1463, %v1459
        %v1508 = vpack.c.b16 %v1468, %v1464
        %v1509 = vpack.c.b16 %v1469, %v1465
        %v1510 = vpack.c.b16 %v1470, %v1466
        %v1511 = vpack.c.b16 %v1471, %v1467
        %v1512 = vpack.c.b16 %v1476, %v1472
        %v1513 = vpack.c.b16 %v1477, %v1473
        %v1514 = vpack.c.b16 %v1478, %v1474
        %v1515 = vpack.c.b16 %v1479, %v1475
        %v1516 = vpack.c.b16 %v1484, %v1480
        %v1517 = vpack.c.b16 %v1485, %v1481
        %v1518 = vpack.c.b16 %v1486, %v1482
        %v1519 = vpack.c.b16 %v1487, %v1483
        %v1520 = vpack.c.b16 %v1492, %v1488
        %v1521 = vpack.c.b16 %v1493, %v1489
        %v1522 = vpack.c.b16 %v1494, %v1490
        %v1523 = vpack.c.b16 %v1495, %v1491
        %v1524 = vpack.c.b16 %v1500, %v1496
        %v1525 = vpack.c.b16 %v1501, %v1497
        %v1526 = vpack.c.b16 %v1502, %v1498
        %v1527 = vpack.c.b16 %v1503, %v1499
        %v1553 = vsel %vm904, %v1406, 0
        %1555 = vmatpush.bf16.msra.mxu0 0
        %1556 = vmatpush.bf16.msra.mxu0 0
        %1557 = vmatpush.bf16.msra.mxu0 %v1524
        %1558 = vmatpush.bf16.msra.mxu0 %v1520
        %1559 = vmatpush.bf16.msra.mxu0 %v1516
        %1560 = vmatpush.bf16.msra.mxu0 %v1512
        %1561 = vmatpush.bf16.msra.mxu0 %v1508
        %1562 = vmatpush.bf16.msra.mxu0 %v1504
        %1563 = vmatmul.bf16.gmra.mxu0 %v1553
        %v1564 = vpop.f32.mrf.mxu0
        %v1565 = vadd.f32 0.0, %v1564
        %v1566 = vpop.f32.mrf.mxu0
        %v1567 = vadd.f32 0.0, %v1566
        %1568 = vdwg.mxu0
        %1569 = vmatpush.bf16.msra.mxu0 0
        %1570 = vmatpush.bf16.msra.mxu0 0
        %1571 = vmatpush.bf16.msra.mxu0 %v1525
        %1572 = vmatpush.bf16.msra.mxu0 %v1521
        %1573 = vmatpush.bf16.msra.mxu0 %v1517
        %1574 = vmatpush.bf16.msra.mxu0 %v1513
        %1575 = vmatpush.bf16.msra.mxu0 %v1509
        %1576 = vmatpush.bf16.msra.mxu0 %v1505
        %1577 = vmatmul.bf16.gmra.mxu0 %v1553
        %v1578 = vpop.f32.mrf.mxu0
        %v1579 = vadd.f32 0.0, %v1578
        %v1580 = vpop.f32.mrf.mxu0
        %v1581 = vadd.f32 0.0, %v1580
        %1582 = vdwg.mxu0
        %1583 = vmatpush.bf16.msra.mxu0 0
        %1584 = vmatpush.bf16.msra.mxu0 0
        %1585 = vmatpush.bf16.msra.mxu0 %v1526
        %1586 = vmatpush.bf16.msra.mxu0 %v1522
        %1587 = vmatpush.bf16.msra.mxu0 %v1518
        %1588 = vmatpush.bf16.msra.mxu0 %v1514
        %1589 = vmatpush.bf16.msra.mxu0 %v1510
        %1590 = vmatpush.bf16.msra.mxu0 %v1506
        %1591 = vmatmul.bf16.gmra.mxu0 %v1553
        %v1592 = vpop.f32.mrf.mxu0
        %v1593 = vadd.f32 0.0, %v1592
        %v1594 = vpop.f32.mrf.mxu0
        %v1595 = vadd.f32 0.0, %v1594
        %1596 = vdwg.mxu0
        %1597 = vmatpush.bf16.msra.mxu0 0
        %1598 = vmatpush.bf16.msra.mxu0 0
        %1599 = vmatpush.bf16.msra.mxu0 %v1527
        %1600 = vmatpush.bf16.msra.mxu0 %v1523
        %1601 = vmatpush.bf16.msra.mxu0 %v1519
        %1602 = vmatpush.bf16.msra.mxu0 %v1515
        %1603 = vmatpush.bf16.msra.mxu0 %v1511
        %1604 = vmatpush.bf16.msra.mxu0 %v1507
        %1605 = vmatmul.bf16.gmra.mxu0 %v1553
        %v1606 = vpop.f32.mrf.mxu0
        %v1607 = vadd.f32 0.0, %v1606
        %v1608 = vpop.f32.mrf.mxu0
        %v1609 = vadd.f32 0.0, %v1608
        %1610 = vdwg.mxu0
        %v1611 = vadd.f32 %v1373, %v1565
        %v1612 = vadd.f32 %v1374, %v1579
        %v1613 = vadd.f32 %v1375, %v1593
        %v1614 = vadd.f32 %v1376, %v1607
        %v1615 = vadd.f32 %v1377, %v1567
        %v1616 = vadd.f32 %v1378, %v1581
        %v1617 = vadd.f32 %v1379, %v1595
        %v1618 = vadd.f32 %v1380, %v1609
        %v1619 = vld [vmem:[#allocation10] sm:$0xf]
        %v1621 = vperm.slane %v1619, 0
        %v1622 = vperm.slane %v1619, 1
        %v1623 = vperm.slane %v1619, 2
        %v1624 = vperm.slane %v1619, 3
        %v1629 = vadd.f32 %v1611, %v1621
        %v1630 = vadd.f32 %v1612, %v1622
        %v1631 = vadd.f32 %v1613, %v1623
        %v1632 = vadd.f32 %v1614, %v1624
        %v1633 = vadd.f32 %v1615, %v1621
        %v1634 = vadd.f32 %v1616, %v1622
        %v1635 = vadd.f32 %v1617, %v1623
        %v1636 = vadd.f32 %v1618, %v1624
        %vm1637 = vcmp.gt.f32.partialorder %v1629, 0.0
        %vm1638 = vcmp.gt.f32.partialorder %v1630, 0.0
        %vm1639 = vcmp.gt.f32.partialorder %v1631, 0.0
        %vm1640 = vcmp.gt.f32.partialorder %v1632, 0.0
        %vm1641 = vcmp.gt.f32.partialorder %v1633, 0.0
        %vm1642 = vcmp.gt.f32.partialorder %v1634, 0.0
        %vm1643 = vcmp.gt.f32.partialorder %v1635, 0.0
        %vm1644 = vcmp.gt.f32.partialorder %v1636, 0.0
        %v1645 = vmul.f32 %v1629, 0.2
        %v1646 = vmul.f32 %v1630, 0.2
        %v1647 = vmul.f32 %v1631, 0.2
        %v1648 = vmul.f32 %v1632, 0.2
        %v1649 = vmul.f32 %v1633, 0.2
        %v1650 = vmul.f32 %v1634, 0.2
        %v1651 = vmul.f32 %v1635, 0.2
        %v1652 = vmul.f32 %v1636, 0.2
        %v1653 = vsel %vm1637, %v1629, %v1645
        %v1654 = vsel %vm1638, %v1630, %v1646
        %v1655 = vsel %vm1639, %v1631, %v1647
        %v1656 = vsel %vm1640, %v1632, %v1648
        %v1657 = vsel %vm1641, %v1633, %v1649
        %v1658 = vsel %vm1642, %v1634, %v1650
        %v1659 = vsel %vm1643, %v1635, %v1651
        %v1660 = vsel %vm1644, %v1636, %v1652
        %v1661 = vpack.c.bf16 %v1657, %v1653
        %v1662 = vpack.c.bf16 %v1658, %v1654
        %v1663 = vpack.c.bf16 %v1659, %v1655
        %v1664 = vpack.c.bf16 %v1660, %v1656
        %v1665 = vld [vmem:[#allocation11] sm:$0xf]
        %vm1666 = vcmask 130048
        %v1668 = vsel %vm1666, %v1665, 0
        %1670 = vmatpush.bf16.msra.mxu0 0
        %1671 = vmatpush.bf16.msra.mxu0 0
        %1672 = vmatpush.bf16.msra.mxu0 0
        %1673 = vmatpush.bf16.msra.mxu0 0
        %1674 = vmatpush.bf16.msra.mxu0 0
        %1675 = vmatpush.bf16.msra.mxu0 0
        %1676 = vmatpush.bf16.msra.mxu0 0
        %1677 = vmatpush.bf16.msra.mxu0 %v1661
        %1678 = vmatmul.bf16.gmra.mxu0 %v1668
        %v1679 = vpop.f32.mrf.mxu0
        %v1680 = vadd.f32 0.0, %v1679
        %v1681 = vpop.f32.mrf.mxu0
        %1682 = vdwg.mxu0
        %1683 = vmatpush.bf16.msra.mxu0 0
        %1684 = vmatpush.bf16.msra.mxu0 0
        %1685 = vmatpush.bf16.msra.mxu0 0
        %1686 = vmatpush.bf16.msra.mxu0 0
        %1687 = vmatpush.bf16.msra.mxu0 0
        %1688 = vmatpush.bf16.msra.mxu0 0
        %1689 = vmatpush.bf16.msra.mxu0 0
        %1690 = vmatpush.bf16.msra.mxu0 %v1662
        %1691 = vmatmul.bf16.gmra.mxu0 %v1668
        %v1692 = vpop.f32.mrf.mxu0
        %v1693 = vadd.f32 0.0, %v1692
        %v1694 = vpop.f32.mrf.mxu0
        %1695 = vdwg.mxu0
        %1696 = vmatpush.bf16.msra.mxu0 0
        %1697 = vmatpush.bf16.msra.mxu0 0
        %1698 = vmatpush.bf16.msra.mxu0 0
        %1699 = vmatpush.bf16.msra.mxu0 0
        %1700 = vmatpush.bf16.msra.mxu0 0
        %1701 = vmatpush.bf16.msra.mxu0 0
        %1702 = vmatpush.bf16.msra.mxu0 0
        %1703 = vmatpush.bf16.msra.mxu0 %v1663
        %1704 = vmatmul.bf16.gmra.mxu0 %v1668
        %v1705 = vpop.f32.mrf.mxu0
        %v1706 = vadd.f32 0.0, %v1705
        %v1707 = vpop.f32.mrf.mxu0
        %1708 = vdwg.mxu0
        %1709 = vmatpush.bf16.msra.mxu0 0
        %1710 = vmatpush.bf16.msra.mxu0 0
        %1711 = vmatpush.bf16.msra.mxu0 0
        %1712 = vmatpush.bf16.msra.mxu0 0
        %1713 = vmatpush.bf16.msra.mxu0 0
        %1714 = vmatpush.bf16.msra.mxu0 0
        %1715 = vmatpush.bf16.msra.mxu0 0
        %1716 = vmatpush.bf16.msra.mxu0 %v1664
        %1717 = vmatmul.bf16.gmra.mxu0 %v1668
        %v1718 = vpop.f32.mrf.mxu0
        %v1719 = vadd.f32 0.0, %v1718
        %v1720 = vpop.f32.mrf.mxu0
        %1721 = vdwg.mxu0
        %v1722 = vpack.c.bf16 %v1680, %v1680
        %v1723 = vpack.c.bf16 %v1693, %v1693
        %v1724 = vpack.c.bf16 %v1706, %v1706
        %v1725 = vpack.c.bf16 %v1719, %v1719
        %v1726 = vld [vmem:[#allocation13] sm:$0xff]
        %v1727 = vld [vmem:[#allocation13 + $0x8] sm:$0xff]
        %v1728 = vld [vmem:[#allocation13 + $0x10] sm:$0xff]
        %v1729 = vld [vmem:[#allocation13 + $0x18] sm:$0xff]
        %v1730 = vld [vmem:[#allocation13 + $0x20] sm:$0xff]
        %v1731 = vld [vmem:[#allocation13 + $0x28] sm:$0xff]
        %v1732 = vld [vmem:[#allocation13 + $0x30] sm:$0xff]
        %v1733 = vld [vmem:[#allocation13 + $0x38] sm:$0xff]
        %v1734 = vld [vmem:[#allocation13 + $0x40] sm:$0xff]
        %v1735 = vld [vmem:[#allocation13 + $0x48] sm:$0xff]
        %v1736 = vld [vmem:[#allocation13 + $0x50] sm:$0xff]
        %v1737 = vld [vmem:[#allocation13 + $0x58] sm:$0xff]
        %v1738 = vld [vmem:[#allocation13 + $0x60] sm:$0xff]
        %v1739 = vld [vmem:[#allocation13 + $0x68] sm:$0xff]
        %v1740 = vld [vmem:[#allocation13 + $0x70] sm:$0xff]
        %v1741 = vld [vmem:[#allocation13 + $0x78] sm:$0xff]
        %v1742 = vld [vmem:[#allocation13 + $0x80] sm:$0xff]
        %v1743 = vld [vmem:[#allocation13 + $0x88] sm:$0xff]
        %v1744 = vld [vmem:[#allocation13 + $0x90] sm:$0xff]
        %v1745 = vld [vmem:[#allocation13 + $0x98] sm:$0xff]
        %v1746 = vld [vmem:[#allocation13 + $0xa0] sm:$0xff]
        %v1747 = vld [vmem:[#allocation13 + $0xa8] sm:$0xff]
        %v1748 = vld [vmem:[#allocation13 + $0xb0] sm:$0xff]
        %v1749 = vld [vmem:[#allocation13 + $0xb8] sm:$0xff]
        %v1750 = vld [vmem:[#allocation13 + $0xc0] sm:$0xff]
        %v1751 = vld [vmem:[#allocation13 + $0xc8] sm:$0xff]
        %v1752 = vld [vmem:[#allocation13 + $0xd0] sm:$0xff]
        %v1753 = vld [vmem:[#allocation13 + $0xd8] sm:$0xff]
        %v1754 = vld [vmem:[#allocation13 + $0xe0] sm:$0xff]
        %v1755 = vld [vmem:[#allocation13 + $0xe8] sm:$0xff]
        %v1756 = vld [vmem:[#allocation13 + $0xf0] sm:$0xff]
        %v1757 = vld [vmem:[#allocation13 + $0xf8] sm:$0xff]
        %v1758 = vld [vmem:[#allocation13 + $0x100] sm:$0xff]
        %v1759 = vld [vmem:[#allocation13 + $0x108] sm:$0xff]
        %v1760 = vld [vmem:[#allocation13 + $0x110] sm:$0xff]
        %v1761 = vld [vmem:[#allocation13 + $0x118] sm:$0xff]
        %v1762 = vld [vmem:[#allocation13 + $0x120] sm:$0xff]
        %v1763 = vld [vmem:[#allocation13 + $0x128] sm:$0xff]
        %v1764 = vld [vmem:[#allocation13 + $0x130] sm:$0xff]
        %v1765 = vld [vmem:[#allocation13 + $0x138] sm:$0xff]
        %v1766 = vld [vmem:[#allocation13 + $0x140] sm:$0xff]
        %v1767 = vld [vmem:[#allocation13 + $0x148] sm:$0xff]
        %v1768 = vld [vmem:[#allocation13 + $0x150] sm:$0xff]
        %v1769 = vld [vmem:[#allocation13 + $0x158] sm:$0xff]
        %v1770 = vld [vmem:[#allocation13 + $0x160] sm:$0xff]
        %v1771 = vld [vmem:[#allocation13 + $0x168] sm:$0xff]
        %v1772 = vld [vmem:[#allocation13 + $0x170] sm:$0xff]
        %v1773 = vld [vmem:[#allocation13 + $0x178] sm:$0xff]
        %v1774 = vld [vmem:[#allocation13 + $0x180] sm:$0xff]
        %v1775 = vld [vmem:[#allocation13 + $0x188] sm:$0xff]
        %v1776 = vld [vmem:[#allocation13 + $0x190] sm:$0xff]
        %v1777 = vld [vmem:[#allocation13 + $0x198] sm:$0xff]
        %v1778 = vld [vmem:[#allocation13 + $0x1a0] sm:$0xff]
        %v1779 = vld [vmem:[#allocation13 + $0x1a8] sm:$0xff]
        %v1780 = vld [vmem:[#allocation13 + $0x1b0] sm:$0xff]
        %v1781 = vld [vmem:[#allocation13 + $0x1b8] sm:$0xff]
        %v1782 = vld [vmem:[#allocation13 + $0x1c0] sm:$0xff]
        %v1783 = vld [vmem:[#allocation13 + $0x1c8] sm:$0xff]
        %v1784 = vld [vmem:[#allocation13 + $0x1d0] sm:$0xff]
        %v1785 = vld [vmem:[#allocation13 + $0x1d8] sm:$0xff]
        %v1786 = vld [vmem:[#allocation13 + $0x1e0] sm:$0xff]
        %v1787 = vld [vmem:[#allocation13 + $0x1e8] sm:$0xff]
        %v1788 = vld [vmem:[#allocation13 + $0x1f0] sm:$0xff]
        %v1789 = vld [vmem:[#allocation13 + $0x1f8] sm:$0xff]
        %v1790 = vld [vmem:[#allocation13 + $0x200] sm:$0xff]
        %v1791 = vld [vmem:[#allocation13 + $0x208] sm:$0xff]
        %v1792 = vld [vmem:[#allocation13 + $0x210] sm:$0xff]
        %v1793 = vld [vmem:[#allocation13 + $0x218] sm:$0xff]
        %v1794 = vld [vmem:[#allocation13 + $0x220] sm:$0xff]
        %v1795 = vld [vmem:[#allocation13 + $0x228] sm:$0xff]
        %v1796 = vld [vmem:[#allocation13 + $0x230] sm:$0xff]
        %v1797 = vld [vmem:[#allocation13 + $0x238] sm:$0xff]
        %v1798 = vld [vmem:[#allocation13 + $0x240] sm:$0xff]
        %v1799 = vld [vmem:[#allocation13 + $0x248] sm:$0xff]
        %v1800 = vld [vmem:[#allocation13 + $0x250] sm:$0xff]
        %v1801 = vld [vmem:[#allocation13 + $0x258] sm:$0xff]
        %v1802 = vld [vmem:[#allocation13 + $0x260] sm:$0xff]
        %v1803 = vld [vmem:[#allocation13 + $0x268] sm:$0xff]
        %v1804 = vld [vmem:[#allocation13 + $0x270] sm:$0xff]
        %v1805 = vld [vmem:[#allocation13 + $0x278] sm:$0xff]
        %v1806 = vld [vmem:[#allocation13 + $0x280] sm:$0xff]
        %v1807 = vld [vmem:[#allocation13 + $0x288] sm:$0xff]
        %v1808 = vld [vmem:[#allocation13 + $0x290] sm:$0xff]
        %v1809 = vld [vmem:[#allocation13 + $0x298] sm:$0xff]
        %v1810 = vld [vmem:[#allocation13 + $0x2a0] sm:$0xff]
        %v1811 = vld [vmem:[#allocation13 + $0x2a8] sm:$0xff]
        %v1812 = vld [vmem:[#allocation13 + $0x2b0] sm:$0xff]
        %v1813 = vld [vmem:[#allocation13 + $0x2b8] sm:$0xff]
        %v1814 = vld [vmem:[#allocation13 + $0x2c0] sm:$0xff]
        %v1815 = vld [vmem:[#allocation13 + $0x2c8] sm:$0xff]
        %v1816 = vld [vmem:[#allocation13 + $0x2d0] sm:$0xff]
        %v1817 = vld [vmem:[#allocation13 + $0x2d8] sm:$0xff]
        %v1818 = vld [vmem:[#allocation13 + $0x2e0] sm:$0xff]
        %v1819 = vld [vmem:[#allocation13 + $0x2e8] sm:$0xff]
        %v1820 = vld [vmem:[#allocation13 + $0x2f0] sm:$0xff]
        %v1821 = vld [vmem:[#allocation13 + $0x2f8] sm:$0xff]
        %v1822 = vld [vmem:[#allocation13 + $0x300] sm:$0xff]
        %v1823 = vld [vmem:[#allocation13 + $0x308] sm:$0xff]
        %v1824 = vld [vmem:[#allocation13 + $0x310] sm:$0xff]
        %v1825 = vld [vmem:[#allocation13 + $0x318] sm:$0xff]
        %v1826 = vld [vmem:[#allocation13 + $0x320] sm:$0xff]
        %v1827 = vld [vmem:[#allocation13 + $0x328] sm:$0xff]
        %v1828 = vld [vmem:[#allocation13 + $0x330] sm:$0xff]
        %v1829 = vld [vmem:[#allocation13 + $0x338] sm:$0xff]
        %v1830 = vld [vmem:[#allocation13 + $0x340] sm:$0xff]
        %v1831 = vld [vmem:[#allocation13 + $0x348] sm:$0xff]
        %v1832 = vld [vmem:[#allocation13 + $0x350] sm:$0xff]
        %v1833 = vld [vmem:[#allocation13 + $0x358] sm:$0xff]
        %v1834 = vld [vmem:[#allocation13 + $0x360] sm:$0xff]
        %v1835 = vld [vmem:[#allocation13 + $0x368] sm:$0xff]
        %v1836 = vld [vmem:[#allocation13 + $0x370] sm:$0xff]
        %v1837 = vld [vmem:[#allocation13 + $0x378] sm:$0xff]
        %v1838 = vld [vmem:[#allocation13 + $0x380] sm:$0xff]
        %v1839 = vld [vmem:[#allocation13 + $0x388] sm:$0xff]
        %v1840 = vld [vmem:[#allocation13 + $0x390] sm:$0xff]
        %v1841 = vld [vmem:[#allocation13 + $0x398] sm:$0xff]
        %v1842 = vld [vmem:[#allocation13 + $0x3a0] sm:$0xff]
        %v1843 = vld [vmem:[#allocation13 + $0x3a8] sm:$0xff]
        %v1844 = vld [vmem:[#allocation13 + $0x3b0] sm:$0xff]
        %v1845 = vld [vmem:[#allocation13 + $0x3b8] sm:$0xff]
        %v1846 = vld [vmem:[#allocation13 + $0x3c0] sm:$0xff]
        %v1847 = vld [vmem:[#allocation13 + $0x3c8] sm:$0xff]
        %v1848 = vld [vmem:[#allocation13 + $0x3d0] sm:$0xff]
        %v1849 = vld [vmem:[#allocation13 + $0x3d8] sm:$0xff]
        %v1850 = vld [vmem:[#allocation13 + $0x3e0] sm:$0xff]
        %v1851 = vld [vmem:[#allocation13 + $0x3e8] sm:$0xff]
        %v1852 = vld [vmem:[#allocation13 + $0x3f0] sm:$0xff]
        %v1853 = vld [vmem:[#allocation13 + $0x3f8] sm:$0xff]
        %s1854 = scalar_lea.vmem [#allocation11], 4
        %v1855 = vld [vmem:[%s1854] sm:$0xf]
        %v1857 = vsel %vm1666, %v1855, 0
        %1859 = vmatpush.bf16.msra.mxu0 0
        %1860 = vmatpush.bf16.msra.mxu0 0
        %1861 = vmatpush.bf16.msra.mxu0 0
        %1862 = vmatpush.bf16.msra.mxu0 0
        %1863 = vmatpush.bf16.msra.mxu0 0
        %1864 = vmatpush.bf16.msra.mxu0 0
        %1865 = vmatpush.bf16.msra.mxu0 0
        %1866 = vmatpush.bf16.msra.mxu0 %v1661
        %1867 = vmatmul.bf16.gmra.mxu0 %v1857
        %v1868 = vpop.f32.mrf.mxu0
        %v1869 = vadd.f32 0.0, %v1868
        %v1870 = vpop.f32.mrf.mxu0
        %1871 = vdwg.mxu0
        %1872 = vmatpush.bf16.msra.mxu0 0
        %1873 = vmatpush.bf16.msra.mxu0 0
        %1874 = vmatpush.bf16.msra.mxu0 0
        %1875 = vmatpush.bf16.msra.mxu0 0
        %1876 = vmatpush.bf16.msra.mxu0 0
        %1877 = vmatpush.bf16.msra.mxu0 0
        %1878 = vmatpush.bf16.msra.mxu0 0
        %1879 = vmatpush.bf16.msra.mxu0 %v1662
        %1880 = vmatmul.bf16.gmra.mxu0 %v1857
        %v1881 = vpop.f32.mrf.mxu0
        %v1882 = vadd.f32 0.0, %v1881
        %v1883 = vpop.f32.mrf.mxu0
        %1884 = vdwg.mxu0
        %1885 = vmatpush.bf16.msra.mxu0 0
        %1886 = vmatpush.bf16.msra.mxu0 0
        %1887 = vmatpush.bf16.msra.mxu0 0
        %1888 = vmatpush.bf16.msra.mxu0 0
        %1889 = vmatpush.bf16.msra.mxu0 0
        %1890 = vmatpush.bf16.msra.mxu0 0
        %1891 = vmatpush.bf16.msra.mxu0 0
        %1892 = vmatpush.bf16.msra.mxu0 %v1663
        %1893 = vmatmul.bf16.gmra.mxu0 %v1857
        %v1894 = vpop.f32.mrf.mxu0
        %v1895 = vadd.f32 0.0, %v1894
        %v1896 = vpop.f32.mrf.mxu0
        %1897 = vdwg.mxu0
        %1898 = vmatpush.bf16.msra.mxu0 0
        %1899 = vmatpush.bf16.msra.mxu0 0
        %1900 = vmatpush.bf16.msra.mxu0 0
        %1901 = vmatpush.bf16.msra.mxu0 0
        %1902 = vmatpush.bf16.msra.mxu0 0
        %1903 = vmatpush.bf16.msra.mxu0 0
        %1904 = vmatpush.bf16.msra.mxu0 0
        %1905 = vmatpush.bf16.msra.mxu0 %v1664
        %1906 = vmatmul.bf16.gmra.mxu0 %v1857
        %v1907 = vpop.f32.mrf.mxu0
        %v1908 = vadd.f32 0.0, %v1907
        %v1909 = vpop.f32.mrf.mxu0
        %1910 = vdwg.mxu0
        %v1911 = vpack.c.bf16 %v1869, %v1869
        %v1912 = vpack.c.bf16 %v1882, %v1882
        %v1913 = vpack.c.bf16 %v1895, %v1895
        %v1914 = vpack.c.bf16 %v1908, %v1908
        %s1915 = scalar_lea.vmem [#allocation13], 1024
        %v1916 = vld [vmem:[%s1915] sm:$0xff]
        %v1917 = vld [vmem:[%s1915 + $0x8] sm:$0xff]
        %v1918 = vld [vmem:[%s1915 + $0x10] sm:$0xff]
        %v1919 = vld [vmem:[%s1915 + $0x18] sm:$0xff]
        %v1920 = vld [vmem:[%s1915 + $0x20] sm:$0xff]
        %v1921 = vld [vmem:[%s1915 + $0x28] sm:$0xff]
        %v1922 = vld [vmem:[%s1915 + $0x30] sm:$0xff]
        %v1923 = vld [vmem:[%s1915 + $0x38] sm:$0xff]
        %v1924 = vld [vmem:[%s1915 + $0x40] sm:$0xff]
        %v1925 = vld [vmem:[%s1915 + $0x48] sm:$0xff]
        %v1926 = vld [vmem:[%s1915 + $0x50] sm:$0xff]
        %v1927 = vld [vmem:[%s1915 + $0x58] sm:$0xff]
        %v1928 = vld [vmem:[%s1915 + $0x60] sm:$0xff]
        %v1929 = vld [vmem:[%s1915 + $0x68] sm:$0xff]
        %v1930 = vld [vmem:[%s1915 + $0x70] sm:$0xff]
        %v1931 = vld [vmem:[%s1915 + $0x78] sm:$0xff]
        %v1932 = vld [vmem:[%s1915 + $0x80] sm:$0xff]
        %v1933 = vld [vmem:[%s1915 + $0x88] sm:$0xff]
        %v1934 = vld [vmem:[%s1915 + $0x90] sm:$0xff]
        %v1935 = vld [vmem:[%s1915 + $0x98] sm:$0xff]
        %v1936 = vld [vmem:[%s1915 + $0xa0] sm:$0xff]
        %v1937 = vld [vmem:[%s1915 + $0xa8] sm:$0xff]
        %v1938 = vld [vmem:[%s1915 + $0xb0] sm:$0xff]
        %v1939 = vld [vmem:[%s1915 + $0xb8] sm:$0xff]
        %v1940 = vld [vmem:[%s1915 + $0xc0] sm:$0xff]
        %v1941 = vld [vmem:[%s1915 + $0xc8] sm:$0xff]
        %v1942 = vld [vmem:[%s1915 + $0xd0] sm:$0xff]
        %v1943 = vld [vmem:[%s1915 + $0xd8] sm:$0xff]
        %v1944 = vld [vmem:[%s1915 + $0xe0] sm:$0xff]
        %v1945 = vld [vmem:[%s1915 + $0xe8] sm:$0xff]
        %v1946 = vld [vmem:[%s1915 + $0xf0] sm:$0xff]
        %v1947 = vld [vmem:[%s1915 + $0xf8] sm:$0xff]
        %v1948 = vld [vmem:[%s1915 + $0x100] sm:$0xff]
        %v1949 = vld [vmem:[%s1915 + $0x108] sm:$0xff]
        %v1950 = vld [vmem:[%s1915 + $0x110] sm:$0xff]
        %v1951 = vld [vmem:[%s1915 + $0x118] sm:$0xff]
        %v1952 = vld [vmem:[%s1915 + $0x120] sm:$0xff]
        %v1953 = vld [vmem:[%s1915 + $0x128] sm:$0xff]
        %v1954 = vld [vmem:[%s1915 + $0x130] sm:$0xff]
        %v1955 = vld [vmem:[%s1915 + $0x138] sm:$0xff]
        %v1956 = vld [vmem:[%s1915 + $0x140] sm:$0xff]
        %v1957 = vld [vmem:[%s1915 + $0x148] sm:$0xff]
        %v1958 = vld [vmem:[%s1915 + $0x150] sm:$0xff]
        %v1959 = vld [vmem:[%s1915 + $0x158] sm:$0xff]
        %v1960 = vld [vmem:[%s1915 + $0x160] sm:$0xff]
        %v1961 = vld [vmem:[%s1915 + $0x168] sm:$0xff]
        %v1962 = vld [vmem:[%s1915 + $0x170] sm:$0xff]
        %v1963 = vld [vmem:[%s1915 + $0x178] sm:$0xff]
        %v1964 = vld [vmem:[%s1915 + $0x180] sm:$0xff]
        %v1965 = vld [vmem:[%s1915 + $0x188] sm:$0xff]
        %v1966 = vld [vmem:[%s1915 + $0x190] sm:$0xff]
        %v1967 = vld [vmem:[%s1915 + $0x198] sm:$0xff]
        %v1968 = vld [vmem:[%s1915 + $0x1a0] sm:$0xff]
        %v1969 = vld [vmem:[%s1915 + $0x1a8] sm:$0xff]
        %v1970 = vld [vmem:[%s1915 + $0x1b0] sm:$0xff]
        %v1971 = vld [vmem:[%s1915 + $0x1b8] sm:$0xff]
        %v1972 = vld [vmem:[%s1915 + $0x1c0] sm:$0xff]
        %v1973 = vld [vmem:[%s1915 + $0x1c8] sm:$0xff]
        %v1974 = vld [vmem:[%s1915 + $0x1d0] sm:$0xff]
        %v1975 = vld [vmem:[%s1915 + $0x1d8] sm:$0xff]
        %v1976 = vld [vmem:[%s1915 + $0x1e0] sm:$0xff]
        %v1977 = vld [vmem:[%s1915 + $0x1e8] sm:$0xff]
        %v1978 = vld [vmem:[%s1915 + $0x1f0] sm:$0xff]
        %v1979 = vld [vmem:[%s1915 + $0x1f8] sm:$0xff]
        %v1980 = vld [vmem:[%s1915 + $0x200] sm:$0xff]
        %v1981 = vld [vmem:[%s1915 + $0x208] sm:$0xff]
        %v1982 = vld [vmem:[%s1915 + $0x210] sm:$0xff]
        %v1983 = vld [vmem:[%s1915 + $0x218] sm:$0xff]
        %v1984 = vld [vmem:[%s1915 + $0x220] sm:$0xff]
        %v1985 = vld [vmem:[%s1915 + $0x228] sm:$0xff]
        %v1986 = vld [vmem:[%s1915 + $0x230] sm:$0xff]
        %v1987 = vld [vmem:[%s1915 + $0x238] sm:$0xff]
        %v1988 = vld [vmem:[%s1915 + $0x240] sm:$0xff]
        %v1989 = vld [vmem:[%s1915 + $0x248] sm:$0xff]
        %v1990 = vld [vmem:[%s1915 + $0x250] sm:$0xff]
        %v1991 = vld [vmem:[%s1915 + $0x258] sm:$0xff]
        %v1992 = vld [vmem:[%s1915 + $0x260] sm:$0xff]
        %v1993 = vld [vmem:[%s1915 + $0x268] sm:$0xff]
        %v1994 = vld [vmem:[%s1915 + $0x270] sm:$0xff]
        %v1995 = vld [vmem:[%s1915 + $0x278] sm:$0xff]
        %v1996 = vld [vmem:[%s1915 + $0x280] sm:$0xff]
        %v1997 = vld [vmem:[%s1915 + $0x288] sm:$0xff]
        %v1998 = vld [vmem:[%s1915 + $0x290] sm:$0xff]
        %v1999 = vld [vmem:[%s1915 + $0x298] sm:$0xff]
        %v2000 = vld [vmem:[%s1915 + $0x2a0] sm:$0xff]
        %v2001 = vld [vmem:[%s1915 + $0x2a8] sm:$0xff]
        %v2002 = vld [vmem:[%s1915 + $0x2b0] sm:$0xff]
        %v2003 = vld [vmem:[%s1915 + $0x2b8] sm:$0xff]
        %v2004 = vld [vmem:[%s1915 + $0x2c0] sm:$0xff]
        %v2005 = vld [vmem:[%s1915 + $0x2c8] sm:$0xff]
        %v2006 = vld [vmem:[%s1915 + $0x2d0] sm:$0xff]
        %v2007 = vld [vmem:[%s1915 + $0x2d8] sm:$0xff]
        %v2008 = vld [vmem:[%s1915 + $0x2e0] sm:$0xff]
        %v2009 = vld [vmem:[%s1915 + $0x2e8] sm:$0xff]
        %v2010 = vld [vmem:[%s1915 + $0x2f0] sm:$0xff]
        %v2011 = vld [vmem:[%s1915 + $0x2f8] sm:$0xff]
        %v2012 = vld [vmem:[%s1915 + $0x300] sm:$0xff]
        %v2013 = vld [vmem:[%s1915 + $0x308] sm:$0xff]
        %v2014 = vld [vmem:[%s1915 + $0x310] sm:$0xff]
        %v2015 = vld [vmem:[%s1915 + $0x318] sm:$0xff]
        %v2016 = vld [vmem:[%s1915 + $0x320] sm:$0xff]
        %v2017 = vld [vmem:[%s1915 + $0x328] sm:$0xff]
        %v2018 = vld [vmem:[%s1915 + $0x330] sm:$0xff]
        %v2019 = vld [vmem:[%s1915 + $0x338] sm:$0xff]
        %v2020 = vld [vmem:[%s1915 + $0x340] sm:$0xff]
        %v2021 = vld [vmem:[%s1915 + $0x348] sm:$0xff]
        %v2022 = vld [vmem:[%s1915 + $0x350] sm:$0xff]
        %v2023 = vld [vmem:[%s1915 + $0x358] sm:$0xff]
        %v2024 = vld [vmem:[%s1915 + $0x360] sm:$0xff]
        %v2025 = vld [vmem:[%s1915 + $0x368] sm:$0xff]
        %v2026 = vld [vmem:[%s1915 + $0x370] sm:$0xff]
        %v2027 = vld [vmem:[%s1915 + $0x378] sm:$0xff]
        %v2028 = vld [vmem:[%s1915 + $0x380] sm:$0xff]
        %v2029 = vld [vmem:[%s1915 + $0x388] sm:$0xff]
        %v2030 = vld [vmem:[%s1915 + $0x390] sm:$0xff]
        %v2031 = vld [vmem:[%s1915 + $0x398] sm:$0xff]
        %v2032 = vld [vmem:[%s1915 + $0x3a0] sm:$0xff]
        %v2033 = vld [vmem:[%s1915 + $0x3a8] sm:$0xff]
        %v2034 = vld [vmem:[%s1915 + $0x3b0] sm:$0xff]
        %v2035 = vld [vmem:[%s1915 + $0x3b8] sm:$0xff]
        %v2036 = vld [vmem:[%s1915 + $0x3c0] sm:$0xff]
        %v2037 = vld [vmem:[%s1915 + $0x3c8] sm:$0xff]
        %v2038 = vld [vmem:[%s1915 + $0x3d0] sm:$0xff]
        %v2039 = vld [vmem:[%s1915 + $0x3d8] sm:$0xff]
        %v2040 = vld [vmem:[%s1915 + $0x3e0] sm:$0xff]
        %v2041 = vld [vmem:[%s1915 + $0x3e8] sm:$0xff]
        %v2042 = vld [vmem:[%s1915 + $0x3f0] sm:$0xff]
        %v2043 = vld [vmem:[%s1915 + $0x3f8] sm:$0xff]
        %v2172 = vunpack.c.l.b16 %v1916
        %v2173 = vunpack.c.h.b16 %v1916
        %v2174 = vunpack.c.l.b16 %v1917
        %v2175 = vunpack.c.h.b16 %v1917
        %v2176 = vunpack.c.l.b16 %v1918
        %v2177 = vunpack.c.h.b16 %v1918
        %v2178 = vunpack.c.l.b16 %v1919
        %v2179 = vunpack.c.h.b16 %v1919
        %v2180 = vunpack.c.l.b16 %v1920
        %v2181 = vunpack.c.h.b16 %v1920
        %v2182 = vunpack.c.l.b16 %v1921
        %v2183 = vunpack.c.h.b16 %v1921
        %v2184 = vunpack.c.l.b16 %v1922
        %v2185 = vunpack.c.h.b16 %v1922
        %v2186 = vunpack.c.l.b16 %v1923
        %v2187 = vunpack.c.h.b16 %v1923
        %v2188 = vunpack.c.l.b16 %v1924
        %v2189 = vunpack.c.h.b16 %v1924
        %v2190 = vunpack.c.l.b16 %v1925
        %v2191 = vunpack.c.h.b16 %v1925
        %v2192 = vunpack.c.l.b16 %v1926
        %v2193 = vunpack.c.h.b16 %v1926
        %v2194 = vunpack.c.l.b16 %v1927
        %v2195 = vunpack.c.h.b16 %v1927
        %v2196 = vunpack.c.l.b16 %v1928
        %v2197 = vunpack.c.h.b16 %v1928
        %v2198 = vunpack.c.l.b16 %v1929
        %v2199 = vunpack.c.h.b16 %v1929
        %v2200 = vunpack.c.l.b16 %v1930
        %v2201 = vunpack.c.h.b16 %v1930
        %v2202 = vunpack.c.l.b16 %v1931
        %v2203 = vunpack.c.h.b16 %v1931
        %v2204 = vunpack.c.l.b16 %v1932
        %v2205 = vunpack.c.h.b16 %v1932
        %v2206 = vunpack.c.l.b16 %v1933
        %v2207 = vunpack.c.h.b16 %v1933
        %v2208 = vunpack.c.l.b16 %v1934
        %v2209 = vunpack.c.h.b16 %v1934
        %v2210 = vunpack.c.l.b16 %v1935
        %v2211 = vunpack.c.h.b16 %v1935
        %v2212 = vunpack.c.l.b16 %v1936
        %v2213 = vunpack.c.h.b16 %v1936
        %v2214 = vunpack.c.l.b16 %v1937
        %v2215 = vunpack.c.h.b16 %v1937
        %v2216 = vunpack.c.l.b16 %v1938
        %v2217 = vunpack.c.h.b16 %v1938
        %v2218 = vunpack.c.l.b16 %v1939
        %v2219 = vunpack.c.h.b16 %v1939
        %v2220 = vunpack.c.l.b16 %v1940
        %v2221 = vunpack.c.h.b16 %v1940
        %v2222 = vunpack.c.l.b16 %v1941
        %v2223 = vunpack.c.h.b16 %v1941
        %v2224 = vunpack.c.l.b16 %v1942
        %v2225 = vunpack.c.h.b16 %v1942
        %v2226 = vunpack.c.l.b16 %v1943
        %v2227 = vunpack.c.h.b16 %v1943
        %v2228 = vunpack.c.l.b16 %v1944
        %v2229 = vunpack.c.h.b16 %v1944
        %v2230 = vunpack.c.l.b16 %v1945
        %v2231 = vunpack.c.h.b16 %v1945
        %v2232 = vunpack.c.l.b16 %v1946
        %v2233 = vunpack.c.h.b16 %v1946
        %v2234 = vunpack.c.l.b16 %v1947
        %v2235 = vunpack.c.h.b16 %v1947
        %v2236 = vunpack.c.l.b16 %v1948
        %v2237 = vunpack.c.h.b16 %v1948
        %v2238 = vunpack.c.l.b16 %v1949
        %v2239 = vunpack.c.h.b16 %v1949
        %v2240 = vunpack.c.l.b16 %v1950
        %v2241 = vunpack.c.h.b16 %v1950
        %v2242 = vunpack.c.l.b16 %v1951
        %v2243 = vunpack.c.h.b16 %v1951
        %v2244 = vunpack.c.l.b16 %v1952
        %v2245 = vunpack.c.h.b16 %v1952
        %v2246 = vunpack.c.l.b16 %v1953
        %v2247 = vunpack.c.h.b16 %v1953
        %v2248 = vunpack.c.l.b16 %v1954
        %v2249 = vunpack.c.h.b16 %v1954
        %v2250 = vunpack.c.l.b16 %v1955
        %v2251 = vunpack.c.h.b16 %v1955
        %v2252 = vunpack.c.l.b16 %v1956
        %v2253 = vunpack.c.h.b16 %v1956
        %v2254 = vunpack.c.l.b16 %v1957
        %v2255 = vunpack.c.h.b16 %v1957
        %v2256 = vunpack.c.l.b16 %v1958
        %v2257 = vunpack.c.h.b16 %v1958
        %v2258 = vunpack.c.l.b16 %v1959
        %v2259 = vunpack.c.h.b16 %v1959
        %v2260 = vunpack.c.l.b16 %v1960
        %v2261 = vunpack.c.h.b16 %v1960
        %v2262 = vunpack.c.l.b16 %v1961
        %v2263 = vunpack.c.h.b16 %v1961
        %v2264 = vunpack.c.l.b16 %v1962
        %v2265 = vunpack.c.h.b16 %v1962
        %v2266 = vunpack.c.l.b16 %v1963
        %v2267 = vunpack.c.h.b16 %v1963
        %v2268 = vunpack.c.l.b16 %v1964
        %v2269 = vunpack.c.h.b16 %v1964
        %v2270 = vunpack.c.l.b16 %v1965
        %v2271 = vunpack.c.h.b16 %v1965
        %v2272 = vunpack.c.l.b16 %v1966
        %v2273 = vunpack.c.h.b16 %v1966
        %v2274 = vunpack.c.l.b16 %v1967
        %v2275 = vunpack.c.h.b16 %v1967
        %v2276 = vunpack.c.l.b16 %v1968
        %v2277 = vunpack.c.h.b16 %v1968
        %v2278 = vunpack.c.l.b16 %v1969
        %v2279 = vunpack.c.h.b16 %v1969
        %v2280 = vunpack.c.l.b16 %v1970
        %v2281 = vunpack.c.h.b16 %v1970
        %v2282 = vunpack.c.l.b16 %v1971
        %v2283 = vunpack.c.h.b16 %v1971
        %v2284 = vunpack.c.l.b16 %v1972
        %v2285 = vunpack.c.h.b16 %v1972
        %v2286 = vunpack.c.l.b16 %v1973
        %v2287 = vunpack.c.h.b16 %v1973
        %v2288 = vunpack.c.l.b16 %v1974
        %v2289 = vunpack.c.h.b16 %v1974
        %v2290 = vunpack.c.l.b16 %v1975
        %v2291 = vunpack.c.h.b16 %v1975
        %v2292 = vunpack.c.l.b16 %v1976
        %v2293 = vunpack.c.h.b16 %v1976
        %v2294 = vunpack.c.l.b16 %v1977
        %v2295 = vunpack.c.h.b16 %v1977
        %v2296 = vunpack.c.l.b16 %v1978
        %v2297 = vunpack.c.h.b16 %v1978
        %v2298 = vunpack.c.l.b16 %v1979
        %v2299 = vunpack.c.h.b16 %v1979
        %v2300 = vunpack.c.l.b16 %v1980
        %v2301 = vunpack.c.h.b16 %v1980
        %v2302 = vunpack.c.l.b16 %v1981
        %v2303 = vunpack.c.h.b16 %v1981
        %v2304 = vunpack.c.l.b16 %v1982
        %v2305 = vunpack.c.h.b16 %v1982
        %v2306 = vunpack.c.l.b16 %v1983
        %v2307 = vunpack.c.h.b16 %v1983
        %v2308 = vunpack.c.l.b16 %v1984
        %v2309 = vunpack.c.h.b16 %v1984
        %v2310 = vunpack.c.l.b16 %v1985
        %v2311 = vunpack.c.h.b16 %v1985
        %v2312 = vunpack.c.l.b16 %v1986
        %v2313 = vunpack.c.h.b16 %v1986
        %v2314 = vunpack.c.l.b16 %v1987
        %v2315 = vunpack.c.h.b16 %v1987
        %v2316 = vunpack.c.l.b16 %v1988
        %v2317 = vunpack.c.h.b16 %v1988
        %v2318 = vunpack.c.l.b16 %v1989
        %v2319 = vunpack.c.h.b16 %v1989
        %v2320 = vunpack.c.l.b16 %v1990
        %v2321 = vunpack.c.h.b16 %v1990
        %v2322 = vunpack.c.l.b16 %v1991
        %v2323 = vunpack.c.h.b16 %v1991
        %v2324 = vunpack.c.l.b16 %v1992
        %v2325 = vunpack.c.h.b16 %v1992
        %v2326 = vunpack.c.l.b16 %v1993
        %v2327 = vunpack.c.h.b16 %v1993
        %v2328 = vunpack.c.l.b16 %v1994
        %v2329 = vunpack.c.h.b16 %v1994
        %v2330 = vunpack.c.l.b16 %v1995
        %v2331 = vunpack.c.h.b16 %v1995
        %v2332 = vunpack.c.l.b16 %v1996
        %v2333 = vunpack.c.h.b16 %v1996
        %v2334 = vunpack.c.l.b16 %v1997
        %v2335 = vunpack.c.h.b16 %v1997
        %v2336 = vunpack.c.l.b16 %v1998
        %v2337 = vunpack.c.h.b16 %v1998
        %v2338 = vunpack.c.l.b16 %v1999
        %v2339 = vunpack.c.h.b16 %v1999
        %v2340 = vunpack.c.l.b16 %v2000
        %v2341 = vunpack.c.h.b16 %v2000
        %v2342 = vunpack.c.l.b16 %v2001
        %v2343 = vunpack.c.h.b16 %v2001
        %v2344 = vunpack.c.l.b16 %v2002
        %v2345 = vunpack.c.h.b16 %v2002
        %v2346 = vunpack.c.l.b16 %v2003
        %v2347 = vunpack.c.h.b16 %v2003
        %v2348 = vunpack.c.l.b16 %v2004
        %v2349 = vunpack.c.h.b16 %v2004
        %v2350 = vunpack.c.l.b16 %v2005
        %v2351 = vunpack.c.h.b16 %v2005
        %v2352 = vunpack.c.l.b16 %v2006
        %v2353 = vunpack.c.h.b16 %v2006
        %v2354 = vunpack.c.l.b16 %v2007
        %v2355 = vunpack.c.h.b16 %v2007
        %v2356 = vunpack.c.l.b16 %v2008
        %v2357 = vunpack.c.h.b16 %v2008
        %v2358 = vunpack.c.l.b16 %v2009
        %v2359 = vunpack.c.h.b16 %v2009
        %v2360 = vunpack.c.l.b16 %v2010
        %v2361 = vunpack.c.h.b16 %v2010
        %v2362 = vunpack.c.l.b16 %v2011
        %v2363 = vunpack.c.h.b16 %v2011
        %v2364 = vunpack.c.l.b16 %v2012
        %v2365 = vunpack.c.h.b16 %v2012
        %v2366 = vunpack.c.l.b16 %v2013
        %v2367 = vunpack.c.h.b16 %v2013
        %v2368 = vunpack.c.l.b16 %v2014
        %v2369 = vunpack.c.h.b16 %v2014
        %v2370 = vunpack.c.l.b16 %v2015
        %v2371 = vunpack.c.h.b16 %v2015
        %v2372 = vunpack.c.l.b16 %v2016
        %v2373 = vunpack.c.h.b16 %v2016
        %v2374 = vunpack.c.l.b16 %v2017
        %v2375 = vunpack.c.h.b16 %v2017
        %v2376 = vunpack.c.l.b16 %v2018
        %v2377 = vunpack.c.h.b16 %v2018
        %v2378 = vunpack.c.l.b16 %v2019
        %v2379 = vunpack.c.h.b16 %v2019
        %v2380 = vunpack.c.l.b16 %v2020
        %v2381 = vunpack.c.h.b16 %v2020
        %v2382 = vunpack.c.l.b16 %v2021
        %v2383 = vunpack.c.h.b16 %v2021
        %v2384 = vunpack.c.l.b16 %v2022
        %v2385 = vunpack.c.h.b16 %v2022
        %v2386 = vunpack.c.l.b16 %v2023
        %v2387 = vunpack.c.h.b16 %v2023
        %v2388 = vunpack.c.l.b16 %v2024
        %v2389 = vunpack.c.h.b16 %v2024
        %v2390 = vunpack.c.l.b16 %v2025
        %v2391 = vunpack.c.h.b16 %v2025
        %v2392 = vunpack.c.l.b16 %v2026
        %v2393 = vunpack.c.h.b16 %v2026
        %v2394 = vunpack.c.l.b16 %v2027
        %v2395 = vunpack.c.h.b16 %v2027
        %v2396 = vunpack.c.l.b16 %v2028
        %v2397 = vunpack.c.h.b16 %v2028
        %v2398 = vunpack.c.l.b16 %v2029
        %v2399 = vunpack.c.h.b16 %v2029
        %v2400 = vunpack.c.l.b16 %v2030
        %v2401 = vunpack.c.h.b16 %v2030
        %v2402 = vunpack.c.l.b16 %v2031
        %v2403 = vunpack.c.h.b16 %v2031
        %v2404 = vunpack.c.l.b16 %v2032
        %v2405 = vunpack.c.h.b16 %v2032
        %v2406 = vunpack.c.l.b16 %v2033
        %v2407 = vunpack.c.h.b16 %v2033
        %v2408 = vunpack.c.l.b16 %v2034
        %v2409 = vunpack.c.h.b16 %v2034
        %v2410 = vunpack.c.l.b16 %v2035
        %v2411 = vunpack.c.h.b16 %v2035
        %v2412 = vunpack.c.l.b16 %v2036
        %v2413 = vunpack.c.h.b16 %v2036
        %v2414 = vunpack.c.l.b16 %v2037
        %v2415 = vunpack.c.h.b16 %v2037
        %v2416 = vunpack.c.l.b16 %v2038
        %v2417 = vunpack.c.h.b16 %v2038
        %v2418 = vunpack.c.l.b16 %v2039
        %v2419 = vunpack.c.h.b16 %v2039
        %v2420 = vunpack.c.l.b16 %v2040
        %v2421 = vunpack.c.h.b16 %v2040
        %v2422 = vunpack.c.l.b16 %v2041
        %v2423 = vunpack.c.h.b16 %v2041
        %v2424 = vunpack.c.l.b16 %v2042
        %v2425 = vunpack.c.h.b16 %v2042
        %v2426 = vunpack.c.l.b16 %v2043
        %v2427 = vunpack.c.h.b16 %v2043
        %v2428 = vpack.c.b16 %v2176, %v2172
        %v2429 = vpack.c.b16 %v2177, %v2173
        %v2430 = vpack.c.b16 %v2178, %v2174
        %v2431 = vpack.c.b16 %v2179, %v2175
        %v2432 = vpack.c.b16 %v2184, %v2180
        %v2433 = vpack.c.b16 %v2185, %v2181
        %v2434 = vpack.c.b16 %v2186, %v2182
        %v2435 = vpack.c.b16 %v2187, %v2183
        %v2436 = vpack.c.b16 %v2192, %v2188
        %v2437 = vpack.c.b16 %v2193, %v2189
        %v2438 = vpack.c.b16 %v2194, %v2190
        %v2439 = vpack.c.b16 %v2195, %v2191
        %v2440 = vpack.c.b16 %v2200, %v2196
        %v2441 = vpack.c.b16 %v2201, %v2197
        %v2442 = vpack.c.b16 %v2202, %v2198
        %v2443 = vpack.c.b16 %v2203, %v2199
        %v2444 = vpack.c.b16 %v2208, %v2204
        %v2445 = vpack.c.b16 %v2209, %v2205
        %v2446 = vpack.c.b16 %v2210, %v2206
        %v2447 = vpack.c.b16 %v2211, %v2207
        %v2448 = vpack.c.b16 %v2216, %v2212
        %v2449 = vpack.c.b16 %v2217, %v2213
        %v2450 = vpack.c.b16 %v2218, %v2214
        %v2451 = vpack.c.b16 %v2219, %v2215
        %v2452 = vpack.c.b16 %v2224, %v2220
        %v2453 = vpack.c.b16 %v2225, %v2221
        %v2454 = vpack.c.b16 %v2226, %v2222
        %v2455 = vpack.c.b16 %v2227, %v2223
        %v2456 = vpack.c.b16 %v2232, %v2228
        %v2457 = vpack.c.b16 %v2233, %v2229
        %v2458 = vpack.c.b16 %v2234, %v2230
        %v2459 = vpack.c.b16 %v2235, %v2231
        %v2460 = vpack.c.b16 %v2240, %v2236
        %v2461 = vpack.c.b16 %v2241, %v2237
        %v2462 = vpack.c.b16 %v2242, %v2238
        %v2463 = vpack.c.b16 %v2243, %v2239
        %v2464 = vpack.c.b16 %v2248, %v2244
        %v2465 = vpack.c.b16 %v2249, %v2245
        %v2466 = vpack.c.b16 %v2250, %v2246
        %v2467 = vpack.c.b16 %v2251, %v2247
        %v2468 = vpack.c.b16 %v2256, %v2252
        %v2469 = vpack.c.b16 %v2257, %v2253
        %v2470 = vpack.c.b16 %v2258, %v2254
        %v2471 = vpack.c.b16 %v2259, %v2255
        %v2472 = vpack.c.b16 %v2264, %v2260
        %v2473 = vpack.c.b16 %v2265, %v2261
        %v2474 = vpack.c.b16 %v2266, %v2262
        %v2475 = vpack.c.b16 %v2267, %v2263
        %v2476 = vpack.c.b16 %v2272, %v2268
        %v2477 = vpack.c.b16 %v2273, %v2269
        %v2478 = vpack.c.b16 %v2274, %v2270
        %v2479 = vpack.c.b16 %v2275, %v2271
        %v2480 = vpack.c.b16 %v2280, %v2276
        %v2481 = vpack.c.b16 %v2281, %v2277
        %v2482 = vpack.c.b16 %v2282, %v2278
        %v2483 = vpack.c.b16 %v2283, %v2279
        %v2484 = vpack.c.b16 %v2288, %v2284
        %v2485 = vpack.c.b16 %v2289, %v2285
        %v2486 = vpack.c.b16 %v2290, %v2286
        %v2487 = vpack.c.b16 %v2291, %v2287
        %v2488 = vpack.c.b16 %v2296, %v2292
        %v2489 = vpack.c.b16 %v2297, %v2293
        %v2490 = vpack.c.b16 %v2298, %v2294
        %v2491 = vpack.c.b16 %v2299, %v2295
        %v2492 = vpack.c.b16 %v2304, %v2300
        %v2493 = vpack.c.b16 %v2305, %v2301
        %v2494 = vpack.c.b16 %v2306, %v2302
        %v2495 = vpack.c.b16 %v2307, %v2303
        %v2496 = vpack.c.b16 %v2312, %v2308
        %v2497 = vpack.c.b16 %v2313, %v2309
        %v2498 = vpack.c.b16 %v2314, %v2310
        %v2499 = vpack.c.b16 %v2315, %v2311
        %v2500 = vpack.c.b16 %v2320, %v2316
        %v2501 = vpack.c.b16 %v2321, %v2317
        %v2502 = vpack.c.b16 %v2322, %v2318
        %v2503 = vpack.c.b16 %v2323, %v2319
        %v2504 = vpack.c.b16 %v2328, %v2324
        %v2505 = vpack.c.b16 %v2329, %v2325
        %v2506 = vpack.c.b16 %v2330, %v2326
        %v2507 = vpack.c.b16 %v2331, %v2327
        %v2508 = vpack.c.b16 %v2336, %v2332
        %v2509 = vpack.c.b16 %v2337, %v2333
        %v2510 = vpack.c.b16 %v2338, %v2334
        %v2511 = vpack.c.b16 %v2339, %v2335
        %v2512 = vpack.c.b16 %v2344, %v2340
        %v2513 = vpack.c.b16 %v2345, %v2341
        %v2514 = vpack.c.b16 %v2346, %v2342
        %v2515 = vpack.c.b16 %v2347, %v2343
        %v2516 = vpack.c.b16 %v2352, %v2348
        %v2517 = vpack.c.b16 %v2353, %v2349
        %v2518 = vpack.c.b16 %v2354, %v2350
        %v2519 = vpack.c.b16 %v2355, %v2351
        %v2520 = vpack.c.b16 %v2360, %v2356
        %v2521 = vpack.c.b16 %v2361, %v2357
        %v2522 = vpack.c.b16 %v2362, %v2358
        %v2523 = vpack.c.b16 %v2363, %v2359
        %v2524 = vpack.c.b16 %v2368, %v2364
        %v2525 = vpack.c.b16 %v2369, %v2365
        %v2526 = vpack.c.b16 %v2370, %v2366
        %v2527 = vpack.c.b16 %v2371, %v2367
        %v2528 = vpack.c.b16 %v2376, %v2372
        %v2529 = vpack.c.b16 %v2377, %v2373
        %v2530 = vpack.c.b16 %v2378, %v2374
        %v2531 = vpack.c.b16 %v2379, %v2375
        %v2532 = vpack.c.b16 %v2384, %v2380
        %v2533 = vpack.c.b16 %v2385, %v2381
        %v2534 = vpack.c.b16 %v2386, %v2382
        %v2535 = vpack.c.b16 %v2387, %v2383
        %v2536 = vpack.c.b16 %v2392, %v2388
        %v2537 = vpack.c.b16 %v2393, %v2389
        %v2538 = vpack.c.b16 %v2394, %v2390
        %v2539 = vpack.c.b16 %v2395, %v2391
        %v2540 = vpack.c.b16 %v2400, %v2396
        %v2541 = vpack.c.b16 %v2401, %v2397
        %v2542 = vpack.c.b16 %v2402, %v2398
        %v2543 = vpack.c.b16 %v2403, %v2399
        %v2544 = vpack.c.b16 %v2408, %v2404
        %v2545 = vpack.c.b16 %v2409, %v2405
        %v2546 = vpack.c.b16 %v2410, %v2406
        %v2547 = vpack.c.b16 %v2411, %v2407
        %v2548 = vpack.c.b16 %v2416, %v2412
        %v2549 = vpack.c.b16 %v2417, %v2413
        %v2550 = vpack.c.b16 %v2418, %v2414
        %v2551 = vpack.c.b16 %v2419, %v2415
        %v2552 = vpack.c.b16 %v2424, %v2420
        %v2553 = vpack.c.b16 %v2425, %v2421
        %v2554 = vpack.c.b16 %v2426, %v2422
        %v2555 = vpack.c.b16 %v2427, %v2423
        %2684 = vmatpush.bf16.msra.mxu0 %v2456
        %2685 = vmatpush.bf16.msra.mxu0 %v2452
        %2686 = vmatpush.bf16.msra.mxu0 %v2448
        %2687 = vmatpush.bf16.msra.mxu0 %v2444
        %2688 = vmatpush.bf16.msra.mxu0 %v2440
        %2689 = vmatpush.bf16.msra.mxu0 %v2436
        %2690 = vmatpush.bf16.msra.mxu0 %v2432
        %2691 = vmatpush.bf16.msra.mxu0 %v2428
        %2692 = vmatmul.bf16.gmra.mxu0 %v1911
        %v2693 = vpop.f32.mrf.mxu0
        %v2694 = vadd.f32 0.0, %v2693
        %v2695 = vpop.f32.mrf.mxu0
        %2696 = vdwg.mxu0
        %2697 = vmatpush.bf16.msra.mxu0 %v2488
        %2698 = vmatpush.bf16.msra.mxu0 %v2484
        %2699 = vmatpush.bf16.msra.mxu0 %v2480
        %2700 = vmatpush.bf16.msra.mxu0 %v2476
        %2701 = vmatpush.bf16.msra.mxu0 %v2472
        %2702 = vmatpush.bf16.msra.mxu0 %v2468
        %2703 = vmatpush.bf16.msra.mxu0 %v2464
        %2704 = vmatpush.bf16.msra.mxu0 %v2460
        %2705 = vmatmul.bf16.gmra.mxu0 %v1912
        %v2706 = vpop.f32.mrf.mxu0
        %v2707 = vadd.f32 %v2694, %v2706
        %v2708 = vpop.f32.mrf.mxu0
        %2709 = vdwg.mxu0
        %2710 = vmatpush.bf16.msra.mxu0 %v2520
        %2711 = vmatpush.bf16.msra.mxu0 %v2516
        %2712 = vmatpush.bf16.msra.mxu0 %v2512
        %2713 = vmatpush.bf16.msra.mxu0 %v2508
        %2714 = vmatpush.bf16.msra.mxu0 %v2504
        %2715 = vmatpush.bf16.msra.mxu0 %v2500
        %2716 = vmatpush.bf16.msra.mxu0 %v2496
        %2717 = vmatpush.bf16.msra.mxu0 %v2492
        %2718 = vmatmul.bf16.gmra.mxu0 %v1913
        %v2719 = vpop.f32.mrf.mxu0
        %v2720 = vadd.f32 %v2707, %v2719
        %v2721 = vpop.f32.mrf.mxu0
        %2722 = vdwg.mxu0
        %2723 = vmatpush.bf16.msra.mxu0 %v2552
        %2724 = vmatpush.bf16.msra.mxu0 %v2548
        %2725 = vmatpush.bf16.msra.mxu0 %v2544
        %2726 = vmatpush.bf16.msra.mxu0 %v2540
        %2727 = vmatpush.bf16.msra.mxu0 %v2536
        %2728 = vmatpush.bf16.msra.mxu0 %v2532
        %2729 = vmatpush.bf16.msra.mxu0 %v2528
        %2730 = vmatpush.bf16.msra.mxu0 %v2524
        %2731 = vmatmul.bf16.gmra.mxu0 %v1914
        %v2732 = vpop.f32.mrf.mxu0
        %v2733 = vadd.f32 %v2720, %v2732
        %v2734 = vpop.f32.mrf.mxu0
        %2735 = vdwg.mxu0
        %2736 = vmatpush.bf16.msra.mxu0 %v2457
        %2737 = vmatpush.bf16.msra.mxu0 %v2453
        %2738 = vmatpush.bf16.msra.mxu0 %v2449
        %2739 = vmatpush.bf16.msra.mxu0 %v2445
        %2740 = vmatpush.bf16.msra.mxu0 %v2441
        %2741 = vmatpush.bf16.msra.mxu0 %v2437
        %2742 = vmatpush.bf16.msra.mxu0 %v2433
        %2743 = vmatpush.bf16.msra.mxu0 %v2429
        %2744 = vmatmul.bf16.gmra.mxu0 %v1911
        %v2745 = vpop.f32.mrf.mxu0
        %v2746 = vadd.f32 0.0, %v2745
        %v2747 = vpop.f32.mrf.mxu0
        %2748 = vdwg.mxu0
        %2749 = vmatpush.bf16.msra.mxu0 %v2489
        %2750 = vmatpush.bf16.msra.mxu0 %v2485
        %2751 = vmatpush.bf16.msra.mxu0 %v2481
        %2752 = vmatpush.bf16.msra.mxu0 %v2477
        %2753 = vmatpush.bf16.msra.mxu0 %v2473
        %2754 = vmatpush.bf16.msra.mxu0 %v2469
        %2755 = vmatpush.bf16.msra.mxu0 %v2465
        %2756 = vmatpush.bf16.msra.mxu0 %v2461
        %2757 = vmatmul.bf16.gmra.mxu0 %v1912
        %v2758 = vpop.f32.mrf.mxu0
        %v2759 = vadd.f32 %v2746, %v2758
        %v2760 = vpop.f32.mrf.mxu0
        %2761 = vdwg.mxu0
        %2762 = vmatpush.bf16.msra.mxu0 %v2521
        %2763 = vmatpush.bf16.msra.mxu0 %v2517
        %2764 = vmatpush.bf16.msra.mxu0 %v2513
        %2765 = vmatpush.bf16.msra.mxu0 %v2509
        %2766 = vmatpush.bf16.msra.mxu0 %v2505
        %2767 = vmatpush.bf16.msra.mxu0 %v2501
        %2768 = vmatpush.bf16.msra.mxu0 %v2497
        %2769 = vmatpush.bf16.msra.mxu0 %v2493
        %2770 = vmatmul.bf16.gmra.mxu0 %v1913
        %v2771 = vpop.f32.mrf.mxu0
        %v2772 = vadd.f32 %v2759, %v2771
        %v2773 = vpop.f32.mrf.mxu0
        %2774 = vdwg.mxu0
        %2775 = vmatpush.bf16.msra.mxu0 %v2553
        %2776 = vmatpush.bf16.msra.mxu0 %v2549
        %2777 = vmatpush.bf16.msra.mxu0 %v2545
        %2778 = vmatpush.bf16.msra.mxu0 %v2541
        %2779 = vmatpush.bf16.msra.mxu0 %v2537
        %2780 = vmatpush.bf16.msra.mxu0 %v2533
        %2781 = vmatpush.bf16.msra.mxu0 %v2529
        %2782 = vmatpush.bf16.msra.mxu0 %v2525
        %2783 = vmatmul.bf16.gmra.mxu0 %v1914
        %v2784 = vpop.f32.mrf.mxu0
        %v2785 = vadd.f32 %v2772, %v2784
        %v2786 = vpop.f32.mrf.mxu0
        %2787 = vdwg.mxu0
        %2788 = vmatpush.bf16.msra.mxu0 %v2458
        %2789 = vmatpush.bf16.msra.mxu0 %v2454
        %2790 = vmatpush.bf16.msra.mxu0 %v2450
        %2791 = vmatpush.bf16.msra.mxu0 %v2446
        %2792 = vmatpush.bf16.msra.mxu0 %v2442
        %2793 = vmatpush.bf16.msra.mxu0 %v2438
        %2794 = vmatpush.bf16.msra.mxu0 %v2434
        %2795 = vmatpush.bf16.msra.mxu0 %v2430
        %2796 = vmatmul.bf16.gmra.mxu0 %v1911
        %v2797 = vpop.f32.mrf.mxu0
        %v2798 = vadd.f32 0.0, %v2797
        %v2799 = vpop.f32.mrf.mxu0
        %2800 = vdwg.mxu0
        %2801 = vmatpush.bf16.msra.mxu0 %v2490
        %2802 = vmatpush.bf16.msra.mxu0 %v2486
        %2803 = vmatpush.bf16.msra.mxu0 %v2482
        %2804 = vmatpush.bf16.msra.mxu0 %v2478
        %2805 = vmatpush.bf16.msra.mxu0 %v2474
        %2806 = vmatpush.bf16.msra.mxu0 %v2470
        %2807 = vmatpush.bf16.msra.mxu0 %v2466
        %2808 = vmatpush.bf16.msra.mxu0 %v2462
        %2809 = vmatmul.bf16.gmra.mxu0 %v1912
        %v2810 = vpop.f32.mrf.mxu0
        %v2811 = vadd.f32 %v2798, %v2810
        %v2812 = vpop.f32.mrf.mxu0
        %2813 = vdwg.mxu0
        %2814 = vmatpush.bf16.msra.mxu0 %v2522
        %2815 = vmatpush.bf16.msra.mxu0 %v2518
        %2816 = vmatpush.bf16.msra.mxu0 %v2514
        %2817 = vmatpush.bf16.msra.mxu0 %v2510
        %2818 = vmatpush.bf16.msra.mxu0 %v2506
        %2819 = vmatpush.bf16.msra.mxu0 %v2502
        %2820 = vmatpush.bf16.msra.mxu0 %v2498
        %2821 = vmatpush.bf16.msra.mxu0 %v2494
        %2822 = vmatmul.bf16.gmra.mxu0 %v1913
        %v2823 = vpop.f32.mrf.mxu0
        %v2824 = vadd.f32 %v2811, %v2823
        %v2825 = vpop.f32.mrf.mxu0
        %2826 = vdwg.mxu0
        %2827 = vmatpush.bf16.msra.mxu0 %v2554
        %2828 = vmatpush.bf16.msra.mxu0 %v2550
        %2829 = vmatpush.bf16.msra.mxu0 %v2546
        %2830 = vmatpush.bf16.msra.mxu0 %v2542
        %2831 = vmatpush.bf16.msra.mxu0 %v2538
        %2832 = vmatpush.bf16.msra.mxu0 %v2534
        %2833 = vmatpush.bf16.msra.mxu0 %v2530
        %2834 = vmatpush.bf16.msra.mxu0 %v2526
        %2835 = vmatmul.bf16.gmra.mxu0 %v1914
        %v2836 = vpop.f32.mrf.mxu0
        %v2837 = vadd.f32 %v2824, %v2836
        %v2838 = vpop.f32.mrf.mxu0
        %2839 = vdwg.mxu0
        %2840 = vmatpush.bf16.msra.mxu0 %v2459
        %2841 = vmatpush.bf16.msra.mxu0 %v2455
        %2842 = vmatpush.bf16.msra.mxu0 %v2451
        %2843 = vmatpush.bf16.msra.mxu0 %v2447
        %2844 = vmatpush.bf16.msra.mxu0 %v2443
        %2845 = vmatpush.bf16.msra.mxu0 %v2439
        %2846 = vmatpush.bf16.msra.mxu0 %v2435
        %2847 = vmatpush.bf16.msra.mxu0 %v2431
        %2848 = vmatmul.bf16.gmra.mxu0 %v1911
        %v2849 = vpop.f32.mrf.mxu0
        %v2850 = vadd.f32 0.0, %v2849
        %v2851 = vpop.f32.mrf.mxu0
        %2852 = vdwg.mxu0
        %2853 = vmatpush.bf16.msra.mxu0 %v2491
        %2854 = vmatpush.bf16.msra.mxu0 %v2487
        %2855 = vmatpush.bf16.msra.mxu0 %v2483
        %2856 = vmatpush.bf16.msra.mxu0 %v2479
        %2857 = vmatpush.bf16.msra.mxu0 %v2475
        %2858 = vmatpush.bf16.msra.mxu0 %v2471
        %2859 = vmatpush.bf16.msra.mxu0 %v2467
        %2860 = vmatpush.bf16.msra.mxu0 %v2463
        %2861 = vmatmul.bf16.gmra.mxu0 %v1912
        %v2862 = vpop.f32.mrf.mxu0
        %v2863 = vadd.f32 %v2850, %v2862
        %v2864 = vpop.f32.mrf.mxu0
        %2865 = vdwg.mxu0
        %2866 = vmatpush.bf16.msra.mxu0 %v2523
        %2867 = vmatpush.bf16.msra.mxu0 %v2519
        %2868 = vmatpush.bf16.msra.mxu0 %v2515
        %2869 = vmatpush.bf16.msra.mxu0 %v2511
        %2870 = vmatpush.bf16.msra.mxu0 %v2507
        %2871 = vmatpush.bf16.msra.mxu0 %v2503
        %2872 = vmatpush.bf16.msra.mxu0 %v2499
        %2873 = vmatpush.bf16.msra.mxu0 %v2495
        %2874 = vmatmul.bf16.gmra.mxu0 %v1913
        %v2875 = vpop.f32.mrf.mxu0
        %v2876 = vadd.f32 %v2863, %v2875
        %v2877 = vpop.f32.mrf.mxu0
        %2878 = vdwg.mxu0
        %2879 = vmatpush.bf16.msra.mxu0 %v2555
        %2880 = vmatpush.bf16.msra.mxu0 %v2551
        %2881 = vmatpush.bf16.msra.mxu0 %v2547
        %2882 = vmatpush.bf16.msra.mxu0 %v2543
        %2883 = vmatpush.bf16.msra.mxu0 %v2539
        %2884 = vmatpush.bf16.msra.mxu0 %v2535
        %2885 = vmatpush.bf16.msra.mxu0 %v2531
        %2886 = vmatpush.bf16.msra.mxu0 %v2527
        %2887 = vmatmul.bf16.gmra.mxu0 %v1914
        %v2888 = vpop.f32.mrf.mxu0
        %v2889 = vadd.f32 %v2876, %v2888
        %v2890 = vpop.f32.mrf.mxu0
        %2891 = vdwg.mxu0
        %v3020 = vunpack.c.l.b16 %v1726
        %v3021 = vunpack.c.h.b16 %v1726
        %v3022 = vunpack.c.l.b16 %v1727
        %v3023 = vunpack.c.h.b16 %v1727
        %v3024 = vunpack.c.l.b16 %v1728
        %v3025 = vunpack.c.h.b16 %v1728
        %v3026 = vunpack.c.l.b16 %v1729
        %v3027 = vunpack.c.h.b16 %v1729
        %v3028 = vunpack.c.l.b16 %v1730
        %v3029 = vunpack.c.h.b16 %v1730
        %v3030 = vunpack.c.l.b16 %v1731
        %v3031 = vunpack.c.h.b16 %v1731
        %v3032 = vunpack.c.l.b16 %v1732
        %v3033 = vunpack.c.h.b16 %v1732
        %v3034 = vunpack.c.l.b16 %v1733
        %v3035 = vunpack.c.h.b16 %v1733
        %v3036 = vunpack.c.l.b16 %v1734
        %v3037 = vunpack.c.h.b16 %v1734
        %v3038 = vunpack.c.l.b16 %v1735
        %v3039 = vunpack.c.h.b16 %v1735
        %v3040 = vunpack.c.l.b16 %v1736
        %v3041 = vunpack.c.h.b16 %v1736
        %v3042 = vunpack.c.l.b16 %v1737
        %v3043 = vunpack.c.h.b16 %v1737
        %v3044 = vunpack.c.l.b16 %v1738
        %v3045 = vunpack.c.h.b16 %v1738
        %v3046 = vunpack.c.l.b16 %v1739
        %v3047 = vunpack.c.h.b16 %v1739
        %v3048 = vunpack.c.l.b16 %v1740
        %v3049 = vunpack.c.h.b16 %v1740
        %v3050 = vunpack.c.l.b16 %v1741
        %v3051 = vunpack.c.h.b16 %v1741
        %v3052 = vunpack.c.l.b16 %v1742
        %v3053 = vunpack.c.h.b16 %v1742
        %v3054 = vunpack.c.l.b16 %v1743
        %v3055 = vunpack.c.h.b16 %v1743
        %v3056 = vunpack.c.l.b16 %v1744
        %v3057 = vunpack.c.h.b16 %v1744
        %v3058 = vunpack.c.l.b16 %v1745
        %v3059 = vunpack.c.h.b16 %v1745
        %v3060 = vunpack.c.l.b16 %v1746
        %v3061 = vunpack.c.h.b16 %v1746
        %v3062 = vunpack.c.l.b16 %v1747
        %v3063 = vunpack.c.h.b16 %v1747
        %v3064 = vunpack.c.l.b16 %v1748
        %v3065 = vunpack.c.h.b16 %v1748
        %v3066 = vunpack.c.l.b16 %v1749
        %v3067 = vunpack.c.h.b16 %v1749
        %v3068 = vunpack.c.l.b16 %v1750
        %v3069 = vunpack.c.h.b16 %v1750
        %v3070 = vunpack.c.l.b16 %v1751
        %v3071 = vunpack.c.h.b16 %v1751
        %v3072 = vunpack.c.l.b16 %v1752
        %v3073 = vunpack.c.h.b16 %v1752
        %v3074 = vunpack.c.l.b16 %v1753
        %v3075 = vunpack.c.h.b16 %v1753
        %v3076 = vunpack.c.l.b16 %v1754
        %v3077 = vunpack.c.h.b16 %v1754
        %v3078 = vunpack.c.l.b16 %v1755
        %v3079 = vunpack.c.h.b16 %v1755
        %v3080 = vunpack.c.l.b16 %v1756
        %v3081 = vunpack.c.h.b16 %v1756
        %v3082 = vunpack.c.l.b16 %v1757
        %v3083 = vunpack.c.h.b16 %v1757
        %v3084 = vunpack.c.l.b16 %v1758
        %v3085 = vunpack.c.h.b16 %v1758
        %v3086 = vunpack.c.l.b16 %v1759
        %v3087 = vunpack.c.h.b16 %v1759
        %v3088 = vunpack.c.l.b16 %v1760
        %v3089 = vunpack.c.h.b16 %v1760
        %v3090 = vunpack.c.l.b16 %v1761
        %v3091 = vunpack.c.h.b16 %v1761
        %v3092 = vunpack.c.l.b16 %v1762
        %v3093 = vunpack.c.h.b16 %v1762
        %v3094 = vunpack.c.l.b16 %v1763
        %v3095 = vunpack.c.h.b16 %v1763
        %v3096 = vunpack.c.l.b16 %v1764
        %v3097 = vunpack.c.h.b16 %v1764
        %v3098 = vunpack.c.l.b16 %v1765
        %v3099 = vunpack.c.h.b16 %v1765
        %v3100 = vunpack.c.l.b16 %v1766
        %v3101 = vunpack.c.h.b16 %v1766
        %v3102 = vunpack.c.l.b16 %v1767
        %v3103 = vunpack.c.h.b16 %v1767
        %v3104 = vunpack.c.l.b16 %v1768
        %v3105 = vunpack.c.h.b16 %v1768
        %v3106 = vunpack.c.l.b16 %v1769
        %v3107 = vunpack.c.h.b16 %v1769
        %v3108 = vunpack.c.l.b16 %v1770
        %v3109 = vunpack.c.h.b16 %v1770
        %v3110 = vunpack.c.l.b16 %v1771
        %v3111 = vunpack.c.h.b16 %v1771
        %v3112 = vunpack.c.l.b16 %v1772
        %v3113 = vunpack.c.h.b16 %v1772
        %v3114 = vunpack.c.l.b16 %v1773
        %v3115 = vunpack.c.h.b16 %v1773
        %v3116 = vunpack.c.l.b16 %v1774
        %v3117 = vunpack.c.h.b16 %v1774
        %v3118 = vunpack.c.l.b16 %v1775
        %v3119 = vunpack.c.h.b16 %v1775
        %v3120 = vunpack.c.l.b16 %v1776
        %v3121 = vunpack.c.h.b16 %v1776
        %v3122 = vunpack.c.l.b16 %v1777
        %v3123 = vunpack.c.h.b16 %v1777
        %v3124 = vunpack.c.l.b16 %v1778
        %v3125 = vunpack.c.h.b16 %v1778
        %v3126 = vunpack.c.l.b16 %v1779
        %v3127 = vunpack.c.h.b16 %v1779
        %v3128 = vunpack.c.l.b16 %v1780
        %v3129 = vunpack.c.h.b16 %v1780
        %v3130 = vunpack.c.l.b16 %v1781
        %v3131 = vunpack.c.h.b16 %v1781
        %v3132 = vunpack.c.l.b16 %v1782
        %v3133 = vunpack.c.h.b16 %v1782
        %v3134 = vunpack.c.l.b16 %v1783
        %v3135 = vunpack.c.h.b16 %v1783
        %v3136 = vunpack.c.l.b16 %v1784
        %v3137 = vunpack.c.h.b16 %v1784
        %v3138 = vunpack.c.l.b16 %v1785
        %v3139 = vunpack.c.h.b16 %v1785
        %v3140 = vunpack.c.l.b16 %v1786
        %v3141 = vunpack.c.h.b16 %v1786
        %v3142 = vunpack.c.l.b16 %v1787
        %v3143 = vunpack.c.h.b16 %v1787
        %v3144 = vunpack.c.l.b16 %v1788
        %v3145 = vunpack.c.h.b16 %v1788
        %v3146 = vunpack.c.l.b16 %v1789
        %v3147 = vunpack.c.h.b16 %v1789
        %v3148 = vunpack.c.l.b16 %v1790
        %v3149 = vunpack.c.h.b16 %v1790
        %v3150 = vunpack.c.l.b16 %v1791
        %v3151 = vunpack.c.h.b16 %v1791
        %v3152 = vunpack.c.l.b16 %v1792
        %v3153 = vunpack.c.h.b16 %v1792
        %v3154 = vunpack.c.l.b16 %v1793
        %v3155 = vunpack.c.h.b16 %v1793
        %v3156 = vunpack.c.l.b16 %v1794
        %v3157 = vunpack.c.h.b16 %v1794
        %v3158 = vunpack.c.l.b16 %v1795
        %v3159 = vunpack.c.h.b16 %v1795
        %v3160 = vunpack.c.l.b16 %v1796
        %v3161 = vunpack.c.h.b16 %v1796
        %v3162 = vunpack.c.l.b16 %v1797
        %v3163 = vunpack.c.h.b16 %v1797
        %v3164 = vunpack.c.l.b16 %v1798
        %v3165 = vunpack.c.h.b16 %v1798
        %v3166 = vunpack.c.l.b16 %v1799
        %v3167 = vunpack.c.h.b16 %v1799
        %v3168 = vunpack.c.l.b16 %v1800
        %v3169 = vunpack.c.h.b16 %v1800
        %v3170 = vunpack.c.l.b16 %v1801
        %v3171 = vunpack.c.h.b16 %v1801
        %v3172 = vunpack.c.l.b16 %v1802
        %v3173 = vunpack.c.h.b16 %v1802
        %v3174 = vunpack.c.l.b16 %v1803
        %v3175 = vunpack.c.h.b16 %v1803
        %v3176 = vunpack.c.l.b16 %v1804
        %v3177 = vunpack.c.h.b16 %v1804
        %v3178 = vunpack.c.l.b16 %v1805
        %v3179 = vunpack.c.h.b16 %v1805
        %v3180 = vunpack.c.l.b16 %v1806
        %v3181 = vunpack.c.h.b16 %v1806
        %v3182 = vunpack.c.l.b16 %v1807
        %v3183 = vunpack.c.h.b16 %v1807
        %v3184 = vunpack.c.l.b16 %v1808
        %v3185 = vunpack.c.h.b16 %v1808
        %v3186 = vunpack.c.l.b16 %v1809
        %v3187 = vunpack.c.h.b16 %v1809
        %v3188 = vunpack.c.l.b16 %v1810
        %v3189 = vunpack.c.h.b16 %v1810
        %v3190 = vunpack.c.l.b16 %v1811
        %v3191 = vunpack.c.h.b16 %v1811
        %v3192 = vunpack.c.l.b16 %v1812
        %v3193 = vunpack.c.h.b16 %v1812
        %v3194 = vunpack.c.l.b16 %v1813
        %v3195 = vunpack.c.h.b16 %v1813
        %v3196 = vunpack.c.l.b16 %v1814
        %v3197 = vunpack.c.h.b16 %v1814
        %v3198 = vunpack.c.l.b16 %v1815
        %v3199 = vunpack.c.h.b16 %v1815
        %v3200 = vunpack.c.l.b16 %v1816
        %v3201 = vunpack.c.h.b16 %v1816
        %v3202 = vunpack.c.l.b16 %v1817
        %v3203 = vunpack.c.h.b16 %v1817
        %v3204 = vunpack.c.l.b16 %v1818
        %v3205 = vunpack.c.h.b16 %v1818
        %v3206 = vunpack.c.l.b16 %v1819
        %v3207 = vunpack.c.h.b16 %v1819
        %v3208 = vunpack.c.l.b16 %v1820
        %v3209 = vunpack.c.h.b16 %v1820
        %v3210 = vunpack.c.l.b16 %v1821
        %v3211 = vunpack.c.h.b16 %v1821
        %v3212 = vunpack.c.l.b16 %v1822
        %v3213 = vunpack.c.h.b16 %v1822
        %v3214 = vunpack.c.l.b16 %v1823
        %v3215 = vunpack.c.h.b16 %v1823
        %v3216 = vunpack.c.l.b16 %v1824
        %v3217 = vunpack.c.h.b16 %v1824
        %v3218 = vunpack.c.l.b16 %v1825
        %v3219 = vunpack.c.h.b16 %v1825
        %v3220 = vunpack.c.l.b16 %v1826
        %v3221 = vunpack.c.h.b16 %v1826
        %v3222 = vunpack.c.l.b16 %v1827
        %v3223 = vunpack.c.h.b16 %v1827
        %v3224 = vunpack.c.l.b16 %v1828
        %v3225 = vunpack.c.h.b16 %v1828
        %v3226 = vunpack.c.l.b16 %v1829
        %v3227 = vunpack.c.h.b16 %v1829
        %v3228 = vunpack.c.l.b16 %v1830
        %v3229 = vunpack.c.h.b16 %v1830
        %v3230 = vunpack.c.l.b16 %v1831
        %v3231 = vunpack.c.h.b16 %v1831
        %v3232 = vunpack.c.l.b16 %v1832
        %v3233 = vunpack.c.h.b16 %v1832
        %v3234 = vunpack.c.l.b16 %v1833
        %v3235 = vunpack.c.h.b16 %v1833
        %v3236 = vunpack.c.l.b16 %v1834
        %v3237 = vunpack.c.h.b16 %v1834
        %v3238 = vunpack.c.l.b16 %v1835
        %v3239 = vunpack.c.h.b16 %v1835
        %v3240 = vunpack.c.l.b16 %v1836
        %v3241 = vunpack.c.h.b16 %v1836
        %v3242 = vunpack.c.l.b16 %v1837
        %v3243 = vunpack.c.h.b16 %v1837
        %v3244 = vunpack.c.l.b16 %v1838
        %v3245 = vunpack.c.h.b16 %v1838
        %v3246 = vunpack.c.l.b16 %v1839
        %v3247 = vunpack.c.h.b16 %v1839
        %v3248 = vunpack.c.l.b16 %v1840
        %v3249 = vunpack.c.h.b16 %v1840
        %v3250 = vunpack.c.l.b16 %v1841
        %v3251 = vunpack.c.h.b16 %v1841
        %v3252 = vunpack.c.l.b16 %v1842
        %v3253 = vunpack.c.h.b16 %v1842
        %v3254 = vunpack.c.l.b16 %v1843
        %v3255 = vunpack.c.h.b16 %v1843
        %v3256 = vunpack.c.l.b16 %v1844
        %v3257 = vunpack.c.h.b16 %v1844
        %v3258 = vunpack.c.l.b16 %v1845
        %v3259 = vunpack.c.h.b16 %v1845
        %v3260 = vunpack.c.l.b16 %v1846
        %v3261 = vunpack.c.h.b16 %v1846
        %v3262 = vunpack.c.l.b16 %v1847
        %v3263 = vunpack.c.h.b16 %v1847
        %v3264 = vunpack.c.l.b16 %v1848
        %v3265 = vunpack.c.h.b16 %v1848
        %v3266 = vunpack.c.l.b16 %v1849
        %v3267 = vunpack.c.h.b16 %v1849
        %v3268 = vunpack.c.l.b16 %v1850
        %v3269 = vunpack.c.h.b16 %v1850
        %v3270 = vunpack.c.l.b16 %v1851
        %v3271 = vunpack.c.h.b16 %v1851
        %v3272 = vunpack.c.l.b16 %v1852
        %v3273 = vunpack.c.h.b16 %v1852
        %v3274 = vunpack.c.l.b16 %v1853
        %v3275 = vunpack.c.h.b16 %v1853
        %v3276 = vpack.c.b16 %v3024, %v3020
        %v3277 = vpack.c.b16 %v3025, %v3021
        %v3278 = vpack.c.b16 %v3026, %v3022
        %v3279 = vpack.c.b16 %v3027, %v3023
        %v3280 = vpack.c.b16 %v3032, %v3028
        %v3281 = vpack.c.b16 %v3033, %v3029
        %v3282 = vpack.c.b16 %v3034, %v3030
        %v3283 = vpack.c.b16 %v3035, %v3031
        %v3284 = vpack.c.b16 %v3040, %v3036
        %v3285 = vpack.c.b16 %v3041, %v3037
        %v3286 = vpack.c.b16 %v3042, %v3038
        %v3287 = vpack.c.b16 %v3043, %v3039
        %v3288 = vpack.c.b16 %v3048, %v3044
        %v3289 = vpack.c.b16 %v3049, %v3045
        %v3290 = vpack.c.b16 %v3050, %v3046
        %v3291 = vpack.c.b16 %v3051, %v3047
        %v3292 = vpack.c.b16 %v3056, %v3052
        %v3293 = vpack.c.b16 %v3057, %v3053
        %v3294 = vpack.c.b16 %v3058, %v3054
        %v3295 = vpack.c.b16 %v3059, %v3055
        %v3296 = vpack.c.b16 %v3064, %v3060
        %v3297 = vpack.c.b16 %v3065, %v3061
        %v3298 = vpack.c.b16 %v3066, %v3062
        %v3299 = vpack.c.b16 %v3067, %v3063
        %v3300 = vpack.c.b16 %v3072, %v3068
        %v3301 = vpack.c.b16 %v3073, %v3069
        %v3302 = vpack.c.b16 %v3074, %v3070
        %v3303 = vpack.c.b16 %v3075, %v3071
        %v3304 = vpack.c.b16 %v3080, %v3076
        %v3305 = vpack.c.b16 %v3081, %v3077
        %v3306 = vpack.c.b16 %v3082, %v3078
        %v3307 = vpack.c.b16 %v3083, %v3079
        %v3308 = vpack.c.b16 %v3088, %v3084
        %v3309 = vpack.c.b16 %v3089, %v3085
        %v3310 = vpack.c.b16 %v3090, %v3086
        %v3311 = vpack.c.b16 %v3091, %v3087
        %v3312 = vpack.c.b16 %v3096, %v3092
        %v3313 = vpack.c.b16 %v3097, %v3093
        %v3314 = vpack.c.b16 %v3098, %v3094
        %v3315 = vpack.c.b16 %v3099, %v3095
        %v3316 = vpack.c.b16 %v3104, %v3100
        %v3317 = vpack.c.b16 %v3105, %v3101
        %v3318 = vpack.c.b16 %v3106, %v3102
        %v3319 = vpack.c.b16 %v3107, %v3103
        %v3320 = vpack.c.b16 %v3112, %v3108
        %v3321 = vpack.c.b16 %v3113, %v3109
        %v3322 = vpack.c.b16 %v3114, %v3110
        %v3323 = vpack.c.b16 %v3115, %v3111
        %v3324 = vpack.c.b16 %v3120, %v3116
        %v3325 = vpack.c.b16 %v3121, %v3117
        %v3326 = vpack.c.b16 %v3122, %v3118
        %v3327 = vpack.c.b16 %v3123, %v3119
        %v3328 = vpack.c.b16 %v3128, %v3124
        %v3329 = vpack.c.b16 %v3129, %v3125
        %v3330 = vpack.c.b16 %v3130, %v3126
        %v3331 = vpack.c.b16 %v3131, %v3127
        %v3332 = vpack.c.b16 %v3136, %v3132
        %v3333 = vpack.c.b16 %v3137, %v3133
        %v3334 = vpack.c.b16 %v3138, %v3134
        %v3335 = vpack.c.b16 %v3139, %v3135
        %v3336 = vpack.c.b16 %v3144, %v3140
        %v3337 = vpack.c.b16 %v3145, %v3141
        %v3338 = vpack.c.b16 %v3146, %v3142
        %v3339 = vpack.c.b16 %v3147, %v3143
        %v3340 = vpack.c.b16 %v3152, %v3148
        %v3341 = vpack.c.b16 %v3153, %v3149
        %v3342 = vpack.c.b16 %v3154, %v3150
        %v3343 = vpack.c.b16 %v3155, %v3151
        %v3344 = vpack.c.b16 %v3160, %v3156
        %v3345 = vpack.c.b16 %v3161, %v3157
        %v3346 = vpack.c.b16 %v3162, %v3158
        %v3347 = vpack.c.b16 %v3163, %v3159
        %v3348 = vpack.c.b16 %v3168, %v3164
        %v3349 = vpack.c.b16 %v3169, %v3165
        %v3350 = vpack.c.b16 %v3170, %v3166
        %v3351 = vpack.c.b16 %v3171, %v3167
        %v3352 = vpack.c.b16 %v3176, %v3172
        %v3353 = vpack.c.b16 %v3177, %v3173
        %v3354 = vpack.c.b16 %v3178, %v3174
        %v3355 = vpack.c.b16 %v3179, %v3175
        %v3356 = vpack.c.b16 %v3184, %v3180
        %v3357 = vpack.c.b16 %v3185, %v3181
        %v3358 = vpack.c.b16 %v3186, %v3182
        %v3359 = vpack.c.b16 %v3187, %v3183
        %v3360 = vpack.c.b16 %v3192, %v3188
        %v3361 = vpack.c.b16 %v3193, %v3189
        %v3362 = vpack.c.b16 %v3194, %v3190
        %v3363 = vpack.c.b16 %v3195, %v3191
        %v3364 = vpack.c.b16 %v3200, %v3196
        %v3365 = vpack.c.b16 %v3201, %v3197
        %v3366 = vpack.c.b16 %v3202, %v3198
        %v3367 = vpack.c.b16 %v3203, %v3199
        %v3368 = vpack.c.b16 %v3208, %v3204
        %v3369 = vpack.c.b16 %v3209, %v3205
        %v3370 = vpack.c.b16 %v3210, %v3206
        %v3371 = vpack.c.b16 %v3211, %v3207
        %v3372 = vpack.c.b16 %v3216, %v3212
        %v3373 = vpack.c.b16 %v3217, %v3213
        %v3374 = vpack.c.b16 %v3218, %v3214
        %v3375 = vpack.c.b16 %v3219, %v3215
        %v3376 = vpack.c.b16 %v3224, %v3220
        %v3377 = vpack.c.b16 %v3225, %v3221
        %v3378 = vpack.c.b16 %v3226, %v3222
        %v3379 = vpack.c.b16 %v3227, %v3223
        %v3380 = vpack.c.b16 %v3232, %v3228
        %v3381 = vpack.c.b16 %v3233, %v3229
        %v3382 = vpack.c.b16 %v3234, %v3230
        %v3383 = vpack.c.b16 %v3235, %v3231
        %v3384 = vpack.c.b16 %v3240, %v3236
        %v3385 = vpack.c.b16 %v3241, %v3237
        %v3386 = vpack.c.b16 %v3242, %v3238
        %v3387 = vpack.c.b16 %v3243, %v3239
        %v3388 = vpack.c.b16 %v3248, %v3244
        %v3389 = vpack.c.b16 %v3249, %v3245
        %v3390 = vpack.c.b16 %v3250, %v3246
        %v3391 = vpack.c.b16 %v3251, %v3247
        %v3392 = vpack.c.b16 %v3256, %v3252
        %v3393 = vpack.c.b16 %v3257, %v3253
        %v3394 = vpack.c.b16 %v3258, %v3254
        %v3395 = vpack.c.b16 %v3259, %v3255
        %v3396 = vpack.c.b16 %v3264, %v3260
        %v3397 = vpack.c.b16 %v3265, %v3261
        %v3398 = vpack.c.b16 %v3266, %v3262
        %v3399 = vpack.c.b16 %v3267, %v3263
        %v3400 = vpack.c.b16 %v3272, %v3268
        %v3401 = vpack.c.b16 %v3273, %v3269
        %v3402 = vpack.c.b16 %v3274, %v3270
        %v3403 = vpack.c.b16 %v3275, %v3271
        %3532 = vmatpush.bf16.msra.mxu0 %v3304
        %3533 = vmatpush.bf16.msra.mxu0 %v3300
        %3534 = vmatpush.bf16.msra.mxu0 %v3296
        %3535 = vmatpush.bf16.msra.mxu0 %v3292
        %3536 = vmatpush.bf16.msra.mxu0 %v3288
        %3537 = vmatpush.bf16.msra.mxu0 %v3284
        %3538 = vmatpush.bf16.msra.mxu0 %v3280
        %3539 = vmatpush.bf16.msra.mxu0 %v3276
        %3540 = vmatmul.bf16.gmra.mxu0 %v1722
        %v3541 = vpop.f32.mrf.mxu0
        %v3542 = vadd.f32 %v2733, %v3541
        %v3543 = vpop.f32.mrf.mxu0
        %3544 = vdwg.mxu0
        %3545 = vmatpush.bf16.msra.mxu0 %v3336
        %3546 = vmatpush.bf16.msra.mxu0 %v3332
        %3547 = vmatpush.bf16.msra.mxu0 %v3328
        %3548 = vmatpush.bf16.msra.mxu0 %v3324
        %3549 = vmatpush.bf16.msra.mxu0 %v3320
        %3550 = vmatpush.bf16.msra.mxu0 %v3316
        %3551 = vmatpush.bf16.msra.mxu0 %v3312
        %3552 = vmatpush.bf16.msra.mxu0 %v3308
        %3553 = vmatmul.bf16.gmra.mxu0 %v1723
        %v3554 = vpop.f32.mrf.mxu0
        %v3555 = vadd.f32 %v3542, %v3554
        %v3556 = vpop.f32.mrf.mxu0
        %3557 = vdwg.mxu0
        %3558 = vmatpush.bf16.msra.mxu0 %v3368
        %3559 = vmatpush.bf16.msra.mxu0 %v3364
        %3560 = vmatpush.bf16.msra.mxu0 %v3360
        %3561 = vmatpush.bf16.msra.mxu0 %v3356
        %3562 = vmatpush.bf16.msra.mxu0 %v3352
        %3563 = vmatpush.bf16.msra.mxu0 %v3348
        %3564 = vmatpush.bf16.msra.mxu0 %v3344
        %3565 = vmatpush.bf16.msra.mxu0 %v3340
        %3566 = vmatmul.bf16.gmra.mxu0 %v1724
        %v3567 = vpop.f32.mrf.mxu0
        %v3568 = vadd.f32 %v3555, %v3567
        %v3569 = vpop.f32.mrf.mxu0
        %3570 = vdwg.mxu0
        %3571 = vmatpush.bf16.msra.mxu0 %v3400
        %3572 = vmatpush.bf16.msra.mxu0 %v3396
        %3573 = vmatpush.bf16.msra.mxu0 %v3392
        %3574 = vmatpush.bf16.msra.mxu0 %v3388
        %3575 = vmatpush.bf16.msra.mxu0 %v3384
        %3576 = vmatpush.bf16.msra.mxu0 %v3380
        %3577 = vmatpush.bf16.msra.mxu0 %v3376
        %3578 = vmatpush.bf16.msra.mxu0 %v3372
        %3579 = vmatmul.bf16.gmra.mxu0 %v1725
        %v3580 = vpop.f32.mrf.mxu0
        %v3581 = vadd.f32 %v3568, %v3580
        %v3582 = vpop.f32.mrf.mxu0
        %3583 = vdwg.mxu0
        %3584 = vmatpush.bf16.msra.mxu0 %v3305
        %3585 = vmatpush.bf16.msra.mxu0 %v3301
        %3586 = vmatpush.bf16.msra.mxu0 %v3297
        %3587 = vmatpush.bf16.msra.mxu0 %v3293
        %3588 = vmatpush.bf16.msra.mxu0 %v3289
        %3589 = vmatpush.bf16.msra.mxu0 %v3285
        %3590 = vmatpush.bf16.msra.mxu0 %v3281
        %3591 = vmatpush.bf16.msra.mxu0 %v3277
        %3592 = vmatmul.bf16.gmra.mxu0 %v1722
        %v3593 = vpop.f32.mrf.mxu0
        %v3594 = vadd.f32 %v2785, %v3593
        %v3595 = vpop.f32.mrf.mxu0
        %3596 = vdwg.mxu0
        %3597 = vmatpush.bf16.msra.mxu0 %v3337
        %3598 = vmatpush.bf16.msra.mxu0 %v3333
        %3599 = vmatpush.bf16.msra.mxu0 %v3329
        %3600 = vmatpush.bf16.msra.mxu0 %v3325
        %3601 = vmatpush.bf16.msra.mxu0 %v3321
        %3602 = vmatpush.bf16.msra.mxu0 %v3317
        %3603 = vmatpush.bf16.msra.mxu0 %v3313
        %3604 = vmatpush.bf16.msra.mxu0 %v3309
        %3605 = vmatmul.bf16.gmra.mxu0 %v1723
        %v3606 = vpop.f32.mrf.mxu0
        %v3607 = vadd.f32 %v3594, %v3606
        %v3608 = vpop.f32.mrf.mxu0
        %3609 = vdwg.mxu0
        %3610 = vmatpush.bf16.msra.mxu0 %v3369
        %3611 = vmatpush.bf16.msra.mxu0 %v3365
        %3612 = vmatpush.bf16.msra.mxu0 %v3361
        %3613 = vmatpush.bf16.msra.mxu0 %v3357
        %3614 = vmatpush.bf16.msra.mxu0 %v3353
        %3615 = vmatpush.bf16.msra.mxu0 %v3349
        %3616 = vmatpush.bf16.msra.mxu0 %v3345
        %3617 = vmatpush.bf16.msra.mxu0 %v3341
        %3618 = vmatmul.bf16.gmra.mxu0 %v1724
        %v3619 = vpop.f32.mrf.mxu0
        %v3620 = vadd.f32 %v3607, %v3619
        %v3621 = vpop.f32.mrf.mxu0
        %3622 = vdwg.mxu0
        %3623 = vmatpush.bf16.msra.mxu0 %v3401
        %3624 = vmatpush.bf16.msra.mxu0 %v3397
        %3625 = vmatpush.bf16.msra.mxu0 %v3393
        %3626 = vmatpush.bf16.msra.mxu0 %v3389
        %3627 = vmatpush.bf16.msra.mxu0 %v3385
        %3628 = vmatpush.bf16.msra.mxu0 %v3381
        %3629 = vmatpush.bf16.msra.mxu0 %v3377
        %3630 = vmatpush.bf16.msra.mxu0 %v3373
        %3631 = vmatmul.bf16.gmra.mxu0 %v1725
        %v3632 = vpop.f32.mrf.mxu0
        %v3633 = vadd.f32 %v3620, %v3632
        %v3634 = vpop.f32.mrf.mxu0
        %3635 = vdwg.mxu0
        %3636 = vmatpush.bf16.msra.mxu0 %v3306
        %3637 = vmatpush.bf16.msra.mxu0 %v3302
        %3638 = vmatpush.bf16.msra.mxu0 %v3298
        %3639 = vmatpush.bf16.msra.mxu0 %v3294
        %3640 = vmatpush.bf16.msra.mxu0 %v3290
        %3641 = vmatpush.bf16.msra.mxu0 %v3286
        %3642 = vmatpush.bf16.msra.mxu0 %v3282
        %3643 = vmatpush.bf16.msra.mxu0 %v3278
        %3644 = vmatmul.bf16.gmra.mxu0 %v1722
        %v3645 = vpop.f32.mrf.mxu0
        %v3646 = vadd.f32 %v2837, %v3645
        %v3647 = vpop.f32.mrf.mxu0
        %3648 = vdwg.mxu0
        %3649 = vmatpush.bf16.msra.mxu0 %v3338
        %3650 = vmatpush.bf16.msra.mxu0 %v3334
        %3651 = vmatpush.bf16.msra.mxu0 %v3330
        %3652 = vmatpush.bf16.msra.mxu0 %v3326
        %3653 = vmatpush.bf16.msra.mxu0 %v3322
        %3654 = vmatpush.bf16.msra.mxu0 %v3318
        %3655 = vmatpush.bf16.msra.mxu0 %v3314
        %3656 = vmatpush.bf16.msra.mxu0 %v3310
        %3657 = vmatmul.bf16.gmra.mxu0 %v1723
        %v3658 = vpop.f32.mrf.mxu0
        %v3659 = vadd.f32 %v3646, %v3658
        %v3660 = vpop.f32.mrf.mxu0
        %3661 = vdwg.mxu0
        %3662 = vmatpush.bf16.msra.mxu0 %v3370
        %3663 = vmatpush.bf16.msra.mxu0 %v3366
        %3664 = vmatpush.bf16.msra.mxu0 %v3362
        %3665 = vmatpush.bf16.msra.mxu0 %v3358
        %3666 = vmatpush.bf16.msra.mxu0 %v3354
        %3667 = vmatpush.bf16.msra.mxu0 %v3350
        %3668 = vmatpush.bf16.msra.mxu0 %v3346
        %3669 = vmatpush.bf16.msra.mxu0 %v3342
        %3670 = vmatmul.bf16.gmra.mxu0 %v1724
        %v3671 = vpop.f32.mrf.mxu0
        %v3672 = vadd.f32 %v3659, %v3671
        %v3673 = vpop.f32.mrf.mxu0
        %3674 = vdwg.mxu0
        %3675 = vmatpush.bf16.msra.mxu0 %v3402
        %3676 = vmatpush.bf16.msra.mxu0 %v3398
        %3677 = vmatpush.bf16.msra.mxu0 %v3394
        %3678 = vmatpush.bf16.msra.mxu0 %v3390
        %3679 = vmatpush.bf16.msra.mxu0 %v3386
        %3680 = vmatpush.bf16.msra.mxu0 %v3382
        %3681 = vmatpush.bf16.msra.mxu0 %v3378
        %3682 = vmatpush.bf16.msra.mxu0 %v3374
        %3683 = vmatmul.bf16.gmra.mxu0 %v1725
        %v3684 = vpop.f32.mrf.mxu0
        %v3685 = vadd.f32 %v3672, %v3684
        %v3686 = vpop.f32.mrf.mxu0
        %3687 = vdwg.mxu0
        %3688 = vmatpush.bf16.msra.mxu0 %v3307
        %3689 = vmatpush.bf16.msra.mxu0 %v3303
        %3690 = vmatpush.bf16.msra.mxu0 %v3299
        %3691 = vmatpush.bf16.msra.mxu0 %v3295
        %3692 = vmatpush.bf16.msra.mxu0 %v3291
        %3693 = vmatpush.bf16.msra.mxu0 %v3287
        %3694 = vmatpush.bf16.msra.mxu0 %v3283
        %3695 = vmatpush.bf16.msra.mxu0 %v3279
        %3696 = vmatmul.bf16.gmra.mxu0 %v1722
        %v3697 = vpop.f32.mrf.mxu0
        %v3698 = vadd.f32 %v2889, %v3697
        %v3699 = vpop.f32.mrf.mxu0
        %3700 = vdwg.mxu0
        %3701 = vmatpush.bf16.msra.mxu0 %v3339
        %3702 = vmatpush.bf16.msra.mxu0 %v3335
        %3703 = vmatpush.bf16.msra.mxu0 %v3331
        %3704 = vmatpush.bf16.msra.mxu0 %v3327
        %3705 = vmatpush.bf16.msra.mxu0 %v3323
        %3706 = vmatpush.bf16.msra.mxu0 %v3319
        %3707 = vmatpush.bf16.msra.mxu0 %v3315
        %3708 = vmatpush.bf16.msra.mxu0 %v3311
        %3709 = vmatmul.bf16.gmra.mxu0 %v1723
        %v3710 = vpop.f32.mrf.mxu0
        %v3711 = vadd.f32 %v3698, %v3710
        %v3712 = vpop.f32.mrf.mxu0
        %3713 = vdwg.mxu0
        %3714 = vmatpush.bf16.msra.mxu0 %v3371
        %3715 = vmatpush.bf16.msra.mxu0 %v3367
        %3716 = vmatpush.bf16.msra.mxu0 %v3363
        %3717 = vmatpush.bf16.msra.mxu0 %v3359
        %3718 = vmatpush.bf16.msra.mxu0 %v3355
        %3719 = vmatpush.bf16.msra.mxu0 %v3351
        %3720 = vmatpush.bf16.msra.mxu0 %v3347
        %3721 = vmatpush.bf16.msra.mxu0 %v3343
        %3722 = vmatmul.bf16.gmra.mxu0 %v1724
        %v3723 = vpop.f32.mrf.mxu0
        %v3724 = vadd.f32 %v3711, %v3723
        %v3725 = vpop.f32.mrf.mxu0
        %3726 = vdwg.mxu0
        %3727 = vmatpush.bf16.msra.mxu0 %v3403
        %3728 = vmatpush.bf16.msra.mxu0 %v3399
        %3729 = vmatpush.bf16.msra.mxu0 %v3395
        %3730 = vmatpush.bf16.msra.mxu0 %v3391
        %3731 = vmatpush.bf16.msra.mxu0 %v3387
        %3732 = vmatpush.bf16.msra.mxu0 %v3383
        %3733 = vmatpush.bf16.msra.mxu0 %v3379
        %3734 = vmatpush.bf16.msra.mxu0 %v3375
        %3735 = vmatmul.bf16.gmra.mxu0 %v1725
        %v3736 = vpop.f32.mrf.mxu0
        %v3737 = vadd.f32 %v3724, %v3736
        %v3738 = vpop.f32.mrf.mxu0
        %3739 = vdwg.mxu0
        %s3740 = scalar_lea.vmem [#allocation11], 8
        %v3741 = vld [vmem:[%s3740] sm:$0xf]
        %v3743 = vsel %vm1666, %v3741, 0
        %3745 = vmatpush.bf16.msra.mxu0 0
        %3746 = vmatpush.bf16.msra.mxu0 0
        %3747 = vmatpush.bf16.msra.mxu0 0
        %3748 = vmatpush.bf16.msra.mxu0 0
        %3749 = vmatpush.bf16.msra.mxu0 0
        %3750 = vmatpush.bf16.msra.mxu0 0
        %3751 = vmatpush.bf16.msra.mxu0 0
        %3752 = vmatpush.bf16.msra.mxu0 %v1661
        %3753 = vmatmul.bf16.gmra.mxu0 %v3743
        %v3754 = vpop.f32.mrf.mxu0
        %v3755 = vadd.f32 0.0, %v3754
        %v3756 = vpop.f32.mrf.mxu0
        %3757 = vdwg.mxu0
        %3758 = vmatpush.bf16.msra.mxu0 0
        %3759 = vmatpush.bf16.msra.mxu0 0
        %3760 = vmatpush.bf16.msra.mxu0 0
        %3761 = vmatpush.bf16.msra.mxu0 0
        %3762 = vmatpush.bf16.msra.mxu0 0
        %3763 = vmatpush.bf16.msra.mxu0 0
        %3764 = vmatpush.bf16.msra.mxu0 0
        %3765 = vmatpush.bf16.msra.mxu0 %v1662
        %3766 = vmatmul.bf16.gmra.mxu0 %v3743
        %v3767 = vpop.f32.mrf.mxu0
        %v3768 = vadd.f32 0.0, %v3767
        %v3769 = vpop.f32.mrf.mxu0
        %3770 = vdwg.mxu0
        %3771 = vmatpush.bf16.msra.mxu0 0
        %3772 = vmatpush.bf16.msra.mxu0 0
        %3773 = vmatpush.bf16.msra.mxu0 0
        %3774 = vmatpush.bf16.msra.mxu0 0
        %3775 = vmatpush.bf16.msra.mxu0 0
        %3776 = vmatpush.bf16.msra.mxu0 0
        %3777 = vmatpush.bf16.msra.mxu0 0
        %3778 = vmatpush.bf16.msra.mxu0 %v1663
        %3779 = vmatmul.bf16.gmra.mxu0 %v3743
        %v3780 = vpop.f32.mrf.mxu0
        %v3781 = vadd.f32 0.0, %v3780
        %v3782 = vpop.f32.mrf.mxu0
        %3783 = vdwg.mxu0
        %3784 = vmatpush.bf16.msra.mxu0 0
        %3785 = vmatpush.bf16.msra.mxu0 0
        %3786 = vmatpush.bf16.msra.mxu0 0
        %3787 = vmatpush.bf16.msra.mxu0 0
        %3788 = vmatpush.bf16.msra.mxu0 0
        %3789 = vmatpush.bf16.msra.mxu0 0
        %3790 = vmatpush.bf16.msra.mxu0 0
        %3791 = vmatpush.bf16.msra.mxu0 %v1664
        %3792 = vmatmul.bf16.gmra.mxu0 %v3743
        %v3793 = vpop.f32.mrf.mxu0
        %v3794 = vadd.f32 0.0, %v3793
        %v3795 = vpop.f32.mrf.mxu0
        %3796 = vdwg.mxu0
        %v3797 = vpack.c.bf16 %v3755, %v3755
        %v3798 = vpack.c.bf16 %v3768, %v3768
        %v3799 = vpack.c.bf16 %v3781, %v3781
        %v3800 = vpack.c.bf16 %v3794, %v3794
        %s3801 = scalar_lea.vmem [#allocation13], 2048
        %v3802 = vld [vmem:[%s3801] sm:$0xff]
        %v3803 = vld [vmem:[%s3801 + $0x8] sm:$0xff]
        %v3804 = vld [vmem:[%s3801 + $0x10] sm:$0xff]
        %v3805 = vld [vmem:[%s3801 + $0x18] sm:$0xff]
        %v3806 = vld [vmem:[%s3801 + $0x20] sm:$0xff]
        %v3807 = vld [vmem:[%s3801 + $0x28] sm:$0xff]
        %v3808 = vld [vmem:[%s3801 + $0x30] sm:$0xff]
        %v3809 = vld [vmem:[%s3801 + $0x38] sm:$0xff]
        %v3810 = vld [vmem:[%s3801 + $0x40] sm:$0xff]
        %v3811 = vld [vmem:[%s3801 + $0x48] sm:$0xff]
        %v3812 = vld [vmem:[%s3801 + $0x50] sm:$0xff]
        %v3813 = vld [vmem:[%s3801 + $0x58] sm:$0xff]
        %v3814 = vld [vmem:[%s3801 + $0x60] sm:$0xff]
        %v3815 = vld [vmem:[%s3801 + $0x68] sm:$0xff]
        %v3816 = vld [vmem:[%s3801 + $0x70] sm:$0xff]
        %v3817 = vld [vmem:[%s3801 + $0x78] sm:$0xff]
        %v3818 = vld [vmem:[%s3801 + $0x80] sm:$0xff]
        %v3819 = vld [vmem:[%s3801 + $0x88] sm:$0xff]
        %v3820 = vld [vmem:[%s3801 + $0x90] sm:$0xff]
        %v3821 = vld [vmem:[%s3801 + $0x98] sm:$0xff]
        %v3822 = vld [vmem:[%s3801 + $0xa0] sm:$0xff]
        %v3823 = vld [vmem:[%s3801 + $0xa8] sm:$0xff]
        %v3824 = vld [vmem:[%s3801 + $0xb0] sm:$0xff]
        %v3825 = vld [vmem:[%s3801 + $0xb8] sm:$0xff]
        %v3826 = vld [vmem:[%s3801 + $0xc0] sm:$0xff]
        %v3827 = vld [vmem:[%s3801 + $0xc8] sm:$0xff]
        %v3828 = vld [vmem:[%s3801 + $0xd0] sm:$0xff]
        %v3829 = vld [vmem:[%s3801 + $0xd8] sm:$0xff]
        %v3830 = vld [vmem:[%s3801 + $0xe0] sm:$0xff]
        %v3831 = vld [vmem:[%s3801 + $0xe8] sm:$0xff]
        %v3832 = vld [vmem:[%s3801 + $0xf0] sm:$0xff]
        %v3833 = vld [vmem:[%s3801 + $0xf8] sm:$0xff]
        %v3834 = vld [vmem:[%s3801 + $0x100] sm:$0xff]
        %v3835 = vld [vmem:[%s3801 + $0x108] sm:$0xff]
        %v3836 = vld [vmem:[%s3801 + $0x110] sm:$0xff]
        %v3837 = vld [vmem:[%s3801 + $0x118] sm:$0xff]
        %v3838 = vld [vmem:[%s3801 + $0x120] sm:$0xff]
        %v3839 = vld [vmem:[%s3801 + $0x128] sm:$0xff]
        %v3840 = vld [vmem:[%s3801 + $0x130] sm:$0xff]
        %v3841 = vld [vmem:[%s3801 + $0x138] sm:$0xff]
        %v3842 = vld [vmem:[%s3801 + $0x140] sm:$0xff]
        %v3843 = vld [vmem:[%s3801 + $0x148] sm:$0xff]
        %v3844 = vld [vmem:[%s3801 + $0x150] sm:$0xff]
        %v3845 = vld [vmem:[%s3801 + $0x158] sm:$0xff]
        %v3846 = vld [vmem:[%s3801 + $0x160] sm:$0xff]
        %v3847 = vld [vmem:[%s3801 + $0x168] sm:$0xff]
        %v3848 = vld [vmem:[%s3801 + $0x170] sm:$0xff]
        %v3849 = vld [vmem:[%s3801 + $0x178] sm:$0xff]
        %v3850 = vld [vmem:[%s3801 + $0x180] sm:$0xff]
        %v3851 = vld [vmem:[%s3801 + $0x188] sm:$0xff]
        %v3852 = vld [vmem:[%s3801 + $0x190] sm:$0xff]
        %v3853 = vld [vmem:[%s3801 + $0x198] sm:$0xff]
        %v3854 = vld [vmem:[%s3801 + $0x1a0] sm:$0xff]
        %v3855 = vld [vmem:[%s3801 + $0x1a8] sm:$0xff]
        %v3856 = vld [vmem:[%s3801 + $0x1b0] sm:$0xff]
        %v3857 = vld [vmem:[%s3801 + $0x1b8] sm:$0xff]
        %v3858 = vld [vmem:[%s3801 + $0x1c0] sm:$0xff]
        %v3859 = vld [vmem:[%s3801 + $0x1c8] sm:$0xff]
        %v3860 = vld [vmem:[%s3801 + $0x1d0] sm:$0xff]
        %v3861 = vld [vmem:[%s3801 + $0x1d8] sm:$0xff]
        %v3862 = vld [vmem:[%s3801 + $0x1e0] sm:$0xff]
        %v3863 = vld [vmem:[%s3801 + $0x1e8] sm:$0xff]
        %v3864 = vld [vmem:[%s3801 + $0x1f0] sm:$0xff]
        %v3865 = vld [vmem:[%s3801 + $0x1f8] sm:$0xff]
        %v3866 = vld [vmem:[%s3801 + $0x200] sm:$0xff]
        %v3867 = vld [vmem:[%s3801 + $0x208] sm:$0xff]
        %v3868 = vld [vmem:[%s3801 + $0x210] sm:$0xff]
        %v3869 = vld [vmem:[%s3801 + $0x218] sm:$0xff]
        %v3870 = vld [vmem:[%s3801 + $0x220] sm:$0xff]
        %v3871 = vld [vmem:[%s3801 + $0x228] sm:$0xff]
        %v3872 = vld [vmem:[%s3801 + $0x230] sm:$0xff]
        %v3873 = vld [vmem:[%s3801 + $0x238] sm:$0xff]
        %v3874 = vld [vmem:[%s3801 + $0x240] sm:$0xff]
        %v3875 = vld [vmem:[%s3801 + $0x248] sm:$0xff]
        %v3876 = vld [vmem:[%s3801 + $0x250] sm:$0xff]
        %v3877 = vld [vmem:[%s3801 + $0x258] sm:$0xff]
        %v3878 = vld [vmem:[%s3801 + $0x260] sm:$0xff]
        %v3879 = vld [vmem:[%s3801 + $0x268] sm:$0xff]
        %v3880 = vld [vmem:[%s3801 + $0x270] sm:$0xff]
        %v3881 = vld [vmem:[%s3801 + $0x278] sm:$0xff]
        %v3882 = vld [vmem:[%s3801 + $0x280] sm:$0xff]
        %v3883 = vld [vmem:[%s3801 + $0x288] sm:$0xff]
        %v3884 = vld [vmem:[%s3801 + $0x290] sm:$0xff]
        %v3885 = vld [vmem:[%s3801 + $0x298] sm:$0xff]
        %v3886 = vld [vmem:[%s3801 + $0x2a0] sm:$0xff]
        %v3887 = vld [vmem:[%s3801 + $0x2a8] sm:$0xff]
        %v3888 = vld [vmem:[%s3801 + $0x2b0] sm:$0xff]
        %v3889 = vld [vmem:[%s3801 + $0x2b8] sm:$0xff]
        %v3890 = vld [vmem:[%s3801 + $0x2c0] sm:$0xff]
        %v3891 = vld [vmem:[%s3801 + $0x2c8] sm:$0xff]
        %v3892 = vld [vmem:[%s3801 + $0x2d0] sm:$0xff]
        %v3893 = vld [vmem:[%s3801 + $0x2d8] sm:$0xff]
        %v3894 = vld [vmem:[%s3801 + $0x2e0] sm:$0xff]
        %v3895 = vld [vmem:[%s3801 + $0x2e8] sm:$0xff]
        %v3896 = vld [vmem:[%s3801 + $0x2f0] sm:$0xff]
        %v3897 = vld [vmem:[%s3801 + $0x2f8] sm:$0xff]
        %v3898 = vld [vmem:[%s3801 + $0x300] sm:$0xff]
        %v3899 = vld [vmem:[%s3801 + $0x308] sm:$0xff]
        %v3900 = vld [vmem:[%s3801 + $0x310] sm:$0xff]
        %v3901 = vld [vmem:[%s3801 + $0x318] sm:$0xff]
        %v3902 = vld [vmem:[%s3801 + $0x320] sm:$0xff]
        %v3903 = vld [vmem:[%s3801 + $0x328] sm:$0xff]
        %v3904 = vld [vmem:[%s3801 + $0x330] sm:$0xff]
        %v3905 = vld [vmem:[%s3801 + $0x338] sm:$0xff]
        %v3906 = vld [vmem:[%s3801 + $0x340] sm:$0xff]
        %v3907 = vld [vmem:[%s3801 + $0x348] sm:$0xff]
        %v3908 = vld [vmem:[%s3801 + $0x350] sm:$0xff]
        %v3909 = vld [vmem:[%s3801 + $0x358] sm:$0xff]
        %v3910 = vld [vmem:[%s3801 + $0x360] sm:$0xff]
        %v3911 = vld [vmem:[%s3801 + $0x368] sm:$0xff]
        %v3912 = vld [vmem:[%s3801 + $0x370] sm:$0xff]
        %v3913 = vld [vmem:[%s3801 + $0x378] sm:$0xff]
        %v3914 = vld [vmem:[%s3801 + $0x380] sm:$0xff]
        %v3915 = vld [vmem:[%s3801 + $0x388] sm:$0xff]
        %v3916 = vld [vmem:[%s3801 + $0x390] sm:$0xff]
        %v3917 = vld [vmem:[%s3801 + $0x398] sm:$0xff]
        %v3918 = vld [vmem:[%s3801 + $0x3a0] sm:$0xff]
        %v3919 = vld [vmem:[%s3801 + $0x3a8] sm:$0xff]
        %v3920 = vld [vmem:[%s3801 + $0x3b0] sm:$0xff]
        %v3921 = vld [vmem:[%s3801 + $0x3b8] sm:$0xff]
        %v3922 = vld [vmem:[%s3801 + $0x3c0] sm:$0xff]
        %v3923 = vld [vmem:[%s3801 + $0x3c8] sm:$0xff]
        %v3924 = vld [vmem:[%s3801 + $0x3d0] sm:$0xff]
        %v3925 = vld [vmem:[%s3801 + $0x3d8] sm:$0xff]
        %v3926 = vld [vmem:[%s3801 + $0x3e0] sm:$0xff]
        %v3927 = vld [vmem:[%s3801 + $0x3e8] sm:$0xff]
        %v3928 = vld [vmem:[%s3801 + $0x3f0] sm:$0xff]
        %v3929 = vld [vmem:[%s3801 + $0x3f8] sm:$0xff]
        %v4058 = vunpack.c.l.b16 %v3802
        %v4059 = vunpack.c.h.b16 %v3802
        %v4060 = vunpack.c.l.b16 %v3803
        %v4061 = vunpack.c.h.b16 %v3803
        %v4062 = vunpack.c.l.b16 %v3804
        %v4063 = vunpack.c.h.b16 %v3804
        %v4064 = vunpack.c.l.b16 %v3805
        %v4065 = vunpack.c.h.b16 %v3805
        %v4066 = vunpack.c.l.b16 %v3806
        %v4067 = vunpack.c.h.b16 %v3806
        %v4068 = vunpack.c.l.b16 %v3807
        %v4069 = vunpack.c.h.b16 %v3807
        %v4070 = vunpack.c.l.b16 %v3808
        %v4071 = vunpack.c.h.b16 %v3808
        %v4072 = vunpack.c.l.b16 %v3809
        %v4073 = vunpack.c.h.b16 %v3809
        %v4074 = vunpack.c.l.b16 %v3810
        %v4075 = vunpack.c.h.b16 %v3810
        %v4076 = vunpack.c.l.b16 %v3811
        %v4077 = vunpack.c.h.b16 %v3811
        %v4078 = vunpack.c.l.b16 %v3812
        %v4079 = vunpack.c.h.b16 %v3812
        %v4080 = vunpack.c.l.b16 %v3813
        %v4081 = vunpack.c.h.b16 %v3813
        %v4082 = vunpack.c.l.b16 %v3814
        %v4083 = vunpack.c.h.b16 %v3814
        %v4084 = vunpack.c.l.b16 %v3815
        %v4085 = vunpack.c.h.b16 %v3815
        %v4086 = vunpack.c.l.b16 %v3816
        %v4087 = vunpack.c.h.b16 %v3816
        %v4088 = vunpack.c.l.b16 %v3817
        %v4089 = vunpack.c.h.b16 %v3817
        %v4090 = vunpack.c.l.b16 %v3818
        %v4091 = vunpack.c.h.b16 %v3818
        %v4092 = vunpack.c.l.b16 %v3819
        %v4093 = vunpack.c.h.b16 %v3819
        %v4094 = vunpack.c.l.b16 %v3820
        %v4095 = vunpack.c.h.b16 %v3820
        %v4096 = vunpack.c.l.b16 %v3821
        %v4097 = vunpack.c.h.b16 %v3821
        %v4098 = vunpack.c.l.b16 %v3822
        %v4099 = vunpack.c.h.b16 %v3822
        %v4100 = vunpack.c.l.b16 %v3823
        %v4101 = vunpack.c.h.b16 %v3823
        %v4102 = vunpack.c.l.b16 %v3824
        %v4103 = vunpack.c.h.b16 %v3824
        %v4104 = vunpack.c.l.b16 %v3825
        %v4105 = vunpack.c.h.b16 %v3825
        %v4106 = vunpack.c.l.b16 %v3826
        %v4107 = vunpack.c.h.b16 %v3826
        %v4108 = vunpack.c.l.b16 %v3827
        %v4109 = vunpack.c.h.b16 %v3827
        %v4110 = vunpack.c.l.b16 %v3828
        %v4111 = vunpack.c.h.b16 %v3828
        %v4112 = vunpack.c.l.b16 %v3829
        %v4113 = vunpack.c.h.b16 %v3829
        %v4114 = vunpack.c.l.b16 %v3830
        %v4115 = vunpack.c.h.b16 %v3830
        %v4116 = vunpack.c.l.b16 %v3831
        %v4117 = vunpack.c.h.b16 %v3831
        %v4118 = vunpack.c.l.b16 %v3832
        %v4119 = vunpack.c.h.b16 %v3832
        %v4120 = vunpack.c.l.b16 %v3833
        %v4121 = vunpack.c.h.b16 %v3833
        %v4122 = vunpack.c.l.b16 %v3834
        %v4123 = vunpack.c.h.b16 %v3834
        %v4124 = vunpack.c.l.b16 %v3835
        %v4125 = vunpack.c.h.b16 %v3835
        %v4126 = vunpack.c.l.b16 %v3836
        %v4127 = vunpack.c.h.b16 %v3836
        %v4128 = vunpack.c.l.b16 %v3837
        %v4129 = vunpack.c.h.b16 %v3837
        %v4130 = vunpack.c.l.b16 %v3838
        %v4131 = vunpack.c.h.b16 %v3838
        %v4132 = vunpack.c.l.b16 %v3839
        %v4133 = vunpack.c.h.b16 %v3839
        %v4134 = vunpack.c.l.b16 %v3840
        %v4135 = vunpack.c.h.b16 %v3840
        %v4136 = vunpack.c.l.b16 %v3841
        %v4137 = vunpack.c.h.b16 %v3841
        %v4138 = vunpack.c.l.b16 %v3842
        %v4139 = vunpack.c.h.b16 %v3842
        %v4140 = vunpack.c.l.b16 %v3843
        %v4141 = vunpack.c.h.b16 %v3843
        %v4142 = vunpack.c.l.b16 %v3844
        %v4143 = vunpack.c.h.b16 %v3844
        %v4144 = vunpack.c.l.b16 %v3845
        %v4145 = vunpack.c.h.b16 %v3845
        %v4146 = vunpack.c.l.b16 %v3846
        %v4147 = vunpack.c.h.b16 %v3846
        %v4148 = vunpack.c.l.b16 %v3847
        %v4149 = vunpack.c.h.b16 %v3847
        %v4150 = vunpack.c.l.b16 %v3848
        %v4151 = vunpack.c.h.b16 %v3848
        %v4152 = vunpack.c.l.b16 %v3849
        %v4153 = vunpack.c.h.b16 %v3849
        %v4154 = vunpack.c.l.b16 %v3850
        %v4155 = vunpack.c.h.b16 %v3850
        %v4156 = vunpack.c.l.b16 %v3851
        %v4157 = vunpack.c.h.b16 %v3851
        %v4158 = vunpack.c.l.b16 %v3852
        %v4159 = vunpack.c.h.b16 %v3852
        %v4160 = vunpack.c.l.b16 %v3853
        %v4161 = vunpack.c.h.b16 %v3853
        %v4162 = vunpack.c.l.b16 %v3854
        %v4163 = vunpack.c.h.b16 %v3854
        %v4164 = vunpack.c.l.b16 %v3855
        %v4165 = vunpack.c.h.b16 %v3855
        %v4166 = vunpack.c.l.b16 %v3856
        %v4167 = vunpack.c.h.b16 %v3856
        %v4168 = vunpack.c.l.b16 %v3857
        %v4169 = vunpack.c.h.b16 %v3857
        %v4170 = vunpack.c.l.b16 %v3858
        %v4171 = vunpack.c.h.b16 %v3858
        %v4172 = vunpack.c.l.b16 %v3859
        %v4173 = vunpack.c.h.b16 %v3859
        %v4174 = vunpack.c.l.b16 %v3860
        %v4175 = vunpack.c.h.b16 %v3860
        %v4176 = vunpack.c.l.b16 %v3861
        %v4177 = vunpack.c.h.b16 %v3861
        %v4178 = vunpack.c.l.b16 %v3862
        %v4179 = vunpack.c.h.b16 %v3862
        %v4180 = vunpack.c.l.b16 %v3863
        %v4181 = vunpack.c.h.b16 %v3863
        %v4182 = vunpack.c.l.b16 %v3864
        %v4183 = vunpack.c.h.b16 %v3864
        %v4184 = vunpack.c.l.b16 %v3865
        %v4185 = vunpack.c.h.b16 %v3865
        %v4186 = vunpack.c.l.b16 %v3866
        %v4187 = vunpack.c.h.b16 %v3866
        %v4188 = vunpack.c.l.b16 %v3867
        %v4189 = vunpack.c.h.b16 %v3867
        %v4190 = vunpack.c.l.b16 %v3868
        %v4191 = vunpack.c.h.b16 %v3868
        %v4192 = vunpack.c.l.b16 %v3869
        %v4193 = vunpack.c.h.b16 %v3869
        %v4194 = vunpack.c.l.b16 %v3870
        %v4195 = vunpack.c.h.b16 %v3870
        %v4196 = vunpack.c.l.b16 %v3871
        %v4197 = vunpack.c.h.b16 %v3871
        %v4198 = vunpack.c.l.b16 %v3872
        %v4199 = vunpack.c.h.b16 %v3872
        %v4200 = vunpack.c.l.b16 %v3873
        %v4201 = vunpack.c.h.b16 %v3873
        %v4202 = vunpack.c.l.b16 %v3874
        %v4203 = vunpack.c.h.b16 %v3874
        %v4204 = vunpack.c.l.b16 %v3875
        %v4205 = vunpack.c.h.b16 %v3875
        %v4206 = vunpack.c.l.b16 %v3876
        %v4207 = vunpack.c.h.b16 %v3876
        %v4208 = vunpack.c.l.b16 %v3877
        %v4209 = vunpack.c.h.b16 %v3877
        %v4210 = vunpack.c.l.b16 %v3878
        %v4211 = vunpack.c.h.b16 %v3878
        %v4212 = vunpack.c.l.b16 %v3879
        %v4213 = vunpack.c.h.b16 %v3879
        %v4214 = vunpack.c.l.b16 %v3880
        %v4215 = vunpack.c.h.b16 %v3880
        %v4216 = vunpack.c.l.b16 %v3881
        %v4217 = vunpack.c.h.b16 %v3881
        %v4218 = vunpack.c.l.b16 %v3882
        %v4219 = vunpack.c.h.b16 %v3882
        %v4220 = vunpack.c.l.b16 %v3883
        %v4221 = vunpack.c.h.b16 %v3883
        %v4222 = vunpack.c.l.b16 %v3884
        %v4223 = vunpack.c.h.b16 %v3884
        %v4224 = vunpack.c.l.b16 %v3885
        %v4225 = vunpack.c.h.b16 %v3885
        %v4226 = vunpack.c.l.b16 %v3886
        %v4227 = vunpack.c.h.b16 %v3886
        %v4228 = vunpack.c.l.b16 %v3887
        %v4229 = vunpack.c.h.b16 %v3887
        %v4230 = vunpack.c.l.b16 %v3888
        %v4231 = vunpack.c.h.b16 %v3888
        %v4232 = vunpack.c.l.b16 %v3889
        %v4233 = vunpack.c.h.b16 %v3889
        %v4234 = vunpack.c.l.b16 %v3890
        %v4235 = vunpack.c.h.b16 %v3890
        %v4236 = vunpack.c.l.b16 %v3891
        %v4237 = vunpack.c.h.b16 %v3891
        %v4238 = vunpack.c.l.b16 %v3892
        %v4239 = vunpack.c.h.b16 %v3892
        %v4240 = vunpack.c.l.b16 %v3893
        %v4241 = vunpack.c.h.b16 %v3893
        %v4242 = vunpack.c.l.b16 %v3894
        %v4243 = vunpack.c.h.b16 %v3894
        %v4244 = vunpack.c.l.b16 %v3895
        %v4245 = vunpack.c.h.b16 %v3895
        %v4246 = vunpack.c.l.b16 %v3896
        %v4247 = vunpack.c.h.b16 %v3896
        %v4248 = vunpack.c.l.b16 %v3897
        %v4249 = vunpack.c.h.b16 %v3897
        %v4250 = vunpack.c.l.b16 %v3898
        %v4251 = vunpack.c.h.b16 %v3898
        %v4252 = vunpack.c.l.b16 %v3899
        %v4253 = vunpack.c.h.b16 %v3899
        %v4254 = vunpack.c.l.b16 %v3900
        %v4255 = vunpack.c.h.b16 %v3900
        %v4256 = vunpack.c.l.b16 %v3901
        %v4257 = vunpack.c.h.b16 %v3901
        %v4258 = vunpack.c.l.b16 %v3902
        %v4259 = vunpack.c.h.b16 %v3902
        %v4260 = vunpack.c.l.b16 %v3903
        %v4261 = vunpack.c.h.b16 %v3903
        %v4262 = vunpack.c.l.b16 %v3904
        %v4263 = vunpack.c.h.b16 %v3904
        %v4264 = vunpack.c.l.b16 %v3905
        %v4265 = vunpack.c.h.b16 %v3905
        %v4266 = vunpack.c.l.b16 %v3906
        %v4267 = vunpack.c.h.b16 %v3906
        %v4268 = vunpack.c.l.b16 %v3907
        %v4269 = vunpack.c.h.b16 %v3907
        %v4270 = vunpack.c.l.b16 %v3908
        %v4271 = vunpack.c.h.b16 %v3908
        %v4272 = vunpack.c.l.b16 %v3909
        %v4273 = vunpack.c.h.b16 %v3909
        %v4274 = vunpack.c.l.b16 %v3910
        %v4275 = vunpack.c.h.b16 %v3910
        %v4276 = vunpack.c.l.b16 %v3911
        %v4277 = vunpack.c.h.b16 %v3911
        %v4278 = vunpack.c.l.b16 %v3912
        %v4279 = vunpack.c.h.b16 %v3912
        %v4280 = vunpack.c.l.b16 %v3913
        %v4281 = vunpack.c.h.b16 %v3913
        %v4282 = vunpack.c.l.b16 %v3914
        %v4283 = vunpack.c.h.b16 %v3914
        %v4284 = vunpack.c.l.b16 %v3915
        %v4285 = vunpack.c.h.b16 %v3915
        %v4286 = vunpack.c.l.b16 %v3916
        %v4287 = vunpack.c.h.b16 %v3916
        %v4288 = vunpack.c.l.b16 %v3917
        %v4289 = vunpack.c.h.b16 %v3917
        %v4290 = vunpack.c.l.b16 %v3918
        %v4291 = vunpack.c.h.b16 %v3918
        %v4292 = vunpack.c.l.b16 %v3919
        %v4293 = vunpack.c.h.b16 %v3919
        %v4294 = vunpack.c.l.b16 %v3920
        %v4295 = vunpack.c.h.b16 %v3920
        %v4296 = vunpack.c.l.b16 %v3921
        %v4297 = vunpack.c.h.b16 %v3921
        %v4298 = vunpack.c.l.b16 %v3922
        %v4299 = vunpack.c.h.b16 %v3922
        %v4300 = vunpack.c.l.b16 %v3923
        %v4301 = vunpack.c.h.b16 %v3923
        %v4302 = vunpack.c.l.b16 %v3924
        %v4303 = vunpack.c.h.b16 %v3924
        %v4304 = vunpack.c.l.b16 %v3925
        %v4305 = vunpack.c.h.b16 %v3925
        %v4306 = vunpack.c.l.b16 %v3926
        %v4307 = vunpack.c.h.b16 %v3926
        %v4308 = vunpack.c.l.b16 %v3927
        %v4309 = vunpack.c.h.b16 %v3927
        %v4310 = vunpack.c.l.b16 %v3928
        %v4311 = vunpack.c.h.b16 %v3928
        %v4312 = vunpack.c.l.b16 %v3929
        %v4313 = vunpack.c.h.b16 %v3929
        %v4314 = vpack.c.b16 %v4062, %v4058
        %v4315 = vpack.c.b16 %v4063, %v4059
        %v4316 = vpack.c.b16 %v4064, %v4060
        %v4317 = vpack.c.b16 %v4065, %v4061
        %v4318 = vpack.c.b16 %v4070, %v4066
        %v4319 = vpack.c.b16 %v4071, %v4067
        %v4320 = vpack.c.b16 %v4072, %v4068
        %v4321 = vpack.c.b16 %v4073, %v4069
        %v4322 = vpack.c.b16 %v4078, %v4074
        %v4323 = vpack.c.b16 %v4079, %v4075
        %v4324 = vpack.c.b16 %v4080, %v4076
        %v4325 = vpack.c.b16 %v4081, %v4077
        %v4326 = vpack.c.b16 %v4086, %v4082
        %v4327 = vpack.c.b16 %v4087, %v4083
        %v4328 = vpack.c.b16 %v4088, %v4084
        %v4329 = vpack.c.b16 %v4089, %v4085
        %v4330 = vpack.c.b16 %v4094, %v4090
        %v4331 = vpack.c.b16 %v4095, %v4091
        %v4332 = vpack.c.b16 %v4096, %v4092
        %v4333 = vpack.c.b16 %v4097, %v4093
        %v4334 = vpack.c.b16 %v4102, %v4098
        %v4335 = vpack.c.b16 %v4103, %v4099
        %v4336 = vpack.c.b16 %v4104, %v4100
        %v4337 = vpack.c.b16 %v4105, %v4101
        %v4338 = vpack.c.b16 %v4110, %v4106
        %v4339 = vpack.c.b16 %v4111, %v4107
        %v4340 = vpack.c.b16 %v4112, %v4108
        %v4341 = vpack.c.b16 %v4113, %v4109
        %v4342 = vpack.c.b16 %v4118, %v4114
        %v4343 = vpack.c.b16 %v4119, %v4115
        %v4344 = vpack.c.b16 %v4120, %v4116
        %v4345 = vpack.c.b16 %v4121, %v4117
        %v4346 = vpack.c.b16 %v4126, %v4122
        %v4347 = vpack.c.b16 %v4127, %v4123
        %v4348 = vpack.c.b16 %v4128, %v4124
        %v4349 = vpack.c.b16 %v4129, %v4125
        %v4350 = vpack.c.b16 %v4134, %v4130
        %v4351 = vpack.c.b16 %v4135, %v4131
        %v4352 = vpack.c.b16 %v4136, %v4132
        %v4353 = vpack.c.b16 %v4137, %v4133
        %v4354 = vpack.c.b16 %v4142, %v4138
        %v4355 = vpack.c.b16 %v4143, %v4139
        %v4356 = vpack.c.b16 %v4144, %v4140
        %v4357 = vpack.c.b16 %v4145, %v4141
        %v4358 = vpack.c.b16 %v4150, %v4146
        %v4359 = vpack.c.b16 %v4151, %v4147
        %v4360 = vpack.c.b16 %v4152, %v4148
        %v4361 = vpack.c.b16 %v4153, %v4149
        %v4362 = vpack.c.b16 %v4158, %v4154
        %v4363 = vpack.c.b16 %v4159, %v4155
        %v4364 = vpack.c.b16 %v4160, %v4156
        %v4365 = vpack.c.b16 %v4161, %v4157
        %v4366 = vpack.c.b16 %v4166, %v4162
        %v4367 = vpack.c.b16 %v4167, %v4163
        %v4368 = vpack.c.b16 %v4168, %v4164
        %v4369 = vpack.c.b16 %v4169, %v4165
        %v4370 = vpack.c.b16 %v4174, %v4170
        %v4371 = vpack.c.b16 %v4175, %v4171
        %v4372 = vpack.c.b16 %v4176, %v4172
        %v4373 = vpack.c.b16 %v4177, %v4173
        %v4374 = vpack.c.b16 %v4182, %v4178
        %v4375 = vpack.c.b16 %v4183, %v4179
        %v4376 = vpack.c.b16 %v4184, %v4180
        %v4377 = vpack.c.b16 %v4185, %v4181
        %v4378 = vpack.c.b16 %v4190, %v4186
        %v4379 = vpack.c.b16 %v4191, %v4187
        %v4380 = vpack.c.b16 %v4192, %v4188
        %v4381 = vpack.c.b16 %v4193, %v4189
        %v4382 = vpack.c.b16 %v4198, %v4194
        %v4383 = vpack.c.b16 %v4199, %v4195
        %v4384 = vpack.c.b16 %v4200, %v4196
        %v4385 = vpack.c.b16 %v4201, %v4197
        %v4386 = vpack.c.b16 %v4206, %v4202
        %v4387 = vpack.c.b16 %v4207, %v4203
        %v4388 = vpack.c.b16 %v4208, %v4204
        %v4389 = vpack.c.b16 %v4209, %v4205
        %v4390 = vpack.c.b16 %v4214, %v4210
        %v4391 = vpack.c.b16 %v4215, %v4211
        %v4392 = vpack.c.b16 %v4216, %v4212
        %v4393 = vpack.c.b16 %v4217, %v4213
        %v4394 = vpack.c.b16 %v4222, %v4218
        %v4395 = vpack.c.b16 %v4223, %v4219
        %v4396 = vpack.c.b16 %v4224, %v4220
        %v4397 = vpack.c.b16 %v4225, %v4221
        %v4398 = vpack.c.b16 %v4230, %v4226
        %v4399 = vpack.c.b16 %v4231, %v4227
        %v4400 = vpack.c.b16 %v4232, %v4228
        %v4401 = vpack.c.b16 %v4233, %v4229
        %v4402 = vpack.c.b16 %v4238, %v4234
        %v4403 = vpack.c.b16 %v4239, %v4235
        %v4404 = vpack.c.b16 %v4240, %v4236
        %v4405 = vpack.c.b16 %v4241, %v4237
        %v4406 = vpack.c.b16 %v4246, %v4242
        %v4407 = vpack.c.b16 %v4247, %v4243
        %v4408 = vpack.c.b16 %v4248, %v4244
        %v4409 = vpack.c.b16 %v4249, %v4245
        %v4410 = vpack.c.b16 %v4254, %v4250
        %v4411 = vpack.c.b16 %v4255, %v4251
        %v4412 = vpack.c.b16 %v4256, %v4252
        %v4413 = vpack.c.b16 %v4257, %v4253
        %v4414 = vpack.c.b16 %v4262, %v4258
        %v4415 = vpack.c.b16 %v4263, %v4259
        %v4416 = vpack.c.b16 %v4264, %v4260
        %v4417 = vpack.c.b16 %v4265, %v4261
        %v4418 = vpack.c.b16 %v4270, %v4266
        %v4419 = vpack.c.b16 %v4271, %v4267
        %v4420 = vpack.c.b16 %v4272, %v4268
        %v4421 = vpack.c.b16 %v4273, %v4269
        %v4422 = vpack.c.b16 %v4278, %v4274
        %v4423 = vpack.c.b16 %v4279, %v4275
        %v4424 = vpack.c.b16 %v4280, %v4276
        %v4425 = vpack.c.b16 %v4281, %v4277
        %v4426 = vpack.c.b16 %v4286, %v4282
        %v4427 = vpack.c.b16 %v4287, %v4283
        %v4428 = vpack.c.b16 %v4288, %v4284
        %v4429 = vpack.c.b16 %v4289, %v4285
        %v4430 = vpack.c.b16 %v4294, %v4290
        %v4431 = vpack.c.b16 %v4295, %v4291
        %v4432 = vpack.c.b16 %v4296, %v4292
        %v4433 = vpack.c.b16 %v4297, %v4293
        %v4434 = vpack.c.b16 %v4302, %v4298
        %v4435 = vpack.c.b16 %v4303, %v4299
        %v4436 = vpack.c.b16 %v4304, %v4300
        %v4437 = vpack.c.b16 %v4305, %v4301
        %v4438 = vpack.c.b16 %v4310, %v4306
        %v4439 = vpack.c.b16 %v4311, %v4307
        %v4440 = vpack.c.b16 %v4312, %v4308
        %v4441 = vpack.c.b16 %v4313, %v4309
        %4570 = vmatpush.bf16.msra.mxu0 %v4342
        %4571 = vmatpush.bf16.msra.mxu0 %v4338
        %4572 = vmatpush.bf16.msra.mxu0 %v4334
        %4573 = vmatpush.bf16.msra.mxu0 %v4330
        %4574 = vmatpush.bf16.msra.mxu0 %v4326
        %4575 = vmatpush.bf16.msra.mxu0 %v4322
        %4576 = vmatpush.bf16.msra.mxu0 %v4318
        %4577 = vmatpush.bf16.msra.mxu0 %v4314
        %4578 = vmatmul.bf16.gmra.mxu0 %v3797
        %v4579 = vpop.f32.mrf.mxu0
        %v4580 = vadd.f32 0.0, %v4579
        %v4581 = vpop.f32.mrf.mxu0
        %4582 = vdwg.mxu0
        %4583 = vmatpush.bf16.msra.mxu0 %v4374
        %4584 = vmatpush.bf16.msra.mxu0 %v4370
        %4585 = vmatpush.bf16.msra.mxu0 %v4366
        %4586 = vmatpush.bf16.msra.mxu0 %v4362
        %4587 = vmatpush.bf16.msra.mxu0 %v4358
        %4588 = vmatpush.bf16.msra.mxu0 %v4354
        %4589 = vmatpush.bf16.msra.mxu0 %v4350
        %4590 = vmatpush.bf16.msra.mxu0 %v4346
        %4591 = vmatmul.bf16.gmra.mxu0 %v3798
        %v4592 = vpop.f32.mrf.mxu0
        %v4593 = vadd.f32 %v4580, %v4592
        %v4594 = vpop.f32.mrf.mxu0
        %4595 = vdwg.mxu0
        %4596 = vmatpush.bf16.msra.mxu0 %v4406
        %4597 = vmatpush.bf16.msra.mxu0 %v4402
        %4598 = vmatpush.bf16.msra.mxu0 %v4398
        %4599 = vmatpush.bf16.msra.mxu0 %v4394
        %4600 = vmatpush.bf16.msra.mxu0 %v4390
        %4601 = vmatpush.bf16.msra.mxu0 %v4386
        %4602 = vmatpush.bf16.msra.mxu0 %v4382
        %4603 = vmatpush.bf16.msra.mxu0 %v4378
        %4604 = vmatmul.bf16.gmra.mxu0 %v3799
        %v4605 = vpop.f32.mrf.mxu0
        %v4606 = vadd.f32 %v4593, %v4605
        %v4607 = vpop.f32.mrf.mxu0
        %4608 = vdwg.mxu0
        %4609 = vmatpush.bf16.msra.mxu0 %v4438
        %4610 = vmatpush.bf16.msra.mxu0 %v4434
        %4611 = vmatpush.bf16.msra.mxu0 %v4430
        %4612 = vmatpush.bf16.msra.mxu0 %v4426
        %4613 = vmatpush.bf16.msra.mxu0 %v4422
        %4614 = vmatpush.bf16.msra.mxu0 %v4418
        %4615 = vmatpush.bf16.msra.mxu0 %v4414
        %4616 = vmatpush.bf16.msra.mxu0 %v4410
        %4617 = vmatmul.bf16.gmra.mxu0 %v3800
        %v4618 = vpop.f32.mrf.mxu0
        %v4619 = vadd.f32 %v4606, %v4618
        %v4620 = vpop.f32.mrf.mxu0
        %4621 = vdwg.mxu0
        %4622 = vmatpush.bf16.msra.mxu0 %v4343
        %4623 = vmatpush.bf16.msra.mxu0 %v4339
        %4624 = vmatpush.bf16.msra.mxu0 %v4335
        %4625 = vmatpush.bf16.msra.mxu0 %v4331
        %4626 = vmatpush.bf16.msra.mxu0 %v4327
        %4627 = vmatpush.bf16.msra.mxu0 %v4323
        %4628 = vmatpush.bf16.msra.mxu0 %v4319
        %4629 = vmatpush.bf16.msra.mxu0 %v4315
        %4630 = vmatmul.bf16.gmra.mxu0 %v3797
        %v4631 = vpop.f32.mrf.mxu0
        %v4632 = vadd.f32 0.0, %v4631
        %v4633 = vpop.f32.mrf.mxu0
        %4634 = vdwg.mxu0
        %4635 = vmatpush.bf16.msra.mxu0 %v4375
        %4636 = vmatpush.bf16.msra.mxu0 %v4371
        %4637 = vmatpush.bf16.msra.mxu0 %v4367
        %4638 = vmatpush.bf16.msra.mxu0 %v4363
        %4639 = vmatpush.bf16.msra.mxu0 %v4359
        %4640 = vmatpush.bf16.msra.mxu0 %v4355
        %4641 = vmatpush.bf16.msra.mxu0 %v4351
        %4642 = vmatpush.bf16.msra.mxu0 %v4347
        %4643 = vmatmul.bf16.gmra.mxu0 %v3798
        %v4644 = vpop.f32.mrf.mxu0
        %v4645 = vadd.f32 %v4632, %v4644
        %v4646 = vpop.f32.mrf.mxu0
        %4647 = vdwg.mxu0
        %4648 = vmatpush.bf16.msra.mxu0 %v4407
        %4649 = vmatpush.bf16.msra.mxu0 %v4403
        %4650 = vmatpush.bf16.msra.mxu0 %v4399
        %4651 = vmatpush.bf16.msra.mxu0 %v4395
        %4652 = vmatpush.bf16.msra.mxu0 %v4391
        %4653 = vmatpush.bf16.msra.mxu0 %v4387
        %4654 = vmatpush.bf16.msra.mxu0 %v4383
        %4655 = vmatpush.bf16.msra.mxu0 %v4379
        %4656 = vmatmul.bf16.gmra.mxu0 %v3799
        %v4657 = vpop.f32.mrf.mxu0
        %v4658 = vadd.f32 %v4645, %v4657
        %v4659 = vpop.f32.mrf.mxu0
        %4660 = vdwg.mxu0
        %4661 = vmatpush.bf16.msra.mxu0 %v4439
        %4662 = vmatpush.bf16.msra.mxu0 %v4435
        %4663 = vmatpush.bf16.msra.mxu0 %v4431
        %4664 = vmatpush.bf16.msra.mxu0 %v4427
        %4665 = vmatpush.bf16.msra.mxu0 %v4423
        %4666 = vmatpush.bf16.msra.mxu0 %v4419
        %4667 = vmatpush.bf16.msra.mxu0 %v4415
        %4668 = vmatpush.bf16.msra.mxu0 %v4411
        %4669 = vmatmul.bf16.gmra.mxu0 %v3800
        %v4670 = vpop.f32.mrf.mxu0
        %v4671 = vadd.f32 %v4658, %v4670
        %v4672 = vpop.f32.mrf.mxu0
        %4673 = vdwg.mxu0
        %4674 = vmatpush.bf16.msra.mxu0 %v4344
        %4675 = vmatpush.bf16.msra.mxu0 %v4340
        %4676 = vmatpush.bf16.msra.mxu0 %v4336
        %4677 = vmatpush.bf16.msra.mxu0 %v4332
        %4678 = vmatpush.bf16.msra.mxu0 %v4328
        %4679 = vmatpush.bf16.msra.mxu0 %v4324
        %4680 = vmatpush.bf16.msra.mxu0 %v4320
        %4681 = vmatpush.bf16.msra.mxu0 %v4316
        %4682 = vmatmul.bf16.gmra.mxu0 %v3797
        %v4683 = vpop.f32.mrf.mxu0
        %v4684 = vadd.f32 0.0, %v4683
        %v4685 = vpop.f32.mrf.mxu0
        %4686 = vdwg.mxu0
        %4687 = vmatpush.bf16.msra.mxu0 %v4376
        %4688 = vmatpush.bf16.msra.mxu0 %v4372
        %4689 = vmatpush.bf16.msra.mxu0 %v4368
        %4690 = vmatpush.bf16.msra.mxu0 %v4364
        %4691 = vmatpush.bf16.msra.mxu0 %v4360
        %4692 = vmatpush.bf16.msra.mxu0 %v4356
        %4693 = vmatpush.bf16.msra.mxu0 %v4352
        %4694 = vmatpush.bf16.msra.mxu0 %v4348
        %4695 = vmatmul.bf16.gmra.mxu0 %v3798
        %v4696 = vpop.f32.mrf.mxu0
        %v4697 = vadd.f32 %v4684, %v4696
        %v4698 = vpop.f32.mrf.mxu0
        %4699 = vdwg.mxu0
        %4700 = vmatpush.bf16.msra.mxu0 %v4408
        %4701 = vmatpush.bf16.msra.mxu0 %v4404
        %4702 = vmatpush.bf16.msra.mxu0 %v4400
        %4703 = vmatpush.bf16.msra.mxu0 %v4396
        %4704 = vmatpush.bf16.msra.mxu0 %v4392
        %4705 = vmatpush.bf16.msra.mxu0 %v4388
        %4706 = vmatpush.bf16.msra.mxu0 %v4384
        %4707 = vmatpush.bf16.msra.mxu0 %v4380
        %4708 = vmatmul.bf16.gmra.mxu0 %v3799
        %v4709 = vpop.f32.mrf.mxu0
        %v4710 = vadd.f32 %v4697, %v4709
        %v4711 = vpop.f32.mrf.mxu0
        %4712 = vdwg.mxu0
        %4713 = vmatpush.bf16.msra.mxu0 %v4440
        %4714 = vmatpush.bf16.msra.mxu0 %v4436
        %4715 = vmatpush.bf16.msra.mxu0 %v4432
        %4716 = vmatpush.bf16.msra.mxu0 %v4428
        %4717 = vmatpush.bf16.msra.mxu0 %v4424
        %4718 = vmatpush.bf16.msra.mxu0 %v4420
        %4719 = vmatpush.bf16.msra.mxu0 %v4416
        %4720 = vmatpush.bf16.msra.mxu0 %v4412
        %4721 = vmatmul.bf16.gmra.mxu0 %v3800
        %v4722 = vpop.f32.mrf.mxu0
        %v4723 = vadd.f32 %v4710, %v4722
        %v4724 = vpop.f32.mrf.mxu0
        %4725 = vdwg.mxu0
        %4726 = vmatpush.bf16.msra.mxu0 %v4345
        %4727 = vmatpush.bf16.msra.mxu0 %v4341
        %4728 = vmatpush.bf16.msra.mxu0 %v4337
        %4729 = vmatpush.bf16.msra.mxu0 %v4333
        %4730 = vmatpush.bf16.msra.mxu0 %v4329
        %4731 = vmatpush.bf16.msra.mxu0 %v4325
        %4732 = vmatpush.bf16.msra.mxu0 %v4321
        %4733 = vmatpush.bf16.msra.mxu0 %v4317
        %4734 = vmatmul.bf16.gmra.mxu0 %v3797
        %v4735 = vpop.f32.mrf.mxu0
        %v4736 = vadd.f32 0.0, %v4735
        %v4737 = vpop.f32.mrf.mxu0
        %4738 = vdwg.mxu0
        %4739 = vmatpush.bf16.msra.mxu0 %v4377
        %4740 = vmatpush.bf16.msra.mxu0 %v4373
        %4741 = vmatpush.bf16.msra.mxu0 %v4369
        %4742 = vmatpush.bf16.msra.mxu0 %v4365
        %4743 = vmatpush.bf16.msra.mxu0 %v4361
        %4744 = vmatpush.bf16.msra.mxu0 %v4357
        %4745 = vmatpush.bf16.msra.mxu0 %v4353
        %4746 = vmatpush.bf16.msra.mxu0 %v4349
        %4747 = vmatmul.bf16.gmra.mxu0 %v3798
        %v4748 = vpop.f32.mrf.mxu0
        %v4749 = vadd.f32 %v4736, %v4748
        %v4750 = vpop.f32.mrf.mxu0
        %4751 = vdwg.mxu0
        %4752 = vmatpush.bf16.msra.mxu0 %v4409
        %4753 = vmatpush.bf16.msra.mxu0 %v4405
        %4754 = vmatpush.bf16.msra.mxu0 %v4401
        %4755 = vmatpush.bf16.msra.mxu0 %v4397
        %4756 = vmatpush.bf16.msra.mxu0 %v4393
        %4757 = vmatpush.bf16.msra.mxu0 %v4389
        %4758 = vmatpush.bf16.msra.mxu0 %v4385
        %4759 = vmatpush.bf16.msra.mxu0 %v4381
        %4760 = vmatmul.bf16.gmra.mxu0 %v3799
        %v4761 = vpop.f32.mrf.mxu0
        %v4762 = vadd.f32 %v4749, %v4761
        %v4763 = vpop.f32.mrf.mxu0
        %4764 = vdwg.mxu0
        %4765 = vmatpush.bf16.msra.mxu0 %v4441
        %4766 = vmatpush.bf16.msra.mxu0 %v4437
        %4767 = vmatpush.bf16.msra.mxu0 %v4433
        %4768 = vmatpush.bf16.msra.mxu0 %v4429
        %4769 = vmatpush.bf16.msra.mxu0 %v4425
        %4770 = vmatpush.bf16.msra.mxu0 %v4421
        %4771 = vmatpush.bf16.msra.mxu0 %v4417
        %4772 = vmatpush.bf16.msra.mxu0 %v4413
        %4773 = vmatmul.bf16.gmra.mxu0 %v3800
        %v4774 = vpop.f32.mrf.mxu0
        %v4775 = vadd.f32 %v4762, %v4774
        %v4776 = vpop.f32.mrf.mxu0
        %4777 = vdwg.mxu0
        %v4778 = vadd.f32 %v3581, %v4619
        %v4779 = vadd.f32 %v3633, %v4671
        %v4780 = vadd.f32 %v3685, %v4723
        %v4781 = vadd.f32 %v3737, %v4775
        %s4782 = scalar_lea.vmem [#allocation11], 12
        %v4783 = vld [vmem:[%s4782] sm:$0xf]
        %v4785 = vsel %vm1666, %v4783, 0
        %4787 = vmatpush.bf16.msra.mxu0 0
        %4788 = vmatpush.bf16.msra.mxu0 0
        %4789 = vmatpush.bf16.msra.mxu0 0
        %4790 = vmatpush.bf16.msra.mxu0 0
        %4791 = vmatpush.bf16.msra.mxu0 0
        %4792 = vmatpush.bf16.msra.mxu0 0
        %4793 = vmatpush.bf16.msra.mxu0 0
        %4794 = vmatpush.bf16.msra.mxu0 %v1661
        %4795 = vmatmul.bf16.gmra.mxu0 %v4785
        %v4796 = vpop.f32.mrf.mxu0
        %v4797 = vadd.f32 0.0, %v4796
        %v4798 = vpop.f32.mrf.mxu0
        %4799 = vdwg.mxu0
        %4800 = vmatpush.bf16.msra.mxu0 0
        %4801 = vmatpush.bf16.msra.mxu0 0
        %4802 = vmatpush.bf16.msra.mxu0 0
        %4803 = vmatpush.bf16.msra.mxu0 0
        %4804 = vmatpush.bf16.msra.mxu0 0
        %4805 = vmatpush.bf16.msra.mxu0 0
        %4806 = vmatpush.bf16.msra.mxu0 0
        %4807 = vmatpush.bf16.msra.mxu0 %v1662
        %4808 = vmatmul.bf16.gmra.mxu0 %v4785
        %v4809 = vpop.f32.mrf.mxu0
        %v4810 = vadd.f32 0.0, %v4809
        %v4811 = vpop.f32.mrf.mxu0
        %4812 = vdwg.mxu0
        %4813 = vmatpush.bf16.msra.mxu0 0
        %4814 = vmatpush.bf16.msra.mxu0 0
        %4815 = vmatpush.bf16.msra.mxu0 0
        %4816 = vmatpush.bf16.msra.mxu0 0
        %4817 = vmatpush.bf16.msra.mxu0 0
        %4818 = vmatpush.bf16.msra.mxu0 0
        %4819 = vmatpush.bf16.msra.mxu0 0
        %4820 = vmatpush.bf16.msra.mxu0 %v1663
        %4821 = vmatmul.bf16.gmra.mxu0 %v4785
        %v4822 = vpop.f32.mrf.mxu0
        %v4823 = vadd.f32 0.0, %v4822
        %v4824 = vpop.f32.mrf.mxu0
        %4825 = vdwg.mxu0
        %4826 = vmatpush.bf16.msra.mxu0 0
        %4827 = vmatpush.bf16.msra.mxu0 0
        %4828 = vmatpush.bf16.msra.mxu0 0
        %4829 = vmatpush.bf16.msra.mxu0 0
        %4830 = vmatpush.bf16.msra.mxu0 0
        %4831 = vmatpush.bf16.msra.mxu0 0
        %4832 = vmatpush.bf16.msra.mxu0 0
        %4833 = vmatpush.bf16.msra.mxu0 %v1664
        %4834 = vmatmul.bf16.gmra.mxu0 %v4785
        %v4835 = vpop.f32.mrf.mxu0
        %v4836 = vadd.f32 0.0, %v4835
        %v4837 = vpop.f32.mrf.mxu0
        %4838 = vdwg.mxu0
        %v4839 = vpack.c.bf16 %v4797, %v4797
        %v4840 = vpack.c.bf16 %v4810, %v4810
        %v4841 = vpack.c.bf16 %v4823, %v4823
        %v4842 = vpack.c.bf16 %v4836, %v4836
        %s4843 = scalar_lea.vmem [#allocation13], 3072
        %v4844 = vld [vmem:[%s4843] sm:$0xff]
        %v4845 = vld [vmem:[%s4843 + $0x8] sm:$0xff]
        %v4846 = vld [vmem:[%s4843 + $0x10] sm:$0xff]
        %v4847 = vld [vmem:[%s4843 + $0x18] sm:$0xff]
        %v4848 = vld [vmem:[%s4843 + $0x20] sm:$0xff]
        %v4849 = vld [vmem:[%s4843 + $0x28] sm:$0xff]
        %v4850 = vld [vmem:[%s4843 + $0x30] sm:$0xff]
        %v4851 = vld [vmem:[%s4843 + $0x38] sm:$0xff]
        %v4852 = vld [vmem:[%s4843 + $0x40] sm:$0xff]
        %v4853 = vld [vmem:[%s4843 + $0x48] sm:$0xff]
        %v4854 = vld [vmem:[%s4843 + $0x50] sm:$0xff]
        %v4855 = vld [vmem:[%s4843 + $0x58] sm:$0xff]
        %v4856 = vld [vmem:[%s4843 + $0x60] sm:$0xff]
        %v4857 = vld [vmem:[%s4843 + $0x68] sm:$0xff]
        %v4858 = vld [vmem:[%s4843 + $0x70] sm:$0xff]
        %v4859 = vld [vmem:[%s4843 + $0x78] sm:$0xff]
        %v4860 = vld [vmem:[%s4843 + $0x80] sm:$0xff]
        %v4861 = vld [vmem:[%s4843 + $0x88] sm:$0xff]
        %v4862 = vld [vmem:[%s4843 + $0x90] sm:$0xff]
        %v4863 = vld [vmem:[%s4843 + $0x98] sm:$0xff]
        %v4864 = vld [vmem:[%s4843 + $0xa0] sm:$0xff]
        %v4865 = vld [vmem:[%s4843 + $0xa8] sm:$0xff]
        %v4866 = vld [vmem:[%s4843 + $0xb0] sm:$0xff]
        %v4867 = vld [vmem:[%s4843 + $0xb8] sm:$0xff]
        %v4868 = vld [vmem:[%s4843 + $0xc0] sm:$0xff]
        %v4869 = vld [vmem:[%s4843 + $0xc8] sm:$0xff]
        %v4870 = vld [vmem:[%s4843 + $0xd0] sm:$0xff]
        %v4871 = vld [vmem:[%s4843 + $0xd8] sm:$0xff]
        %v4872 = vld [vmem:[%s4843 + $0xe0] sm:$0xff]
        %v4873 = vld [vmem:[%s4843 + $0xe8] sm:$0xff]
        %v4874 = vld [vmem:[%s4843 + $0xf0] sm:$0xff]
        %v4875 = vld [vmem:[%s4843 + $0xf8] sm:$0xff]
        %v4876 = vld [vmem:[%s4843 + $0x100] sm:$0xff]
        %v4877 = vld [vmem:[%s4843 + $0x108] sm:$0xff]
        %v4878 = vld [vmem:[%s4843 + $0x110] sm:$0xff]
        %v4879 = vld [vmem:[%s4843 + $0x118] sm:$0xff]
        %v4880 = vld [vmem:[%s4843 + $0x120] sm:$0xff]
        %v4881 = vld [vmem:[%s4843 + $0x128] sm:$0xff]
        %v4882 = vld [vmem:[%s4843 + $0x130] sm:$0xff]
        %v4883 = vld [vmem:[%s4843 + $0x138] sm:$0xff]
        %v4884 = vld [vmem:[%s4843 + $0x140] sm:$0xff]
        %v4885 = vld [vmem:[%s4843 + $0x148] sm:$0xff]
        %v4886 = vld [vmem:[%s4843 + $0x150] sm:$0xff]
        %v4887 = vld [vmem:[%s4843 + $0x158] sm:$0xff]
        %v4888 = vld [vmem:[%s4843 + $0x160] sm:$0xff]
        %v4889 = vld [vmem:[%s4843 + $0x168] sm:$0xff]
        %v4890 = vld [vmem:[%s4843 + $0x170] sm:$0xff]
        %v4891 = vld [vmem:[%s4843 + $0x178] sm:$0xff]
        %v4892 = vld [vmem:[%s4843 + $0x180] sm:$0xff]
        %v4893 = vld [vmem:[%s4843 + $0x188] sm:$0xff]
        %v4894 = vld [vmem:[%s4843 + $0x190] sm:$0xff]
        %v4895 = vld [vmem:[%s4843 + $0x198] sm:$0xff]
        %v4896 = vld [vmem:[%s4843 + $0x1a0] sm:$0xff]
        %v4897 = vld [vmem:[%s4843 + $0x1a8] sm:$0xff]
        %v4898 = vld [vmem:[%s4843 + $0x1b0] sm:$0xff]
        %v4899 = vld [vmem:[%s4843 + $0x1b8] sm:$0xff]
        %v4900 = vld [vmem:[%s4843 + $0x1c0] sm:$0xff]
        %v4901 = vld [vmem:[%s4843 + $0x1c8] sm:$0xff]
        %v4902 = vld [vmem:[%s4843 + $0x1d0] sm:$0xff]
        %v4903 = vld [vmem:[%s4843 + $0x1d8] sm:$0xff]
        %v4904 = vld [vmem:[%s4843 + $0x1e0] sm:$0xff]
        %v4905 = vld [vmem:[%s4843 + $0x1e8] sm:$0xff]
        %v4906 = vld [vmem:[%s4843 + $0x1f0] sm:$0xff]
        %v4907 = vld [vmem:[%s4843 + $0x1f8] sm:$0xff]
        %v4908 = vld [vmem:[%s4843 + $0x200] sm:$0xff]
        %v4909 = vld [vmem:[%s4843 + $0x208] sm:$0xff]
        %v4910 = vld [vmem:[%s4843 + $0x210] sm:$0xff]
        %v4911 = vld [vmem:[%s4843 + $0x218] sm:$0xff]
        %v4912 = vld [vmem:[%s4843 + $0x220] sm:$0xff]
        %v4913 = vld [vmem:[%s4843 + $0x228] sm:$0xff]
        %v4914 = vld [vmem:[%s4843 + $0x230] sm:$0xff]
        %v4915 = vld [vmem:[%s4843 + $0x238] sm:$0xff]
        %v4916 = vld [vmem:[%s4843 + $0x240] sm:$0xff]
        %v4917 = vld [vmem:[%s4843 + $0x248] sm:$0xff]
        %v4918 = vld [vmem:[%s4843 + $0x250] sm:$0xff]
        %v4919 = vld [vmem:[%s4843 + $0x258] sm:$0xff]
        %v4920 = vld [vmem:[%s4843 + $0x260] sm:$0xff]
        %v4921 = vld [vmem:[%s4843 + $0x268] sm:$0xff]
        %v4922 = vld [vmem:[%s4843 + $0x270] sm:$0xff]
        %v4923 = vld [vmem:[%s4843 + $0x278] sm:$0xff]
        %v4924 = vld [vmem:[%s4843 + $0x280] sm:$0xff]
        %v4925 = vld [vmem:[%s4843 + $0x288] sm:$0xff]
        %v4926 = vld [vmem:[%s4843 + $0x290] sm:$0xff]
        %v4927 = vld [vmem:[%s4843 + $0x298] sm:$0xff]
        %v4928 = vld [vmem:[%s4843 + $0x2a0] sm:$0xff]
        %v4929 = vld [vmem:[%s4843 + $0x2a8] sm:$0xff]
        %v4930 = vld [vmem:[%s4843 + $0x2b0] sm:$0xff]
        %v4931 = vld [vmem:[%s4843 + $0x2b8] sm:$0xff]
        %v4932 = vld [vmem:[%s4843 + $0x2c0] sm:$0xff]
        %v4933 = vld [vmem:[%s4843 + $0x2c8] sm:$0xff]
        %v4934 = vld [vmem:[%s4843 + $0x2d0] sm:$0xff]
        %v4935 = vld [vmem:[%s4843 + $0x2d8] sm:$0xff]
        %v4936 = vld [vmem:[%s4843 + $0x2e0] sm:$0xff]
        %v4937 = vld [vmem:[%s4843 + $0x2e8] sm:$0xff]
        %v4938 = vld [vmem:[%s4843 + $0x2f0] sm:$0xff]
        %v4939 = vld [vmem:[%s4843 + $0x2f8] sm:$0xff]
        %v4940 = vld [vmem:[%s4843 + $0x300] sm:$0xff]
        %v4941 = vld [vmem:[%s4843 + $0x308] sm:$0xff]
        %v4942 = vld [vmem:[%s4843 + $0x310] sm:$0xff]
        %v4943 = vld [vmem:[%s4843 + $0x318] sm:$0xff]
        %v4944 = vld [vmem:[%s4843 + $0x320] sm:$0xff]
        %v4945 = vld [vmem:[%s4843 + $0x328] sm:$0xff]
        %v4946 = vld [vmem:[%s4843 + $0x330] sm:$0xff]
        %v4947 = vld [vmem:[%s4843 + $0x338] sm:$0xff]
        %v4948 = vld [vmem:[%s4843 + $0x340] sm:$0xff]
        %v4949 = vld [vmem:[%s4843 + $0x348] sm:$0xff]
        %v4950 = vld [vmem:[%s4843 + $0x350] sm:$0xff]
        %v4951 = vld [vmem:[%s4843 + $0x358] sm:$0xff]
        %v4952 = vld [vmem:[%s4843 + $0x360] sm:$0xff]
        %v4953 = vld [vmem:[%s4843 + $0x368] sm:$0xff]
        %v4954 = vld [vmem:[%s4843 + $0x370] sm:$0xff]
        %v4955 = vld [vmem:[%s4843 + $0x378] sm:$0xff]
        %v4956 = vld [vmem:[%s4843 + $0x380] sm:$0xff]
        %v4957 = vld [vmem:[%s4843 + $0x388] sm:$0xff]
        %v4958 = vld [vmem:[%s4843 + $0x390] sm:$0xff]
        %v4959 = vld [vmem:[%s4843 + $0x398] sm:$0xff]
        %v4960 = vld [vmem:[%s4843 + $0x3a0] sm:$0xff]
        %v4961 = vld [vmem:[%s4843 + $0x3a8] sm:$0xff]
        %v4962 = vld [vmem:[%s4843 + $0x3b0] sm:$0xff]
        %v4963 = vld [vmem:[%s4843 + $0x3b8] sm:$0xff]
        %v4964 = vld [vmem:[%s4843 + $0x3c0] sm:$0xff]
        %v4965 = vld [vmem:[%s4843 + $0x3c8] sm:$0xff]
        %v4966 = vld [vmem:[%s4843 + $0x3d0] sm:$0xff]
        %v4967 = vld [vmem:[%s4843 + $0x3d8] sm:$0xff]
        %v4968 = vld [vmem:[%s4843 + $0x3e0] sm:$0xff]
        %v4969 = vld [vmem:[%s4843 + $0x3e8] sm:$0xff]
        %v4970 = vld [vmem:[%s4843 + $0x3f0] sm:$0xff]
        %v4971 = vld [vmem:[%s4843 + $0x3f8] sm:$0xff]
        %v5100 = vunpack.c.l.b16 %v4844
        %v5101 = vunpack.c.h.b16 %v4844
        %v5102 = vunpack.c.l.b16 %v4845
        %v5103 = vunpack.c.h.b16 %v4845
        %v5104 = vunpack.c.l.b16 %v4846
        %v5105 = vunpack.c.h.b16 %v4846
        %v5106 = vunpack.c.l.b16 %v4847
        %v5107 = vunpack.c.h.b16 %v4847
        %v5108 = vunpack.c.l.b16 %v4848
        %v5109 = vunpack.c.h.b16 %v4848
        %v5110 = vunpack.c.l.b16 %v4849
        %v5111 = vunpack.c.h.b16 %v4849
        %v5112 = vunpack.c.l.b16 %v4850
        %v5113 = vunpack.c.h.b16 %v4850
        %v5114 = vunpack.c.l.b16 %v4851
        %v5115 = vunpack.c.h.b16 %v4851
        %v5116 = vunpack.c.l.b16 %v4852
        %v5117 = vunpack.c.h.b16 %v4852
        %v5118 = vunpack.c.l.b16 %v4853
        %v5119 = vunpack.c.h.b16 %v4853
        %v5120 = vunpack.c.l.b16 %v4854
        %v5121 = vunpack.c.h.b16 %v4854
        %v5122 = vunpack.c.l.b16 %v4855
        %v5123 = vunpack.c.h.b16 %v4855
        %v5124 = vunpack.c.l.b16 %v4856
        %v5125 = vunpack.c.h.b16 %v4856
        %v5126 = vunpack.c.l.b16 %v4857
        %v5127 = vunpack.c.h.b16 %v4857
        %v5128 = vunpack.c.l.b16 %v4858
        %v5129 = vunpack.c.h.b16 %v4858
        %v5130 = vunpack.c.l.b16 %v4859
        %v5131 = vunpack.c.h.b16 %v4859
        %v5132 = vunpack.c.l.b16 %v4860
        %v5133 = vunpack.c.h.b16 %v4860
        %v5134 = vunpack.c.l.b16 %v4861
        %v5135 = vunpack.c.h.b16 %v4861
        %v5136 = vunpack.c.l.b16 %v4862
        %v5137 = vunpack.c.h.b16 %v4862
        %v5138 = vunpack.c.l.b16 %v4863
        %v5139 = vunpack.c.h.b16 %v4863
        %v5140 = vunpack.c.l.b16 %v4864
        %v5141 = vunpack.c.h.b16 %v4864
        %v5142 = vunpack.c.l.b16 %v4865
        %v5143 = vunpack.c.h.b16 %v4865
        %v5144 = vunpack.c.l.b16 %v4866
        %v5145 = vunpack.c.h.b16 %v4866
        %v5146 = vunpack.c.l.b16 %v4867
        %v5147 = vunpack.c.h.b16 %v4867
        %v5148 = vunpack.c.l.b16 %v4868
        %v5149 = vunpack.c.h.b16 %v4868
        %v5150 = vunpack.c.l.b16 %v4869
        %v5151 = vunpack.c.h.b16 %v4869
        %v5152 = vunpack.c.l.b16 %v4870
        %v5153 = vunpack.c.h.b16 %v4870
        %v5154 = vunpack.c.l.b16 %v4871
        %v5155 = vunpack.c.h.b16 %v4871
        %v5156 = vunpack.c.l.b16 %v4872
        %v5157 = vunpack.c.h.b16 %v4872
        %v5158 = vunpack.c.l.b16 %v4873
        %v5159 = vunpack.c.h.b16 %v4873
        %v5160 = vunpack.c.l.b16 %v4874
        %v5161 = vunpack.c.h.b16 %v4874
        %v5162 = vunpack.c.l.b16 %v4875
        %v5163 = vunpack.c.h.b16 %v4875
        %v5164 = vunpack.c.l.b16 %v4876
        %v5165 = vunpack.c.h.b16 %v4876
        %v5166 = vunpack.c.l.b16 %v4877
        %v5167 = vunpack.c.h.b16 %v4877
        %v5168 = vunpack.c.l.b16 %v4878
        %v5169 = vunpack.c.h.b16 %v4878
        %v5170 = vunpack.c.l.b16 %v4879
        %v5171 = vunpack.c.h.b16 %v4879
        %v5172 = vunpack.c.l.b16 %v4880
        %v5173 = vunpack.c.h.b16 %v4880
        %v5174 = vunpack.c.l.b16 %v4881
        %v5175 = vunpack.c.h.b16 %v4881
        %v5176 = vunpack.c.l.b16 %v4882
        %v5177 = vunpack.c.h.b16 %v4882
        %v5178 = vunpack.c.l.b16 %v4883
        %v5179 = vunpack.c.h.b16 %v4883
        %v5180 = vunpack.c.l.b16 %v4884
        %v5181 = vunpack.c.h.b16 %v4884
        %v5182 = vunpack.c.l.b16 %v4885
        %v5183 = vunpack.c.h.b16 %v4885
        %v5184 = vunpack.c.l.b16 %v4886
        %v5185 = vunpack.c.h.b16 %v4886
        %v5186 = vunpack.c.l.b16 %v4887
        %v5187 = vunpack.c.h.b16 %v4887
        %v5188 = vunpack.c.l.b16 %v4888
        %v5189 = vunpack.c.h.b16 %v4888
        %v5190 = vunpack.c.l.b16 %v4889
        %v5191 = vunpack.c.h.b16 %v4889
        %v5192 = vunpack.c.l.b16 %v4890
        %v5193 = vunpack.c.h.b16 %v4890
        %v5194 = vunpack.c.l.b16 %v4891
        %v5195 = vunpack.c.h.b16 %v4891
        %v5196 = vunpack.c.l.b16 %v4892
        %v5197 = vunpack.c.h.b16 %v4892
        %v5198 = vunpack.c.l.b16 %v4893
        %v5199 = vunpack.c.h.b16 %v4893
        %v5200 = vunpack.c.l.b16 %v4894
        %v5201 = vunpack.c.h.b16 %v4894
        %v5202 = vunpack.c.l.b16 %v4895
        %v5203 = vunpack.c.h.b16 %v4895
        %v5204 = vunpack.c.l.b16 %v4896
        %v5205 = vunpack.c.h.b16 %v4896
        %v5206 = vunpack.c.l.b16 %v4897
        %v5207 = vunpack.c.h.b16 %v4897
        %v5208 = vunpack.c.l.b16 %v4898
        %v5209 = vunpack.c.h.b16 %v4898
        %v5210 = vunpack.c.l.b16 %v4899
        %v5211 = vunpack.c.h.b16 %v4899
        %v5212 = vunpack.c.l.b16 %v4900
        %v5213 = vunpack.c.h.b16 %v4900
        %v5214 = vunpack.c.l.b16 %v4901
        %v5215 = vunpack.c.h.b16 %v4901
        %v5216 = vunpack.c.l.b16 %v4902
        %v5217 = vunpack.c.h.b16 %v4902
        %v5218 = vunpack.c.l.b16 %v4903
        %v5219 = vunpack.c.h.b16 %v4903
        %v5220 = vunpack.c.l.b16 %v4904
        %v5221 = vunpack.c.h.b16 %v4904
        %v5222 = vunpack.c.l.b16 %v4905
        %v5223 = vunpack.c.h.b16 %v4905
        %v5224 = vunpack.c.l.b16 %v4906
        %v5225 = vunpack.c.h.b16 %v4906
        %v5226 = vunpack.c.l.b16 %v4907
        %v5227 = vunpack.c.h.b16 %v4907
        %v5228 = vunpack.c.l.b16 %v4908
        %v5229 = vunpack.c.h.b16 %v4908
        %v5230 = vunpack.c.l.b16 %v4909
        %v5231 = vunpack.c.h.b16 %v4909
        %v5232 = vunpack.c.l.b16 %v4910
        %v5233 = vunpack.c.h.b16 %v4910
        %v5234 = vunpack.c.l.b16 %v4911
        %v5235 = vunpack.c.h.b16 %v4911
        %v5236 = vunpack.c.l.b16 %v4912
        %v5237 = vunpack.c.h.b16 %v4912
        %v5238 = vunpack.c.l.b16 %v4913
        %v5239 = vunpack.c.h.b16 %v4913
        %v5240 = vunpack.c.l.b16 %v4914
        %v5241 = vunpack.c.h.b16 %v4914
        %v5242 = vunpack.c.l.b16 %v4915
        %v5243 = vunpack.c.h.b16 %v4915
        %v5244 = vunpack.c.l.b16 %v4916
        %v5245 = vunpack.c.h.b16 %v4916
        %v5246 = vunpack.c.l.b16 %v4917
        %v5247 = vunpack.c.h.b16 %v4917
        %v5248 = vunpack.c.l.b16 %v4918
        %v5249 = vunpack.c.h.b16 %v4918
        %v5250 = vunpack.c.l.b16 %v4919
        %v5251 = vunpack.c.h.b16 %v4919
        %v5252 = vunpack.c.l.b16 %v4920
        %v5253 = vunpack.c.h.b16 %v4920
        %v5254 = vunpack.c.l.b16 %v4921
        %v5255 = vunpack.c.h.b16 %v4921
        %v5256 = vunpack.c.l.b16 %v4922
        %v5257 = vunpack.c.h.b16 %v4922
        %v5258 = vunpack.c.l.b16 %v4923
        %v5259 = vunpack.c.h.b16 %v4923
        %v5260 = vunpack.c.l.b16 %v4924
        %v5261 = vunpack.c.h.b16 %v4924
        %v5262 = vunpack.c.l.b16 %v4925
        %v5263 = vunpack.c.h.b16 %v4925
        %v5264 = vunpack.c.l.b16 %v4926
        %v5265 = vunpack.c.h.b16 %v4926
        %v5266 = vunpack.c.l.b16 %v4927
        %v5267 = vunpack.c.h.b16 %v4927
        %v5268 = vunpack.c.l.b16 %v4928
        %v5269 = vunpack.c.h.b16 %v4928
        %v5270 = vunpack.c.l.b16 %v4929
        %v5271 = vunpack.c.h.b16 %v4929
        %v5272 = vunpack.c.l.b16 %v4930
        %v5273 = vunpack.c.h.b16 %v4930
        %v5274 = vunpack.c.l.b16 %v4931
        %v5275 = vunpack.c.h.b16 %v4931
        %v5276 = vunpack.c.l.b16 %v4932
        %v5277 = vunpack.c.h.b16 %v4932
        %v5278 = vunpack.c.l.b16 %v4933
        %v5279 = vunpack.c.h.b16 %v4933
        %v5280 = vunpack.c.l.b16 %v4934
        %v5281 = vunpack.c.h.b16 %v4934
        %v5282 = vunpack.c.l.b16 %v4935
        %v5283 = vunpack.c.h.b16 %v4935
        %v5284 = vunpack.c.l.b16 %v4936
        %v5285 = vunpack.c.h.b16 %v4936
        %v5286 = vunpack.c.l.b16 %v4937
        %v5287 = vunpack.c.h.b16 %v4937
        %v5288 = vunpack.c.l.b16 %v4938
        %v5289 = vunpack.c.h.b16 %v4938
        %v5290 = vunpack.c.l.b16 %v4939
        %v5291 = vunpack.c.h.b16 %v4939
        %v5292 = vunpack.c.l.b16 %v4940
        %v5293 = vunpack.c.h.b16 %v4940
        %v5294 = vunpack.c.l.b16 %v4941
        %v5295 = vunpack.c.h.b16 %v4941
        %v5296 = vunpack.c.l.b16 %v4942
        %v5297 = vunpack.c.h.b16 %v4942
        %v5298 = vunpack.c.l.b16 %v4943
        %v5299 = vunpack.c.h.b16 %v4943
        %v5300 = vunpack.c.l.b16 %v4944
        %v5301 = vunpack.c.h.b16 %v4944
        %v5302 = vunpack.c.l.b16 %v4945
        %v5303 = vunpack.c.h.b16 %v4945
        %v5304 = vunpack.c.l.b16 %v4946
        %v5305 = vunpack.c.h.b16 %v4946
        %v5306 = vunpack.c.l.b16 %v4947
        %v5307 = vunpack.c.h.b16 %v4947
        %v5308 = vunpack.c.l.b16 %v4948
        %v5309 = vunpack.c.h.b16 %v4948
        %v5310 = vunpack.c.l.b16 %v4949
        %v5311 = vunpack.c.h.b16 %v4949
        %v5312 = vunpack.c.l.b16 %v4950
        %v5313 = vunpack.c.h.b16 %v4950
        %v5314 = vunpack.c.l.b16 %v4951
        %v5315 = vunpack.c.h.b16 %v4951
        %v5316 = vunpack.c.l.b16 %v4952
        %v5317 = vunpack.c.h.b16 %v4952
        %v5318 = vunpack.c.l.b16 %v4953
        %v5319 = vunpack.c.h.b16 %v4953
        %v5320 = vunpack.c.l.b16 %v4954
        %v5321 = vunpack.c.h.b16 %v4954
        %v5322 = vunpack.c.l.b16 %v4955
        %v5323 = vunpack.c.h.b16 %v4955
        %v5324 = vunpack.c.l.b16 %v4956
        %v5325 = vunpack.c.h.b16 %v4956
        %v5326 = vunpack.c.l.b16 %v4957
        %v5327 = vunpack.c.h.b16 %v4957
        %v5328 = vunpack.c.l.b16 %v4958
        %v5329 = vunpack.c.h.b16 %v4958
        %v5330 = vunpack.c.l.b16 %v4959
        %v5331 = vunpack.c.h.b16 %v4959
        %v5332 = vunpack.c.l.b16 %v4960
        %v5333 = vunpack.c.h.b16 %v4960
        %v5334 = vunpack.c.l.b16 %v4961
        %v5335 = vunpack.c.h.b16 %v4961
        %v5336 = vunpack.c.l.b16 %v4962
        %v5337 = vunpack.c.h.b16 %v4962
        %v5338 = vunpack.c.l.b16 %v4963
        %v5339 = vunpack.c.h.b16 %v4963
        %v5340 = vunpack.c.l.b16 %v4964
        %v5341 = vunpack.c.h.b16 %v4964
        %v5342 = vunpack.c.l.b16 %v4965
        %v5343 = vunpack.c.h.b16 %v4965
        %v5344 = vunpack.c.l.b16 %v4966
        %v5345 = vunpack.c.h.b16 %v4966
        %v5346 = vunpack.c.l.b16 %v4967
        %v5347 = vunpack.c.h.b16 %v4967
        %v5348 = vunpack.c.l.b16 %v4968
        %v5349 = vunpack.c.h.b16 %v4968
        %v5350 = vunpack.c.l.b16 %v4969
        %v5351 = vunpack.c.h.b16 %v4969
        %v5352 = vunpack.c.l.b16 %v4970
        %v5353 = vunpack.c.h.b16 %v4970
        %v5354 = vunpack.c.l.b16 %v4971
        %v5355 = vunpack.c.h.b16 %v4971
        %v5356 = vpack.c.b16 %v5104, %v5100
        %v5357 = vpack.c.b16 %v5105, %v5101
        %v5358 = vpack.c.b16 %v5106, %v5102
        %v5359 = vpack.c.b16 %v5107, %v5103
        %v5360 = vpack.c.b16 %v5112, %v5108
        %v5361 = vpack.c.b16 %v5113, %v5109
        %v5362 = vpack.c.b16 %v5114, %v5110
        %v5363 = vpack.c.b16 %v5115, %v5111
        %v5364 = vpack.c.b16 %v5120, %v5116
        %v5365 = vpack.c.b16 %v5121, %v5117
        %v5366 = vpack.c.b16 %v5122, %v5118
        %v5367 = vpack.c.b16 %v5123, %v5119
        %v5368 = vpack.c.b16 %v5128, %v5124
        %v5369 = vpack.c.b16 %v5129, %v5125
        %v5370 = vpack.c.b16 %v5130, %v5126
        %v5371 = vpack.c.b16 %v5131, %v5127
        %v5372 = vpack.c.b16 %v5136, %v5132
        %v5373 = vpack.c.b16 %v5137, %v5133
        %v5374 = vpack.c.b16 %v5138, %v5134
        %v5375 = vpack.c.b16 %v5139, %v5135
        %v5376 = vpack.c.b16 %v5144, %v5140
        %v5377 = vpack.c.b16 %v5145, %v5141
        %v5378 = vpack.c.b16 %v5146, %v5142
        %v5379 = vpack.c.b16 %v5147, %v5143
        %v5380 = vpack.c.b16 %v5152, %v5148
        %v5381 = vpack.c.b16 %v5153, %v5149
        %v5382 = vpack.c.b16 %v5154, %v5150
        %v5383 = vpack.c.b16 %v5155, %v5151
        %v5384 = vpack.c.b16 %v5160, %v5156
        %v5385 = vpack.c.b16 %v5161, %v5157
        %v5386 = vpack.c.b16 %v5162, %v5158
        %v5387 = vpack.c.b16 %v5163, %v5159
        %v5388 = vpack.c.b16 %v5168, %v5164
        %v5389 = vpack.c.b16 %v5169, %v5165
        %v5390 = vpack.c.b16 %v5170, %v5166
        %v5391 = vpack.c.b16 %v5171, %v5167
        %v5392 = vpack.c.b16 %v5176, %v5172
        %v5393 = vpack.c.b16 %v5177, %v5173
        %v5394 = vpack.c.b16 %v5178, %v5174
        %v5395 = vpack.c.b16 %v5179, %v5175
        %v5396 = vpack.c.b16 %v5184, %v5180
        %v5397 = vpack.c.b16 %v5185, %v5181
        %v5398 = vpack.c.b16 %v5186, %v5182
        %v5399 = vpack.c.b16 %v5187, %v5183
        %v5400 = vpack.c.b16 %v5192, %v5188
        %v5401 = vpack.c.b16 %v5193, %v5189
        %v5402 = vpack.c.b16 %v5194, %v5190
        %v5403 = vpack.c.b16 %v5195, %v5191
        %v5404 = vpack.c.b16 %v5200, %v5196
        %v5405 = vpack.c.b16 %v5201, %v5197
        %v5406 = vpack.c.b16 %v5202, %v5198
        %v5407 = vpack.c.b16 %v5203, %v5199
        %v5408 = vpack.c.b16 %v5208, %v5204
        %v5409 = vpack.c.b16 %v5209, %v5205
        %v5410 = vpack.c.b16 %v5210, %v5206
        %v5411 = vpack.c.b16 %v5211, %v5207
        %v5412 = vpack.c.b16 %v5216, %v5212
        %v5413 = vpack.c.b16 %v5217, %v5213
        %v5414 = vpack.c.b16 %v5218, %v5214
        %v5415 = vpack.c.b16 %v5219, %v5215
        %v5416 = vpack.c.b16 %v5224, %v5220
        %v5417 = vpack.c.b16 %v5225, %v5221
        %v5418 = vpack.c.b16 %v5226, %v5222
        %v5419 = vpack.c.b16 %v5227, %v5223
        %v5420 = vpack.c.b16 %v5232, %v5228
        %v5421 = vpack.c.b16 %v5233, %v5229
        %v5422 = vpack.c.b16 %v5234, %v5230
        %v5423 = vpack.c.b16 %v5235, %v5231
        %v5424 = vpack.c.b16 %v5240, %v5236
        %v5425 = vpack.c.b16 %v5241, %v5237
        %v5426 = vpack.c.b16 %v5242, %v5238
        %v5427 = vpack.c.b16 %v5243, %v5239
        %v5428 = vpack.c.b16 %v5248, %v5244
        %v5429 = vpack.c.b16 %v5249, %v5245
        %v5430 = vpack.c.b16 %v5250, %v5246
        %v5431 = vpack.c.b16 %v5251, %v5247
        %v5432 = vpack.c.b16 %v5256, %v5252
        %v5433 = vpack.c.b16 %v5257, %v5253
        %v5434 = vpack.c.b16 %v5258, %v5254
        %v5435 = vpack.c.b16 %v5259, %v5255
        %v5436 = vpack.c.b16 %v5264, %v5260
        %v5437 = vpack.c.b16 %v5265, %v5261
        %v5438 = vpack.c.b16 %v5266, %v5262
        %v5439 = vpack.c.b16 %v5267, %v5263
        %v5440 = vpack.c.b16 %v5272, %v5268
        %v5441 = vpack.c.b16 %v5273, %v5269
        %v5442 = vpack.c.b16 %v5274, %v5270
        %v5443 = vpack.c.b16 %v5275, %v5271
        %v5444 = vpack.c.b16 %v5280, %v5276
        %v5445 = vpack.c.b16 %v5281, %v5277
        %v5446 = vpack.c.b16 %v5282, %v5278
        %v5447 = vpack.c.b16 %v5283, %v5279
        %v5448 = vpack.c.b16 %v5288, %v5284
        %v5449 = vpack.c.b16 %v5289, %v5285
        %v5450 = vpack.c.b16 %v5290, %v5286
        %v5451 = vpack.c.b16 %v5291, %v5287
        %v5452 = vpack.c.b16 %v5296, %v5292
        %v5453 = vpack.c.b16 %v5297, %v5293
        %v5454 = vpack.c.b16 %v5298, %v5294
        %v5455 = vpack.c.b16 %v5299, %v5295
        %v5456 = vpack.c.b16 %v5304, %v5300
        %v5457 = vpack.c.b16 %v5305, %v5301
        %v5458 = vpack.c.b16 %v5306, %v5302
        %v5459 = vpack.c.b16 %v5307, %v5303
        %v5460 = vpack.c.b16 %v5312, %v5308
        %v5461 = vpack.c.b16 %v5313, %v5309
        %v5462 = vpack.c.b16 %v5314, %v5310
        %v5463 = vpack.c.b16 %v5315, %v5311
        %v5464 = vpack.c.b16 %v5320, %v5316
        %v5465 = vpack.c.b16 %v5321, %v5317
        %v5466 = vpack.c.b16 %v5322, %v5318
        %v5467 = vpack.c.b16 %v5323, %v5319
        %v5468 = vpack.c.b16 %v5328, %v5324
        %v5469 = vpack.c.b16 %v5329, %v5325
        %v5470 = vpack.c.b16 %v5330, %v5326
        %v5471 = vpack.c.b16 %v5331, %v5327
        %v5472 = vpack.c.b16 %v5336, %v5332
        %v5473 = vpack.c.b16 %v5337, %v5333
        %v5474 = vpack.c.b16 %v5338, %v5334
        %v5475 = vpack.c.b16 %v5339, %v5335
        %v5476 = vpack.c.b16 %v5344, %v5340
        %v5477 = vpack.c.b16 %v5345, %v5341
        %v5478 = vpack.c.b16 %v5346, %v5342
        %v5479 = vpack.c.b16 %v5347, %v5343
        %v5480 = vpack.c.b16 %v5352, %v5348
        %v5481 = vpack.c.b16 %v5353, %v5349
        %v5482 = vpack.c.b16 %v5354, %v5350
        %v5483 = vpack.c.b16 %v5355, %v5351
        %5612 = vmatpush.bf16.msra.mxu0 %v5384
        %5613 = vmatpush.bf16.msra.mxu0 %v5380
        %5614 = vmatpush.bf16.msra.mxu0 %v5376
        %5615 = vmatpush.bf16.msra.mxu0 %v5372
        %5616 = vmatpush.bf16.msra.mxu0 %v5368
        %5617 = vmatpush.bf16.msra.mxu0 %v5364
        %5618 = vmatpush.bf16.msra.mxu0 %v5360
        %5619 = vmatpush.bf16.msra.mxu0 %v5356
        %5620 = vmatmul.bf16.gmra.mxu0 %v4839
        %v5621 = vpop.f32.mrf.mxu0
        %v5622 = vadd.f32 0.0, %v5621
        %v5623 = vpop.f32.mrf.mxu0
        %5624 = vdwg.mxu0
        %5625 = vmatpush.bf16.msra.mxu0 %v5416
        %5626 = vmatpush.bf16.msra.mxu0 %v5412
        %5627 = vmatpush.bf16.msra.mxu0 %v5408
        %5628 = vmatpush.bf16.msra.mxu0 %v5404
        %5629 = vmatpush.bf16.msra.mxu0 %v5400
        %5630 = vmatpush.bf16.msra.mxu0 %v5396
        %5631 = vmatpush.bf16.msra.mxu0 %v5392
        %5632 = vmatpush.bf16.msra.mxu0 %v5388
        %5633 = vmatmul.bf16.gmra.mxu0 %v4840
        %v5634 = vpop.f32.mrf.mxu0
        %v5635 = vadd.f32 %v5622, %v5634
        %v5636 = vpop.f32.mrf.mxu0
        %5637 = vdwg.mxu0
        %5638 = vmatpush.bf16.msra.mxu0 %v5448
        %5639 = vmatpush.bf16.msra.mxu0 %v5444
        %5640 = vmatpush.bf16.msra.mxu0 %v5440
        %5641 = vmatpush.bf16.msra.mxu0 %v5436
        %5642 = vmatpush.bf16.msra.mxu0 %v5432
        %5643 = vmatpush.bf16.msra.mxu0 %v5428
        %5644 = vmatpush.bf16.msra.mxu0 %v5424
        %5645 = vmatpush.bf16.msra.mxu0 %v5420
        %5646 = vmatmul.bf16.gmra.mxu0 %v4841
        %v5647 = vpop.f32.mrf.mxu0
        %v5648 = vadd.f32 %v5635, %v5647
        %v5649 = vpop.f32.mrf.mxu0
        %5650 = vdwg.mxu0
        %5651 = vmatpush.bf16.msra.mxu0 %v5480
        %5652 = vmatpush.bf16.msra.mxu0 %v5476
        %5653 = vmatpush.bf16.msra.mxu0 %v5472
        %5654 = vmatpush.bf16.msra.mxu0 %v5468
        %5655 = vmatpush.bf16.msra.mxu0 %v5464
        %5656 = vmatpush.bf16.msra.mxu0 %v5460
        %5657 = vmatpush.bf16.msra.mxu0 %v5456
        %5658 = vmatpush.bf16.msra.mxu0 %v5452
        %5659 = vmatmul.bf16.gmra.mxu0 %v4842
        %v5660 = vpop.f32.mrf.mxu0
        %v5661 = vadd.f32 %v5648, %v5660
        %v5662 = vpop.f32.mrf.mxu0
        %5663 = vdwg.mxu0
        %5664 = vmatpush.bf16.msra.mxu0 %v5385
        %5665 = vmatpush.bf16.msra.mxu0 %v5381
        %5666 = vmatpush.bf16.msra.mxu0 %v5377
        %5667 = vmatpush.bf16.msra.mxu0 %v5373
        %5668 = vmatpush.bf16.msra.mxu0 %v5369
        %5669 = vmatpush.bf16.msra.mxu0 %v5365
        %5670 = vmatpush.bf16.msra.mxu0 %v5361
        %5671 = vmatpush.bf16.msra.mxu0 %v5357
        %5672 = vmatmul.bf16.gmra.mxu0 %v4839
        %v5673 = vpop.f32.mrf.mxu0
        %v5674 = vadd.f32 0.0, %v5673
        %v5675 = vpop.f32.mrf.mxu0
        %5676 = vdwg.mxu0
        %5677 = vmatpush.bf16.msra.mxu0 %v5417
        %5678 = vmatpush.bf16.msra.mxu0 %v5413
        %5679 = vmatpush.bf16.msra.mxu0 %v5409
        %5680 = vmatpush.bf16.msra.mxu0 %v5405
        %5681 = vmatpush.bf16.msra.mxu0 %v5401
        %5682 = vmatpush.bf16.msra.mxu0 %v5397
        %5683 = vmatpush.bf16.msra.mxu0 %v5393
        %5684 = vmatpush.bf16.msra.mxu0 %v5389
        %5685 = vmatmul.bf16.gmra.mxu0 %v4840
        %v5686 = vpop.f32.mrf.mxu0
        %v5687 = vadd.f32 %v5674, %v5686
        %v5688 = vpop.f32.mrf.mxu0
        %5689 = vdwg.mxu0
        %5690 = vmatpush.bf16.msra.mxu0 %v5449
        %5691 = vmatpush.bf16.msra.mxu0 %v5445
        %5692 = vmatpush.bf16.msra.mxu0 %v5441
        %5693 = vmatpush.bf16.msra.mxu0 %v5437
        %5694 = vmatpush.bf16.msra.mxu0 %v5433
        %5695 = vmatpush.bf16.msra.mxu0 %v5429
        %5696 = vmatpush.bf16.msra.mxu0 %v5425
        %5697 = vmatpush.bf16.msra.mxu0 %v5421
        %5698 = vmatmul.bf16.gmra.mxu0 %v4841
        %v5699 = vpop.f32.mrf.mxu0
        %v5700 = vadd.f32 %v5687, %v5699
        %v5701 = vpop.f32.mrf.mxu0
        %5702 = vdwg.mxu0
        %5703 = vmatpush.bf16.msra.mxu0 %v5481
        %5704 = vmatpush.bf16.msra.mxu0 %v5477
        %5705 = vmatpush.bf16.msra.mxu0 %v5473
        %5706 = vmatpush.bf16.msra.mxu0 %v5469
        %5707 = vmatpush.bf16.msra.mxu0 %v5465
        %5708 = vmatpush.bf16.msra.mxu0 %v5461
        %5709 = vmatpush.bf16.msra.mxu0 %v5457
        %5710 = vmatpush.bf16.msra.mxu0 %v5453
        %5711 = vmatmul.bf16.gmra.mxu0 %v4842
        %v5712 = vpop.f32.mrf.mxu0
        %v5713 = vadd.f32 %v5700, %v5712
        %v5714 = vpop.f32.mrf.mxu0
        %5715 = vdwg.mxu0
        %5716 = vmatpush.bf16.msra.mxu0 %v5386
        %5717 = vmatpush.bf16.msra.mxu0 %v5382
        %5718 = vmatpush.bf16.msra.mxu0 %v5378
        %5719 = vmatpush.bf16.msra.mxu0 %v5374
        %5720 = vmatpush.bf16.msra.mxu0 %v5370
        %5721 = vmatpush.bf16.msra.mxu0 %v5366
        %5722 = vmatpush.bf16.msra.mxu0 %v5362
        %5723 = vmatpush.bf16.msra.mxu0 %v5358
        %5724 = vmatmul.bf16.gmra.mxu0 %v4839
        %v5725 = vpop.f32.mrf.mxu0
        %v5726 = vadd.f32 0.0, %v5725
        %v5727 = vpop.f32.mrf.mxu0
        %5728 = vdwg.mxu0
        %5729 = vmatpush.bf16.msra.mxu0 %v5418
        %5730 = vmatpush.bf16.msra.mxu0 %v5414
        %5731 = vmatpush.bf16.msra.mxu0 %v5410
        %5732 = vmatpush.bf16.msra.mxu0 %v5406
        %5733 = vmatpush.bf16.msra.mxu0 %v5402
        %5734 = vmatpush.bf16.msra.mxu0 %v5398
        %5735 = vmatpush.bf16.msra.mxu0 %v5394
        %5736 = vmatpush.bf16.msra.mxu0 %v5390
        %5737 = vmatmul.bf16.gmra.mxu0 %v4840
        %v5738 = vpop.f32.mrf.mxu0
        %v5739 = vadd.f32 %v5726, %v5738
        %v5740 = vpop.f32.mrf.mxu0
        %5741 = vdwg.mxu0
        %5742 = vmatpush.bf16.msra.mxu0 %v5450
        %5743 = vmatpush.bf16.msra.mxu0 %v5446
        %5744 = vmatpush.bf16.msra.mxu0 %v5442
        %5745 = vmatpush.bf16.msra.mxu0 %v5438
        %5746 = vmatpush.bf16.msra.mxu0 %v5434
        %5747 = vmatpush.bf16.msra.mxu0 %v5430
        %5748 = vmatpush.bf16.msra.mxu0 %v5426
        %5749 = vmatpush.bf16.msra.mxu0 %v5422
        %5750 = vmatmul.bf16.gmra.mxu0 %v4841
        %v5751 = vpop.f32.mrf.mxu0
        %v5752 = vadd.f32 %v5739, %v5751
        %v5753 = vpop.f32.mrf.mxu0
        %5754 = vdwg.mxu0
        %5755 = vmatpush.bf16.msra.mxu0 %v5482
        %5756 = vmatpush.bf16.msra.mxu0 %v5478
        %5757 = vmatpush.bf16.msra.mxu0 %v5474
        %5758 = vmatpush.bf16.msra.mxu0 %v5470
        %5759 = vmatpush.bf16.msra.mxu0 %v5466
        %5760 = vmatpush.bf16.msra.mxu0 %v5462
        %5761 = vmatpush.bf16.msra.mxu0 %v5458
        %5762 = vmatpush.bf16.msra.mxu0 %v5454
        %5763 = vmatmul.bf16.gmra.mxu0 %v4842
        %v5764 = vpop.f32.mrf.mxu0
        %v5765 = vadd.f32 %v5752, %v5764
        %v5766 = vpop.f32.mrf.mxu0
        %5767 = vdwg.mxu0
        %5768 = vmatpush.bf16.msra.mxu0 %v5387
        %5769 = vmatpush.bf16.msra.mxu0 %v5383
        %5770 = vmatpush.bf16.msra.mxu0 %v5379
        %5771 = vmatpush.bf16.msra.mxu0 %v5375
        %5772 = vmatpush.bf16.msra.mxu0 %v5371
        %5773 = vmatpush.bf16.msra.mxu0 %v5367
        %5774 = vmatpush.bf16.msra.mxu0 %v5363
        %5775 = vmatpush.bf16.msra.mxu0 %v5359
        %5776 = vmatmul.bf16.gmra.mxu0 %v4839
        %v5777 = vpop.f32.mrf.mxu0
        %v5778 = vadd.f32 0.0, %v5777
        %v5779 = vpop.f32.mrf.mxu0
        %5780 = vdwg.mxu0
        %5781 = vmatpush.bf16.msra.mxu0 %v5419
        %5782 = vmatpush.bf16.msra.mxu0 %v5415
        %5783 = vmatpush.bf16.msra.mxu0 %v5411
        %5784 = vmatpush.bf16.msra.mxu0 %v5407
        %5785 = vmatpush.bf16.msra.mxu0 %v5403
        %5786 = vmatpush.bf16.msra.mxu0 %v5399
        %5787 = vmatpush.bf16.msra.mxu0 %v5395
        %5788 = vmatpush.bf16.msra.mxu0 %v5391
        %5789 = vmatmul.bf16.gmra.mxu0 %v4840
        %v5790 = vpop.f32.mrf.mxu0
        %v5791 = vadd.f32 %v5778, %v5790
        %v5792 = vpop.f32.mrf.mxu0
        %5793 = vdwg.mxu0
        %5794 = vmatpush.bf16.msra.mxu0 %v5451
        %5795 = vmatpush.bf16.msra.mxu0 %v5447
        %5796 = vmatpush.bf16.msra.mxu0 %v5443
        %5797 = vmatpush.bf16.msra.mxu0 %v5439
        %5798 = vmatpush.bf16.msra.mxu0 %v5435
        %5799 = vmatpush.bf16.msra.mxu0 %v5431
        %5800 = vmatpush.bf16.msra.mxu0 %v5427
        %5801 = vmatpush.bf16.msra.mxu0 %v5423
        %5802 = vmatmul.bf16.gmra.mxu0 %v4841
        %v5803 = vpop.f32.mrf.mxu0
        %v5804 = vadd.f32 %v5791, %v5803
        %v5805 = vpop.f32.mrf.mxu0
        %5806 = vdwg.mxu0
        %5807 = vmatpush.bf16.msra.mxu0 %v5483
        %5808 = vmatpush.bf16.msra.mxu0 %v5479
        %5809 = vmatpush.bf16.msra.mxu0 %v5475
        %5810 = vmatpush.bf16.msra.mxu0 %v5471
        %5811 = vmatpush.bf16.msra.mxu0 %v5467
        %5812 = vmatpush.bf16.msra.mxu0 %v5463
        %5813 = vmatpush.bf16.msra.mxu0 %v5459
        %5814 = vmatpush.bf16.msra.mxu0 %v5455
        %5815 = vmatmul.bf16.gmra.mxu0 %v4842
        %v5816 = vpop.f32.mrf.mxu0
        %v5817 = vadd.f32 %v5804, %v5816
        %v5818 = vpop.f32.mrf.mxu0
        %5819 = vdwg.mxu0
        %v5820 = vadd.f32 %v4778, %v5661
        %v5821 = vadd.f32 %v4779, %v5713
        %v5822 = vadd.f32 %v4780, %v5765
        %v5823 = vadd.f32 %v4781, %v5817
        %v5824 = vld [vmem:[#allocation14] sm:$0xf]
        %v5826 = vperm.slane %v5824, 0
        %v5827 = vperm.slane %v5824, 1
        %v5828 = vperm.slane %v5824, 2
        %v5829 = vperm.slane %v5824, 3
        %v5834 = vadd.f32 %v5820, %v5826
        %v5835 = vadd.f32 %v5821, %v5827
        %v5836 = vadd.f32 %v5822, %v5828
        %v5837 = vadd.f32 %v5823, %v5829
        %vm5838 = vcmp.gt.f32.partialorder %v5834, 0.0
        %vm5839 = vcmp.gt.f32.partialorder %v5835, 0.0
        %vm5840 = vcmp.gt.f32.partialorder %v5836, 0.0
        %vm5841 = vcmp.gt.f32.partialorder %v5837, 0.0
        %v5842 = vmul.f32 %v5834, 0.2
        %v5843 = vmul.f32 %v5835, 0.2
        %v5844 = vmul.f32 %v5836, 0.2
        %v5845 = vmul.f32 %v5837, 0.2
        %v5846 = vsel %vm5838, %v5834, %v5842
        %v5847 = vsel %vm5839, %v5835, %v5843
        %v5848 = vsel %vm5840, %v5836, %v5844
        %v5849 = vsel %vm5841, %v5837, %v5845
        %v5850 = vpack.c.bf16 %v5846, %v5846
        %v5851 = vpack.c.bf16 %v5847, %v5847
        %v5852 = vpack.c.bf16 %v5848, %v5848
        %v5853 = vpack.c.bf16 %v5849, %v5849
        %v5854 = vld [vmem:[#allocation16] sm:$0x3]
        %vm5855 = vcmask 64512
        %v5857 = vsel %vm5855, %v5854, 0
        %vm5859 = vcmask 1043456
        %v5861 = vsel %vm5859, %v5850, 0
        %v5864 = vsel %vm5859, %v5851, 0
        %v5867 = vsel %vm5859, %v5852, 0
        %v5870 = vsel %vm5859, %v5853, 0
        %5872 = vmatpush.bf16.msra.mxu0 0
        %5873 = vmatpush.bf16.msra.mxu0 0
        %5874 = vmatpush.bf16.msra.mxu0 0
        %5875 = vmatpush.bf16.msra.mxu0 0
        %5876 = vmatpush.bf16.msra.mxu0 0
        %5877 = vmatpush.bf16.msra.mxu0 0
        %5878 = vmatpush.bf16.msra.mxu0 0
        %5879 = vmatpush.bf16.msra.mxu0 %v5861
        %5880 = vmatmul.bf16.gmra.mxu0 %v5857
        %v5881 = vpop.f32.mrf.mxu0
        %v5882 = vadd.f32 0.0, %v5881
        %v5883 = vpop.f32.mrf.mxu0
        %5884 = vdwg.mxu0
        %5885 = vmatpush.bf16.msra.mxu0 0
        %5886 = vmatpush.bf16.msra.mxu0 0
        %5887 = vmatpush.bf16.msra.mxu0 0
        %5888 = vmatpush.bf16.msra.mxu0 0
        %5889 = vmatpush.bf16.msra.mxu0 0
        %5890 = vmatpush.bf16.msra.mxu0 0
        %5891 = vmatpush.bf16.msra.mxu0 0
        %5892 = vmatpush.bf16.msra.mxu0 %v5864
        %5893 = vmatmul.bf16.gmra.mxu0 %v5857
        %v5894 = vpop.f32.mrf.mxu0
        %v5895 = vadd.f32 0.0, %v5894
        %v5896 = vpop.f32.mrf.mxu0
        %5897 = vdwg.mxu0
        %5898 = vmatpush.bf16.msra.mxu0 0
        %5899 = vmatpush.bf16.msra.mxu0 0
        %5900 = vmatpush.bf16.msra.mxu0 0
        %5901 = vmatpush.bf16.msra.mxu0 0
        %5902 = vmatpush.bf16.msra.mxu0 0
        %5903 = vmatpush.bf16.msra.mxu0 0
        %5904 = vmatpush.bf16.msra.mxu0 0
        %5905 = vmatpush.bf16.msra.mxu0 %v5867
        %5906 = vmatmul.bf16.gmra.mxu0 %v5857
        %v5907 = vpop.f32.mrf.mxu0
        %v5908 = vadd.f32 0.0, %v5907
        %v5909 = vpop.f32.mrf.mxu0
        %5910 = vdwg.mxu0
        %5911 = vmatpush.bf16.msra.mxu0 0
        %5912 = vmatpush.bf16.msra.mxu0 0
        %5913 = vmatpush.bf16.msra.mxu0 0
        %5914 = vmatpush.bf16.msra.mxu0 0
        %5915 = vmatpush.bf16.msra.mxu0 0
        %5916 = vmatpush.bf16.msra.mxu0 0
        %5917 = vmatpush.bf16.msra.mxu0 0
        %5918 = vmatpush.bf16.msra.mxu0 %v5870
        %5919 = vmatmul.bf16.gmra.mxu0 %v5857
        %v5920 = vpop.f32.mrf.mxu0
        %v5921 = vadd.f32 0.0, %v5920
        %v5922 = vpop.f32.mrf.mxu0
        %5923 = vdwg.mxu0
        %v5924 = vpack.c.bf16 %v5882, %v5882
        %v5925 = vpack.c.bf16 %v5895, %v5895
        %v5926 = vpack.c.bf16 %v5908, %v5908
        %v5927 = vpack.c.bf16 %v5921, %v5921
        %v5928 = vld [vmem:[#allocation17] sm:$0xff]
        %v5929 = vld [vmem:[#allocation17 + $0x8] sm:$0xff]
        %v5930 = vld [vmem:[#allocation17 + $0x10] sm:$0xff]
        %v5931 = vld [vmem:[#allocation17 + $0x18] sm:$0xff]
        %v5932 = vld [vmem:[#allocation17 + $0x20] sm:$0xff]
        %v5933 = vld [vmem:[#allocation17 + $0x28] sm:$0xff]
        %v5934 = vld [vmem:[#allocation17 + $0x30] sm:$0xff]
        %v5935 = vld [vmem:[#allocation17 + $0x38] sm:$0xff]
        %v5936 = vld [vmem:[#allocation17 + $0x40] sm:$0xff]
        %v5937 = vld [vmem:[#allocation17 + $0x48] sm:$0xff]
        %v5938 = vld [vmem:[#allocation17 + $0x50] sm:$0xff]
        %v5939 = vld [vmem:[#allocation17 + $0x58] sm:$0xff]
        %v5940 = vld [vmem:[#allocation17 + $0x60] sm:$0xff]
        %v5941 = vld [vmem:[#allocation17 + $0x68] sm:$0xff]
        %v5942 = vld [vmem:[#allocation17 + $0x70] sm:$0xff]
        %v5943 = vld [vmem:[#allocation17 + $0x78] sm:$0xff]
        %v5944 = vld [vmem:[#allocation17 + $0x80] sm:$0xff]
        %v5945 = vld [vmem:[#allocation17 + $0x88] sm:$0xff]
        %v5946 = vld [vmem:[#allocation17 + $0x90] sm:$0xff]
        %v5947 = vld [vmem:[#allocation17 + $0x98] sm:$0xff]
        %v5948 = vld [vmem:[#allocation17 + $0xa0] sm:$0xff]
        %v5949 = vld [vmem:[#allocation17 + $0xa8] sm:$0xff]
        %v5950 = vld [vmem:[#allocation17 + $0xb0] sm:$0xff]
        %v5951 = vld [vmem:[#allocation17 + $0xb8] sm:$0xff]
        %v5952 = vld [vmem:[#allocation17 + $0xc0] sm:$0xff]
        %v5953 = vld [vmem:[#allocation17 + $0xc8] sm:$0xff]
        %v5954 = vld [vmem:[#allocation17 + $0xd0] sm:$0xff]
        %v5955 = vld [vmem:[#allocation17 + $0xd8] sm:$0xff]
        %v5956 = vld [vmem:[#allocation17 + $0xe0] sm:$0xff]
        %v5957 = vld [vmem:[#allocation17 + $0xe8] sm:$0xff]
        %v5958 = vld [vmem:[#allocation17 + $0xf0] sm:$0xff]
        %v5959 = vld [vmem:[#allocation17 + $0xf8] sm:$0xff]
        %v5960 = vld [vmem:[#allocation17 + $0x100] sm:$0xff]
        %v5961 = vld [vmem:[#allocation17 + $0x108] sm:$0xff]
        %v5962 = vld [vmem:[#allocation17 + $0x110] sm:$0xff]
        %v5963 = vld [vmem:[#allocation17 + $0x118] sm:$0xff]
        %v5964 = vld [vmem:[#allocation17 + $0x120] sm:$0xff]
        %v5965 = vld [vmem:[#allocation17 + $0x128] sm:$0xff]
        %v5966 = vld [vmem:[#allocation17 + $0x130] sm:$0xff]
        %v5967 = vld [vmem:[#allocation17 + $0x138] sm:$0xff]
        %v5968 = vld [vmem:[#allocation17 + $0x140] sm:$0xff]
        %v5969 = vld [vmem:[#allocation17 + $0x148] sm:$0xff]
        %v5970 = vld [vmem:[#allocation17 + $0x150] sm:$0xff]
        %v5971 = vld [vmem:[#allocation17 + $0x158] sm:$0xff]
        %v5972 = vld [vmem:[#allocation17 + $0x160] sm:$0xff]
        %v5973 = vld [vmem:[#allocation17 + $0x168] sm:$0xff]
        %v5974 = vld [vmem:[#allocation17 + $0x170] sm:$0xff]
        %v5975 = vld [vmem:[#allocation17 + $0x178] sm:$0xff]
        %v5976 = vld [vmem:[#allocation17 + $0x180] sm:$0xff]
        %v5977 = vld [vmem:[#allocation17 + $0x188] sm:$0xff]
        %v5978 = vld [vmem:[#allocation17 + $0x190] sm:$0xff]
        %v5979 = vld [vmem:[#allocation17 + $0x198] sm:$0xff]
        %v5980 = vld [vmem:[#allocation17 + $0x1a0] sm:$0xff]
        %v5981 = vld [vmem:[#allocation17 + $0x1a8] sm:$0xff]
        %v5982 = vld [vmem:[#allocation17 + $0x1b0] sm:$0xff]
        %v5983 = vld [vmem:[#allocation17 + $0x1b8] sm:$0xff]
        %v5984 = vld [vmem:[#allocation17 + $0x1c0] sm:$0xff]
        %v5985 = vld [vmem:[#allocation17 + $0x1c8] sm:$0xff]
        %v5986 = vld [vmem:[#allocation17 + $0x1d0] sm:$0xff]
        %v5987 = vld [vmem:[#allocation17 + $0x1d8] sm:$0xff]
        %v5988 = vld [vmem:[#allocation17 + $0x1e0] sm:$0xff]
        %v5989 = vld [vmem:[#allocation17 + $0x1e8] sm:$0xff]
        %v5990 = vld [vmem:[#allocation17 + $0x1f0] sm:$0xff]
        %v5991 = vld [vmem:[#allocation17 + $0x1f8] sm:$0xff]
        %v5992 = vld [vmem:[#allocation17 + $0x200] sm:$0xff]
        %v5993 = vld [vmem:[#allocation17 + $0x208] sm:$0xff]
        %v5994 = vld [vmem:[#allocation17 + $0x210] sm:$0xff]
        %v5995 = vld [vmem:[#allocation17 + $0x218] sm:$0xff]
        %v5996 = vld [vmem:[#allocation17 + $0x220] sm:$0xff]
        %v5997 = vld [vmem:[#allocation17 + $0x228] sm:$0xff]
        %v5998 = vld [vmem:[#allocation17 + $0x230] sm:$0xff]
        %v5999 = vld [vmem:[#allocation17 + $0x238] sm:$0xff]
        %v6000 = vld [vmem:[#allocation17 + $0x240] sm:$0xff]
        %v6001 = vld [vmem:[#allocation17 + $0x248] sm:$0xff]
        %v6002 = vld [vmem:[#allocation17 + $0x250] sm:$0xff]
        %v6003 = vld [vmem:[#allocation17 + $0x258] sm:$0xff]
        %v6004 = vld [vmem:[#allocation17 + $0x260] sm:$0xff]
        %v6005 = vld [vmem:[#allocation17 + $0x268] sm:$0xff]
        %v6006 = vld [vmem:[#allocation17 + $0x270] sm:$0xff]
        %v6007 = vld [vmem:[#allocation17 + $0x278] sm:$0xff]
        %v6008 = vld [vmem:[#allocation17 + $0x280] sm:$0xff]
        %v6009 = vld [vmem:[#allocation17 + $0x288] sm:$0xff]
        %v6010 = vld [vmem:[#allocation17 + $0x290] sm:$0xff]
        %v6011 = vld [vmem:[#allocation17 + $0x298] sm:$0xff]
        %v6012 = vld [vmem:[#allocation17 + $0x2a0] sm:$0xff]
        %v6013 = vld [vmem:[#allocation17 + $0x2a8] sm:$0xff]
        %v6014 = vld [vmem:[#allocation17 + $0x2b0] sm:$0xff]
        %v6015 = vld [vmem:[#allocation17 + $0x2b8] sm:$0xff]
        %v6016 = vld [vmem:[#allocation17 + $0x2c0] sm:$0xff]
        %v6017 = vld [vmem:[#allocation17 + $0x2c8] sm:$0xff]
        %v6018 = vld [vmem:[#allocation17 + $0x2d0] sm:$0xff]
        %v6019 = vld [vmem:[#allocation17 + $0x2d8] sm:$0xff]
        %v6020 = vld [vmem:[#allocation17 + $0x2e0] sm:$0xff]
        %v6021 = vld [vmem:[#allocation17 + $0x2e8] sm:$0xff]
        %v6022 = vld [vmem:[#allocation17 + $0x2f0] sm:$0xff]
        %v6023 = vld [vmem:[#allocation17 + $0x2f8] sm:$0xff]
        %v6024 = vld [vmem:[#allocation17 + $0x300] sm:$0xff]
        %v6025 = vld [vmem:[#allocation17 + $0x308] sm:$0xff]
        %v6026 = vld [vmem:[#allocation17 + $0x310] sm:$0xff]
        %v6027 = vld [vmem:[#allocation17 + $0x318] sm:$0xff]
        %v6028 = vld [vmem:[#allocation17 + $0x320] sm:$0xff]
        %v6029 = vld [vmem:[#allocation17 + $0x328] sm:$0xff]
        %v6030 = vld [vmem:[#allocation17 + $0x330] sm:$0xff]
        %v6031 = vld [vmem:[#allocation17 + $0x338] sm:$0xff]
        %v6032 = vld [vmem:[#allocation17 + $0x340] sm:$0xff]
        %v6033 = vld [vmem:[#allocation17 + $0x348] sm:$0xff]
        %v6034 = vld [vmem:[#allocation17 + $0x350] sm:$0xff]
        %v6035 = vld [vmem:[#allocation17 + $0x358] sm:$0xff]
        %v6036 = vld [vmem:[#allocation17 + $0x360] sm:$0xff]
        %v6037 = vld [vmem:[#allocation17 + $0x368] sm:$0xff]
        %v6038 = vld [vmem:[#allocation17 + $0x370] sm:$0xff]
        %v6039 = vld [vmem:[#allocation17 + $0x378] sm:$0xff]
        %v6040 = vld [vmem:[#allocation17 + $0x380] sm:$0xff]
        %v6041 = vld [vmem:[#allocation17 + $0x388] sm:$0xff]
        %v6042 = vld [vmem:[#allocation17 + $0x390] sm:$0xff]
        %v6043 = vld [vmem:[#allocation17 + $0x398] sm:$0xff]
        %v6044 = vld [vmem:[#allocation17 + $0x3a0] sm:$0xff]
        %v6045 = vld [vmem:[#allocation17 + $0x3a8] sm:$0xff]
        %v6046 = vld [vmem:[#allocation17 + $0x3b0] sm:$0xff]
        %v6047 = vld [vmem:[#allocation17 + $0x3b8] sm:$0xff]
        %v6048 = vld [vmem:[#allocation17 + $0x3c0] sm:$0xff]
        %v6049 = vld [vmem:[#allocation17 + $0x3c8] sm:$0xff]
        %v6050 = vld [vmem:[#allocation17 + $0x3d0] sm:$0xff]
        %v6051 = vld [vmem:[#allocation17 + $0x3d8] sm:$0xff]
        %v6052 = vld [vmem:[#allocation17 + $0x3e0] sm:$0xff]
        %v6053 = vld [vmem:[#allocation17 + $0x3e8] sm:$0xff]
        %v6054 = vld [vmem:[#allocation17 + $0x3f0] sm:$0xff]
        %v6055 = vld [vmem:[#allocation17 + $0x3f8] sm:$0xff]
        %s6056 = scalar_lea.vmem [#allocation16], 2
        %v6057 = vld [vmem:[%s6056] sm:$0x3]
        %v6059 = vsel %vm5855, %v6057, 0
        %6061 = vmatpush.bf16.msra.mxu0 0
        %6062 = vmatpush.bf16.msra.mxu0 0
        %6063 = vmatpush.bf16.msra.mxu0 0
        %6064 = vmatpush.bf16.msra.mxu0 0
        %6065 = vmatpush.bf16.msra.mxu0 0
        %6066 = vmatpush.bf16.msra.mxu0 0
        %6067 = vmatpush.bf16.msra.mxu0 0
        %6068 = vmatpush.bf16.msra.mxu0 %v5861
        %6069 = vmatmul.bf16.gmra.mxu0 %v6059
        %v6070 = vpop.f32.mrf.mxu0
        %v6071 = vadd.f32 0.0, %v6070
        %v6072 = vpop.f32.mrf.mxu0
        %6073 = vdwg.mxu0
        %6074 = vmatpush.bf16.msra.mxu0 0
        %6075 = vmatpush.bf16.msra.mxu0 0
        %6076 = vmatpush.bf16.msra.mxu0 0
        %6077 = vmatpush.bf16.msra.mxu0 0
        %6078 = vmatpush.bf16.msra.mxu0 0
        %6079 = vmatpush.bf16.msra.mxu0 0
        %6080 = vmatpush.bf16.msra.mxu0 0
        %6081 = vmatpush.bf16.msra.mxu0 %v5864
        %6082 = vmatmul.bf16.gmra.mxu0 %v6059
        %v6083 = vpop.f32.mrf.mxu0
        %v6084 = vadd.f32 0.0, %v6083
        %v6085 = vpop.f32.mrf.mxu0
        %6086 = vdwg.mxu0
        %6087 = vmatpush.bf16.msra.mxu0 0
        %6088 = vmatpush.bf16.msra.mxu0 0
        %6089 = vmatpush.bf16.msra.mxu0 0
        %6090 = vmatpush.bf16.msra.mxu0 0
        %6091 = vmatpush.bf16.msra.mxu0 0
        %6092 = vmatpush.bf16.msra.mxu0 0
        %6093 = vmatpush.bf16.msra.mxu0 0
        %6094 = vmatpush.bf16.msra.mxu0 %v5867
        %6095 = vmatmul.bf16.gmra.mxu0 %v6059
        %v6096 = vpop.f32.mrf.mxu0
        %v6097 = vadd.f32 0.0, %v6096
        %v6098 = vpop.f32.mrf.mxu0
        %6099 = vdwg.mxu0
        %6100 = vmatpush.bf16.msra.mxu0 0
        %6101 = vmatpush.bf16.msra.mxu0 0
        %6102 = vmatpush.bf16.msra.mxu0 0
        %6103 = vmatpush.bf16.msra.mxu0 0
        %6104 = vmatpush.bf16.msra.mxu0 0
        %6105 = vmatpush.bf16.msra.mxu0 0
        %6106 = vmatpush.bf16.msra.mxu0 0
        %6107 = vmatpush.bf16.msra.mxu0 %v5870
        %6108 = vmatmul.bf16.gmra.mxu0 %v6059
        %v6109 = vpop.f32.mrf.mxu0
        %v6110 = vadd.f32 0.0, %v6109
        %v6111 = vpop.f32.mrf.mxu0
        %6112 = vdwg.mxu0
        %v6113 = vpack.c.bf16 %v6071, %v6071
        %v6114 = vpack.c.bf16 %v6084, %v6084
        %v6115 = vpack.c.bf16 %v6097, %v6097
        %v6116 = vpack.c.bf16 %v6110, %v6110
        %s6117 = scalar_lea.vmem [#allocation17], 1024
        %v6118 = vld [vmem:[%s6117] sm:$0xff]
        %v6119 = vld [vmem:[%s6117 + $0x8] sm:$0xff]
        %v6120 = vld [vmem:[%s6117 + $0x10] sm:$0xff]
        %v6121 = vld [vmem:[%s6117 + $0x18] sm:$0xff]
        %v6122 = vld [vmem:[%s6117 + $0x20] sm:$0xff]
        %v6123 = vld [vmem:[%s6117 + $0x28] sm:$0xff]
        %v6124 = vld [vmem:[%s6117 + $0x30] sm:$0xff]
        %v6125 = vld [vmem:[%s6117 + $0x38] sm:$0xff]
        %v6126 = vld [vmem:[%s6117 + $0x40] sm:$0xff]
        %v6127 = vld [vmem:[%s6117 + $0x48] sm:$0xff]
        %v6128 = vld [vmem:[%s6117 + $0x50] sm:$0xff]
        %v6129 = vld [vmem:[%s6117 + $0x58] sm:$0xff]
        %v6130 = vld [vmem:[%s6117 + $0x60] sm:$0xff]
        %v6131 = vld [vmem:[%s6117 + $0x68] sm:$0xff]
        %v6132 = vld [vmem:[%s6117 + $0x70] sm:$0xff]
        %v6133 = vld [vmem:[%s6117 + $0x78] sm:$0xff]
        %v6134 = vld [vmem:[%s6117 + $0x80] sm:$0xff]
        %v6135 = vld [vmem:[%s6117 + $0x88] sm:$0xff]
        %v6136 = vld [vmem:[%s6117 + $0x90] sm:$0xff]
        %v6137 = vld [vmem:[%s6117 + $0x98] sm:$0xff]
        %v6138 = vld [vmem:[%s6117 + $0xa0] sm:$0xff]
        %v6139 = vld [vmem:[%s6117 + $0xa8] sm:$0xff]
        %v6140 = vld [vmem:[%s6117 + $0xb0] sm:$0xff]
        %v6141 = vld [vmem:[%s6117 + $0xb8] sm:$0xff]
        %v6142 = vld [vmem:[%s6117 + $0xc0] sm:$0xff]
        %v6143 = vld [vmem:[%s6117 + $0xc8] sm:$0xff]
        %v6144 = vld [vmem:[%s6117 + $0xd0] sm:$0xff]
        %v6145 = vld [vmem:[%s6117 + $0xd8] sm:$0xff]
        %v6146 = vld [vmem:[%s6117 + $0xe0] sm:$0xff]
        %v6147 = vld [vmem:[%s6117 + $0xe8] sm:$0xff]
        %v6148 = vld [vmem:[%s6117 + $0xf0] sm:$0xff]
        %v6149 = vld [vmem:[%s6117 + $0xf8] sm:$0xff]
        %v6150 = vld [vmem:[%s6117 + $0x100] sm:$0xff]
        %v6151 = vld [vmem:[%s6117 + $0x108] sm:$0xff]
        %v6152 = vld [vmem:[%s6117 + $0x110] sm:$0xff]
        %v6153 = vld [vmem:[%s6117 + $0x118] sm:$0xff]
        %v6154 = vld [vmem:[%s6117 + $0x120] sm:$0xff]
        %v6155 = vld [vmem:[%s6117 + $0x128] sm:$0xff]
        %v6156 = vld [vmem:[%s6117 + $0x130] sm:$0xff]
        %v6157 = vld [vmem:[%s6117 + $0x138] sm:$0xff]
        %v6158 = vld [vmem:[%s6117 + $0x140] sm:$0xff]
        %v6159 = vld [vmem:[%s6117 + $0x148] sm:$0xff]
        %v6160 = vld [vmem:[%s6117 + $0x150] sm:$0xff]
        %v6161 = vld [vmem:[%s6117 + $0x158] sm:$0xff]
        %v6162 = vld [vmem:[%s6117 + $0x160] sm:$0xff]
        %v6163 = vld [vmem:[%s6117 + $0x168] sm:$0xff]
        %v6164 = vld [vmem:[%s6117 + $0x170] sm:$0xff]
        %v6165 = vld [vmem:[%s6117 + $0x178] sm:$0xff]
        %v6166 = vld [vmem:[%s6117 + $0x180] sm:$0xff]
        %v6167 = vld [vmem:[%s6117 + $0x188] sm:$0xff]
        %v6168 = vld [vmem:[%s6117 + $0x190] sm:$0xff]
        %v6169 = vld [vmem:[%s6117 + $0x198] sm:$0xff]
        %v6170 = vld [vmem:[%s6117 + $0x1a0] sm:$0xff]
        %v6171 = vld [vmem:[%s6117 + $0x1a8] sm:$0xff]
        %v6172 = vld [vmem:[%s6117 + $0x1b0] sm:$0xff]
        %v6173 = vld [vmem:[%s6117 + $0x1b8] sm:$0xff]
        %v6174 = vld [vmem:[%s6117 + $0x1c0] sm:$0xff]
        %v6175 = vld [vmem:[%s6117 + $0x1c8] sm:$0xff]
        %v6176 = vld [vmem:[%s6117 + $0x1d0] sm:$0xff]
        %v6177 = vld [vmem:[%s6117 + $0x1d8] sm:$0xff]
        %v6178 = vld [vmem:[%s6117 + $0x1e0] sm:$0xff]
        %v6179 = vld [vmem:[%s6117 + $0x1e8] sm:$0xff]
        %v6180 = vld [vmem:[%s6117 + $0x1f0] sm:$0xff]
        %v6181 = vld [vmem:[%s6117 + $0x1f8] sm:$0xff]
        %v6182 = vld [vmem:[%s6117 + $0x200] sm:$0xff]
        %v6183 = vld [vmem:[%s6117 + $0x208] sm:$0xff]
        %v6184 = vld [vmem:[%s6117 + $0x210] sm:$0xff]
        %v6185 = vld [vmem:[%s6117 + $0x218] sm:$0xff]
        %v6186 = vld [vmem:[%s6117 + $0x220] sm:$0xff]
        %v6187 = vld [vmem:[%s6117 + $0x228] sm:$0xff]
        %v6188 = vld [vmem:[%s6117 + $0x230] sm:$0xff]
        %v6189 = vld [vmem:[%s6117 + $0x238] sm:$0xff]
        %v6190 = vld [vmem:[%s6117 + $0x240] sm:$0xff]
        %v6191 = vld [vmem:[%s6117 + $0x248] sm:$0xff]
        %v6192 = vld [vmem:[%s6117 + $0x250] sm:$0xff]
        %v6193 = vld [vmem:[%s6117 + $0x258] sm:$0xff]
        %v6194 = vld [vmem:[%s6117 + $0x260] sm:$0xff]
        %v6195 = vld [vmem:[%s6117 + $0x268] sm:$0xff]
        %v6196 = vld [vmem:[%s6117 + $0x270] sm:$0xff]
        %v6197 = vld [vmem:[%s6117 + $0x278] sm:$0xff]
        %v6198 = vld [vmem:[%s6117 + $0x280] sm:$0xff]
        %v6199 = vld [vmem:[%s6117 + $0x288] sm:$0xff]
        %v6200 = vld [vmem:[%s6117 + $0x290] sm:$0xff]
        %v6201 = vld [vmem:[%s6117 + $0x298] sm:$0xff]
        %v6202 = vld [vmem:[%s6117 + $0x2a0] sm:$0xff]
        %v6203 = vld [vmem:[%s6117 + $0x2a8] sm:$0xff]
        %v6204 = vld [vmem:[%s6117 + $0x2b0] sm:$0xff]
        %v6205 = vld [vmem:[%s6117 + $0x2b8] sm:$0xff]
        %v6206 = vld [vmem:[%s6117 + $0x2c0] sm:$0xff]
        %v6207 = vld [vmem:[%s6117 + $0x2c8] sm:$0xff]
        %v6208 = vld [vmem:[%s6117 + $0x2d0] sm:$0xff]
        %v6209 = vld [vmem:[%s6117 + $0x2d8] sm:$0xff]
        %v6210 = vld [vmem:[%s6117 + $0x2e0] sm:$0xff]
        %v6211 = vld [vmem:[%s6117 + $0x2e8] sm:$0xff]
        %v6212 = vld [vmem:[%s6117 + $0x2f0] sm:$0xff]
        %v6213 = vld [vmem:[%s6117 + $0x2f8] sm:$0xff]
        %v6214 = vld [vmem:[%s6117 + $0x300] sm:$0xff]
        %v6215 = vld [vmem:[%s6117 + $0x308] sm:$0xff]
        %v6216 = vld [vmem:[%s6117 + $0x310] sm:$0xff]
        %v6217 = vld [vmem:[%s6117 + $0x318] sm:$0xff]
        %v6218 = vld [vmem:[%s6117 + $0x320] sm:$0xff]
        %v6219 = vld [vmem:[%s6117 + $0x328] sm:$0xff]
        %v6220 = vld [vmem:[%s6117 + $0x330] sm:$0xff]
        %v6221 = vld [vmem:[%s6117 + $0x338] sm:$0xff]
        %v6222 = vld [vmem:[%s6117 + $0x340] sm:$0xff]
        %v6223 = vld [vmem:[%s6117 + $0x348] sm:$0xff]
        %v6224 = vld [vmem:[%s6117 + $0x350] sm:$0xff]
        %v6225 = vld [vmem:[%s6117 + $0x358] sm:$0xff]
        %v6226 = vld [vmem:[%s6117 + $0x360] sm:$0xff]
        %v6227 = vld [vmem:[%s6117 + $0x368] sm:$0xff]
        %v6228 = vld [vmem:[%s6117 + $0x370] sm:$0xff]
        %v6229 = vld [vmem:[%s6117 + $0x378] sm:$0xff]
        %v6230 = vld [vmem:[%s6117 + $0x380] sm:$0xff]
        %v6231 = vld [vmem:[%s6117 + $0x388] sm:$0xff]
        %v6232 = vld [vmem:[%s6117 + $0x390] sm:$0xff]
        %v6233 = vld [vmem:[%s6117 + $0x398] sm:$0xff]
        %v6234 = vld [vmem:[%s6117 + $0x3a0] sm:$0xff]
        %v6235 = vld [vmem:[%s6117 + $0x3a8] sm:$0xff]
        %v6236 = vld [vmem:[%s6117 + $0x3b0] sm:$0xff]
        %v6237 = vld [vmem:[%s6117 + $0x3b8] sm:$0xff]
        %v6238 = vld [vmem:[%s6117 + $0x3c0] sm:$0xff]
        %v6239 = vld [vmem:[%s6117 + $0x3c8] sm:$0xff]
        %v6240 = vld [vmem:[%s6117 + $0x3d0] sm:$0xff]
        %v6241 = vld [vmem:[%s6117 + $0x3d8] sm:$0xff]
        %v6242 = vld [vmem:[%s6117 + $0x3e0] sm:$0xff]
        %v6243 = vld [vmem:[%s6117 + $0x3e8] sm:$0xff]
        %v6244 = vld [vmem:[%s6117 + $0x3f0] sm:$0xff]
        %v6245 = vld [vmem:[%s6117 + $0x3f8] sm:$0xff]
        %v6374 = vunpack.c.l.b16 %v6118
        %v6375 = vunpack.c.h.b16 %v6118
        %v6376 = vunpack.c.l.b16 %v6119
        %v6377 = vunpack.c.h.b16 %v6119
        %v6378 = vunpack.c.l.b16 %v6120
        %v6379 = vunpack.c.h.b16 %v6120
        %v6380 = vunpack.c.l.b16 %v6121
        %v6381 = vunpack.c.h.b16 %v6121
        %v6382 = vunpack.c.l.b16 %v6122
        %v6383 = vunpack.c.h.b16 %v6122
        %v6384 = vunpack.c.l.b16 %v6123
        %v6385 = vunpack.c.h.b16 %v6123
        %v6386 = vunpack.c.l.b16 %v6124
        %v6387 = vunpack.c.h.b16 %v6124
        %v6388 = vunpack.c.l.b16 %v6125
        %v6389 = vunpack.c.h.b16 %v6125
        %v6390 = vunpack.c.l.b16 %v6126
        %v6391 = vunpack.c.h.b16 %v6126
        %v6392 = vunpack.c.l.b16 %v6127
        %v6393 = vunpack.c.h.b16 %v6127
        %v6394 = vunpack.c.l.b16 %v6128
        %v6395 = vunpack.c.h.b16 %v6128
        %v6396 = vunpack.c.l.b16 %v6129
        %v6397 = vunpack.c.h.b16 %v6129
        %v6398 = vunpack.c.l.b16 %v6130
        %v6399 = vunpack.c.h.b16 %v6130
        %v6400 = vunpack.c.l.b16 %v6131
        %v6401 = vunpack.c.h.b16 %v6131
        %v6402 = vunpack.c.l.b16 %v6132
        %v6403 = vunpack.c.h.b16 %v6132
        %v6404 = vunpack.c.l.b16 %v6133
        %v6405 = vunpack.c.h.b16 %v6133
        %v6406 = vunpack.c.l.b16 %v6134
        %v6407 = vunpack.c.h.b16 %v6134
        %v6408 = vunpack.c.l.b16 %v6135
        %v6409 = vunpack.c.h.b16 %v6135
        %v6410 = vunpack.c.l.b16 %v6136
        %v6411 = vunpack.c.h.b16 %v6136
        %v6412 = vunpack.c.l.b16 %v6137
        %v6413 = vunpack.c.h.b16 %v6137
        %v6414 = vunpack.c.l.b16 %v6138
        %v6415 = vunpack.c.h.b16 %v6138
        %v6416 = vunpack.c.l.b16 %v6139
        %v6417 = vunpack.c.h.b16 %v6139
        %v6418 = vunpack.c.l.b16 %v6140
        %v6419 = vunpack.c.h.b16 %v6140
        %v6420 = vunpack.c.l.b16 %v6141
        %v6421 = vunpack.c.h.b16 %v6141
        %v6422 = vunpack.c.l.b16 %v6142
        %v6423 = vunpack.c.h.b16 %v6142
        %v6424 = vunpack.c.l.b16 %v6143
        %v6425 = vunpack.c.h.b16 %v6143
        %v6426 = vunpack.c.l.b16 %v6144
        %v6427 = vunpack.c.h.b16 %v6144
        %v6428 = vunpack.c.l.b16 %v6145
        %v6429 = vunpack.c.h.b16 %v6145
        %v6430 = vunpack.c.l.b16 %v6146
        %v6431 = vunpack.c.h.b16 %v6146
        %v6432 = vunpack.c.l.b16 %v6147
        %v6433 = vunpack.c.h.b16 %v6147
        %v6434 = vunpack.c.l.b16 %v6148
        %v6435 = vunpack.c.h.b16 %v6148
        %v6436 = vunpack.c.l.b16 %v6149
        %v6437 = vunpack.c.h.b16 %v6149
        %v6438 = vunpack.c.l.b16 %v6150
        %v6439 = vunpack.c.h.b16 %v6150
        %v6440 = vunpack.c.l.b16 %v6151
        %v6441 = vunpack.c.h.b16 %v6151
        %v6442 = vunpack.c.l.b16 %v6152
        %v6443 = vunpack.c.h.b16 %v6152
        %v6444 = vunpack.c.l.b16 %v6153
        %v6445 = vunpack.c.h.b16 %v6153
        %v6446 = vunpack.c.l.b16 %v6154
        %v6447 = vunpack.c.h.b16 %v6154
        %v6448 = vunpack.c.l.b16 %v6155
        %v6449 = vunpack.c.h.b16 %v6155
        %v6450 = vunpack.c.l.b16 %v6156
        %v6451 = vunpack.c.h.b16 %v6156
        %v6452 = vunpack.c.l.b16 %v6157
        %v6453 = vunpack.c.h.b16 %v6157
        %v6454 = vunpack.c.l.b16 %v6158
        %v6455 = vunpack.c.h.b16 %v6158
        %v6456 = vunpack.c.l.b16 %v6159
        %v6457 = vunpack.c.h.b16 %v6159
        %v6458 = vunpack.c.l.b16 %v6160
        %v6459 = vunpack.c.h.b16 %v6160
        %v6460 = vunpack.c.l.b16 %v6161
        %v6461 = vunpack.c.h.b16 %v6161
        %v6462 = vunpack.c.l.b16 %v6162
        %v6463 = vunpack.c.h.b16 %v6162
        %v6464 = vunpack.c.l.b16 %v6163
        %v6465 = vunpack.c.h.b16 %v6163
        %v6466 = vunpack.c.l.b16 %v6164
        %v6467 = vunpack.c.h.b16 %v6164
        %v6468 = vunpack.c.l.b16 %v6165
        %v6469 = vunpack.c.h.b16 %v6165
        %v6470 = vunpack.c.l.b16 %v6166
        %v6471 = vunpack.c.h.b16 %v6166
        %v6472 = vunpack.c.l.b16 %v6167
        %v6473 = vunpack.c.h.b16 %v6167
        %v6474 = vunpack.c.l.b16 %v6168
        %v6475 = vunpack.c.h.b16 %v6168
        %v6476 = vunpack.c.l.b16 %v6169
        %v6477 = vunpack.c.h.b16 %v6169
        %v6478 = vunpack.c.l.b16 %v6170
        %v6479 = vunpack.c.h.b16 %v6170
        %v6480 = vunpack.c.l.b16 %v6171
        %v6481 = vunpack.c.h.b16 %v6171
        %v6482 = vunpack.c.l.b16 %v6172
        %v6483 = vunpack.c.h.b16 %v6172
        %v6484 = vunpack.c.l.b16 %v6173
        %v6485 = vunpack.c.h.b16 %v6173
        %v6486 = vunpack.c.l.b16 %v6174
        %v6487 = vunpack.c.h.b16 %v6174
        %v6488 = vunpack.c.l.b16 %v6175
        %v6489 = vunpack.c.h.b16 %v6175
        %v6490 = vunpack.c.l.b16 %v6176
        %v6491 = vunpack.c.h.b16 %v6176
        %v6492 = vunpack.c.l.b16 %v6177
        %v6493 = vunpack.c.h.b16 %v6177
        %v6494 = vunpack.c.l.b16 %v6178
        %v6495 = vunpack.c.h.b16 %v6178
        %v6496 = vunpack.c.l.b16 %v6179
        %v6497 = vunpack.c.h.b16 %v6179
        %v6498 = vunpack.c.l.b16 %v6180
        %v6499 = vunpack.c.h.b16 %v6180
        %v6500 = vunpack.c.l.b16 %v6181
        %v6501 = vunpack.c.h.b16 %v6181
        %v6502 = vunpack.c.l.b16 %v6182
        %v6503 = vunpack.c.h.b16 %v6182
        %v6504 = vunpack.c.l.b16 %v6183
        %v6505 = vunpack.c.h.b16 %v6183
        %v6506 = vunpack.c.l.b16 %v6184
        %v6507 = vunpack.c.h.b16 %v6184
        %v6508 = vunpack.c.l.b16 %v6185
        %v6509 = vunpack.c.h.b16 %v6185
        %v6510 = vunpack.c.l.b16 %v6186
        %v6511 = vunpack.c.h.b16 %v6186
        %v6512 = vunpack.c.l.b16 %v6187
        %v6513 = vunpack.c.h.b16 %v6187
        %v6514 = vunpack.c.l.b16 %v6188
        %v6515 = vunpack.c.h.b16 %v6188
        %v6516 = vunpack.c.l.b16 %v6189
        %v6517 = vunpack.c.h.b16 %v6189
        %v6518 = vunpack.c.l.b16 %v6190
        %v6519 = vunpack.c.h.b16 %v6190
        %v6520 = vunpack.c.l.b16 %v6191
        %v6521 = vunpack.c.h.b16 %v6191
        %v6522 = vunpack.c.l.b16 %v6192
        %v6523 = vunpack.c.h.b16 %v6192
        %v6524 = vunpack.c.l.b16 %v6193
        %v6525 = vunpack.c.h.b16 %v6193
        %v6526 = vunpack.c.l.b16 %v6194
        %v6527 = vunpack.c.h.b16 %v6194
        %v6528 = vunpack.c.l.b16 %v6195
        %v6529 = vunpack.c.h.b16 %v6195
        %v6530 = vunpack.c.l.b16 %v6196
        %v6531 = vunpack.c.h.b16 %v6196
        %v6532 = vunpack.c.l.b16 %v6197
        %v6533 = vunpack.c.h.b16 %v6197
        %v6534 = vunpack.c.l.b16 %v6198
        %v6535 = vunpack.c.h.b16 %v6198
        %v6536 = vunpack.c.l.b16 %v6199
        %v6537 = vunpack.c.h.b16 %v6199
        %v6538 = vunpack.c.l.b16 %v6200
        %v6539 = vunpack.c.h.b16 %v6200
        %v6540 = vunpack.c.l.b16 %v6201
        %v6541 = vunpack.c.h.b16 %v6201
        %v6542 = vunpack.c.l.b16 %v6202
        %v6543 = vunpack.c.h.b16 %v6202
        %v6544 = vunpack.c.l.b16 %v6203
        %v6545 = vunpack.c.h.b16 %v6203
        %v6546 = vunpack.c.l.b16 %v6204
        %v6547 = vunpack.c.h.b16 %v6204
        %v6548 = vunpack.c.l.b16 %v6205
        %v6549 = vunpack.c.h.b16 %v6205
        %v6550 = vunpack.c.l.b16 %v6206
        %v6551 = vunpack.c.h.b16 %v6206
        %v6552 = vunpack.c.l.b16 %v6207
        %v6553 = vunpack.c.h.b16 %v6207
        %v6554 = vunpack.c.l.b16 %v6208
        %v6555 = vunpack.c.h.b16 %v6208
        %v6556 = vunpack.c.l.b16 %v6209
        %v6557 = vunpack.c.h.b16 %v6209
        %v6558 = vunpack.c.l.b16 %v6210
        %v6559 = vunpack.c.h.b16 %v6210
        %v6560 = vunpack.c.l.b16 %v6211
        %v6561 = vunpack.c.h.b16 %v6211
        %v6562 = vunpack.c.l.b16 %v6212
        %v6563 = vunpack.c.h.b16 %v6212
        %v6564 = vunpack.c.l.b16 %v6213
        %v6565 = vunpack.c.h.b16 %v6213
        %v6566 = vunpack.c.l.b16 %v6214
        %v6567 = vunpack.c.h.b16 %v6214
        %v6568 = vunpack.c.l.b16 %v6215
        %v6569 = vunpack.c.h.b16 %v6215
        %v6570 = vunpack.c.l.b16 %v6216
        %v6571 = vunpack.c.h.b16 %v6216
        %v6572 = vunpack.c.l.b16 %v6217
        %v6573 = vunpack.c.h.b16 %v6217
        %v6574 = vunpack.c.l.b16 %v6218
        %v6575 = vunpack.c.h.b16 %v6218
        %v6576 = vunpack.c.l.b16 %v6219
        %v6577 = vunpack.c.h.b16 %v6219
        %v6578 = vunpack.c.l.b16 %v6220
        %v6579 = vunpack.c.h.b16 %v6220
        %v6580 = vunpack.c.l.b16 %v6221
        %v6581 = vunpack.c.h.b16 %v6221
        %v6582 = vunpack.c.l.b16 %v6222
        %v6583 = vunpack.c.h.b16 %v6222
        %v6584 = vunpack.c.l.b16 %v6223
        %v6585 = vunpack.c.h.b16 %v6223
        %v6586 = vunpack.c.l.b16 %v6224
        %v6587 = vunpack.c.h.b16 %v6224
        %v6588 = vunpack.c.l.b16 %v6225
        %v6589 = vunpack.c.h.b16 %v6225
        %v6590 = vunpack.c.l.b16 %v6226
        %v6591 = vunpack.c.h.b16 %v6226
        %v6592 = vunpack.c.l.b16 %v6227
        %v6593 = vunpack.c.h.b16 %v6227
        %v6594 = vunpack.c.l.b16 %v6228
        %v6595 = vunpack.c.h.b16 %v6228
        %v6596 = vunpack.c.l.b16 %v6229
        %v6597 = vunpack.c.h.b16 %v6229
        %v6598 = vunpack.c.l.b16 %v6230
        %v6599 = vunpack.c.h.b16 %v6230
        %v6600 = vunpack.c.l.b16 %v6231
        %v6601 = vunpack.c.h.b16 %v6231
        %v6602 = vunpack.c.l.b16 %v6232
        %v6603 = vunpack.c.h.b16 %v6232
        %v6604 = vunpack.c.l.b16 %v6233
        %v6605 = vunpack.c.h.b16 %v6233
        %v6606 = vunpack.c.l.b16 %v6234
        %v6607 = vunpack.c.h.b16 %v6234
        %v6608 = vunpack.c.l.b16 %v6235
        %v6609 = vunpack.c.h.b16 %v6235
        %v6610 = vunpack.c.l.b16 %v6236
        %v6611 = vunpack.c.h.b16 %v6236
        %v6612 = vunpack.c.l.b16 %v6237
        %v6613 = vunpack.c.h.b16 %v6237
        %v6614 = vunpack.c.l.b16 %v6238
        %v6615 = vunpack.c.h.b16 %v6238
        %v6616 = vunpack.c.l.b16 %v6239
        %v6617 = vunpack.c.h.b16 %v6239
        %v6618 = vunpack.c.l.b16 %v6240
        %v6619 = vunpack.c.h.b16 %v6240
        %v6620 = vunpack.c.l.b16 %v6241
        %v6621 = vunpack.c.h.b16 %v6241
        %v6622 = vunpack.c.l.b16 %v6242
        %v6623 = vunpack.c.h.b16 %v6242
        %v6624 = vunpack.c.l.b16 %v6243
        %v6625 = vunpack.c.h.b16 %v6243
        %v6626 = vunpack.c.l.b16 %v6244
        %v6627 = vunpack.c.h.b16 %v6244
        %v6628 = vunpack.c.l.b16 %v6245
        %v6629 = vunpack.c.h.b16 %v6245
        %v6630 = vpack.c.b16 %v6378, %v6374
        %v6631 = vpack.c.b16 %v6379, %v6375
        %v6632 = vpack.c.b16 %v6380, %v6376
        %v6633 = vpack.c.b16 %v6381, %v6377
        %v6634 = vpack.c.b16 %v6386, %v6382
        %v6635 = vpack.c.b16 %v6387, %v6383
        %v6636 = vpack.c.b16 %v6388, %v6384
        %v6637 = vpack.c.b16 %v6389, %v6385
        %v6638 = vpack.c.b16 %v6394, %v6390
        %v6639 = vpack.c.b16 %v6395, %v6391
        %v6640 = vpack.c.b16 %v6396, %v6392
        %v6641 = vpack.c.b16 %v6397, %v6393
        %v6642 = vpack.c.b16 %v6402, %v6398
        %v6643 = vpack.c.b16 %v6403, %v6399
        %v6644 = vpack.c.b16 %v6404, %v6400
        %v6645 = vpack.c.b16 %v6405, %v6401
        %v6646 = vpack.c.b16 %v6410, %v6406
        %v6647 = vpack.c.b16 %v6411, %v6407
        %v6648 = vpack.c.b16 %v6412, %v6408
        %v6649 = vpack.c.b16 %v6413, %v6409
        %v6650 = vpack.c.b16 %v6418, %v6414
        %v6651 = vpack.c.b16 %v6419, %v6415
        %v6652 = vpack.c.b16 %v6420, %v6416
        %v6653 = vpack.c.b16 %v6421, %v6417
        %v6654 = vpack.c.b16 %v6426, %v6422
        %v6655 = vpack.c.b16 %v6427, %v6423
        %v6656 = vpack.c.b16 %v6428, %v6424
        %v6657 = vpack.c.b16 %v6429, %v6425
        %v6658 = vpack.c.b16 %v6434, %v6430
        %v6659 = vpack.c.b16 %v6435, %v6431
        %v6660 = vpack.c.b16 %v6436, %v6432
        %v6661 = vpack.c.b16 %v6437, %v6433
        %v6662 = vpack.c.b16 %v6442, %v6438
        %v6663 = vpack.c.b16 %v6443, %v6439
        %v6664 = vpack.c.b16 %v6444, %v6440
        %v6665 = vpack.c.b16 %v6445, %v6441
        %v6666 = vpack.c.b16 %v6450, %v6446
        %v6667 = vpack.c.b16 %v6451, %v6447
        %v6668 = vpack.c.b16 %v6452, %v6448
        %v6669 = vpack.c.b16 %v6453, %v6449
        %v6670 = vpack.c.b16 %v6458, %v6454
        %v6671 = vpack.c.b16 %v6459, %v6455
        %v6672 = vpack.c.b16 %v6460, %v6456
        %v6673 = vpack.c.b16 %v6461, %v6457
        %v6674 = vpack.c.b16 %v6466, %v6462
        %v6675 = vpack.c.b16 %v6467, %v6463
        %v6676 = vpack.c.b16 %v6468, %v6464
        %v6677 = vpack.c.b16 %v6469, %v6465
        %v6678 = vpack.c.b16 %v6474, %v6470
        %v6679 = vpack.c.b16 %v6475, %v6471
        %v6680 = vpack.c.b16 %v6476, %v6472
        %v6681 = vpack.c.b16 %v6477, %v6473
        %v6682 = vpack.c.b16 %v6482, %v6478
        %v6683 = vpack.c.b16 %v6483, %v6479
        %v6684 = vpack.c.b16 %v6484, %v6480
        %v6685 = vpack.c.b16 %v6485, %v6481
        %v6686 = vpack.c.b16 %v6490, %v6486
        %v6687 = vpack.c.b16 %v6491, %v6487
        %v6688 = vpack.c.b16 %v6492, %v6488
        %v6689 = vpack.c.b16 %v6493, %v6489
        %v6690 = vpack.c.b16 %v6498, %v6494
        %v6691 = vpack.c.b16 %v6499, %v6495
        %v6692 = vpack.c.b16 %v6500, %v6496
        %v6693 = vpack.c.b16 %v6501, %v6497
        %v6694 = vpack.c.b16 %v6506, %v6502
        %v6695 = vpack.c.b16 %v6507, %v6503
        %v6696 = vpack.c.b16 %v6508, %v6504
        %v6697 = vpack.c.b16 %v6509, %v6505
        %v6698 = vpack.c.b16 %v6514, %v6510
        %v6699 = vpack.c.b16 %v6515, %v6511
        %v6700 = vpack.c.b16 %v6516, %v6512
        %v6701 = vpack.c.b16 %v6517, %v6513
        %v6702 = vpack.c.b16 %v6522, %v6518
        %v6703 = vpack.c.b16 %v6523, %v6519
        %v6704 = vpack.c.b16 %v6524, %v6520
        %v6705 = vpack.c.b16 %v6525, %v6521
        %v6706 = vpack.c.b16 %v6530, %v6526
        %v6707 = vpack.c.b16 %v6531, %v6527
        %v6708 = vpack.c.b16 %v6532, %v6528
        %v6709 = vpack.c.b16 %v6533, %v6529
        %v6710 = vpack.c.b16 %v6538, %v6534
        %v6711 = vpack.c.b16 %v6539, %v6535
        %v6712 = vpack.c.b16 %v6540, %v6536
        %v6713 = vpack.c.b16 %v6541, %v6537
        %v6714 = vpack.c.b16 %v6546, %v6542
        %v6715 = vpack.c.b16 %v6547, %v6543
        %v6716 = vpack.c.b16 %v6548, %v6544
        %v6717 = vpack.c.b16 %v6549, %v6545
        %v6718 = vpack.c.b16 %v6554, %v6550
        %v6719 = vpack.c.b16 %v6555, %v6551
        %v6720 = vpack.c.b16 %v6556, %v6552
        %v6721 = vpack.c.b16 %v6557, %v6553
        %v6722 = vpack.c.b16 %v6562, %v6558
        %v6723 = vpack.c.b16 %v6563, %v6559
        %v6724 = vpack.c.b16 %v6564, %v6560
        %v6725 = vpack.c.b16 %v6565, %v6561
        %v6726 = vpack.c.b16 %v6570, %v6566
        %v6727 = vpack.c.b16 %v6571, %v6567
        %v6728 = vpack.c.b16 %v6572, %v6568
        %v6729 = vpack.c.b16 %v6573, %v6569
        %v6730 = vpack.c.b16 %v6578, %v6574
        %v6731 = vpack.c.b16 %v6579, %v6575
        %v6732 = vpack.c.b16 %v6580, %v6576
        %v6733 = vpack.c.b16 %v6581, %v6577
        %v6734 = vpack.c.b16 %v6586, %v6582
        %v6735 = vpack.c.b16 %v6587, %v6583
        %v6736 = vpack.c.b16 %v6588, %v6584
        %v6737 = vpack.c.b16 %v6589, %v6585
        %v6738 = vpack.c.b16 %v6594, %v6590
        %v6739 = vpack.c.b16 %v6595, %v6591
        %v6740 = vpack.c.b16 %v6596, %v6592
        %v6741 = vpack.c.b16 %v6597, %v6593
        %v6742 = vpack.c.b16 %v6602, %v6598
        %v6743 = vpack.c.b16 %v6603, %v6599
        %v6744 = vpack.c.b16 %v6604, %v6600
        %v6745 = vpack.c.b16 %v6605, %v6601
        %v6746 = vpack.c.b16 %v6610, %v6606
        %v6747 = vpack.c.b16 %v6611, %v6607
        %v6748 = vpack.c.b16 %v6612, %v6608
        %v6749 = vpack.c.b16 %v6613, %v6609
        %v6750 = vpack.c.b16 %v6618, %v6614
        %v6751 = vpack.c.b16 %v6619, %v6615
        %v6752 = vpack.c.b16 %v6620, %v6616
        %v6753 = vpack.c.b16 %v6621, %v6617
        %v6754 = vpack.c.b16 %v6626, %v6622
        %v6755 = vpack.c.b16 %v6627, %v6623
        %v6756 = vpack.c.b16 %v6628, %v6624
        %v6757 = vpack.c.b16 %v6629, %v6625
        %6886 = vmatpush.bf16.msra.mxu0 %v6658
        %6887 = vmatpush.bf16.msra.mxu0 %v6654
        %6888 = vmatpush.bf16.msra.mxu0 %v6650
        %6889 = vmatpush.bf16.msra.mxu0 %v6646
        %6890 = vmatpush.bf16.msra.mxu0 %v6642
        %6891 = vmatpush.bf16.msra.mxu0 %v6638
        %6892 = vmatpush.bf16.msra.mxu0 %v6634
        %6893 = vmatpush.bf16.msra.mxu0 %v6630
        %6894 = vmatmul.bf16.gmra.mxu0 %v6113
        %v6895 = vpop.f32.mrf.mxu0
        %v6896 = vadd.f32 0.0, %v6895
        %v6897 = vpop.f32.mrf.mxu0
        %6898 = vdwg.mxu0
        %6899 = vmatpush.bf16.msra.mxu0 %v6690
        %6900 = vmatpush.bf16.msra.mxu0 %v6686
        %6901 = vmatpush.bf16.msra.mxu0 %v6682
        %6902 = vmatpush.bf16.msra.mxu0 %v6678
        %6903 = vmatpush.bf16.msra.mxu0 %v6674
        %6904 = vmatpush.bf16.msra.mxu0 %v6670
        %6905 = vmatpush.bf16.msra.mxu0 %v6666
        %6906 = vmatpush.bf16.msra.mxu0 %v6662
        %6907 = vmatmul.bf16.gmra.mxu0 %v6114
        %v6908 = vpop.f32.mrf.mxu0
        %v6909 = vadd.f32 %v6896, %v6908
        %v6910 = vpop.f32.mrf.mxu0
        %6911 = vdwg.mxu0
        %6912 = vmatpush.bf16.msra.mxu0 %v6722
        %6913 = vmatpush.bf16.msra.mxu0 %v6718
        %6914 = vmatpush.bf16.msra.mxu0 %v6714
        %6915 = vmatpush.bf16.msra.mxu0 %v6710
        %6916 = vmatpush.bf16.msra.mxu0 %v6706
        %6917 = vmatpush.bf16.msra.mxu0 %v6702
        %6918 = vmatpush.bf16.msra.mxu0 %v6698
        %6919 = vmatpush.bf16.msra.mxu0 %v6694
        %6920 = vmatmul.bf16.gmra.mxu0 %v6115
        %v6921 = vpop.f32.mrf.mxu0
        %v6922 = vadd.f32 %v6909, %v6921
        %v6923 = vpop.f32.mrf.mxu0
        %6924 = vdwg.mxu0
        %6925 = vmatpush.bf16.msra.mxu0 %v6754
        %6926 = vmatpush.bf16.msra.mxu0 %v6750
        %6927 = vmatpush.bf16.msra.mxu0 %v6746
        %6928 = vmatpush.bf16.msra.mxu0 %v6742
        %6929 = vmatpush.bf16.msra.mxu0 %v6738
        %6930 = vmatpush.bf16.msra.mxu0 %v6734
        %6931 = vmatpush.bf16.msra.mxu0 %v6730
        %6932 = vmatpush.bf16.msra.mxu0 %v6726
        %6933 = vmatmul.bf16.gmra.mxu0 %v6116
        %v6934 = vpop.f32.mrf.mxu0
        %v6935 = vadd.f32 %v6922, %v6934
        %v6936 = vpop.f32.mrf.mxu0
        %6937 = vdwg.mxu0
        %6938 = vmatpush.bf16.msra.mxu0 %v6659
        %6939 = vmatpush.bf16.msra.mxu0 %v6655
        %6940 = vmatpush.bf16.msra.mxu0 %v6651
        %6941 = vmatpush.bf16.msra.mxu0 %v6647
        %6942 = vmatpush.bf16.msra.mxu0 %v6643
        %6943 = vmatpush.bf16.msra.mxu0 %v6639
        %6944 = vmatpush.bf16.msra.mxu0 %v6635
        %6945 = vmatpush.bf16.msra.mxu0 %v6631
        %6946 = vmatmul.bf16.gmra.mxu0 %v6113
        %v6947 = vpop.f32.mrf.mxu0
        %v6948 = vadd.f32 0.0, %v6947
        %v6949 = vpop.f32.mrf.mxu0
        %6950 = vdwg.mxu0
        %6951 = vmatpush.bf16.msra.mxu0 %v6691
        %6952 = vmatpush.bf16.msra.mxu0 %v6687
        %6953 = vmatpush.bf16.msra.mxu0 %v6683
        %6954 = vmatpush.bf16.msra.mxu0 %v6679
        %6955 = vmatpush.bf16.msra.mxu0 %v6675
        %6956 = vmatpush.bf16.msra.mxu0 %v6671
        %6957 = vmatpush.bf16.msra.mxu0 %v6667
        %6958 = vmatpush.bf16.msra.mxu0 %v6663
        %6959 = vmatmul.bf16.gmra.mxu0 %v6114
        %v6960 = vpop.f32.mrf.mxu0
        %v6961 = vadd.f32 %v6948, %v6960
        %v6962 = vpop.f32.mrf.mxu0
        %6963 = vdwg.mxu0
        %6964 = vmatpush.bf16.msra.mxu0 %v6723
        %6965 = vmatpush.bf16.msra.mxu0 %v6719
        %6966 = vmatpush.bf16.msra.mxu0 %v6715
        %6967 = vmatpush.bf16.msra.mxu0 %v6711
        %6968 = vmatpush.bf16.msra.mxu0 %v6707
        %6969 = vmatpush.bf16.msra.mxu0 %v6703
        %6970 = vmatpush.bf16.msra.mxu0 %v6699
        %6971 = vmatpush.bf16.msra.mxu0 %v6695
        %6972 = vmatmul.bf16.gmra.mxu0 %v6115
        %v6973 = vpop.f32.mrf.mxu0
        %v6974 = vadd.f32 %v6961, %v6973
        %v6975 = vpop.f32.mrf.mxu0
        %6976 = vdwg.mxu0
        %6977 = vmatpush.bf16.msra.mxu0 %v6755
        %6978 = vmatpush.bf16.msra.mxu0 %v6751
        %6979 = vmatpush.bf16.msra.mxu0 %v6747
        %6980 = vmatpush.bf16.msra.mxu0 %v6743
        %6981 = vmatpush.bf16.msra.mxu0 %v6739
        %6982 = vmatpush.bf16.msra.mxu0 %v6735
        %6983 = vmatpush.bf16.msra.mxu0 %v6731
        %6984 = vmatpush.bf16.msra.mxu0 %v6727
        %6985 = vmatmul.bf16.gmra.mxu0 %v6116
        %v6986 = vpop.f32.mrf.mxu0
        %v6987 = vadd.f32 %v6974, %v6986
        %v6988 = vpop.f32.mrf.mxu0
        %6989 = vdwg.mxu0
        %6990 = vmatpush.bf16.msra.mxu0 %v6660
        %6991 = vmatpush.bf16.msra.mxu0 %v6656
        %6992 = vmatpush.bf16.msra.mxu0 %v6652
        %6993 = vmatpush.bf16.msra.mxu0 %v6648
        %6994 = vmatpush.bf16.msra.mxu0 %v6644
        %6995 = vmatpush.bf16.msra.mxu0 %v6640
        %6996 = vmatpush.bf16.msra.mxu0 %v6636
        %6997 = vmatpush.bf16.msra.mxu0 %v6632
        %6998 = vmatmul.bf16.gmra.mxu0 %v6113
        %v6999 = vpop.f32.mrf.mxu0
        %v7000 = vadd.f32 0.0, %v6999
        %v7001 = vpop.f32.mrf.mxu0
        %7002 = vdwg.mxu0
        %7003 = vmatpush.bf16.msra.mxu0 %v6692
        %7004 = vmatpush.bf16.msra.mxu0 %v6688
        %7005 = vmatpush.bf16.msra.mxu0 %v6684
        %7006 = vmatpush.bf16.msra.mxu0 %v6680
        %7007 = vmatpush.bf16.msra.mxu0 %v6676
        %7008 = vmatpush.bf16.msra.mxu0 %v6672
        %7009 = vmatpush.bf16.msra.mxu0 %v6668
        %7010 = vmatpush.bf16.msra.mxu0 %v6664
        %7011 = vmatmul.bf16.gmra.mxu0 %v6114
        %v7012 = vpop.f32.mrf.mxu0
        %v7013 = vadd.f32 %v7000, %v7012
        %v7014 = vpop.f32.mrf.mxu0
        %7015 = vdwg.mxu0
        %7016 = vmatpush.bf16.msra.mxu0 %v6724
        %7017 = vmatpush.bf16.msra.mxu0 %v6720
        %7018 = vmatpush.bf16.msra.mxu0 %v6716
        %7019 = vmatpush.bf16.msra.mxu0 %v6712
        %7020 = vmatpush.bf16.msra.mxu0 %v6708
        %7021 = vmatpush.bf16.msra.mxu0 %v6704
        %7022 = vmatpush.bf16.msra.mxu0 %v6700
        %7023 = vmatpush.bf16.msra.mxu0 %v6696
        %7024 = vmatmul.bf16.gmra.mxu0 %v6115
        %v7025 = vpop.f32.mrf.mxu0
        %v7026 = vadd.f32 %v7013, %v7025
        %v7027 = vpop.f32.mrf.mxu0
        %7028 = vdwg.mxu0
        %7029 = vmatpush.bf16.msra.mxu0 %v6756
        %7030 = vmatpush.bf16.msra.mxu0 %v6752
        %7031 = vmatpush.bf16.msra.mxu0 %v6748
        %7032 = vmatpush.bf16.msra.mxu0 %v6744
        %7033 = vmatpush.bf16.msra.mxu0 %v6740
        %7034 = vmatpush.bf16.msra.mxu0 %v6736
        %7035 = vmatpush.bf16.msra.mxu0 %v6732
        %7036 = vmatpush.bf16.msra.mxu0 %v6728
        %7037 = vmatmul.bf16.gmra.mxu0 %v6116
        %v7038 = vpop.f32.mrf.mxu0
        %v7039 = vadd.f32 %v7026, %v7038
        %v7040 = vpop.f32.mrf.mxu0
        %7041 = vdwg.mxu0
        %7042 = vmatpush.bf16.msra.mxu0 %v6661
        %7043 = vmatpush.bf16.msra.mxu0 %v6657
        %7044 = vmatpush.bf16.msra.mxu0 %v6653
        %7045 = vmatpush.bf16.msra.mxu0 %v6649
        %7046 = vmatpush.bf16.msra.mxu0 %v6645
        %7047 = vmatpush.bf16.msra.mxu0 %v6641
        %7048 = vmatpush.bf16.msra.mxu0 %v6637
        %7049 = vmatpush.bf16.msra.mxu0 %v6633
        %7050 = vmatmul.bf16.gmra.mxu0 %v6113
        %v7051 = vpop.f32.mrf.mxu0
        %v7052 = vadd.f32 0.0, %v7051
        %v7053 = vpop.f32.mrf.mxu0
        %7054 = vdwg.mxu0
        %7055 = vmatpush.bf16.msra.mxu0 %v6693
        %7056 = vmatpush.bf16.msra.mxu0 %v6689
        %7057 = vmatpush.bf16.msra.mxu0 %v6685
        %7058 = vmatpush.bf16.msra.mxu0 %v6681
        %7059 = vmatpush.bf16.msra.mxu0 %v6677
        %7060 = vmatpush.bf16.msra.mxu0 %v6673
        %7061 = vmatpush.bf16.msra.mxu0 %v6669
        %7062 = vmatpush.bf16.msra.mxu0 %v6665
        %7063 = vmatmul.bf16.gmra.mxu0 %v6114
        %v7064 = vpop.f32.mrf.mxu0
        %v7065 = vadd.f32 %v7052, %v7064
        %v7066 = vpop.f32.mrf.mxu0
        %7067 = vdwg.mxu0
        %7068 = vmatpush.bf16.msra.mxu0 %v6725
        %7069 = vmatpush.bf16.msra.mxu0 %v6721
        %7070 = vmatpush.bf16.msra.mxu0 %v6717
        %7071 = vmatpush.bf16.msra.mxu0 %v6713
        %7072 = vmatpush.bf16.msra.mxu0 %v6709
        %7073 = vmatpush.bf16.msra.mxu0 %v6705
        %7074 = vmatpush.bf16.msra.mxu0 %v6701
        %7075 = vmatpush.bf16.msra.mxu0 %v6697
        %7076 = vmatmul.bf16.gmra.mxu0 %v6115
        %v7077 = vpop.f32.mrf.mxu0
        %v7078 = vadd.f32 %v7065, %v7077
        %v7079 = vpop.f32.mrf.mxu0
        %7080 = vdwg.mxu0
        %7081 = vmatpush.bf16.msra.mxu0 %v6757
        %7082 = vmatpush.bf16.msra.mxu0 %v6753
        %7083 = vmatpush.bf16.msra.mxu0 %v6749
        %7084 = vmatpush.bf16.msra.mxu0 %v6745
        %7085 = vmatpush.bf16.msra.mxu0 %v6741
        %7086 = vmatpush.bf16.msra.mxu0 %v6737
        %7087 = vmatpush.bf16.msra.mxu0 %v6733
        %7088 = vmatpush.bf16.msra.mxu0 %v6729
        %7089 = vmatmul.bf16.gmra.mxu0 %v6116
        %v7090 = vpop.f32.mrf.mxu0
        %v7091 = vadd.f32 %v7078, %v7090
        %v7092 = vpop.f32.mrf.mxu0
        %7093 = vdwg.mxu0
        %v7222 = vunpack.c.l.b16 %v5928
        %v7223 = vunpack.c.h.b16 %v5928
        %v7224 = vunpack.c.l.b16 %v5929
        %v7225 = vunpack.c.h.b16 %v5929
        %v7226 = vunpack.c.l.b16 %v5930
        %v7227 = vunpack.c.h.b16 %v5930
        %v7228 = vunpack.c.l.b16 %v5931
        %v7229 = vunpack.c.h.b16 %v5931
        %v7230 = vunpack.c.l.b16 %v5932
        %v7231 = vunpack.c.h.b16 %v5932
        %v7232 = vunpack.c.l.b16 %v5933
        %v7233 = vunpack.c.h.b16 %v5933
        %v7234 = vunpack.c.l.b16 %v5934
        %v7235 = vunpack.c.h.b16 %v5934
        %v7236 = vunpack.c.l.b16 %v5935
        %v7237 = vunpack.c.h.b16 %v5935
        %v7238 = vunpack.c.l.b16 %v5936
        %v7239 = vunpack.c.h.b16 %v5936
        %v7240 = vunpack.c.l.b16 %v5937
        %v7241 = vunpack.c.h.b16 %v5937
        %v7242 = vunpack.c.l.b16 %v5938
        %v7243 = vunpack.c.h.b16 %v5938
        %v7244 = vunpack.c.l.b16 %v5939
        %v7245 = vunpack.c.h.b16 %v5939
        %v7246 = vunpack.c.l.b16 %v5940
        %v7247 = vunpack.c.h.b16 %v5940
        %v7248 = vunpack.c.l.b16 %v5941
        %v7249 = vunpack.c.h.b16 %v5941
        %v7250 = vunpack.c.l.b16 %v5942
        %v7251 = vunpack.c.h.b16 %v5942
        %v7252 = vunpack.c.l.b16 %v5943
        %v7253 = vunpack.c.h.b16 %v5943
        %v7254 = vunpack.c.l.b16 %v5944
        %v7255 = vunpack.c.h.b16 %v5944
        %v7256 = vunpack.c.l.b16 %v5945
        %v7257 = vunpack.c.h.b16 %v5945
        %v7258 = vunpack.c.l.b16 %v5946
        %v7259 = vunpack.c.h.b16 %v5946
        %v7260 = vunpack.c.l.b16 %v5947
        %v7261 = vunpack.c.h.b16 %v5947
        %v7262 = vunpack.c.l.b16 %v5948
        %v7263 = vunpack.c.h.b16 %v5948
        %v7264 = vunpack.c.l.b16 %v5949
        %v7265 = vunpack.c.h.b16 %v5949
        %v7266 = vunpack.c.l.b16 %v5950
        %v7267 = vunpack.c.h.b16 %v5950
        %v7268 = vunpack.c.l.b16 %v5951
        %v7269 = vunpack.c.h.b16 %v5951
        %v7270 = vunpack.c.l.b16 %v5952
        %v7271 = vunpack.c.h.b16 %v5952
        %v7272 = vunpack.c.l.b16 %v5953
        %v7273 = vunpack.c.h.b16 %v5953
        %v7274 = vunpack.c.l.b16 %v5954
        %v7275 = vunpack.c.h.b16 %v5954
        %v7276 = vunpack.c.l.b16 %v5955
        %v7277 = vunpack.c.h.b16 %v5955
        %v7278 = vunpack.c.l.b16 %v5956
        %v7279 = vunpack.c.h.b16 %v5956
        %v7280 = vunpack.c.l.b16 %v5957
        %v7281 = vunpack.c.h.b16 %v5957
        %v7282 = vunpack.c.l.b16 %v5958
        %v7283 = vunpack.c.h.b16 %v5958
        %v7284 = vunpack.c.l.b16 %v5959
        %v7285 = vunpack.c.h.b16 %v5959
        %v7286 = vunpack.c.l.b16 %v5960
        %v7287 = vunpack.c.h.b16 %v5960
        %v7288 = vunpack.c.l.b16 %v5961
        %v7289 = vunpack.c.h.b16 %v5961
        %v7290 = vunpack.c.l.b16 %v5962
        %v7291 = vunpack.c.h.b16 %v5962
        %v7292 = vunpack.c.l.b16 %v5963
        %v7293 = vunpack.c.h.b16 %v5963
        %v7294 = vunpack.c.l.b16 %v5964
        %v7295 = vunpack.c.h.b16 %v5964
        %v7296 = vunpack.c.l.b16 %v5965
        %v7297 = vunpack.c.h.b16 %v5965
        %v7298 = vunpack.c.l.b16 %v5966
        %v7299 = vunpack.c.h.b16 %v5966
        %v7300 = vunpack.c.l.b16 %v5967
        %v7301 = vunpack.c.h.b16 %v5967
        %v7302 = vunpack.c.l.b16 %v5968
        %v7303 = vunpack.c.h.b16 %v5968
        %v7304 = vunpack.c.l.b16 %v5969
        %v7305 = vunpack.c.h.b16 %v5969
        %v7306 = vunpack.c.l.b16 %v5970
        %v7307 = vunpack.c.h.b16 %v5970
        %v7308 = vunpack.c.l.b16 %v5971
        %v7309 = vunpack.c.h.b16 %v5971
        %v7310 = vunpack.c.l.b16 %v5972
        %v7311 = vunpack.c.h.b16 %v5972
        %v7312 = vunpack.c.l.b16 %v5973
        %v7313 = vunpack.c.h.b16 %v5973
        %v7314 = vunpack.c.l.b16 %v5974
        %v7315 = vunpack.c.h.b16 %v5974
        %v7316 = vunpack.c.l.b16 %v5975
        %v7317 = vunpack.c.h.b16 %v5975
        %v7318 = vunpack.c.l.b16 %v5976
        %v7319 = vunpack.c.h.b16 %v5976
        %v7320 = vunpack.c.l.b16 %v5977
        %v7321 = vunpack.c.h.b16 %v5977
        %v7322 = vunpack.c.l.b16 %v5978
        %v7323 = vunpack.c.h.b16 %v5978
        %v7324 = vunpack.c.l.b16 %v5979
        %v7325 = vunpack.c.h.b16 %v5979
        %v7326 = vunpack.c.l.b16 %v5980
        %v7327 = vunpack.c.h.b16 %v5980
        %v7328 = vunpack.c.l.b16 %v5981
        %v7329 = vunpack.c.h.b16 %v5981
        %v7330 = vunpack.c.l.b16 %v5982
        %v7331 = vunpack.c.h.b16 %v5982
        %v7332 = vunpack.c.l.b16 %v5983
        %v7333 = vunpack.c.h.b16 %v5983
        %v7334 = vunpack.c.l.b16 %v5984
        %v7335 = vunpack.c.h.b16 %v5984
        %v7336 = vunpack.c.l.b16 %v5985
        %v7337 = vunpack.c.h.b16 %v5985
        %v7338 = vunpack.c.l.b16 %v5986
        %v7339 = vunpack.c.h.b16 %v5986
        %v7340 = vunpack.c.l.b16 %v5987
        %v7341 = vunpack.c.h.b16 %v5987
        %v7342 = vunpack.c.l.b16 %v5988
        %v7343 = vunpack.c.h.b16 %v5988
        %v7344 = vunpack.c.l.b16 %v5989
        %v7345 = vunpack.c.h.b16 %v5989
        %v7346 = vunpack.c.l.b16 %v5990
        %v7347 = vunpack.c.h.b16 %v5990
        %v7348 = vunpack.c.l.b16 %v5991
        %v7349 = vunpack.c.h.b16 %v5991
        %v7350 = vunpack.c.l.b16 %v5992
        %v7351 = vunpack.c.h.b16 %v5992
        %v7352 = vunpack.c.l.b16 %v5993
        %v7353 = vunpack.c.h.b16 %v5993
        %v7354 = vunpack.c.l.b16 %v5994
        %v7355 = vunpack.c.h.b16 %v5994
        %v7356 = vunpack.c.l.b16 %v5995
        %v7357 = vunpack.c.h.b16 %v5995
        %v7358 = vunpack.c.l.b16 %v5996
        %v7359 = vunpack.c.h.b16 %v5996
        %v7360 = vunpack.c.l.b16 %v5997
        %v7361 = vunpack.c.h.b16 %v5997
        %v7362 = vunpack.c.l.b16 %v5998
        %v7363 = vunpack.c.h.b16 %v5998
        %v7364 = vunpack.c.l.b16 %v5999
        %v7365 = vunpack.c.h.b16 %v5999
        %v7366 = vunpack.c.l.b16 %v6000
        %v7367 = vunpack.c.h.b16 %v6000
        %v7368 = vunpack.c.l.b16 %v6001
        %v7369 = vunpack.c.h.b16 %v6001
        %v7370 = vunpack.c.l.b16 %v6002
        %v7371 = vunpack.c.h.b16 %v6002
        %v7372 = vunpack.c.l.b16 %v6003
        %v7373 = vunpack.c.h.b16 %v6003
        %v7374 = vunpack.c.l.b16 %v6004
        %v7375 = vunpack.c.h.b16 %v6004
        %v7376 = vunpack.c.l.b16 %v6005
        %v7377 = vunpack.c.h.b16 %v6005
        %v7378 = vunpack.c.l.b16 %v6006
        %v7379 = vunpack.c.h.b16 %v6006
        %v7380 = vunpack.c.l.b16 %v6007
        %v7381 = vunpack.c.h.b16 %v6007
        %v7382 = vunpack.c.l.b16 %v6008
        %v7383 = vunpack.c.h.b16 %v6008
        %v7384 = vunpack.c.l.b16 %v6009
        %v7385 = vunpack.c.h.b16 %v6009
        %v7386 = vunpack.c.l.b16 %v6010
        %v7387 = vunpack.c.h.b16 %v6010
        %v7388 = vunpack.c.l.b16 %v6011
        %v7389 = vunpack.c.h.b16 %v6011
        %v7390 = vunpack.c.l.b16 %v6012
        %v7391 = vunpack.c.h.b16 %v6012
        %v7392 = vunpack.c.l.b16 %v6013
        %v7393 = vunpack.c.h.b16 %v6013
        %v7394 = vunpack.c.l.b16 %v6014
        %v7395 = vunpack.c.h.b16 %v6014
        %v7396 = vunpack.c.l.b16 %v6015
        %v7397 = vunpack.c.h.b16 %v6015
        %v7398 = vunpack.c.l.b16 %v6016
        %v7399 = vunpack.c.h.b16 %v6016
        %v7400 = vunpack.c.l.b16 %v6017
        %v7401 = vunpack.c.h.b16 %v6017
        %v7402 = vunpack.c.l.b16 %v6018
        %v7403 = vunpack.c.h.b16 %v6018
        %v7404 = vunpack.c.l.b16 %v6019
        %v7405 = vunpack.c.h.b16 %v6019
        %v7406 = vunpack.c.l.b16 %v6020
        %v7407 = vunpack.c.h.b16 %v6020
        %v7408 = vunpack.c.l.b16 %v6021
        %v7409 = vunpack.c.h.b16 %v6021
        %v7410 = vunpack.c.l.b16 %v6022
        %v7411 = vunpack.c.h.b16 %v6022
        %v7412 = vunpack.c.l.b16 %v6023
        %v7413 = vunpack.c.h.b16 %v6023
        %v7414 = vunpack.c.l.b16 %v6024
        %v7415 = vunpack.c.h.b16 %v6024
        %v7416 = vunpack.c.l.b16 %v6025
        %v7417 = vunpack.c.h.b16 %v6025
        %v7418 = vunpack.c.l.b16 %v6026
        %v7419 = vunpack.c.h.b16 %v6026
        %v7420 = vunpack.c.l.b16 %v6027
        %v7421 = vunpack.c.h.b16 %v6027
        %v7422 = vunpack.c.l.b16 %v6028
        %v7423 = vunpack.c.h.b16 %v6028
        %v7424 = vunpack.c.l.b16 %v6029
        %v7425 = vunpack.c.h.b16 %v6029
        %v7426 = vunpack.c.l.b16 %v6030
        %v7427 = vunpack.c.h.b16 %v6030
        %v7428 = vunpack.c.l.b16 %v6031
        %v7429 = vunpack.c.h.b16 %v6031
        %v7430 = vunpack.c.l.b16 %v6032
        %v7431 = vunpack.c.h.b16 %v6032
        %v7432 = vunpack.c.l.b16 %v6033
        %v7433 = vunpack.c.h.b16 %v6033
        %v7434 = vunpack.c.l.b16 %v6034
        %v7435 = vunpack.c.h.b16 %v6034
        %v7436 = vunpack.c.l.b16 %v6035
        %v7437 = vunpack.c.h.b16 %v6035
        %v7438 = vunpack.c.l.b16 %v6036
        %v7439 = vunpack.c.h.b16 %v6036
        %v7440 = vunpack.c.l.b16 %v6037
        %v7441 = vunpack.c.h.b16 %v6037
        %v7442 = vunpack.c.l.b16 %v6038
        %v7443 = vunpack.c.h.b16 %v6038
        %v7444 = vunpack.c.l.b16 %v6039
        %v7445 = vunpack.c.h.b16 %v6039
        %v7446 = vunpack.c.l.b16 %v6040
        %v7447 = vunpack.c.h.b16 %v6040
        %v7448 = vunpack.c.l.b16 %v6041
        %v7449 = vunpack.c.h.b16 %v6041
        %v7450 = vunpack.c.l.b16 %v6042
        %v7451 = vunpack.c.h.b16 %v6042
        %v7452 = vunpack.c.l.b16 %v6043
        %v7453 = vunpack.c.h.b16 %v6043
        %v7454 = vunpack.c.l.b16 %v6044
        %v7455 = vunpack.c.h.b16 %v6044
        %v7456 = vunpack.c.l.b16 %v6045
        %v7457 = vunpack.c.h.b16 %v6045
        %v7458 = vunpack.c.l.b16 %v6046
        %v7459 = vunpack.c.h.b16 %v6046
        %v7460 = vunpack.c.l.b16 %v6047
        %v7461 = vunpack.c.h.b16 %v6047
        %v7462 = vunpack.c.l.b16 %v6048
        %v7463 = vunpack.c.h.b16 %v6048
        %v7464 = vunpack.c.l.b16 %v6049
        %v7465 = vunpack.c.h.b16 %v6049
        %v7466 = vunpack.c.l.b16 %v6050
        %v7467 = vunpack.c.h.b16 %v6050
        %v7468 = vunpack.c.l.b16 %v6051
        %v7469 = vunpack.c.h.b16 %v6051
        %v7470 = vunpack.c.l.b16 %v6052
        %v7471 = vunpack.c.h.b16 %v6052
        %v7472 = vunpack.c.l.b16 %v6053
        %v7473 = vunpack.c.h.b16 %v6053
        %v7474 = vunpack.c.l.b16 %v6054
        %v7475 = vunpack.c.h.b16 %v6054
        %v7476 = vunpack.c.l.b16 %v6055
        %v7477 = vunpack.c.h.b16 %v6055
        %v7478 = vpack.c.b16 %v7226, %v7222
        %v7479 = vpack.c.b16 %v7227, %v7223
        %v7480 = vpack.c.b16 %v7228, %v7224
        %v7481 = vpack.c.b16 %v7229, %v7225
        %v7482 = vpack.c.b16 %v7234, %v7230
        %v7483 = vpack.c.b16 %v7235, %v7231
        %v7484 = vpack.c.b16 %v7236, %v7232
        %v7485 = vpack.c.b16 %v7237, %v7233
        %v7486 = vpack.c.b16 %v7242, %v7238
        %v7487 = vpack.c.b16 %v7243, %v7239
        %v7488 = vpack.c.b16 %v7244, %v7240
        %v7489 = vpack.c.b16 %v7245, %v7241
        %v7490 = vpack.c.b16 %v7250, %v7246
        %v7491 = vpack.c.b16 %v7251, %v7247
        %v7492 = vpack.c.b16 %v7252, %v7248
        %v7493 = vpack.c.b16 %v7253, %v7249
        %v7494 = vpack.c.b16 %v7258, %v7254
        %v7495 = vpack.c.b16 %v7259, %v7255
        %v7496 = vpack.c.b16 %v7260, %v7256
        %v7497 = vpack.c.b16 %v7261, %v7257
        %v7498 = vpack.c.b16 %v7266, %v7262
        %v7499 = vpack.c.b16 %v7267, %v7263
        %v7500 = vpack.c.b16 %v7268, %v7264
        %v7501 = vpack.c.b16 %v7269, %v7265
        %v7502 = vpack.c.b16 %v7274, %v7270
        %v7503 = vpack.c.b16 %v7275, %v7271
        %v7504 = vpack.c.b16 %v7276, %v7272
        %v7505 = vpack.c.b16 %v7277, %v7273
        %v7506 = vpack.c.b16 %v7282, %v7278
        %v7507 = vpack.c.b16 %v7283, %v7279
        %v7508 = vpack.c.b16 %v7284, %v7280
        %v7509 = vpack.c.b16 %v7285, %v7281
        %v7510 = vpack.c.b16 %v7290, %v7286
        %v7511 = vpack.c.b16 %v7291, %v7287
        %v7512 = vpack.c.b16 %v7292, %v7288
        %v7513 = vpack.c.b16 %v7293, %v7289
        %v7514 = vpack.c.b16 %v7298, %v7294
        %v7515 = vpack.c.b16 %v7299, %v7295
        %v7516 = vpack.c.b16 %v7300, %v7296
        %v7517 = vpack.c.b16 %v7301, %v7297
        %v7518 = vpack.c.b16 %v7306, %v7302
        %v7519 = vpack.c.b16 %v7307, %v7303
        %v7520 = vpack.c.b16 %v7308, %v7304
        %v7521 = vpack.c.b16 %v7309, %v7305
        %v7522 = vpack.c.b16 %v7314, %v7310
        %v7523 = vpack.c.b16 %v7315, %v7311
        %v7524 = vpack.c.b16 %v7316, %v7312
        %v7525 = vpack.c.b16 %v7317, %v7313
        %v7526 = vpack.c.b16 %v7322, %v7318
        %v7527 = vpack.c.b16 %v7323, %v7319
        %v7528 = vpack.c.b16 %v7324, %v7320
        %v7529 = vpack.c.b16 %v7325, %v7321
        %v7530 = vpack.c.b16 %v7330, %v7326
        %v7531 = vpack.c.b16 %v7331, %v7327
        %v7532 = vpack.c.b16 %v7332, %v7328
        %v7533 = vpack.c.b16 %v7333, %v7329
        %v7534 = vpack.c.b16 %v7338, %v7334
        %v7535 = vpack.c.b16 %v7339, %v7335
        %v7536 = vpack.c.b16 %v7340, %v7336
        %v7537 = vpack.c.b16 %v7341, %v7337
        %v7538 = vpack.c.b16 %v7346, %v7342
        %v7539 = vpack.c.b16 %v7347, %v7343
        %v7540 = vpack.c.b16 %v7348, %v7344
        %v7541 = vpack.c.b16 %v7349, %v7345
        %v7542 = vpack.c.b16 %v7354, %v7350
        %v7543 = vpack.c.b16 %v7355, %v7351
        %v7544 = vpack.c.b16 %v7356, %v7352
        %v7545 = vpack.c.b16 %v7357, %v7353
        %v7546 = vpack.c.b16 %v7362, %v7358
        %v7547 = vpack.c.b16 %v7363, %v7359
        %v7548 = vpack.c.b16 %v7364, %v7360
        %v7549 = vpack.c.b16 %v7365, %v7361
        %v7550 = vpack.c.b16 %v7370, %v7366
        %v7551 = vpack.c.b16 %v7371, %v7367
        %v7552 = vpack.c.b16 %v7372, %v7368
        %v7553 = vpack.c.b16 %v7373, %v7369
        %v7554 = vpack.c.b16 %v7378, %v7374
        %v7555 = vpack.c.b16 %v7379, %v7375
        %v7556 = vpack.c.b16 %v7380, %v7376
        %v7557 = vpack.c.b16 %v7381, %v7377
        %v7558 = vpack.c.b16 %v7386, %v7382
        %v7559 = vpack.c.b16 %v7387, %v7383
        %v7560 = vpack.c.b16 %v7388, %v7384
        %v7561 = vpack.c.b16 %v7389, %v7385
        %v7562 = vpack.c.b16 %v7394, %v7390
        %v7563 = vpack.c.b16 %v7395, %v7391
        %v7564 = vpack.c.b16 %v7396, %v7392
        %v7565 = vpack.c.b16 %v7397, %v7393
        %v7566 = vpack.c.b16 %v7402, %v7398
        %v7567 = vpack.c.b16 %v7403, %v7399
        %v7568 = vpack.c.b16 %v7404, %v7400
        %v7569 = vpack.c.b16 %v7405, %v7401
        %v7570 = vpack.c.b16 %v7410, %v7406
        %v7571 = vpack.c.b16 %v7411, %v7407
        %v7572 = vpack.c.b16 %v7412, %v7408
        %v7573 = vpack.c.b16 %v7413, %v7409
        %v7574 = vpack.c.b16 %v7418, %v7414
        %v7575 = vpack.c.b16 %v7419, %v7415
        %v7576 = vpack.c.b16 %v7420, %v7416
        %v7577 = vpack.c.b16 %v7421, %v7417
        %v7578 = vpack.c.b16 %v7426, %v7422
        %v7579 = vpack.c.b16 %v7427, %v7423
        %v7580 = vpack.c.b16 %v7428, %v7424
        %v7581 = vpack.c.b16 %v7429, %v7425
        %v7582 = vpack.c.b16 %v7434, %v7430
        %v7583 = vpack.c.b16 %v7435, %v7431
        %v7584 = vpack.c.b16 %v7436, %v7432
        %v7585 = vpack.c.b16 %v7437, %v7433
        %v7586 = vpack.c.b16 %v7442, %v7438
        %v7587 = vpack.c.b16 %v7443, %v7439
        %v7588 = vpack.c.b16 %v7444, %v7440
        %v7589 = vpack.c.b16 %v7445, %v7441
        %v7590 = vpack.c.b16 %v7450, %v7446
        %v7591 = vpack.c.b16 %v7451, %v7447
        %v7592 = vpack.c.b16 %v7452, %v7448
        %v7593 = vpack.c.b16 %v7453, %v7449
        %v7594 = vpack.c.b16 %v7458, %v7454
        %v7595 = vpack.c.b16 %v7459, %v7455
        %v7596 = vpack.c.b16 %v7460, %v7456
        %v7597 = vpack.c.b16 %v7461, %v7457
        %v7598 = vpack.c.b16 %v7466, %v7462
        %v7599 = vpack.c.b16 %v7467, %v7463
        %v7600 = vpack.c.b16 %v7468, %v7464
        %v7601 = vpack.c.b16 %v7469, %v7465
        %v7602 = vpack.c.b16 %v7474, %v7470
        %v7603 = vpack.c.b16 %v7475, %v7471
        %v7604 = vpack.c.b16 %v7476, %v7472
        %v7605 = vpack.c.b16 %v7477, %v7473
        %7734 = vmatpush.bf16.msra.mxu0 %v7506
        %7735 = vmatpush.bf16.msra.mxu0 %v7502
        %7736 = vmatpush.bf16.msra.mxu0 %v7498
        %7737 = vmatpush.bf16.msra.mxu0 %v7494
        %7738 = vmatpush.bf16.msra.mxu0 %v7490
        %7739 = vmatpush.bf16.msra.mxu0 %v7486
        %7740 = vmatpush.bf16.msra.mxu0 %v7482
        %7741 = vmatpush.bf16.msra.mxu0 %v7478
        %7742 = vmatmul.bf16.gmra.mxu0 %v5924
        %v7743 = vpop.f32.mrf.mxu0
        %v7744 = vadd.f32 %v6935, %v7743
        %v7745 = vpop.f32.mrf.mxu0
        %7746 = vdwg.mxu0
        %7747 = vmatpush.bf16.msra.mxu0 %v7538
        %7748 = vmatpush.bf16.msra.mxu0 %v7534
        %7749 = vmatpush.bf16.msra.mxu0 %v7530
        %7750 = vmatpush.bf16.msra.mxu0 %v7526
        %7751 = vmatpush.bf16.msra.mxu0 %v7522
        %7752 = vmatpush.bf16.msra.mxu0 %v7518
        %7753 = vmatpush.bf16.msra.mxu0 %v7514
        %7754 = vmatpush.bf16.msra.mxu0 %v7510
        %7755 = vmatmul.bf16.gmra.mxu0 %v5925
        %v7756 = vpop.f32.mrf.mxu0
        %v7757 = vadd.f32 %v7744, %v7756
        %v7758 = vpop.f32.mrf.mxu0
        %7759 = vdwg.mxu0
        %7760 = vmatpush.bf16.msra.mxu0 %v7570
        %7761 = vmatpush.bf16.msra.mxu0 %v7566
        %7762 = vmatpush.bf16.msra.mxu0 %v7562
        %7763 = vmatpush.bf16.msra.mxu0 %v7558
        %7764 = vmatpush.bf16.msra.mxu0 %v7554
        %7765 = vmatpush.bf16.msra.mxu0 %v7550
        %7766 = vmatpush.bf16.msra.mxu0 %v7546
        %7767 = vmatpush.bf16.msra.mxu0 %v7542
        %7768 = vmatmul.bf16.gmra.mxu0 %v5926
        %v7769 = vpop.f32.mrf.mxu0
        %v7770 = vadd.f32 %v7757, %v7769
        %v7771 = vpop.f32.mrf.mxu0
        %7772 = vdwg.mxu0
        %7773 = vmatpush.bf16.msra.mxu0 %v7602
        %7774 = vmatpush.bf16.msra.mxu0 %v7598
        %7775 = vmatpush.bf16.msra.mxu0 %v7594
        %7776 = vmatpush.bf16.msra.mxu0 %v7590
        %7777 = vmatpush.bf16.msra.mxu0 %v7586
        %7778 = vmatpush.bf16.msra.mxu0 %v7582
        %7779 = vmatpush.bf16.msra.mxu0 %v7578
        %7780 = vmatpush.bf16.msra.mxu0 %v7574
        %7781 = vmatmul.bf16.gmra.mxu0 %v5927
        %v7782 = vpop.f32.mrf.mxu0
        %v7783 = vadd.f32 %v7770, %v7782
        %v7784 = vpop.f32.mrf.mxu0
        %7785 = vdwg.mxu0
        %7786 = vmatpush.bf16.msra.mxu0 %v7507
        %7787 = vmatpush.bf16.msra.mxu0 %v7503
        %7788 = vmatpush.bf16.msra.mxu0 %v7499
        %7789 = vmatpush.bf16.msra.mxu0 %v7495
        %7790 = vmatpush.bf16.msra.mxu0 %v7491
        %7791 = vmatpush.bf16.msra.mxu0 %v7487
        %7792 = vmatpush.bf16.msra.mxu0 %v7483
        %7793 = vmatpush.bf16.msra.mxu0 %v7479
        %7794 = vmatmul.bf16.gmra.mxu0 %v5924
        %v7795 = vpop.f32.mrf.mxu0
        %v7796 = vadd.f32 %v6987, %v7795
        %v7797 = vpop.f32.mrf.mxu0
        %7798 = vdwg.mxu0
        %7799 = vmatpush.bf16.msra.mxu0 %v7539
        %7800 = vmatpush.bf16.msra.mxu0 %v7535
        %7801 = vmatpush.bf16.msra.mxu0 %v7531
        %7802 = vmatpush.bf16.msra.mxu0 %v7527
        %7803 = vmatpush.bf16.msra.mxu0 %v7523
        %7804 = vmatpush.bf16.msra.mxu0 %v7519
        %7805 = vmatpush.bf16.msra.mxu0 %v7515
        %7806 = vmatpush.bf16.msra.mxu0 %v7511
        %7807 = vmatmul.bf16.gmra.mxu0 %v5925
        %v7808 = vpop.f32.mrf.mxu0
        %v7809 = vadd.f32 %v7796, %v7808
        %v7810 = vpop.f32.mrf.mxu0
        %7811 = vdwg.mxu0
        %7812 = vmatpush.bf16.msra.mxu0 %v7571
        %7813 = vmatpush.bf16.msra.mxu0 %v7567
        %7814 = vmatpush.bf16.msra.mxu0 %v7563
        %7815 = vmatpush.bf16.msra.mxu0 %v7559
        %7816 = vmatpush.bf16.msra.mxu0 %v7555
        %7817 = vmatpush.bf16.msra.mxu0 %v7551
        %7818 = vmatpush.bf16.msra.mxu0 %v7547
        %7819 = vmatpush.bf16.msra.mxu0 %v7543
        %7820 = vmatmul.bf16.gmra.mxu0 %v5926
        %v7821 = vpop.f32.mrf.mxu0
        %v7822 = vadd.f32 %v7809, %v7821
        %v7823 = vpop.f32.mrf.mxu0
        %7824 = vdwg.mxu0
        %7825 = vmatpush.bf16.msra.mxu0 %v7603
        %7826 = vmatpush.bf16.msra.mxu0 %v7599
        %7827 = vmatpush.bf16.msra.mxu0 %v7595
        %7828 = vmatpush.bf16.msra.mxu0 %v7591
        %7829 = vmatpush.bf16.msra.mxu0 %v7587
        %7830 = vmatpush.bf16.msra.mxu0 %v7583
        %7831 = vmatpush.bf16.msra.mxu0 %v7579
        %7832 = vmatpush.bf16.msra.mxu0 %v7575
        %7833 = vmatmul.bf16.gmra.mxu0 %v5927
        %v7834 = vpop.f32.mrf.mxu0
        %v7835 = vadd.f32 %v7822, %v7834
        %v7836 = vpop.f32.mrf.mxu0
        %7837 = vdwg.mxu0
        %7838 = vmatpush.bf16.msra.mxu0 %v7508
        %7839 = vmatpush.bf16.msra.mxu0 %v7504
        %7840 = vmatpush.bf16.msra.mxu0 %v7500
        %7841 = vmatpush.bf16.msra.mxu0 %v7496
        %7842 = vmatpush.bf16.msra.mxu0 %v7492
        %7843 = vmatpush.bf16.msra.mxu0 %v7488
        %7844 = vmatpush.bf16.msra.mxu0 %v7484
        %7845 = vmatpush.bf16.msra.mxu0 %v7480
        %7846 = vmatmul.bf16.gmra.mxu0 %v5924
        %v7847 = vpop.f32.mrf.mxu0
        %v7848 = vadd.f32 %v7039, %v7847
        %v7849 = vpop.f32.mrf.mxu0
        %7850 = vdwg.mxu0
        %7851 = vmatpush.bf16.msra.mxu0 %v7540
        %7852 = vmatpush.bf16.msra.mxu0 %v7536
        %7853 = vmatpush.bf16.msra.mxu0 %v7532
        %7854 = vmatpush.bf16.msra.mxu0 %v7528
        %7855 = vmatpush.bf16.msra.mxu0 %v7524
        %7856 = vmatpush.bf16.msra.mxu0 %v7520
        %7857 = vmatpush.bf16.msra.mxu0 %v7516
        %7858 = vmatpush.bf16.msra.mxu0 %v7512
        %7859 = vmatmul.bf16.gmra.mxu0 %v5925
        %v7860 = vpop.f32.mrf.mxu0
        %v7861 = vadd.f32 %v7848, %v7860
        %v7862 = vpop.f32.mrf.mxu0
        %7863 = vdwg.mxu0
        %7864 = vmatpush.bf16.msra.mxu0 %v7572
        %7865 = vmatpush.bf16.msra.mxu0 %v7568
        %7866 = vmatpush.bf16.msra.mxu0 %v7564
        %7867 = vmatpush.bf16.msra.mxu0 %v7560
        %7868 = vmatpush.bf16.msra.mxu0 %v7556
        %7869 = vmatpush.bf16.msra.mxu0 %v7552
        %7870 = vmatpush.bf16.msra.mxu0 %v7548
        %7871 = vmatpush.bf16.msra.mxu0 %v7544
        %7872 = vmatmul.bf16.gmra.mxu0 %v5926
        %v7873 = vpop.f32.mrf.mxu0
        %v7874 = vadd.f32 %v7861, %v7873
        %v7875 = vpop.f32.mrf.mxu0
        %7876 = vdwg.mxu0
        %7877 = vmatpush.bf16.msra.mxu0 %v7604
        %7878 = vmatpush.bf16.msra.mxu0 %v7600
        %7879 = vmatpush.bf16.msra.mxu0 %v7596
        %7880 = vmatpush.bf16.msra.mxu0 %v7592
        %7881 = vmatpush.bf16.msra.mxu0 %v7588
        %7882 = vmatpush.bf16.msra.mxu0 %v7584
        %7883 = vmatpush.bf16.msra.mxu0 %v7580
        %7884 = vmatpush.bf16.msra.mxu0 %v7576
        %7885 = vmatmul.bf16.gmra.mxu0 %v5927
        %v7886 = vpop.f32.mrf.mxu0
        %v7887 = vadd.f32 %v7874, %v7886
        %v7888 = vpop.f32.mrf.mxu0
        %7889 = vdwg.mxu0
        %7890 = vmatpush.bf16.msra.mxu0 %v7509
        %7891 = vmatpush.bf16.msra.mxu0 %v7505
        %7892 = vmatpush.bf16.msra.mxu0 %v7501
        %7893 = vmatpush.bf16.msra.mxu0 %v7497
        %7894 = vmatpush.bf16.msra.mxu0 %v7493
        %7895 = vmatpush.bf16.msra.mxu0 %v7489
        %7896 = vmatpush.bf16.msra.mxu0 %v7485
        %7897 = vmatpush.bf16.msra.mxu0 %v7481
        %7898 = vmatmul.bf16.gmra.mxu0 %v5924
        %v7899 = vpop.f32.mrf.mxu0
        %v7900 = vadd.f32 %v7091, %v7899
        %v7901 = vpop.f32.mrf.mxu0
        %7902 = vdwg.mxu0
        %7903 = vmatpush.bf16.msra.mxu0 %v7541
        %7904 = vmatpush.bf16.msra.mxu0 %v7537
        %7905 = vmatpush.bf16.msra.mxu0 %v7533
        %7906 = vmatpush.bf16.msra.mxu0 %v7529
        %7907 = vmatpush.bf16.msra.mxu0 %v7525
        %7908 = vmatpush.bf16.msra.mxu0 %v7521
        %7909 = vmatpush.bf16.msra.mxu0 %v7517
        %7910 = vmatpush.bf16.msra.mxu0 %v7513
        %7911 = vmatmul.bf16.gmra.mxu0 %v5925
        %v7912 = vpop.f32.mrf.mxu0
        %v7913 = vadd.f32 %v7900, %v7912
        %v7914 = vpop.f32.mrf.mxu0
        %7915 = vdwg.mxu0
        %7916 = vmatpush.bf16.msra.mxu0 %v7573
        %7917 = vmatpush.bf16.msra.mxu0 %v7569
        %7918 = vmatpush.bf16.msra.mxu0 %v7565
        %7919 = vmatpush.bf16.msra.mxu0 %v7561
        %7920 = vmatpush.bf16.msra.mxu0 %v7557
        %7921 = vmatpush.bf16.msra.mxu0 %v7553
        %7922 = vmatpush.bf16.msra.mxu0 %v7549
        %7923 = vmatpush.bf16.msra.mxu0 %v7545
        %7924 = vmatmul.bf16.gmra.mxu0 %v5926
        %v7925 = vpop.f32.mrf.mxu0
        %v7926 = vadd.f32 %v7913, %v7925
        %v7927 = vpop.f32.mrf.mxu0
        %7928 = vdwg.mxu0
        %7929 = vmatpush.bf16.msra.mxu0 %v7605
        %7930 = vmatpush.bf16.msra.mxu0 %v7601
        %7931 = vmatpush.bf16.msra.mxu0 %v7597
        %7932 = vmatpush.bf16.msra.mxu0 %v7593
        %7933 = vmatpush.bf16.msra.mxu0 %v7589
        %7934 = vmatpush.bf16.msra.mxu0 %v7585
        %7935 = vmatpush.bf16.msra.mxu0 %v7581
        %7936 = vmatpush.bf16.msra.mxu0 %v7577
        %7937 = vmatmul.bf16.gmra.mxu0 %v5927
        %v7938 = vpop.f32.mrf.mxu0
        %v7939 = vadd.f32 %v7926, %v7938
        %v7940 = vpop.f32.mrf.mxu0
        %7941 = vdwg.mxu0
        %s7942 = scalar_lea.vmem [#allocation16], 4
        %v7943 = vld [vmem:[%s7942] sm:$0x3]
        %v7945 = vsel %vm5855, %v7943, 0
        %7947 = vmatpush.bf16.msra.mxu0 0
        %7948 = vmatpush.bf16.msra.mxu0 0
        %7949 = vmatpush.bf16.msra.mxu0 0
        %7950 = vmatpush.bf16.msra.mxu0 0
        %7951 = vmatpush.bf16.msra.mxu0 0
        %7952 = vmatpush.bf16.msra.mxu0 0
        %7953 = vmatpush.bf16.msra.mxu0 0
        %7954 = vmatpush.bf16.msra.mxu0 %v5861
        %7955 = vmatmul.bf16.gmra.mxu0 %v7945
        %v7956 = vpop.f32.mrf.mxu0
        %v7957 = vadd.f32 0.0, %v7956
        %v7958 = vpop.f32.mrf.mxu0
        %7959 = vdwg.mxu0
        %7960 = vmatpush.bf16.msra.mxu0 0
        %7961 = vmatpush.bf16.msra.mxu0 0
        %7962 = vmatpush.bf16.msra.mxu0 0
        %7963 = vmatpush.bf16.msra.mxu0 0
        %7964 = vmatpush.bf16.msra.mxu0 0
        %7965 = vmatpush.bf16.msra.mxu0 0
        %7966 = vmatpush.bf16.msra.mxu0 0
        %7967 = vmatpush.bf16.msra.mxu0 %v5864
        %7968 = vmatmul.bf16.gmra.mxu0 %v7945
        %v7969 = vpop.f32.mrf.mxu0
        %v7970 = vadd.f32 0.0, %v7969
        %v7971 = vpop.f32.mrf.mxu0
        %7972 = vdwg.mxu0
        %7973 = vmatpush.bf16.msra.mxu0 0
        %7974 = vmatpush.bf16.msra.mxu0 0
        %7975 = vmatpush.bf16.msra.mxu0 0
        %7976 = vmatpush.bf16.msra.mxu0 0
        %7977 = vmatpush.bf16.msra.mxu0 0
        %7978 = vmatpush.bf16.msra.mxu0 0
        %7979 = vmatpush.bf16.msra.mxu0 0
        %7980 = vmatpush.bf16.msra.mxu0 %v5867
        %7981 = vmatmul.bf16.gmra.mxu0 %v7945
        %v7982 = vpop.f32.mrf.mxu0
        %v7983 = vadd.f32 0.0, %v7982
        %v7984 = vpop.f32.mrf.mxu0
        %7985 = vdwg.mxu0
        %7986 = vmatpush.bf16.msra.mxu0 0
        %7987 = vmatpush.bf16.msra.mxu0 0
        %7988 = vmatpush.bf16.msra.mxu0 0
        %7989 = vmatpush.bf16.msra.mxu0 0
        %7990 = vmatpush.bf16.msra.mxu0 0
        %7991 = vmatpush.bf16.msra.mxu0 0
        %7992 = vmatpush.bf16.msra.mxu0 0
        %7993 = vmatpush.bf16.msra.mxu0 %v5870
        %7994 = vmatmul.bf16.gmra.mxu0 %v7945
        %v7995 = vpop.f32.mrf.mxu0
        %v7996 = vadd.f32 0.0, %v7995
        %v7997 = vpop.f32.mrf.mxu0
        %7998 = vdwg.mxu0
        %v7999 = vpack.c.bf16 %v7957, %v7957
        %v8000 = vpack.c.bf16 %v7970, %v7970
        %v8001 = vpack.c.bf16 %v7983, %v7983
        %v8002 = vpack.c.bf16 %v7996, %v7996
        %s8003 = scalar_lea.vmem [#allocation17], 2048
        %v8004 = vld [vmem:[%s8003] sm:$0xff]
        %v8005 = vld [vmem:[%s8003 + $0x8] sm:$0xff]
        %v8006 = vld [vmem:[%s8003 + $0x10] sm:$0xff]
        %v8007 = vld [vmem:[%s8003 + $0x18] sm:$0xff]
        %v8008 = vld [vmem:[%s8003 + $0x20] sm:$0xff]
        %v8009 = vld [vmem:[%s8003 + $0x28] sm:$0xff]
        %v8010 = vld [vmem:[%s8003 + $0x30] sm:$0xff]
        %v8011 = vld [vmem:[%s8003 + $0x38] sm:$0xff]
        %v8012 = vld [vmem:[%s8003 + $0x40] sm:$0xff]
        %v8013 = vld [vmem:[%s8003 + $0x48] sm:$0xff]
        %v8014 = vld [vmem:[%s8003 + $0x50] sm:$0xff]
        %v8015 = vld [vmem:[%s8003 + $0x58] sm:$0xff]
        %v8016 = vld [vmem:[%s8003 + $0x60] sm:$0xff]
        %v8017 = vld [vmem:[%s8003 + $0x68] sm:$0xff]
        %v8018 = vld [vmem:[%s8003 + $0x70] sm:$0xff]
        %v8019 = vld [vmem:[%s8003 + $0x78] sm:$0xff]
        %v8020 = vld [vmem:[%s8003 + $0x80] sm:$0xff]
        %v8021 = vld [vmem:[%s8003 + $0x88] sm:$0xff]
        %v8022 = vld [vmem:[%s8003 + $0x90] sm:$0xff]
        %v8023 = vld [vmem:[%s8003 + $0x98] sm:$0xff]
        %v8024 = vld [vmem:[%s8003 + $0xa0] sm:$0xff]
        %v8025 = vld [vmem:[%s8003 + $0xa8] sm:$0xff]
        %v8026 = vld [vmem:[%s8003 + $0xb0] sm:$0xff]
        %v8027 = vld [vmem:[%s8003 + $0xb8] sm:$0xff]
        %v8028 = vld [vmem:[%s8003 + $0xc0] sm:$0xff]
        %v8029 = vld [vmem:[%s8003 + $0xc8] sm:$0xff]
        %v8030 = vld [vmem:[%s8003 + $0xd0] sm:$0xff]
        %v8031 = vld [vmem:[%s8003 + $0xd8] sm:$0xff]
        %v8032 = vld [vmem:[%s8003 + $0xe0] sm:$0xff]
        %v8033 = vld [vmem:[%s8003 + $0xe8] sm:$0xff]
        %v8034 = vld [vmem:[%s8003 + $0xf0] sm:$0xff]
        %v8035 = vld [vmem:[%s8003 + $0xf8] sm:$0xff]
        %v8036 = vld [vmem:[%s8003 + $0x100] sm:$0xff]
        %v8037 = vld [vmem:[%s8003 + $0x108] sm:$0xff]
        %v8038 = vld [vmem:[%s8003 + $0x110] sm:$0xff]
        %v8039 = vld [vmem:[%s8003 + $0x118] sm:$0xff]
        %v8040 = vld [vmem:[%s8003 + $0x120] sm:$0xff]
        %v8041 = vld [vmem:[%s8003 + $0x128] sm:$0xff]
        %v8042 = vld [vmem:[%s8003 + $0x130] sm:$0xff]
        %v8043 = vld [vmem:[%s8003 + $0x138] sm:$0xff]
        %v8044 = vld [vmem:[%s8003 + $0x140] sm:$0xff]
        %v8045 = vld [vmem:[%s8003 + $0x148] sm:$0xff]
        %v8046 = vld [vmem:[%s8003 + $0x150] sm:$0xff]
        %v8047 = vld [vmem:[%s8003 + $0x158] sm:$0xff]
        %v8048 = vld [vmem:[%s8003 + $0x160] sm:$0xff]
        %v8049 = vld [vmem:[%s8003 + $0x168] sm:$0xff]
        %v8050 = vld [vmem:[%s8003 + $0x170] sm:$0xff]
        %v8051 = vld [vmem:[%s8003 + $0x178] sm:$0xff]
        %v8052 = vld [vmem:[%s8003 + $0x180] sm:$0xff]
        %v8053 = vld [vmem:[%s8003 + $0x188] sm:$0xff]
        %v8054 = vld [vmem:[%s8003 + $0x190] sm:$0xff]
        %v8055 = vld [vmem:[%s8003 + $0x198] sm:$0xff]
        %v8056 = vld [vmem:[%s8003 + $0x1a0] sm:$0xff]
        %v8057 = vld [vmem:[%s8003 + $0x1a8] sm:$0xff]
        %v8058 = vld [vmem:[%s8003 + $0x1b0] sm:$0xff]
        %v8059 = vld [vmem:[%s8003 + $0x1b8] sm:$0xff]
        %v8060 = vld [vmem:[%s8003 + $0x1c0] sm:$0xff]
        %v8061 = vld [vmem:[%s8003 + $0x1c8] sm:$0xff]
        %v8062 = vld [vmem:[%s8003 + $0x1d0] sm:$0xff]
        %v8063 = vld [vmem:[%s8003 + $0x1d8] sm:$0xff]
        %v8064 = vld [vmem:[%s8003 + $0x1e0] sm:$0xff]
        %v8065 = vld [vmem:[%s8003 + $0x1e8] sm:$0xff]
        %v8066 = vld [vmem:[%s8003 + $0x1f0] sm:$0xff]
        %v8067 = vld [vmem:[%s8003 + $0x1f8] sm:$0xff]
        %v8068 = vld [vmem:[%s8003 + $0x200] sm:$0xff]
        %v8069 = vld [vmem:[%s8003 + $0x208] sm:$0xff]
        %v8070 = vld [vmem:[%s8003 + $0x210] sm:$0xff]
        %v8071 = vld [vmem:[%s8003 + $0x218] sm:$0xff]
        %v8072 = vld [vmem:[%s8003 + $0x220] sm:$0xff]
        %v8073 = vld [vmem:[%s8003 + $0x228] sm:$0xff]
        %v8074 = vld [vmem:[%s8003 + $0x230] sm:$0xff]
        %v8075 = vld [vmem:[%s8003 + $0x238] sm:$0xff]
        %v8076 = vld [vmem:[%s8003 + $0x240] sm:$0xff]
        %v8077 = vld [vmem:[%s8003 + $0x248] sm:$0xff]
        %v8078 = vld [vmem:[%s8003 + $0x250] sm:$0xff]
        %v8079 = vld [vmem:[%s8003 + $0x258] sm:$0xff]
        %v8080 = vld [vmem:[%s8003 + $0x260] sm:$0xff]
        %v8081 = vld [vmem:[%s8003 + $0x268] sm:$0xff]
        %v8082 = vld [vmem:[%s8003 + $0x270] sm:$0xff]
        %v8083 = vld [vmem:[%s8003 + $0x278] sm:$0xff]
        %v8084 = vld [vmem:[%s8003 + $0x280] sm:$0xff]
        %v8085 = vld [vmem:[%s8003 + $0x288] sm:$0xff]
        %v8086 = vld [vmem:[%s8003 + $0x290] sm:$0xff]
        %v8087 = vld [vmem:[%s8003 + $0x298] sm:$0xff]
        %v8088 = vld [vmem:[%s8003 + $0x2a0] sm:$0xff]
        %v8089 = vld [vmem:[%s8003 + $0x2a8] sm:$0xff]
        %v8090 = vld [vmem:[%s8003 + $0x2b0] sm:$0xff]
        %v8091 = vld [vmem:[%s8003 + $0x2b8] sm:$0xff]
        %v8092 = vld [vmem:[%s8003 + $0x2c0] sm:$0xff]
        %v8093 = vld [vmem:[%s8003 + $0x2c8] sm:$0xff]
        %v8094 = vld [vmem:[%s8003 + $0x2d0] sm:$0xff]
        %v8095 = vld [vmem:[%s8003 + $0x2d8] sm:$0xff]
        %v8096 = vld [vmem:[%s8003 + $0x2e0] sm:$0xff]
        %v8097 = vld [vmem:[%s8003 + $0x2e8] sm:$0xff]
        %v8098 = vld [vmem:[%s8003 + $0x2f0] sm:$0xff]
        %v8099 = vld [vmem:[%s8003 + $0x2f8] sm:$0xff]
        %v8100 = vld [vmem:[%s8003 + $0x300] sm:$0xff]
        %v8101 = vld [vmem:[%s8003 + $0x308] sm:$0xff]
        %v8102 = vld [vmem:[%s8003 + $0x310] sm:$0xff]
        %v8103 = vld [vmem:[%s8003 + $0x318] sm:$0xff]
        %v8104 = vld [vmem:[%s8003 + $0x320] sm:$0xff]
        %v8105 = vld [vmem:[%s8003 + $0x328] sm:$0xff]
        %v8106 = vld [vmem:[%s8003 + $0x330] sm:$0xff]
        %v8107 = vld [vmem:[%s8003 + $0x338] sm:$0xff]
        %v8108 = vld [vmem:[%s8003 + $0x340] sm:$0xff]
        %v8109 = vld [vmem:[%s8003 + $0x348] sm:$0xff]
        %v8110 = vld [vmem:[%s8003 + $0x350] sm:$0xff]
        %v8111 = vld [vmem:[%s8003 + $0x358] sm:$0xff]
        %v8112 = vld [vmem:[%s8003 + $0x360] sm:$0xff]
        %v8113 = vld [vmem:[%s8003 + $0x368] sm:$0xff]
        %v8114 = vld [vmem:[%s8003 + $0x370] sm:$0xff]
        %v8115 = vld [vmem:[%s8003 + $0x378] sm:$0xff]
        %v8116 = vld [vmem:[%s8003 + $0x380] sm:$0xff]
        %v8117 = vld [vmem:[%s8003 + $0x388] sm:$0xff]
        %v8118 = vld [vmem:[%s8003 + $0x390] sm:$0xff]
        %v8119 = vld [vmem:[%s8003 + $0x398] sm:$0xff]
        %v8120 = vld [vmem:[%s8003 + $0x3a0] sm:$0xff]
        %v8121 = vld [vmem:[%s8003 + $0x3a8] sm:$0xff]
        %v8122 = vld [vmem:[%s8003 + $0x3b0] sm:$0xff]
        %v8123 = vld [vmem:[%s8003 + $0x3b8] sm:$0xff]
        %v8124 = vld [vmem:[%s8003 + $0x3c0] sm:$0xff]
        %v8125 = vld [vmem:[%s8003 + $0x3c8] sm:$0xff]
        %v8126 = vld [vmem:[%s8003 + $0x3d0] sm:$0xff]
        %v8127 = vld [vmem:[%s8003 + $0x3d8] sm:$0xff]
        %v8128 = vld [vmem:[%s8003 + $0x3e0] sm:$0xff]
        %v8129 = vld [vmem:[%s8003 + $0x3e8] sm:$0xff]
        %v8130 = vld [vmem:[%s8003 + $0x3f0] sm:$0xff]
        %v8131 = vld [vmem:[%s8003 + $0x3f8] sm:$0xff]
        %v8260 = vunpack.c.l.b16 %v8004
        %v8261 = vunpack.c.h.b16 %v8004
        %v8262 = vunpack.c.l.b16 %v8005
        %v8263 = vunpack.c.h.b16 %v8005
        %v8264 = vunpack.c.l.b16 %v8006
        %v8265 = vunpack.c.h.b16 %v8006
        %v8266 = vunpack.c.l.b16 %v8007
        %v8267 = vunpack.c.h.b16 %v8007
        %v8268 = vunpack.c.l.b16 %v8008
        %v8269 = vunpack.c.h.b16 %v8008
        %v8270 = vunpack.c.l.b16 %v8009
        %v8271 = vunpack.c.h.b16 %v8009
        %v8272 = vunpack.c.l.b16 %v8010
        %v8273 = vunpack.c.h.b16 %v8010
        %v8274 = vunpack.c.l.b16 %v8011
        %v8275 = vunpack.c.h.b16 %v8011
        %v8276 = vunpack.c.l.b16 %v8012
        %v8277 = vunpack.c.h.b16 %v8012
        %v8278 = vunpack.c.l.b16 %v8013
        %v8279 = vunpack.c.h.b16 %v8013
        %v8280 = vunpack.c.l.b16 %v8014
        %v8281 = vunpack.c.h.b16 %v8014
        %v8282 = vunpack.c.l.b16 %v8015
        %v8283 = vunpack.c.h.b16 %v8015
        %v8284 = vunpack.c.l.b16 %v8016
        %v8285 = vunpack.c.h.b16 %v8016
        %v8286 = vunpack.c.l.b16 %v8017
        %v8287 = vunpack.c.h.b16 %v8017
        %v8288 = vunpack.c.l.b16 %v8018
        %v8289 = vunpack.c.h.b16 %v8018
        %v8290 = vunpack.c.l.b16 %v8019
        %v8291 = vunpack.c.h.b16 %v8019
        %v8292 = vunpack.c.l.b16 %v8020
        %v8293 = vunpack.c.h.b16 %v8020
        %v8294 = vunpack.c.l.b16 %v8021
        %v8295 = vunpack.c.h.b16 %v8021
        %v8296 = vunpack.c.l.b16 %v8022
        %v8297 = vunpack.c.h.b16 %v8022
        %v8298 = vunpack.c.l.b16 %v8023
        %v8299 = vunpack.c.h.b16 %v8023
        %v8300 = vunpack.c.l.b16 %v8024
        %v8301 = vunpack.c.h.b16 %v8024
        %v8302 = vunpack.c.l.b16 %v8025
        %v8303 = vunpack.c.h.b16 %v8025
        %v8304 = vunpack.c.l.b16 %v8026
        %v8305 = vunpack.c.h.b16 %v8026
        %v8306 = vunpack.c.l.b16 %v8027
        %v8307 = vunpack.c.h.b16 %v8027
        %v8308 = vunpack.c.l.b16 %v8028
        %v8309 = vunpack.c.h.b16 %v8028
        %v8310 = vunpack.c.l.b16 %v8029
        %v8311 = vunpack.c.h.b16 %v8029
        %v8312 = vunpack.c.l.b16 %v8030
        %v8313 = vunpack.c.h.b16 %v8030
        %v8314 = vunpack.c.l.b16 %v8031
        %v8315 = vunpack.c.h.b16 %v8031
        %v8316 = vunpack.c.l.b16 %v8032
        %v8317 = vunpack.c.h.b16 %v8032
        %v8318 = vunpack.c.l.b16 %v8033
        %v8319 = vunpack.c.h.b16 %v8033
        %v8320 = vunpack.c.l.b16 %v8034
        %v8321 = vunpack.c.h.b16 %v8034
        %v8322 = vunpack.c.l.b16 %v8035
        %v8323 = vunpack.c.h.b16 %v8035
        %v8324 = vunpack.c.l.b16 %v8036
        %v8325 = vunpack.c.h.b16 %v8036
        %v8326 = vunpack.c.l.b16 %v8037
        %v8327 = vunpack.c.h.b16 %v8037
        %v8328 = vunpack.c.l.b16 %v8038
        %v8329 = vunpack.c.h.b16 %v8038
        %v8330 = vunpack.c.l.b16 %v8039
        %v8331 = vunpack.c.h.b16 %v8039
        %v8332 = vunpack.c.l.b16 %v8040
        %v8333 = vunpack.c.h.b16 %v8040
        %v8334 = vunpack.c.l.b16 %v8041
        %v8335 = vunpack.c.h.b16 %v8041
        %v8336 = vunpack.c.l.b16 %v8042
        %v8337 = vunpack.c.h.b16 %v8042
        %v8338 = vunpack.c.l.b16 %v8043
        %v8339 = vunpack.c.h.b16 %v8043
        %v8340 = vunpack.c.l.b16 %v8044
        %v8341 = vunpack.c.h.b16 %v8044
        %v8342 = vunpack.c.l.b16 %v8045
        %v8343 = vunpack.c.h.b16 %v8045
        %v8344 = vunpack.c.l.b16 %v8046
        %v8345 = vunpack.c.h.b16 %v8046
        %v8346 = vunpack.c.l.b16 %v8047
        %v8347 = vunpack.c.h.b16 %v8047
        %v8348 = vunpack.c.l.b16 %v8048
        %v8349 = vunpack.c.h.b16 %v8048
        %v8350 = vunpack.c.l.b16 %v8049
        %v8351 = vunpack.c.h.b16 %v8049
        %v8352 = vunpack.c.l.b16 %v8050
        %v8353 = vunpack.c.h.b16 %v8050
        %v8354 = vunpack.c.l.b16 %v8051
        %v8355 = vunpack.c.h.b16 %v8051
        %v8356 = vunpack.c.l.b16 %v8052
        %v8357 = vunpack.c.h.b16 %v8052
        %v8358 = vunpack.c.l.b16 %v8053
        %v8359 = vunpack.c.h.b16 %v8053
        %v8360 = vunpack.c.l.b16 %v8054
        %v8361 = vunpack.c.h.b16 %v8054
        %v8362 = vunpack.c.l.b16 %v8055
        %v8363 = vunpack.c.h.b16 %v8055
        %v8364 = vunpack.c.l.b16 %v8056
        %v8365 = vunpack.c.h.b16 %v8056
        %v8366 = vunpack.c.l.b16 %v8057
        %v8367 = vunpack.c.h.b16 %v8057
        %v8368 = vunpack.c.l.b16 %v8058
        %v8369 = vunpack.c.h.b16 %v8058
        %v8370 = vunpack.c.l.b16 %v8059
        %v8371 = vunpack.c.h.b16 %v8059
        %v8372 = vunpack.c.l.b16 %v8060
        %v8373 = vunpack.c.h.b16 %v8060
        %v8374 = vunpack.c.l.b16 %v8061
        %v8375 = vunpack.c.h.b16 %v8061
        %v8376 = vunpack.c.l.b16 %v8062
        %v8377 = vunpack.c.h.b16 %v8062
        %v8378 = vunpack.c.l.b16 %v8063
        %v8379 = vunpack.c.h.b16 %v8063
        %v8380 = vunpack.c.l.b16 %v8064
        %v8381 = vunpack.c.h.b16 %v8064
        %v8382 = vunpack.c.l.b16 %v8065
        %v8383 = vunpack.c.h.b16 %v8065
        %v8384 = vunpack.c.l.b16 %v8066
        %v8385 = vunpack.c.h.b16 %v8066
        %v8386 = vunpack.c.l.b16 %v8067
        %v8387 = vunpack.c.h.b16 %v8067
        %v8388 = vunpack.c.l.b16 %v8068
        %v8389 = vunpack.c.h.b16 %v8068
        %v8390 = vunpack.c.l.b16 %v8069
        %v8391 = vunpack.c.h.b16 %v8069
        %v8392 = vunpack.c.l.b16 %v8070
        %v8393 = vunpack.c.h.b16 %v8070
        %v8394 = vunpack.c.l.b16 %v8071
        %v8395 = vunpack.c.h.b16 %v8071
        %v8396 = vunpack.c.l.b16 %v8072
        %v8397 = vunpack.c.h.b16 %v8072
        %v8398 = vunpack.c.l.b16 %v8073
        %v8399 = vunpack.c.h.b16 %v8073
        %v8400 = vunpack.c.l.b16 %v8074
        %v8401 = vunpack.c.h.b16 %v8074
        %v8402 = vunpack.c.l.b16 %v8075
        %v8403 = vunpack.c.h.b16 %v8075
        %v8404 = vunpack.c.l.b16 %v8076
        %v8405 = vunpack.c.h.b16 %v8076
        %v8406 = vunpack.c.l.b16 %v8077
        %v8407 = vunpack.c.h.b16 %v8077
        %v8408 = vunpack.c.l.b16 %v8078
        %v8409 = vunpack.c.h.b16 %v8078
        %v8410 = vunpack.c.l.b16 %v8079
        %v8411 = vunpack.c.h.b16 %v8079
        %v8412 = vunpack.c.l.b16 %v8080
        %v8413 = vunpack.c.h.b16 %v8080
        %v8414 = vunpack.c.l.b16 %v8081
        %v8415 = vunpack.c.h.b16 %v8081
        %v8416 = vunpack.c.l.b16 %v8082
        %v8417 = vunpack.c.h.b16 %v8082
        %v8418 = vunpack.c.l.b16 %v8083
        %v8419 = vunpack.c.h.b16 %v8083
        %v8420 = vunpack.c.l.b16 %v8084
        %v8421 = vunpack.c.h.b16 %v8084
        %v8422 = vunpack.c.l.b16 %v8085
        %v8423 = vunpack.c.h.b16 %v8085
        %v8424 = vunpack.c.l.b16 %v8086
        %v8425 = vunpack.c.h.b16 %v8086
        %v8426 = vunpack.c.l.b16 %v8087
        %v8427 = vunpack.c.h.b16 %v8087
        %v8428 = vunpack.c.l.b16 %v8088
        %v8429 = vunpack.c.h.b16 %v8088
        %v8430 = vunpack.c.l.b16 %v8089
        %v8431 = vunpack.c.h.b16 %v8089
        %v8432 = vunpack.c.l.b16 %v8090
        %v8433 = vunpack.c.h.b16 %v8090
        %v8434 = vunpack.c.l.b16 %v8091
        %v8435 = vunpack.c.h.b16 %v8091
        %v8436 = vunpack.c.l.b16 %v8092
        %v8437 = vunpack.c.h.b16 %v8092
        %v8438 = vunpack.c.l.b16 %v8093
        %v8439 = vunpack.c.h.b16 %v8093
        %v8440 = vunpack.c.l.b16 %v8094
        %v8441 = vunpack.c.h.b16 %v8094
        %v8442 = vunpack.c.l.b16 %v8095
        %v8443 = vunpack.c.h.b16 %v8095
        %v8444 = vunpack.c.l.b16 %v8096
        %v8445 = vunpack.c.h.b16 %v8096
        %v8446 = vunpack.c.l.b16 %v8097
        %v8447 = vunpack.c.h.b16 %v8097
        %v8448 = vunpack.c.l.b16 %v8098
        %v8449 = vunpack.c.h.b16 %v8098
        %v8450 = vunpack.c.l.b16 %v8099
        %v8451 = vunpack.c.h.b16 %v8099
        %v8452 = vunpack.c.l.b16 %v8100
        %v8453 = vunpack.c.h.b16 %v8100
        %v8454 = vunpack.c.l.b16 %v8101
        %v8455 = vunpack.c.h.b16 %v8101
        %v8456 = vunpack.c.l.b16 %v8102
        %v8457 = vunpack.c.h.b16 %v8102
        %v8458 = vunpack.c.l.b16 %v8103
        %v8459 = vunpack.c.h.b16 %v8103
        %v8460 = vunpack.c.l.b16 %v8104
        %v8461 = vunpack.c.h.b16 %v8104
        %v8462 = vunpack.c.l.b16 %v8105
        %v8463 = vunpack.c.h.b16 %v8105
        %v8464 = vunpack.c.l.b16 %v8106
        %v8465 = vunpack.c.h.b16 %v8106
        %v8466 = vunpack.c.l.b16 %v8107
        %v8467 = vunpack.c.h.b16 %v8107
        %v8468 = vunpack.c.l.b16 %v8108
        %v8469 = vunpack.c.h.b16 %v8108
        %v8470 = vunpack.c.l.b16 %v8109
        %v8471 = vunpack.c.h.b16 %v8109
        %v8472 = vunpack.c.l.b16 %v8110
        %v8473 = vunpack.c.h.b16 %v8110
        %v8474 = vunpack.c.l.b16 %v8111
        %v8475 = vunpack.c.h.b16 %v8111
        %v8476 = vunpack.c.l.b16 %v8112
        %v8477 = vunpack.c.h.b16 %v8112
        %v8478 = vunpack.c.l.b16 %v8113
        %v8479 = vunpack.c.h.b16 %v8113
        %v8480 = vunpack.c.l.b16 %v8114
        %v8481 = vunpack.c.h.b16 %v8114
        %v8482 = vunpack.c.l.b16 %v8115
        %v8483 = vunpack.c.h.b16 %v8115
        %v8484 = vunpack.c.l.b16 %v8116
        %v8485 = vunpack.c.h.b16 %v8116
        %v8486 = vunpack.c.l.b16 %v8117
        %v8487 = vunpack.c.h.b16 %v8117
        %v8488 = vunpack.c.l.b16 %v8118
        %v8489 = vunpack.c.h.b16 %v8118
        %v8490 = vunpack.c.l.b16 %v8119
        %v8491 = vunpack.c.h.b16 %v8119
        %v8492 = vunpack.c.l.b16 %v8120
        %v8493 = vunpack.c.h.b16 %v8120
        %v8494 = vunpack.c.l.b16 %v8121
        %v8495 = vunpack.c.h.b16 %v8121
        %v8496 = vunpack.c.l.b16 %v8122
        %v8497 = vunpack.c.h.b16 %v8122
        %v8498 = vunpack.c.l.b16 %v8123
        %v8499 = vunpack.c.h.b16 %v8123
        %v8500 = vunpack.c.l.b16 %v8124
        %v8501 = vunpack.c.h.b16 %v8124
        %v8502 = vunpack.c.l.b16 %v8125
        %v8503 = vunpack.c.h.b16 %v8125
        %v8504 = vunpack.c.l.b16 %v8126
        %v8505 = vunpack.c.h.b16 %v8126
        %v8506 = vunpack.c.l.b16 %v8127
        %v8507 = vunpack.c.h.b16 %v8127
        %v8508 = vunpack.c.l.b16 %v8128
        %v8509 = vunpack.c.h.b16 %v8128
        %v8510 = vunpack.c.l.b16 %v8129
        %v8511 = vunpack.c.h.b16 %v8129
        %v8512 = vunpack.c.l.b16 %v8130
        %v8513 = vunpack.c.h.b16 %v8130
        %v8514 = vunpack.c.l.b16 %v8131
        %v8515 = vunpack.c.h.b16 %v8131
        %v8516 = vpack.c.b16 %v8264, %v8260
        %v8517 = vpack.c.b16 %v8265, %v8261
        %v8518 = vpack.c.b16 %v8266, %v8262
        %v8519 = vpack.c.b16 %v8267, %v8263
        %v8520 = vpack.c.b16 %v8272, %v8268
        %v8521 = vpack.c.b16 %v8273, %v8269
        %v8522 = vpack.c.b16 %v8274, %v8270
        %v8523 = vpack.c.b16 %v8275, %v8271
        %v8524 = vpack.c.b16 %v8280, %v8276
        %v8525 = vpack.c.b16 %v8281, %v8277
        %v8526 = vpack.c.b16 %v8282, %v8278
        %v8527 = vpack.c.b16 %v8283, %v8279
        %v8528 = vpack.c.b16 %v8288, %v8284
        %v8529 = vpack.c.b16 %v8289, %v8285
        %v8530 = vpack.c.b16 %v8290, %v8286
        %v8531 = vpack.c.b16 %v8291, %v8287
        %v8532 = vpack.c.b16 %v8296, %v8292
        %v8533 = vpack.c.b16 %v8297, %v8293
        %v8534 = vpack.c.b16 %v8298, %v8294
        %v8535 = vpack.c.b16 %v8299, %v8295
        %v8536 = vpack.c.b16 %v8304, %v8300
        %v8537 = vpack.c.b16 %v8305, %v8301
        %v8538 = vpack.c.b16 %v8306, %v8302
        %v8539 = vpack.c.b16 %v8307, %v8303
        %v8540 = vpack.c.b16 %v8312, %v8308
        %v8541 = vpack.c.b16 %v8313, %v8309
        %v8542 = vpack.c.b16 %v8314, %v8310
        %v8543 = vpack.c.b16 %v8315, %v8311
        %v8544 = vpack.c.b16 %v8320, %v8316
        %v8545 = vpack.c.b16 %v8321, %v8317
        %v8546 = vpack.c.b16 %v8322, %v8318
        %v8547 = vpack.c.b16 %v8323, %v8319
        %v8548 = vpack.c.b16 %v8328, %v8324
        %v8549 = vpack.c.b16 %v8329, %v8325
        %v8550 = vpack.c.b16 %v8330, %v8326
        %v8551 = vpack.c.b16 %v8331, %v8327
        %v8552 = vpack.c.b16 %v8336, %v8332
        %v8553 = vpack.c.b16 %v8337, %v8333
        %v8554 = vpack.c.b16 %v8338, %v8334
        %v8555 = vpack.c.b16 %v8339, %v8335
        %v8556 = vpack.c.b16 %v8344, %v8340
        %v8557 = vpack.c.b16 %v8345, %v8341
        %v8558 = vpack.c.b16 %v8346, %v8342
        %v8559 = vpack.c.b16 %v8347, %v8343
        %v8560 = vpack.c.b16 %v8352, %v8348
        %v8561 = vpack.c.b16 %v8353, %v8349
        %v8562 = vpack.c.b16 %v8354, %v8350
        %v8563 = vpack.c.b16 %v8355, %v8351
        %v8564 = vpack.c.b16 %v8360, %v8356
        %v8565 = vpack.c.b16 %v8361, %v8357
        %v8566 = vpack.c.b16 %v8362, %v8358
        %v8567 = vpack.c.b16 %v8363, %v8359
        %v8568 = vpack.c.b16 %v8368, %v8364
        %v8569 = vpack.c.b16 %v8369, %v8365
        %v8570 = vpack.c.b16 %v8370, %v8366
        %v8571 = vpack.c.b16 %v8371, %v8367
        %v8572 = vpack.c.b16 %v8376, %v8372
        %v8573 = vpack.c.b16 %v8377, %v8373
        %v8574 = vpack.c.b16 %v8378, %v8374
        %v8575 = vpack.c.b16 %v8379, %v8375
        %v8576 = vpack.c.b16 %v8384, %v8380
        %v8577 = vpack.c.b16 %v8385, %v8381
        %v8578 = vpack.c.b16 %v8386, %v8382
        %v8579 = vpack.c.b16 %v8387, %v8383
        %v8580 = vpack.c.b16 %v8392, %v8388
        %v8581 = vpack.c.b16 %v8393, %v8389
        %v8582 = vpack.c.b16 %v8394, %v8390
        %v8583 = vpack.c.b16 %v8395, %v8391
        %v8584 = vpack.c.b16 %v8400, %v8396
        %v8585 = vpack.c.b16 %v8401, %v8397
        %v8586 = vpack.c.b16 %v8402, %v8398
        %v8587 = vpack.c.b16 %v8403, %v8399
        %v8588 = vpack.c.b16 %v8408, %v8404
        %v8589 = vpack.c.b16 %v8409, %v8405
        %v8590 = vpack.c.b16 %v8410, %v8406
        %v8591 = vpack.c.b16 %v8411, %v8407
        %v8592 = vpack.c.b16 %v8416, %v8412
        %v8593 = vpack.c.b16 %v8417, %v8413
        %v8594 = vpack.c.b16 %v8418, %v8414
        %v8595 = vpack.c.b16 %v8419, %v8415
        %v8596 = vpack.c.b16 %v8424, %v8420
        %v8597 = vpack.c.b16 %v8425, %v8421
        %v8598 = vpack.c.b16 %v8426, %v8422
        %v8599 = vpack.c.b16 %v8427, %v8423
        %v8600 = vpack.c.b16 %v8432, %v8428
        %v8601 = vpack.c.b16 %v8433, %v8429
        %v8602 = vpack.c.b16 %v8434, %v8430
        %v8603 = vpack.c.b16 %v8435, %v8431
        %v8604 = vpack.c.b16 %v8440, %v8436
        %v8605 = vpack.c.b16 %v8441, %v8437
        %v8606 = vpack.c.b16 %v8442, %v8438
        %v8607 = vpack.c.b16 %v8443, %v8439
        %v8608 = vpack.c.b16 %v8448, %v8444
        %v8609 = vpack.c.b16 %v8449, %v8445
        %v8610 = vpack.c.b16 %v8450, %v8446
        %v8611 = vpack.c.b16 %v8451, %v8447
        %v8612 = vpack.c.b16 %v8456, %v8452
        %v8613 = vpack.c.b16 %v8457, %v8453
        %v8614 = vpack.c.b16 %v8458, %v8454
        %v8615 = vpack.c.b16 %v8459, %v8455
        %v8616 = vpack.c.b16 %v8464, %v8460
        %v8617 = vpack.c.b16 %v8465, %v8461
        %v8618 = vpack.c.b16 %v8466, %v8462
        %v8619 = vpack.c.b16 %v8467, %v8463
        %v8620 = vpack.c.b16 %v8472, %v8468
        %v8621 = vpack.c.b16 %v8473, %v8469
        %v8622 = vpack.c.b16 %v8474, %v8470
        %v8623 = vpack.c.b16 %v8475, %v8471
        %v8624 = vpack.c.b16 %v8480, %v8476
        %v8625 = vpack.c.b16 %v8481, %v8477
        %v8626 = vpack.c.b16 %v8482, %v8478
        %v8627 = vpack.c.b16 %v8483, %v8479
        %v8628 = vpack.c.b16 %v8488, %v8484
        %v8629 = vpack.c.b16 %v8489, %v8485
        %v8630 = vpack.c.b16 %v8490, %v8486
        %v8631 = vpack.c.b16 %v8491, %v8487
        %v8632 = vpack.c.b16 %v8496, %v8492
        %v8633 = vpack.c.b16 %v8497, %v8493
        %v8634 = vpack.c.b16 %v8498, %v8494
        %v8635 = vpack.c.b16 %v8499, %v8495
        %v8636 = vpack.c.b16 %v8504, %v8500
        %v8637 = vpack.c.b16 %v8505, %v8501
        %v8638 = vpack.c.b16 %v8506, %v8502
        %v8639 = vpack.c.b16 %v8507, %v8503
        %v8640 = vpack.c.b16 %v8512, %v8508
        %v8641 = vpack.c.b16 %v8513, %v8509
        %v8642 = vpack.c.b16 %v8514, %v8510
        %v8643 = vpack.c.b16 %v8515, %v8511
        %8772 = vmatpush.bf16.msra.mxu0 %v8544
        %8773 = vmatpush.bf16.msra.mxu0 %v8540
        %8774 = vmatpush.bf16.msra.mxu0 %v8536
        %8775 = vmatpush.bf16.msra.mxu0 %v8532
        %8776 = vmatpush.bf16.msra.mxu0 %v8528
        %8777 = vmatpush.bf16.msra.mxu0 %v8524
        %8778 = vmatpush.bf16.msra.mxu0 %v8520
        %8779 = vmatpush.bf16.msra.mxu0 %v8516
        %8780 = vmatmul.bf16.gmra.mxu0 %v7999
        %v8781 = vpop.f32.mrf.mxu0
        %v8782 = vadd.f32 0.0, %v8781
        %v8783 = vpop.f32.mrf.mxu0
        %8784 = vdwg.mxu0
        %8785 = vmatpush.bf16.msra.mxu0 %v8576
        %8786 = vmatpush.bf16.msra.mxu0 %v8572
        %8787 = vmatpush.bf16.msra.mxu0 %v8568
        %8788 = vmatpush.bf16.msra.mxu0 %v8564
        %8789 = vmatpush.bf16.msra.mxu0 %v8560
        %8790 = vmatpush.bf16.msra.mxu0 %v8556
        %8791 = vmatpush.bf16.msra.mxu0 %v8552
        %8792 = vmatpush.bf16.msra.mxu0 %v8548
        %8793 = vmatmul.bf16.gmra.mxu0 %v8000
        %v8794 = vpop.f32.mrf.mxu0
        %v8795 = vadd.f32 %v8782, %v8794
        %v8796 = vpop.f32.mrf.mxu0
        %8797 = vdwg.mxu0
        %8798 = vmatpush.bf16.msra.mxu0 %v8608
        %8799 = vmatpush.bf16.msra.mxu0 %v8604
        %8800 = vmatpush.bf16.msra.mxu0 %v8600
        %8801 = vmatpush.bf16.msra.mxu0 %v8596
        %8802 = vmatpush.bf16.msra.mxu0 %v8592
        %8803 = vmatpush.bf16.msra.mxu0 %v8588
        %8804 = vmatpush.bf16.msra.mxu0 %v8584
        %8805 = vmatpush.bf16.msra.mxu0 %v8580
        %8806 = vmatmul.bf16.gmra.mxu0 %v8001
        %v8807 = vpop.f32.mrf.mxu0
        %v8808 = vadd.f32 %v8795, %v8807
        %v8809 = vpop.f32.mrf.mxu0
        %8810 = vdwg.mxu0
        %8811 = vmatpush.bf16.msra.mxu0 %v8640
        %8812 = vmatpush.bf16.msra.mxu0 %v8636
        %8813 = vmatpush.bf16.msra.mxu0 %v8632
        %8814 = vmatpush.bf16.msra.mxu0 %v8628
        %8815 = vmatpush.bf16.msra.mxu0 %v8624
        %8816 = vmatpush.bf16.msra.mxu0 %v8620
        %8817 = vmatpush.bf16.msra.mxu0 %v8616
        %8818 = vmatpush.bf16.msra.mxu0 %v8612
        %8819 = vmatmul.bf16.gmra.mxu0 %v8002
        %v8820 = vpop.f32.mrf.mxu0
        %v8821 = vadd.f32 %v8808, %v8820
        %v8822 = vpop.f32.mrf.mxu0
        %8823 = vdwg.mxu0
        %8824 = vmatpush.bf16.msra.mxu0 %v8545
        %8825 = vmatpush.bf16.msra.mxu0 %v8541
        %8826 = vmatpush.bf16.msra.mxu0 %v8537
        %8827 = vmatpush.bf16.msra.mxu0 %v8533
        %8828 = vmatpush.bf16.msra.mxu0 %v8529
        %8829 = vmatpush.bf16.msra.mxu0 %v8525
        %8830 = vmatpush.bf16.msra.mxu0 %v8521
        %8831 = vmatpush.bf16.msra.mxu0 %v8517
        %8832 = vmatmul.bf16.gmra.mxu0 %v7999
        %v8833 = vpop.f32.mrf.mxu0
        %v8834 = vadd.f32 0.0, %v8833
        %v8835 = vpop.f32.mrf.mxu0
        %8836 = vdwg.mxu0
        %8837 = vmatpush.bf16.msra.mxu0 %v8577
        %8838 = vmatpush.bf16.msra.mxu0 %v8573
        %8839 = vmatpush.bf16.msra.mxu0 %v8569
        %8840 = vmatpush.bf16.msra.mxu0 %v8565
        %8841 = vmatpush.bf16.msra.mxu0 %v8561
        %8842 = vmatpush.bf16.msra.mxu0 %v8557
        %8843 = vmatpush.bf16.msra.mxu0 %v8553
        %8844 = vmatpush.bf16.msra.mxu0 %v8549
        %8845 = vmatmul.bf16.gmra.mxu0 %v8000
        %v8846 = vpop.f32.mrf.mxu0
        %v8847 = vadd.f32 %v8834, %v8846
        %v8848 = vpop.f32.mrf.mxu0
        %8849 = vdwg.mxu0
        %8850 = vmatpush.bf16.msra.mxu0 %v8609
        %8851 = vmatpush.bf16.msra.mxu0 %v8605
        %8852 = vmatpush.bf16.msra.mxu0 %v8601
        %8853 = vmatpush.bf16.msra.mxu0 %v8597
        %8854 = vmatpush.bf16.msra.mxu0 %v8593
        %8855 = vmatpush.bf16.msra.mxu0 %v8589
        %8856 = vmatpush.bf16.msra.mxu0 %v8585
        %8857 = vmatpush.bf16.msra.mxu0 %v8581
        %8858 = vmatmul.bf16.gmra.mxu0 %v8001
        %v8859 = vpop.f32.mrf.mxu0
        %v8860 = vadd.f32 %v8847, %v8859
        %v8861 = vpop.f32.mrf.mxu0
        %8862 = vdwg.mxu0
        %8863 = vmatpush.bf16.msra.mxu0 %v8641
        %8864 = vmatpush.bf16.msra.mxu0 %v8637
        %8865 = vmatpush.bf16.msra.mxu0 %v8633
        %8866 = vmatpush.bf16.msra.mxu0 %v8629
        %8867 = vmatpush.bf16.msra.mxu0 %v8625
        %8868 = vmatpush.bf16.msra.mxu0 %v8621
        %8869 = vmatpush.bf16.msra.mxu0 %v8617
        %8870 = vmatpush.bf16.msra.mxu0 %v8613
        %8871 = vmatmul.bf16.gmra.mxu0 %v8002
        %v8872 = vpop.f32.mrf.mxu0
        %v8873 = vadd.f32 %v8860, %v8872
        %v8874 = vpop.f32.mrf.mxu0
        %8875 = vdwg.mxu0
        %8876 = vmatpush.bf16.msra.mxu0 %v8546
        %8877 = vmatpush.bf16.msra.mxu0 %v8542
        %8878 = vmatpush.bf16.msra.mxu0 %v8538
        %8879 = vmatpush.bf16.msra.mxu0 %v8534
        %8880 = vmatpush.bf16.msra.mxu0 %v8530
        %8881 = vmatpush.bf16.msra.mxu0 %v8526
        %8882 = vmatpush.bf16.msra.mxu0 %v8522
        %8883 = vmatpush.bf16.msra.mxu0 %v8518
        %8884 = vmatmul.bf16.gmra.mxu0 %v7999
        %v8885 = vpop.f32.mrf.mxu0
        %v8886 = vadd.f32 0.0, %v8885
        %v8887 = vpop.f32.mrf.mxu0
        %8888 = vdwg.mxu0
        %8889 = vmatpush.bf16.msra.mxu0 %v8578
        %8890 = vmatpush.bf16.msra.mxu0 %v8574
        %8891 = vmatpush.bf16.msra.mxu0 %v8570
        %8892 = vmatpush.bf16.msra.mxu0 %v8566
        %8893 = vmatpush.bf16.msra.mxu0 %v8562
        %8894 = vmatpush.bf16.msra.mxu0 %v8558
        %8895 = vmatpush.bf16.msra.mxu0 %v8554
        %8896 = vmatpush.bf16.msra.mxu0 %v8550
        %8897 = vmatmul.bf16.gmra.mxu0 %v8000
        %v8898 = vpop.f32.mrf.mxu0
        %v8899 = vadd.f32 %v8886, %v8898
        %v8900 = vpop.f32.mrf.mxu0
        %8901 = vdwg.mxu0
        %8902 = vmatpush.bf16.msra.mxu0 %v8610
        %8903 = vmatpush.bf16.msra.mxu0 %v8606
        %8904 = vmatpush.bf16.msra.mxu0 %v8602
        %8905 = vmatpush.bf16.msra.mxu0 %v8598
        %8906 = vmatpush.bf16.msra.mxu0 %v8594
        %8907 = vmatpush.bf16.msra.mxu0 %v8590
        %8908 = vmatpush.bf16.msra.mxu0 %v8586
        %8909 = vmatpush.bf16.msra.mxu0 %v8582
        %8910 = vmatmul.bf16.gmra.mxu0 %v8001
        %v8911 = vpop.f32.mrf.mxu0
        %v8912 = vadd.f32 %v8899, %v8911
        %v8913 = vpop.f32.mrf.mxu0
        %8914 = vdwg.mxu0
        %8915 = vmatpush.bf16.msra.mxu0 %v8642
        %8916 = vmatpush.bf16.msra.mxu0 %v8638
        %8917 = vmatpush.bf16.msra.mxu0 %v8634
        %8918 = vmatpush.bf16.msra.mxu0 %v8630
        %8919 = vmatpush.bf16.msra.mxu0 %v8626
        %8920 = vmatpush.bf16.msra.mxu0 %v8622
        %8921 = vmatpush.bf16.msra.mxu0 %v8618
        %8922 = vmatpush.bf16.msra.mxu0 %v8614
        %8923 = vmatmul.bf16.gmra.mxu0 %v8002
        %v8924 = vpop.f32.mrf.mxu0
        %v8925 = vadd.f32 %v8912, %v8924
        %v8926 = vpop.f32.mrf.mxu0
        %8927 = vdwg.mxu0
        %8928 = vmatpush.bf16.msra.mxu0 %v8547
        %8929 = vmatpush.bf16.msra.mxu0 %v8543
        %8930 = vmatpush.bf16.msra.mxu0 %v8539
        %8931 = vmatpush.bf16.msra.mxu0 %v8535
        %8932 = vmatpush.bf16.msra.mxu0 %v8531
        %8933 = vmatpush.bf16.msra.mxu0 %v8527
        %8934 = vmatpush.bf16.msra.mxu0 %v8523
        %8935 = vmatpush.bf16.msra.mxu0 %v8519
        %8936 = vmatmul.bf16.gmra.mxu0 %v7999
        %v8937 = vpop.f32.mrf.mxu0
        %v8938 = vadd.f32 0.0, %v8937
        %v8939 = vpop.f32.mrf.mxu0
        %8940 = vdwg.mxu0
        %8941 = vmatpush.bf16.msra.mxu0 %v8579
        %8942 = vmatpush.bf16.msra.mxu0 %v8575
        %8943 = vmatpush.bf16.msra.mxu0 %v8571
        %8944 = vmatpush.bf16.msra.mxu0 %v8567
        %8945 = vmatpush.bf16.msra.mxu0 %v8563
        %8946 = vmatpush.bf16.msra.mxu0 %v8559
        %8947 = vmatpush.bf16.msra.mxu0 %v8555
        %8948 = vmatpush.bf16.msra.mxu0 %v8551
        %8949 = vmatmul.bf16.gmra.mxu0 %v8000
        %v8950 = vpop.f32.mrf.mxu0
        %v8951 = vadd.f32 %v8938, %v8950
        %v8952 = vpop.f32.mrf.mxu0
        %8953 = vdwg.mxu0
        %8954 = vmatpush.bf16.msra.mxu0 %v8611
        %8955 = vmatpush.bf16.msra.mxu0 %v8607
        %8956 = vmatpush.bf16.msra.mxu0 %v8603
        %8957 = vmatpush.bf16.msra.mxu0 %v8599
        %8958 = vmatpush.bf16.msra.mxu0 %v8595
        %8959 = vmatpush.bf16.msra.mxu0 %v8591
        %8960 = vmatpush.bf16.msra.mxu0 %v8587
        %8961 = vmatpush.bf16.msra.mxu0 %v8583
        %8962 = vmatmul.bf16.gmra.mxu0 %v8001
        %v8963 = vpop.f32.mrf.mxu0
        %v8964 = vadd.f32 %v8951, %v8963
        %v8965 = vpop.f32.mrf.mxu0
        %8966 = vdwg.mxu0
        %8967 = vmatpush.bf16.msra.mxu0 %v8643
        %8968 = vmatpush.bf16.msra.mxu0 %v8639
        %8969 = vmatpush.bf16.msra.mxu0 %v8635
        %8970 = vmatpush.bf16.msra.mxu0 %v8631
        %8971 = vmatpush.bf16.msra.mxu0 %v8627
        %8972 = vmatpush.bf16.msra.mxu0 %v8623
        %8973 = vmatpush.bf16.msra.mxu0 %v8619
        %8974 = vmatpush.bf16.msra.mxu0 %v8615
        %8975 = vmatmul.bf16.gmra.mxu0 %v8002
        %v8976 = vpop.f32.mrf.mxu0
        %v8977 = vadd.f32 %v8964, %v8976
        %v8978 = vpop.f32.mrf.mxu0
        %8979 = vdwg.mxu0
        %v8980 = vadd.f32 %v7783, %v8821
        %v8981 = vadd.f32 %v7835, %v8873
        %v8982 = vadd.f32 %v7887, %v8925
        %v8983 = vadd.f32 %v7939, %v8977
        %s8984 = scalar_lea.vmem [#allocation16], 6
        %v8985 = vld [vmem:[%s8984] sm:$0x3]
        %v8987 = vsel %vm5855, %v8985, 0
        %8989 = vmatpush.bf16.msra.mxu0 0
        %8990 = vmatpush.bf16.msra.mxu0 0
        %8991 = vmatpush.bf16.msra.mxu0 0
        %8992 = vmatpush.bf16.msra.mxu0 0
        %8993 = vmatpush.bf16.msra.mxu0 0
        %8994 = vmatpush.bf16.msra.mxu0 0
        %8995 = vmatpush.bf16.msra.mxu0 0
        %8996 = vmatpush.bf16.msra.mxu0 %v5861
        %8997 = vmatmul.bf16.gmra.mxu0 %v8987
        %v8998 = vpop.f32.mrf.mxu0
        %v8999 = vadd.f32 0.0, %v8998
        %v9000 = vpop.f32.mrf.mxu0
        %9001 = vdwg.mxu0
        %9002 = vmatpush.bf16.msra.mxu0 0
        %9003 = vmatpush.bf16.msra.mxu0 0
        %9004 = vmatpush.bf16.msra.mxu0 0
        %9005 = vmatpush.bf16.msra.mxu0 0
        %9006 = vmatpush.bf16.msra.mxu0 0
        %9007 = vmatpush.bf16.msra.mxu0 0
        %9008 = vmatpush.bf16.msra.mxu0 0
        %9009 = vmatpush.bf16.msra.mxu0 %v5864
        %9010 = vmatmul.bf16.gmra.mxu0 %v8987
        %v9011 = vpop.f32.mrf.mxu0
        %v9012 = vadd.f32 0.0, %v9011
        %v9013 = vpop.f32.mrf.mxu0
        %9014 = vdwg.mxu0
        %9015 = vmatpush.bf16.msra.mxu0 0
        %9016 = vmatpush.bf16.msra.mxu0 0
        %9017 = vmatpush.bf16.msra.mxu0 0
        %9018 = vmatpush.bf16.msra.mxu0 0
        %9019 = vmatpush.bf16.msra.mxu0 0
        %9020 = vmatpush.bf16.msra.mxu0 0
        %9021 = vmatpush.bf16.msra.mxu0 0
        %9022 = vmatpush.bf16.msra.mxu0 %v5867
        %9023 = vmatmul.bf16.gmra.mxu0 %v8987
        %v9024 = vpop.f32.mrf.mxu0
        %v9025 = vadd.f32 0.0, %v9024
        %v9026 = vpop.f32.mrf.mxu0
        %9027 = vdwg.mxu0
        %9028 = vmatpush.bf16.msra.mxu0 0
        %9029 = vmatpush.bf16.msra.mxu0 0
        %9030 = vmatpush.bf16.msra.mxu0 0
        %9031 = vmatpush.bf16.msra.mxu0 0
        %9032 = vmatpush.bf16.msra.mxu0 0
        %9033 = vmatpush.bf16.msra.mxu0 0
        %9034 = vmatpush.bf16.msra.mxu0 0
        %9035 = vmatpush.bf16.msra.mxu0 %v5870
        %9036 = vmatmul.bf16.gmra.mxu0 %v8987
        %v9037 = vpop.f32.mrf.mxu0
        %v9038 = vadd.f32 0.0, %v9037
        %v9039 = vpop.f32.mrf.mxu0
        %9040 = vdwg.mxu0
        %v9041 = vpack.c.bf16 %v8999, %v8999
        %v9042 = vpack.c.bf16 %v9012, %v9012
        %v9043 = vpack.c.bf16 %v9025, %v9025
        %v9044 = vpack.c.bf16 %v9038, %v9038
        %s9045 = scalar_lea.vmem [#allocation17], 3072
        %v9046 = vld [vmem:[%s9045] sm:$0xff]
        %v9047 = vld [vmem:[%s9045 + $0x8] sm:$0xff]
        %v9048 = vld [vmem:[%s9045 + $0x10] sm:$0xff]
        %v9049 = vld [vmem:[%s9045 + $0x18] sm:$0xff]
        %v9050 = vld [vmem:[%s9045 + $0x20] sm:$0xff]
        %v9051 = vld [vmem:[%s9045 + $0x28] sm:$0xff]
        %v9052 = vld [vmem:[%s9045 + $0x30] sm:$0xff]
        %v9053 = vld [vmem:[%s9045 + $0x38] sm:$0xff]
        %v9054 = vld [vmem:[%s9045 + $0x40] sm:$0xff]
        %v9055 = vld [vmem:[%s9045 + $0x48] sm:$0xff]
        %v9056 = vld [vmem:[%s9045 + $0x50] sm:$0xff]
        %v9057 = vld [vmem:[%s9045 + $0x58] sm:$0xff]
        %v9058 = vld [vmem:[%s9045 + $0x60] sm:$0xff]
        %v9059 = vld [vmem:[%s9045 + $0x68] sm:$0xff]
        %v9060 = vld [vmem:[%s9045 + $0x70] sm:$0xff]
        %v9061 = vld [vmem:[%s9045 + $0x78] sm:$0xff]
        %v9062 = vld [vmem:[%s9045 + $0x80] sm:$0xff]
        %v9063 = vld [vmem:[%s9045 + $0x88] sm:$0xff]
        %v9064 = vld [vmem:[%s9045 + $0x90] sm:$0xff]
        %v9065 = vld [vmem:[%s9045 + $0x98] sm:$0xff]
        %v9066 = vld [vmem:[%s9045 + $0xa0] sm:$0xff]
        %v9067 = vld [vmem:[%s9045 + $0xa8] sm:$0xff]
        %v9068 = vld [vmem:[%s9045 + $0xb0] sm:$0xff]
        %v9069 = vld [vmem:[%s9045 + $0xb8] sm:$0xff]
        %v9070 = vld [vmem:[%s9045 + $0xc0] sm:$0xff]
        %v9071 = vld [vmem:[%s9045 + $0xc8] sm:$0xff]
        %v9072 = vld [vmem:[%s9045 + $0xd0] sm:$0xff]
        %v9073 = vld [vmem:[%s9045 + $0xd8] sm:$0xff]
        %v9074 = vld [vmem:[%s9045 + $0xe0] sm:$0xff]
        %v9075 = vld [vmem:[%s9045 + $0xe8] sm:$0xff]
        %v9076 = vld [vmem:[%s9045 + $0xf0] sm:$0xff]
        %v9077 = vld [vmem:[%s9045 + $0xf8] sm:$0xff]
        %v9078 = vld [vmem:[%s9045 + $0x100] sm:$0xff]
        %v9079 = vld [vmem:[%s9045 + $0x108] sm:$0xff]
        %v9080 = vld [vmem:[%s9045 + $0x110] sm:$0xff]
        %v9081 = vld [vmem:[%s9045 + $0x118] sm:$0xff]
        %v9082 = vld [vmem:[%s9045 + $0x120] sm:$0xff]
        %v9083 = vld [vmem:[%s9045 + $0x128] sm:$0xff]
        %v9084 = vld [vmem:[%s9045 + $0x130] sm:$0xff]
        %v9085 = vld [vmem:[%s9045 + $0x138] sm:$0xff]
        %v9086 = vld [vmem:[%s9045 + $0x140] sm:$0xff]
        %v9087 = vld [vmem:[%s9045 + $0x148] sm:$0xff]
        %v9088 = vld [vmem:[%s9045 + $0x150] sm:$0xff]
        %v9089 = vld [vmem:[%s9045 + $0x158] sm:$0xff]
        %v9090 = vld [vmem:[%s9045 + $0x160] sm:$0xff]
        %v9091 = vld [vmem:[%s9045 + $0x168] sm:$0xff]
        %v9092 = vld [vmem:[%s9045 + $0x170] sm:$0xff]
        %v9093 = vld [vmem:[%s9045 + $0x178] sm:$0xff]
        %v9094 = vld [vmem:[%s9045 + $0x180] sm:$0xff]
        %v9095 = vld [vmem:[%s9045 + $0x188] sm:$0xff]
        %v9096 = vld [vmem:[%s9045 + $0x190] sm:$0xff]
        %v9097 = vld [vmem:[%s9045 + $0x198] sm:$0xff]
        %v9098 = vld [vmem:[%s9045 + $0x1a0] sm:$0xff]
        %v9099 = vld [vmem:[%s9045 + $0x1a8] sm:$0xff]
        %v9100 = vld [vmem:[%s9045 + $0x1b0] sm:$0xff]
        %v9101 = vld [vmem:[%s9045 + $0x1b8] sm:$0xff]
        %v9102 = vld [vmem:[%s9045 + $0x1c0] sm:$0xff]
        %v9103 = vld [vmem:[%s9045 + $0x1c8] sm:$0xff]
        %v9104 = vld [vmem:[%s9045 + $0x1d0] sm:$0xff]
        %v9105 = vld [vmem:[%s9045 + $0x1d8] sm:$0xff]
        %v9106 = vld [vmem:[%s9045 + $0x1e0] sm:$0xff]
        %v9107 = vld [vmem:[%s9045 + $0x1e8] sm:$0xff]
        %v9108 = vld [vmem:[%s9045 + $0x1f0] sm:$0xff]
        %v9109 = vld [vmem:[%s9045 + $0x1f8] sm:$0xff]
        %v9110 = vld [vmem:[%s9045 + $0x200] sm:$0xff]
        %v9111 = vld [vmem:[%s9045 + $0x208] sm:$0xff]
        %v9112 = vld [vmem:[%s9045 + $0x210] sm:$0xff]
        %v9113 = vld [vmem:[%s9045 + $0x218] sm:$0xff]
        %v9114 = vld [vmem:[%s9045 + $0x220] sm:$0xff]
        %v9115 = vld [vmem:[%s9045 + $0x228] sm:$0xff]
        %v9116 = vld [vmem:[%s9045 + $0x230] sm:$0xff]
        %v9117 = vld [vmem:[%s9045 + $0x238] sm:$0xff]
        %v9118 = vld [vmem:[%s9045 + $0x240] sm:$0xff]
        %v9119 = vld [vmem:[%s9045 + $0x248] sm:$0xff]
        %v9120 = vld [vmem:[%s9045 + $0x250] sm:$0xff]
        %v9121 = vld [vmem:[%s9045 + $0x258] sm:$0xff]
        %v9122 = vld [vmem:[%s9045 + $0x260] sm:$0xff]
        %v9123 = vld [vmem:[%s9045 + $0x268] sm:$0xff]
        %v9124 = vld [vmem:[%s9045 + $0x270] sm:$0xff]
        %v9125 = vld [vmem:[%s9045 + $0x278] sm:$0xff]
        %v9126 = vld [vmem:[%s9045 + $0x280] sm:$0xff]
        %v9127 = vld [vmem:[%s9045 + $0x288] sm:$0xff]
        %v9128 = vld [vmem:[%s9045 + $0x290] sm:$0xff]
        %v9129 = vld [vmem:[%s9045 + $0x298] sm:$0xff]
        %v9130 = vld [vmem:[%s9045 + $0x2a0] sm:$0xff]
        %v9131 = vld [vmem:[%s9045 + $0x2a8] sm:$0xff]
        %v9132 = vld [vmem:[%s9045 + $0x2b0] sm:$0xff]
        %v9133 = vld [vmem:[%s9045 + $0x2b8] sm:$0xff]
        %v9134 = vld [vmem:[%s9045 + $0x2c0] sm:$0xff]
        %v9135 = vld [vmem:[%s9045 + $0x2c8] sm:$0xff]
        %v9136 = vld [vmem:[%s9045 + $0x2d0] sm:$0xff]
        %v9137 = vld [vmem:[%s9045 + $0x2d8] sm:$0xff]
        %v9138 = vld [vmem:[%s9045 + $0x2e0] sm:$0xff]
        %v9139 = vld [vmem:[%s9045 + $0x2e8] sm:$0xff]
        %v9140 = vld [vmem:[%s9045 + $0x2f0] sm:$0xff]
        %v9141 = vld [vmem:[%s9045 + $0x2f8] sm:$0xff]
        %v9142 = vld [vmem:[%s9045 + $0x300] sm:$0xff]
        %v9143 = vld [vmem:[%s9045 + $0x308] sm:$0xff]
        %v9144 = vld [vmem:[%s9045 + $0x310] sm:$0xff]
        %v9145 = vld [vmem:[%s9045 + $0x318] sm:$0xff]
        %v9146 = vld [vmem:[%s9045 + $0x320] sm:$0xff]
        %v9147 = vld [vmem:[%s9045 + $0x328] sm:$0xff]
        %v9148 = vld [vmem:[%s9045 + $0x330] sm:$0xff]
        %v9149 = vld [vmem:[%s9045 + $0x338] sm:$0xff]
        %v9150 = vld [vmem:[%s9045 + $0x340] sm:$0xff]
        %v9151 = vld [vmem:[%s9045 + $0x348] sm:$0xff]
        %v9152 = vld [vmem:[%s9045 + $0x350] sm:$0xff]
        %v9153 = vld [vmem:[%s9045 + $0x358] sm:$0xff]
        %v9154 = vld [vmem:[%s9045 + $0x360] sm:$0xff]
        %v9155 = vld [vmem:[%s9045 + $0x368] sm:$0xff]
        %v9156 = vld [vmem:[%s9045 + $0x370] sm:$0xff]
        %v9157 = vld [vmem:[%s9045 + $0x378] sm:$0xff]
        %v9158 = vld [vmem:[%s9045 + $0x380] sm:$0xff]
        %v9159 = vld [vmem:[%s9045 + $0x388] sm:$0xff]
        %v9160 = vld [vmem:[%s9045 + $0x390] sm:$0xff]
        %v9161 = vld [vmem:[%s9045 + $0x398] sm:$0xff]
        %v9162 = vld [vmem:[%s9045 + $0x3a0] sm:$0xff]
        %v9163 = vld [vmem:[%s9045 + $0x3a8] sm:$0xff]
        %v9164 = vld [vmem:[%s9045 + $0x3b0] sm:$0xff]
        %v9165 = vld [vmem:[%s9045 + $0x3b8] sm:$0xff]
        %v9166 = vld [vmem:[%s9045 + $0x3c0] sm:$0xff]
        %v9167 = vld [vmem:[%s9045 + $0x3c8] sm:$0xff]
        %v9168 = vld [vmem:[%s9045 + $0x3d0] sm:$0xff]
        %v9169 = vld [vmem:[%s9045 + $0x3d8] sm:$0xff]
        %v9170 = vld [vmem:[%s9045 + $0x3e0] sm:$0xff]
        %v9171 = vld [vmem:[%s9045 + $0x3e8] sm:$0xff]
        %v9172 = vld [vmem:[%s9045 + $0x3f0] sm:$0xff]
        %v9173 = vld [vmem:[%s9045 + $0x3f8] sm:$0xff]
        %v9302 = vunpack.c.l.b16 %v9046
        %v9303 = vunpack.c.h.b16 %v9046
        %v9304 = vunpack.c.l.b16 %v9047
        %v9305 = vunpack.c.h.b16 %v9047
        %v9306 = vunpack.c.l.b16 %v9048
        %v9307 = vunpack.c.h.b16 %v9048
        %v9308 = vunpack.c.l.b16 %v9049
        %v9309 = vunpack.c.h.b16 %v9049
        %v9310 = vunpack.c.l.b16 %v9050
        %v9311 = vunpack.c.h.b16 %v9050
        %v9312 = vunpack.c.l.b16 %v9051
        %v9313 = vunpack.c.h.b16 %v9051
        %v9314 = vunpack.c.l.b16 %v9052
        %v9315 = vunpack.c.h.b16 %v9052
        %v9316 = vunpack.c.l.b16 %v9053
        %v9317 = vunpack.c.h.b16 %v9053
        %v9318 = vunpack.c.l.b16 %v9054
        %v9319 = vunpack.c.h.b16 %v9054
        %v9320 = vunpack.c.l.b16 %v9055
        %v9321 = vunpack.c.h.b16 %v9055
        %v9322 = vunpack.c.l.b16 %v9056
        %v9323 = vunpack.c.h.b16 %v9056
        %v9324 = vunpack.c.l.b16 %v9057
        %v9325 = vunpack.c.h.b16 %v9057
        %v9326 = vunpack.c.l.b16 %v9058
        %v9327 = vunpack.c.h.b16 %v9058
        %v9328 = vunpack.c.l.b16 %v9059
        %v9329 = vunpack.c.h.b16 %v9059
        %v9330 = vunpack.c.l.b16 %v9060
        %v9331 = vunpack.c.h.b16 %v9060
        %v9332 = vunpack.c.l.b16 %v9061
        %v9333 = vunpack.c.h.b16 %v9061
        %v9334 = vunpack.c.l.b16 %v9062
        %v9335 = vunpack.c.h.b16 %v9062
        %v9336 = vunpack.c.l.b16 %v9063
        %v9337 = vunpack.c.h.b16 %v9063
        %v9338 = vunpack.c.l.b16 %v9064
        %v9339 = vunpack.c.h.b16 %v9064
        %v9340 = vunpack.c.l.b16 %v9065
        %v9341 = vunpack.c.h.b16 %v9065
        %v9342 = vunpack.c.l.b16 %v9066
        %v9343 = vunpack.c.h.b16 %v9066
        %v9344 = vunpack.c.l.b16 %v9067
        %v9345 = vunpack.c.h.b16 %v9067
        %v9346 = vunpack.c.l.b16 %v9068
        %v9347 = vunpack.c.h.b16 %v9068
        %v9348 = vunpack.c.l.b16 %v9069
        %v9349 = vunpack.c.h.b16 %v9069
        %v9350 = vunpack.c.l.b16 %v9070
        %v9351 = vunpack.c.h.b16 %v9070
        %v9352 = vunpack.c.l.b16 %v9071
        %v9353 = vunpack.c.h.b16 %v9071
        %v9354 = vunpack.c.l.b16 %v9072
        %v9355 = vunpack.c.h.b16 %v9072
        %v9356 = vunpack.c.l.b16 %v9073
        %v9357 = vunpack.c.h.b16 %v9073
        %v9358 = vunpack.c.l.b16 %v9074
        %v9359 = vunpack.c.h.b16 %v9074
        %v9360 = vunpack.c.l.b16 %v9075
        %v9361 = vunpack.c.h.b16 %v9075
        %v9362 = vunpack.c.l.b16 %v9076
        %v9363 = vunpack.c.h.b16 %v9076
        %v9364 = vunpack.c.l.b16 %v9077
        %v9365 = vunpack.c.h.b16 %v9077
        %v9366 = vunpack.c.l.b16 %v9078
        %v9367 = vunpack.c.h.b16 %v9078
        %v9368 = vunpack.c.l.b16 %v9079
        %v9369 = vunpack.c.h.b16 %v9079
        %v9370 = vunpack.c.l.b16 %v9080
        %v9371 = vunpack.c.h.b16 %v9080
        %v9372 = vunpack.c.l.b16 %v9081
        %v9373 = vunpack.c.h.b16 %v9081
        %v9374 = vunpack.c.l.b16 %v9082
        %v9375 = vunpack.c.h.b16 %v9082
        %v9376 = vunpack.c.l.b16 %v9083
        %v9377 = vunpack.c.h.b16 %v9083
        %v9378 = vunpack.c.l.b16 %v9084
        %v9379 = vunpack.c.h.b16 %v9084
        %v9380 = vunpack.c.l.b16 %v9085
        %v9381 = vunpack.c.h.b16 %v9085
        %v9382 = vunpack.c.l.b16 %v9086
        %v9383 = vunpack.c.h.b16 %v9086
        %v9384 = vunpack.c.l.b16 %v9087
        %v9385 = vunpack.c.h.b16 %v9087
        %v9386 = vunpack.c.l.b16 %v9088
        %v9387 = vunpack.c.h.b16 %v9088
        %v9388 = vunpack.c.l.b16 %v9089
        %v9389 = vunpack.c.h.b16 %v9089
        %v9390 = vunpack.c.l.b16 %v9090
        %v9391 = vunpack.c.h.b16 %v9090
        %v9392 = vunpack.c.l.b16 %v9091
        %v9393 = vunpack.c.h.b16 %v9091
        %v9394 = vunpack.c.l.b16 %v9092
        %v9395 = vunpack.c.h.b16 %v9092
        %v9396 = vunpack.c.l.b16 %v9093
        %v9397 = vunpack.c.h.b16 %v9093
        %v9398 = vunpack.c.l.b16 %v9094
        %v9399 = vunpack.c.h.b16 %v9094
        %v9400 = vunpack.c.l.b16 %v9095
        %v9401 = vunpack.c.h.b16 %v9095
        %v9402 = vunpack.c.l.b16 %v9096
        %v9403 = vunpack.c.h.b16 %v9096
        %v9404 = vunpack.c.l.b16 %v9097
        %v9405 = vunpack.c.h.b16 %v9097
        %v9406 = vunpack.c.l.b16 %v9098
        %v9407 = vunpack.c.h.b16 %v9098
        %v9408 = vunpack.c.l.b16 %v9099
        %v9409 = vunpack.c.h.b16 %v9099
        %v9410 = vunpack.c.l.b16 %v9100
        %v9411 = vunpack.c.h.b16 %v9100
        %v9412 = vunpack.c.l.b16 %v9101
        %v9413 = vunpack.c.h.b16 %v9101
        %v9414 = vunpack.c.l.b16 %v9102
        %v9415 = vunpack.c.h.b16 %v9102
        %v9416 = vunpack.c.l.b16 %v9103
        %v9417 = vunpack.c.h.b16 %v9103
        %v9418 = vunpack.c.l.b16 %v9104
        %v9419 = vunpack.c.h.b16 %v9104
        %v9420 = vunpack.c.l.b16 %v9105
        %v9421 = vunpack.c.h.b16 %v9105
        %v9422 = vunpack.c.l.b16 %v9106
        %v9423 = vunpack.c.h.b16 %v9106
        %v9424 = vunpack.c.l.b16 %v9107
        %v9425 = vunpack.c.h.b16 %v9107
        %v9426 = vunpack.c.l.b16 %v9108
        %v9427 = vunpack.c.h.b16 %v9108
        %v9428 = vunpack.c.l.b16 %v9109
        %v9429 = vunpack.c.h.b16 %v9109
        %v9430 = vunpack.c.l.b16 %v9110
        %v9431 = vunpack.c.h.b16 %v9110
        %v9432 = vunpack.c.l.b16 %v9111
        %v9433 = vunpack.c.h.b16 %v9111
        %v9434 = vunpack.c.l.b16 %v9112
        %v9435 = vunpack.c.h.b16 %v9112
        %v9436 = vunpack.c.l.b16 %v9113
        %v9437 = vunpack.c.h.b16 %v9113
        %v9438 = vunpack.c.l.b16 %v9114
        %v9439 = vunpack.c.h.b16 %v9114
        %v9440 = vunpack.c.l.b16 %v9115
        %v9441 = vunpack.c.h.b16 %v9115
        %v9442 = vunpack.c.l.b16 %v9116
        %v9443 = vunpack.c.h.b16 %v9116
        %v9444 = vunpack.c.l.b16 %v9117
        %v9445 = vunpack.c.h.b16 %v9117
        %v9446 = vunpack.c.l.b16 %v9118
        %v9447 = vunpack.c.h.b16 %v9118
        %v9448 = vunpack.c.l.b16 %v9119
        %v9449 = vunpack.c.h.b16 %v9119
        %v9450 = vunpack.c.l.b16 %v9120
        %v9451 = vunpack.c.h.b16 %v9120
        %v9452 = vunpack.c.l.b16 %v9121
        %v9453 = vunpack.c.h.b16 %v9121
        %v9454 = vunpack.c.l.b16 %v9122
        %v9455 = vunpack.c.h.b16 %v9122
        %v9456 = vunpack.c.l.b16 %v9123
        %v9457 = vunpack.c.h.b16 %v9123
        %v9458 = vunpack.c.l.b16 %v9124
        %v9459 = vunpack.c.h.b16 %v9124
        %v9460 = vunpack.c.l.b16 %v9125
        %v9461 = vunpack.c.h.b16 %v9125
        %v9462 = vunpack.c.l.b16 %v9126
        %v9463 = vunpack.c.h.b16 %v9126
        %v9464 = vunpack.c.l.b16 %v9127
        %v9465 = vunpack.c.h.b16 %v9127
        %v9466 = vunpack.c.l.b16 %v9128
        %v9467 = vunpack.c.h.b16 %v9128
        %v9468 = vunpack.c.l.b16 %v9129
        %v9469 = vunpack.c.h.b16 %v9129
        %v9470 = vunpack.c.l.b16 %v9130
        %v9471 = vunpack.c.h.b16 %v9130
        %v9472 = vunpack.c.l.b16 %v9131
        %v9473 = vunpack.c.h.b16 %v9131
        %v9474 = vunpack.c.l.b16 %v9132
        %v9475 = vunpack.c.h.b16 %v9132
        %v9476 = vunpack.c.l.b16 %v9133
        %v9477 = vunpack.c.h.b16 %v9133
        %v9478 = vunpack.c.l.b16 %v9134
        %v9479 = vunpack.c.h.b16 %v9134
        %v9480 = vunpack.c.l.b16 %v9135
        %v9481 = vunpack.c.h.b16 %v9135
        %v9482 = vunpack.c.l.b16 %v9136
        %v9483 = vunpack.c.h.b16 %v9136
        %v9484 = vunpack.c.l.b16 %v9137
        %v9485 = vunpack.c.h.b16 %v9137
        %v9486 = vunpack.c.l.b16 %v9138
        %v9487 = vunpack.c.h.b16 %v9138
        %v9488 = vunpack.c.l.b16 %v9139
        %v9489 = vunpack.c.h.b16 %v9139
        %v9490 = vunpack.c.l.b16 %v9140
        %v9491 = vunpack.c.h.b16 %v9140
        %v9492 = vunpack.c.l.b16 %v9141
        %v9493 = vunpack.c.h.b16 %v9141
        %v9494 = vunpack.c.l.b16 %v9142
        %v9495 = vunpack.c.h.b16 %v9142
        %v9496 = vunpack.c.l.b16 %v9143
        %v9497 = vunpack.c.h.b16 %v9143
        %v9498 = vunpack.c.l.b16 %v9144
        %v9499 = vunpack.c.h.b16 %v9144
        %v9500 = vunpack.c.l.b16 %v9145
        %v9501 = vunpack.c.h.b16 %v9145
        %v9502 = vunpack.c.l.b16 %v9146
        %v9503 = vunpack.c.h.b16 %v9146
        %v9504 = vunpack.c.l.b16 %v9147
        %v9505 = vunpack.c.h.b16 %v9147
        %v9506 = vunpack.c.l.b16 %v9148
        %v9507 = vunpack.c.h.b16 %v9148
        %v9508 = vunpack.c.l.b16 %v9149
        %v9509 = vunpack.c.h.b16 %v9149
        %v9510 = vunpack.c.l.b16 %v9150
        %v9511 = vunpack.c.h.b16 %v9150
        %v9512 = vunpack.c.l.b16 %v9151
        %v9513 = vunpack.c.h.b16 %v9151
        %v9514 = vunpack.c.l.b16 %v9152
        %v9515 = vunpack.c.h.b16 %v9152
        %v9516 = vunpack.c.l.b16 %v9153
        %v9517 = vunpack.c.h.b16 %v9153
        %v9518 = vunpack.c.l.b16 %v9154
        %v9519 = vunpack.c.h.b16 %v9154
        %v9520 = vunpack.c.l.b16 %v9155
        %v9521 = vunpack.c.h.b16 %v9155
        %v9522 = vunpack.c.l.b16 %v9156
        %v9523 = vunpack.c.h.b16 %v9156
        %v9524 = vunpack.c.l.b16 %v9157
        %v9525 = vunpack.c.h.b16 %v9157
        %v9526 = vunpack.c.l.b16 %v9158
        %v9527 = vunpack.c.h.b16 %v9158
        %v9528 = vunpack.c.l.b16 %v9159
        %v9529 = vunpack.c.h.b16 %v9159
        %v9530 = vunpack.c.l.b16 %v9160
        %v9531 = vunpack.c.h.b16 %v9160
        %v9532 = vunpack.c.l.b16 %v9161
        %v9533 = vunpack.c.h.b16 %v9161
        %v9534 = vunpack.c.l.b16 %v9162
        %v9535 = vunpack.c.h.b16 %v9162
        %v9536 = vunpack.c.l.b16 %v9163
        %v9537 = vunpack.c.h.b16 %v9163
        %v9538 = vunpack.c.l.b16 %v9164
        %v9539 = vunpack.c.h.b16 %v9164
        %v9540 = vunpack.c.l.b16 %v9165
        %v9541 = vunpack.c.h.b16 %v9165
        %v9542 = vunpack.c.l.b16 %v9166
        %v9543 = vunpack.c.h.b16 %v9166
        %v9544 = vunpack.c.l.b16 %v9167
        %v9545 = vunpack.c.h.b16 %v9167
        %v9546 = vunpack.c.l.b16 %v9168
        %v9547 = vunpack.c.h.b16 %v9168
        %v9548 = vunpack.c.l.b16 %v9169
        %v9549 = vunpack.c.h.b16 %v9169
        %v9550 = vunpack.c.l.b16 %v9170
        %v9551 = vunpack.c.h.b16 %v9170
        %v9552 = vunpack.c.l.b16 %v9171
        %v9553 = vunpack.c.h.b16 %v9171
        %v9554 = vunpack.c.l.b16 %v9172
        %v9555 = vunpack.c.h.b16 %v9172
        %v9556 = vunpack.c.l.b16 %v9173
        %v9557 = vunpack.c.h.b16 %v9173
        %v9558 = vpack.c.b16 %v9306, %v9302
        %v9559 = vpack.c.b16 %v9307, %v9303
        %v9560 = vpack.c.b16 %v9308, %v9304
        %v9561 = vpack.c.b16 %v9309, %v9305
        %v9562 = vpack.c.b16 %v9314, %v9310
        %v9563 = vpack.c.b16 %v9315, %v9311
        %v9564 = vpack.c.b16 %v9316, %v9312
        %v9565 = vpack.c.b16 %v9317, %v9313
        %v9566 = vpack.c.b16 %v9322, %v9318
        %v9567 = vpack.c.b16 %v9323, %v9319
        %v9568 = vpack.c.b16 %v9324, %v9320
        %v9569 = vpack.c.b16 %v9325, %v9321
        %v9570 = vpack.c.b16 %v9330, %v9326
        %v9571 = vpack.c.b16 %v9331, %v9327
        %v9572 = vpack.c.b16 %v9332, %v9328
        %v9573 = vpack.c.b16 %v9333, %v9329
        %v9574 = vpack.c.b16 %v9338, %v9334
        %v9575 = vpack.c.b16 %v9339, %v9335
        %v9576 = vpack.c.b16 %v9340, %v9336
        %v9577 = vpack.c.b16 %v9341, %v9337
        %v9578 = vpack.c.b16 %v9346, %v9342
        %v9579 = vpack.c.b16 %v9347, %v9343
        %v9580 = vpack.c.b16 %v9348, %v9344
        %v9581 = vpack.c.b16 %v9349, %v9345
        %v9582 = vpack.c.b16 %v9354, %v9350
        %v9583 = vpack.c.b16 %v9355, %v9351
        %v9584 = vpack.c.b16 %v9356, %v9352
        %v9585 = vpack.c.b16 %v9357, %v9353
        %v9586 = vpack.c.b16 %v9362, %v9358
        %v9587 = vpack.c.b16 %v9363, %v9359
        %v9588 = vpack.c.b16 %v9364, %v9360
        %v9589 = vpack.c.b16 %v9365, %v9361
        %v9590 = vpack.c.b16 %v9370, %v9366
        %v9591 = vpack.c.b16 %v9371, %v9367
        %v9592 = vpack.c.b16 %v9372, %v9368
        %v9593 = vpack.c.b16 %v9373, %v9369
        %v9594 = vpack.c.b16 %v9378, %v9374
        %v9595 = vpack.c.b16 %v9379, %v9375
        %v9596 = vpack.c.b16 %v9380, %v9376
        %v9597 = vpack.c.b16 %v9381, %v9377
        %v9598 = vpack.c.b16 %v9386, %v9382
        %v9599 = vpack.c.b16 %v9387, %v9383
        %v9600 = vpack.c.b16 %v9388, %v9384
        %v9601 = vpack.c.b16 %v9389, %v9385
        %v9602 = vpack.c.b16 %v9394, %v9390
        %v9603 = vpack.c.b16 %v9395, %v9391
        %v9604 = vpack.c.b16 %v9396, %v9392
        %v9605 = vpack.c.b16 %v9397, %v9393
        %v9606 = vpack.c.b16 %v9402, %v9398
        %v9607 = vpack.c.b16 %v9403, %v9399
        %v9608 = vpack.c.b16 %v9404, %v9400
        %v9609 = vpack.c.b16 %v9405, %v9401
        %v9610 = vpack.c.b16 %v9410, %v9406
        %v9611 = vpack.c.b16 %v9411, %v9407
        %v9612 = vpack.c.b16 %v9412, %v9408
        %v9613 = vpack.c.b16 %v9413, %v9409
        %v9614 = vpack.c.b16 %v9418, %v9414
        %v9615 = vpack.c.b16 %v9419, %v9415
        %v9616 = vpack.c.b16 %v9420, %v9416
        %v9617 = vpack.c.b16 %v9421, %v9417
        %v9618 = vpack.c.b16 %v9426, %v9422
        %v9619 = vpack.c.b16 %v9427, %v9423
        %v9620 = vpack.c.b16 %v9428, %v9424
        %v9621 = vpack.c.b16 %v9429, %v9425
        %v9622 = vpack.c.b16 %v9434, %v9430
        %v9623 = vpack.c.b16 %v9435, %v9431
        %v9624 = vpack.c.b16 %v9436, %v9432
        %v9625 = vpack.c.b16 %v9437, %v9433
        %v9626 = vpack.c.b16 %v9442, %v9438
        %v9627 = vpack.c.b16 %v9443, %v9439
        %v9628 = vpack.c.b16 %v9444, %v9440
        %v9629 = vpack.c.b16 %v9445, %v9441
        %v9630 = vpack.c.b16 %v9450, %v9446
        %v9631 = vpack.c.b16 %v9451, %v9447
        %v9632 = vpack.c.b16 %v9452, %v9448
        %v9633 = vpack.c.b16 %v9453, %v9449
        %v9634 = vpack.c.b16 %v9458, %v9454
        %v9635 = vpack.c.b16 %v9459, %v9455
        %v9636 = vpack.c.b16 %v9460, %v9456
        %v9637 = vpack.c.b16 %v9461, %v9457
        %v9638 = vpack.c.b16 %v9466, %v9462
        %v9639 = vpack.c.b16 %v9467, %v9463
        %v9640 = vpack.c.b16 %v9468, %v9464
        %v9641 = vpack.c.b16 %v9469, %v9465
        %v9642 = vpack.c.b16 %v9474, %v9470
        %v9643 = vpack.c.b16 %v9475, %v9471
        %v9644 = vpack.c.b16 %v9476, %v9472
        %v9645 = vpack.c.b16 %v9477, %v9473
        %v9646 = vpack.c.b16 %v9482, %v9478
        %v9647 = vpack.c.b16 %v9483, %v9479
        %v9648 = vpack.c.b16 %v9484, %v9480
        %v9649 = vpack.c.b16 %v9485, %v9481
        %v9650 = vpack.c.b16 %v9490, %v9486
        %v9651 = vpack.c.b16 %v9491, %v9487
        %v9652 = vpack.c.b16 %v9492, %v9488
        %v9653 = vpack.c.b16 %v9493, %v9489
        %v9654 = vpack.c.b16 %v9498, %v9494
        %v9655 = vpack.c.b16 %v9499, %v9495
        %v9656 = vpack.c.b16 %v9500, %v9496
        %v9657 = vpack.c.b16 %v9501, %v9497
        %v9658 = vpack.c.b16 %v9506, %v9502
        %v9659 = vpack.c.b16 %v9507, %v9503
        %v9660 = vpack.c.b16 %v9508, %v9504
        %v9661 = vpack.c.b16 %v9509, %v9505
        %v9662 = vpack.c.b16 %v9514, %v9510
        %v9663 = vpack.c.b16 %v9515, %v9511
        %v9664 = vpack.c.b16 %v9516, %v9512
        %v9665 = vpack.c.b16 %v9517, %v9513
        %v9666 = vpack.c.b16 %v9522, %v9518
        %v9667 = vpack.c.b16 %v9523, %v9519
        %v9668 = vpack.c.b16 %v9524, %v9520
        %v9669 = vpack.c.b16 %v9525, %v9521
        %v9670 = vpack.c.b16 %v9530, %v9526
        %v9671 = vpack.c.b16 %v9531, %v9527
        %v9672 = vpack.c.b16 %v9532, %v9528
        %v9673 = vpack.c.b16 %v9533, %v9529
        %v9674 = vpack.c.b16 %v9538, %v9534
        %v9675 = vpack.c.b16 %v9539, %v9535
        %v9676 = vpack.c.b16 %v9540, %v9536
        %v9677 = vpack.c.b16 %v9541, %v9537
        %v9678 = vpack.c.b16 %v9546, %v9542
        %v9679 = vpack.c.b16 %v9547, %v9543
        %v9680 = vpack.c.b16 %v9548, %v9544
        %v9681 = vpack.c.b16 %v9549, %v9545
        %v9682 = vpack.c.b16 %v9554, %v9550
        %v9683 = vpack.c.b16 %v9555, %v9551
        %v9684 = vpack.c.b16 %v9556, %v9552
        %v9685 = vpack.c.b16 %v9557, %v9553
        %9814 = vmatpush.bf16.msra.mxu0 %v9586
        %9815 = vmatpush.bf16.msra.mxu0 %v9582
        %9816 = vmatpush.bf16.msra.mxu0 %v9578
        %9817 = vmatpush.bf16.msra.mxu0 %v9574
        %9818 = vmatpush.bf16.msra.mxu0 %v9570
        %9819 = vmatpush.bf16.msra.mxu0 %v9566
        %9820 = vmatpush.bf16.msra.mxu0 %v9562
        %9821 = vmatpush.bf16.msra.mxu0 %v9558
        %9822 = vmatmul.bf16.gmra.mxu0 %v9041
        %v9823 = vpop.f32.mrf.mxu0
        %v9824 = vadd.f32 0.0, %v9823
        %v9825 = vpop.f32.mrf.mxu0
        %9826 = vdwg.mxu0
        %9827 = vmatpush.bf16.msra.mxu0 %v9618
        %9828 = vmatpush.bf16.msra.mxu0 %v9614
        %9829 = vmatpush.bf16.msra.mxu0 %v9610
        %9830 = vmatpush.bf16.msra.mxu0 %v9606
        %9831 = vmatpush.bf16.msra.mxu0 %v9602
        %9832 = vmatpush.bf16.msra.mxu0 %v9598
        %9833 = vmatpush.bf16.msra.mxu0 %v9594
        %9834 = vmatpush.bf16.msra.mxu0 %v9590
        %9835 = vmatmul.bf16.gmra.mxu0 %v9042
        %v9836 = vpop.f32.mrf.mxu0
        %v9837 = vadd.f32 %v9824, %v9836
        %v9838 = vpop.f32.mrf.mxu0
        %9839 = vdwg.mxu0
        %9840 = vmatpush.bf16.msra.mxu0 %v9650
        %9841 = vmatpush.bf16.msra.mxu0 %v9646
        %9842 = vmatpush.bf16.msra.mxu0 %v9642
        %9843 = vmatpush.bf16.msra.mxu0 %v9638
        %9844 = vmatpush.bf16.msra.mxu0 %v9634
        %9845 = vmatpush.bf16.msra.mxu0 %v9630
        %9846 = vmatpush.bf16.msra.mxu0 %v9626
        %9847 = vmatpush.bf16.msra.mxu0 %v9622
        %9848 = vmatmul.bf16.gmra.mxu0 %v9043
        %v9849 = vpop.f32.mrf.mxu0
        %v9850 = vadd.f32 %v9837, %v9849
        %v9851 = vpop.f32.mrf.mxu0
        %9852 = vdwg.mxu0
        %9853 = vmatpush.bf16.msra.mxu0 %v9682
        %9854 = vmatpush.bf16.msra.mxu0 %v9678
        %9855 = vmatpush.bf16.msra.mxu0 %v9674
        %9856 = vmatpush.bf16.msra.mxu0 %v9670
        %9857 = vmatpush.bf16.msra.mxu0 %v9666
        %9858 = vmatpush.bf16.msra.mxu0 %v9662
        %9859 = vmatpush.bf16.msra.mxu0 %v9658
        %9860 = vmatpush.bf16.msra.mxu0 %v9654
        %9861 = vmatmul.bf16.gmra.mxu0 %v9044
        %v9862 = vpop.f32.mrf.mxu0
        %v9863 = vadd.f32 %v9850, %v9862
        %v9864 = vpop.f32.mrf.mxu0
        %9865 = vdwg.mxu0
        %9866 = vmatpush.bf16.msra.mxu0 %v9587
        %9867 = vmatpush.bf16.msra.mxu0 %v9583
        %9868 = vmatpush.bf16.msra.mxu0 %v9579
        %9869 = vmatpush.bf16.msra.mxu0 %v9575
        %9870 = vmatpush.bf16.msra.mxu0 %v9571
        %9871 = vmatpush.bf16.msra.mxu0 %v9567
        %9872 = vmatpush.bf16.msra.mxu0 %v9563
        %9873 = vmatpush.bf16.msra.mxu0 %v9559
        %9874 = vmatmul.bf16.gmra.mxu0 %v9041
        %v9875 = vpop.f32.mrf.mxu0
        %v9876 = vadd.f32 0.0, %v9875
        %v9877 = vpop.f32.mrf.mxu0
        %9878 = vdwg.mxu0
        %9879 = vmatpush.bf16.msra.mxu0 %v9619
        %9880 = vmatpush.bf16.msra.mxu0 %v9615
        %9881 = vmatpush.bf16.msra.mxu0 %v9611
        %9882 = vmatpush.bf16.msra.mxu0 %v9607
        %9883 = vmatpush.bf16.msra.mxu0 %v9603
        %9884 = vmatpush.bf16.msra.mxu0 %v9599
        %9885 = vmatpush.bf16.msra.mxu0 %v9595
        %9886 = vmatpush.bf16.msra.mxu0 %v9591
        %9887 = vmatmul.bf16.gmra.mxu0 %v9042
        %v9888 = vpop.f32.mrf.mxu0
        %v9889 = vadd.f32 %v9876, %v9888
        %v9890 = vpop.f32.mrf.mxu0
        %9891 = vdwg.mxu0
        %9892 = vmatpush.bf16.msra.mxu0 %v9651
        %9893 = vmatpush.bf16.msra.mxu0 %v9647
        %9894 = vmatpush.bf16.msra.mxu0 %v9643
        %9895 = vmatpush.bf16.msra.mxu0 %v9639
        %9896 = vmatpush.bf16.msra.mxu0 %v9635
        %9897 = vmatpush.bf16.msra.mxu0 %v9631
        %9898 = vmatpush.bf16.msra.mxu0 %v9627
        %9899 = vmatpush.bf16.msra.mxu0 %v9623
        %9900 = vmatmul.bf16.gmra.mxu0 %v9043
        %v9901 = vpop.f32.mrf.mxu0
        %v9902 = vadd.f32 %v9889, %v9901
        %v9903 = vpop.f32.mrf.mxu0
        %9904 = vdwg.mxu0
        %9905 = vmatpush.bf16.msra.mxu0 %v9683
        %9906 = vmatpush.bf16.msra.mxu0 %v9679
        %9907 = vmatpush.bf16.msra.mxu0 %v9675
        %9908 = vmatpush.bf16.msra.mxu0 %v9671
        %9909 = vmatpush.bf16.msra.mxu0 %v9667
        %9910 = vmatpush.bf16.msra.mxu0 %v9663
        %9911 = vmatpush.bf16.msra.mxu0 %v9659
        %9912 = vmatpush.bf16.msra.mxu0 %v9655
        %9913 = vmatmul.bf16.gmra.mxu0 %v9044
        %v9914 = vpop.f32.mrf.mxu0
        %v9915 = vadd.f32 %v9902, %v9914
        %v9916 = vpop.f32.mrf.mxu0
        %9917 = vdwg.mxu0
        %9918 = vmatpush.bf16.msra.mxu0 %v9588
        %9919 = vmatpush.bf16.msra.mxu0 %v9584
        %9920 = vmatpush.bf16.msra.mxu0 %v9580
        %9921 = vmatpush.bf16.msra.mxu0 %v9576
        %9922 = vmatpush.bf16.msra.mxu0 %v9572
        %9923 = vmatpush.bf16.msra.mxu0 %v9568
        %9924 = vmatpush.bf16.msra.mxu0 %v9564
        %9925 = vmatpush.bf16.msra.mxu0 %v9560
        %9926 = vmatmul.bf16.gmra.mxu0 %v9041
        %v9927 = vpop.f32.mrf.mxu0
        %v9928 = vadd.f32 0.0, %v9927
        %v9929 = vpop.f32.mrf.mxu0
        %9930 = vdwg.mxu0
        %9931 = vmatpush.bf16.msra.mxu0 %v9620
        %9932 = vmatpush.bf16.msra.mxu0 %v9616
        %9933 = vmatpush.bf16.msra.mxu0 %v9612
        %9934 = vmatpush.bf16.msra.mxu0 %v9608
        %9935 = vmatpush.bf16.msra.mxu0 %v9604
        %9936 = vmatpush.bf16.msra.mxu0 %v9600
        %9937 = vmatpush.bf16.msra.mxu0 %v9596
        %9938 = vmatpush.bf16.msra.mxu0 %v9592
        %9939 = vmatmul.bf16.gmra.mxu0 %v9042
        %v9940 = vpop.f32.mrf.mxu0
        %v9941 = vadd.f32 %v9928, %v9940
        %v9942 = vpop.f32.mrf.mxu0
        %9943 = vdwg.mxu0
        %9944 = vmatpush.bf16.msra.mxu0 %v9652
        %9945 = vmatpush.bf16.msra.mxu0 %v9648
        %9946 = vmatpush.bf16.msra.mxu0 %v9644
        %9947 = vmatpush.bf16.msra.mxu0 %v9640
        %9948 = vmatpush.bf16.msra.mxu0 %v9636
        %9949 = vmatpush.bf16.msra.mxu0 %v9632
        %9950 = vmatpush.bf16.msra.mxu0 %v9628
        %9951 = vmatpush.bf16.msra.mxu0 %v9624
        %9952 = vmatmul.bf16.gmra.mxu0 %v9043
        %v9953 = vpop.f32.mrf.mxu0
        %v9954 = vadd.f32 %v9941, %v9953
        %v9955 = vpop.f32.mrf.mxu0
        %9956 = vdwg.mxu0
        %9957 = vmatpush.bf16.msra.mxu0 %v9684
        %9958 = vmatpush.bf16.msra.mxu0 %v9680
        %9959 = vmatpush.bf16.msra.mxu0 %v9676
        %9960 = vmatpush.bf16.msra.mxu0 %v9672
        %9961 = vmatpush.bf16.msra.mxu0 %v9668
        %9962 = vmatpush.bf16.msra.mxu0 %v9664
        %9963 = vmatpush.bf16.msra.mxu0 %v9660
        %9964 = vmatpush.bf16.msra.mxu0 %v9656
        %9965 = vmatmul.bf16.gmra.mxu0 %v9044
        %v9966 = vpop.f32.mrf.mxu0
        %v9967 = vadd.f32 %v9954, %v9966
        %v9968 = vpop.f32.mrf.mxu0
        %9969 = vdwg.mxu0
        %9970 = vmatpush.bf16.msra.mxu0 %v9589
        %9971 = vmatpush.bf16.msra.mxu0 %v9585
        %9972 = vmatpush.bf16.msra.mxu0 %v9581
        %9973 = vmatpush.bf16.msra.mxu0 %v9577
        %9974 = vmatpush.bf16.msra.mxu0 %v9573
        %9975 = vmatpush.bf16.msra.mxu0 %v9569
        %9976 = vmatpush.bf16.msra.mxu0 %v9565
        %9977 = vmatpush.bf16.msra.mxu0 %v9561
        %9978 = vmatmul.bf16.gmra.mxu0 %v9041
        %v9979 = vpop.f32.mrf.mxu0
        %v9980 = vadd.f32 0.0, %v9979
        %v9981 = vpop.f32.mrf.mxu0
        %9982 = vdwg.mxu0
        %9983 = vmatpush.bf16.msra.mxu0 %v9621
        %9984 = vmatpush.bf16.msra.mxu0 %v9617
        %9985 = vmatpush.bf16.msra.mxu0 %v9613
        %9986 = vmatpush.bf16.msra.mxu0 %v9609
        %9987 = vmatpush.bf16.msra.mxu0 %v9605
        %9988 = vmatpush.bf16.msra.mxu0 %v9601
        %9989 = vmatpush.bf16.msra.mxu0 %v9597
        %9990 = vmatpush.bf16.msra.mxu0 %v9593
        %9991 = vmatmul.bf16.gmra.mxu0 %v9042
        %v9992 = vpop.f32.mrf.mxu0
        %v9993 = vadd.f32 %v9980, %v9992
        %v9994 = vpop.f32.mrf.mxu0
        %9995 = vdwg.mxu0
        %9996 = vmatpush.bf16.msra.mxu0 %v9653
        %9997 = vmatpush.bf16.msra.mxu0 %v9649
        %9998 = vmatpush.bf16.msra.mxu0 %v9645
        %9999 = vmatpush.bf16.msra.mxu0 %v9641
        %10000 = vmatpush.bf16.msra.mxu0 %v9637
        %10001 = vmatpush.bf16.msra.mxu0 %v9633
        %10002 = vmatpush.bf16.msra.mxu0 %v9629
        %10003 = vmatpush.bf16.msra.mxu0 %v9625
        %10004 = vmatmul.bf16.gmra.mxu0 %v9043
        %v10005 = vpop.f32.mrf.mxu0
        %v10006 = vadd.f32 %v9993, %v10005
        %v10007 = vpop.f32.mrf.mxu0
        %10008 = vdwg.mxu0
        %10009 = vmatpush.bf16.msra.mxu0 %v9685
        %10010 = vmatpush.bf16.msra.mxu0 %v9681
        %10011 = vmatpush.bf16.msra.mxu0 %v9677
        %10012 = vmatpush.bf16.msra.mxu0 %v9673
        %10013 = vmatpush.bf16.msra.mxu0 %v9669
        %10014 = vmatpush.bf16.msra.mxu0 %v9665
        %10015 = vmatpush.bf16.msra.mxu0 %v9661
        %10016 = vmatpush.bf16.msra.mxu0 %v9657
        %10017 = vmatmul.bf16.gmra.mxu0 %v9044
        %v10018 = vpop.f32.mrf.mxu0
        %v10019 = vadd.f32 %v10006, %v10018
        %v10020 = vpop.f32.mrf.mxu0
        %10021 = vdwg.mxu0
        %v10022 = vadd.f32 %v8980, %v9863
        %v10023 = vadd.f32 %v8981, %v9915
        %v10024 = vadd.f32 %v8982, %v9967
        %v10025 = vadd.f32 %v8983, %v10019
        %v10026 = vld [vmem:[#allocation19] sm:$0xf]
        %v10028 = vperm.slane %v10026, 0
        %v10029 = vperm.slane %v10026, 1
        %v10030 = vperm.slane %v10026, 2
        %v10031 = vperm.slane %v10026, 3
        %v10036 = vadd.f32 %v10022, %v10028
        %v10037 = vadd.f32 %v10023, %v10029
        %v10038 = vadd.f32 %v10024, %v10030
        %v10039 = vadd.f32 %v10025, %v10031
        %vm10040 = vcmp.gt.f32.partialorder %v10036, 0.0
        %vm10041 = vcmp.gt.f32.partialorder %v10037, 0.0
        %vm10042 = vcmp.gt.f32.partialorder %v10038, 0.0
        %vm10043 = vcmp.gt.f32.partialorder %v10039, 0.0
        %v10044 = vmul.f32 %v10036, 0.2
        %v10045 = vmul.f32 %v10037, 0.2
        %v10046 = vmul.f32 %v10038, 0.2
        %v10047 = vmul.f32 %v10039, 0.2
        %v10048 = vsel %vm10040, %v10036, %v10044
        %v10049 = vsel %vm10041, %v10037, %v10045
        %v10050 = vsel %vm10042, %v10038, %v10046
        %v10051 = vsel %vm10043, %v10039, %v10047
        %v10052 = vpack.c.bf16 %v10049, %v10048
        %v10053 = vpack.c.bf16 %v10051, %v10050
        %v10054 = vunpack.c.l.bf16 %v10052
        %v10055 = vunpack.c.h.bf16 %v10052
        %v10056 = vunpack.c.l.bf16 %v10053
        %v10057 = vunpack.c.h.bf16 %v10053
        %v10058 = vld [vmem:[#allocation20] sm:$0xff]
        %v10059 = vld [vmem:[#allocation20 + $0x8] sm:$0xff]
        %10062 = vst [vmem:[#allocation1] ss:$2 sm:$0xff] %v10058
        %s10063 = scalar_lea.vmem [#allocation1], 16
        %10064 = vst [vmem:[%s10063] ss:$2 sm:$0xff] %v10059
        %v10065 = vld.sshfl [vmem:[#allocation1] sm:$0xff pattern:$0x75316420]
        %v10066 = vld.sshfl [vmem:[#allocation1 + $0x8] sm:$0xff pattern:$0x75316420]
        %v10067 = vld.sshfl [vmem:[#allocation1 + $0x10] sm:$0xff pattern:$0x75316420]
        %v10068 = vld.sshfl [vmem:[#allocation1 + $0x18] sm:$0xff pattern:$0x75316420]
        %v10073 = vmul.f32 %v10054, %v10065
        %v10074 = vmul.f32 %v10055, %v10066
        %v10075 = vmul.f32 %v10056, %v10067
        %v10076 = vmul.f32 %v10057, %v10068
        %v10077 = vsel %vm5859, %v10073, 0.0
        %v10078 = vsel %vm5859, %v10074, 0.0
        %v10079 = vadd.f32 %v10077, %v10078
        %v10080 = vsel %vm5859, %v10075, 0.0
        %v10081 = vadd.f32 %v10079, %v10080
        %v10082 = vsel %vm5859, %v10076, 0.0
        %v10083 = vadd.f32 %v10081, %v10082
        %10084 = vadd.xlane.f32.xlu0 %v10083
        %v10085 = vpop.xlane.xlu0 %10084
        %v10086 = vsel %vm5859, %v10085, 0.0
        %v10087 = vrot.slane %v10086, 4
        %v10088 = vadd.f32 %v10086, %v10087
        %v10089 = vrot.slane %v10088, 2
        %v10090 = vadd.f32 %v10088, %v10089
        %v10091 = vrot.slane %v10090, 1
        %v10092 = vadd.f32 %v10090, %v10091
        %v10093 = vld [vmem:[%s564] sm:$0x1]
        %v10094 = vld [vmem:[#allocation22] sm:$0x1]
        %v10095 = vmul.f32 %v10093, %v10094
        %vm10096 = vcmask 1040384
        %v10097 = vsel %vm10096, %v10095, 0.0
        %10098 = vadd.xlane.f32.xlu0 %v10097
        %v10099 = vpop.xlane.xlu0 %10098
        %v10100 = vadd.f32 %v10092, %v10099
        %v10101 = vand.u32 2147483647, %v10100
        %v10102 = vsub.f32 0.0, %v10101
        %v10103 = vmul.f32 %v10102, 1.442695
        %v10104 = vpow.pop %v10103
        %vm10105 = vcmp.ge.f32.partialorder %v10100, 0.0
        %v10106 = vadd.f32 %v10104, 1.0
        %v10107 = vrcp.pop %v10106
        %v10108 = vmul.f32 %v10106, %v10107
        %v10109 = vsub.f32 1.0, %v10108
        %v10110 = vmul.f32 %v10107, %v10109
        %v10111 = vadd.f32 %v10107, %v10110
        %vm10112 = vweird.f32 %v10106
        %vm10113 = vweird.f32 %v10107
        %vm10114 = vmor %vm10112, %vm10113
        %v10115 = vsel %vm10114, %v10107, %v10111
        %v10116 = vand.u32 2147483647, %v10106
        %vm10117 = vcmp.eq.f32.partialorder %v10116, 8.507059e+37
        %v10118 = vand.u32 %v10106, 2147483648
        %v10119 = vor.u32 1.1754944e-38, %v10118
        %v10120 = vsel %vm10117, %v10119, %v10115
        %v10121 = vmul.f32 1.0, %v10120
        %v10122 = vmul.f32 %v10104, %v10120
        %v10123 = vsel %vm10105, %v10121, %v10122
        %10124 = vst [vmem:[%s665] sm:$0x1] %v10123
        %s10125 = sand.u32 %s329, 1
        %s10126 = scalar_lea.sflag [#allocation4], %s10125
        %s10127 = sand.u32 %s329, 1
        %s10128 = scalar_lea.vmem [#allocation23], %s10127
        // Predicated region
        $region125: #{tpu_custom_call.1} parent=71 // pred_check
          %p10129 = pneg %p339
        $region126: #{tpu_custom_call.1} parent=71 // pred_check_branch
          %10131 = sbr.rel (%p10129) target = $region128
        $region127: #{tpu_custom_call.1} parent=71 // pred_region
          %10133 = vsyncadd %s10126, 0
          %s10134 = scalar_lea.hbm %s13, %s38
          %s10136 = sshll.u32 %s10128, 4
          %s10137 = int_to_ptr.vmem [resolvable:$true] %s10136
          %s10138 = sshll.u32 %s10134, 4
          %s10139 = int_to_ptr.hbm [resolvable:$true] %s10138
          %10141 = dma.vmem_to_hbm [thread:$0]  %s10137, 16, %s10139, %s10126
        $region128: #{tpu_custom_call.1} parent=71 // pred_fallthru
          _
      $region72: #{tpu_custom_call.1} parent=5 // pred_fallthru
        _
      %p10142 = scmp.le.s32.totalorder 2, %s33
      // Predicated region
      $region129: #{tpu_custom_call.1} parent=5 // pred_check
        %p10143 = pneg %p10142
      $region130: #{tpu_custom_call.1} parent=5 // pred_check_branch
        %10145 = sbr.rel (%p10143) target = $region132
      $region131: #{tpu_custom_call.1} parent=5 // pred_region
        %s10146 = ssub.s32 %s33, 2
        // Predicated region
        $region133: #{tpu_custom_call.1} parent=131 // pred_check
          %p10147 = pneg %p345
        $region134: #{tpu_custom_call.1} parent=131 // pred_check_branch
          %10149 = sbr.rel (%p10147) target = $region136
        $region135: #{tpu_custom_call.1} parent=131 // pred_region
          %s10150 = sand.u32 %s330, 1
          %s10151 = scalar_lea.sflag [#allocation4], %s10150
          %s10152 = sand.u32 %s330, 1
          %s10153 = scalar_lea.vmem [#allocation23], %s10152
          %10155 = dma.done %s10151, 16
        $region136: #{tpu_custom_call.1} parent=131 // pred_fallthru
          _
      $region132: #{tpu_custom_call.1} parent=5 // pred_fallthru
        _
    $region6: #{tpu_custom_call.1} parent=1 // loop_footer
      %s37 = sadd.s32 1, %s33
    $region7: #{tpu_custom_call.1} parent=1 // loop_footer_branch
      %32 = sbr.rel target = $region3
    $region8: #{tpu_custom_call.1} parent=1 // loop_exit
      _
    %10156 = vsyncpa [#allocation3], 1
    %s10157 = scalar_lea.sflag [#allocation3], 1
    %10158 = vsyncpa %s10157, 1
    %10159 = vsyncpa [#allocation6], 1
    %s10160 = scalar_lea.sflag [#allocation6], 1
    %10161 = vsyncpa %s10160, 1
    %10162 = vsyncpa [#allocation9], 1
    %10163 = vsyncpa [#allocation12], 1
    %10164 = vsyncpa [#allocation15], 1
    %10165 = vsyncpa [#allocation18], 1
    %10166 = vsyncpa [#allocation21], 1
    %10167 = vsyncpa [#allocation4], 1
    %s10168 = scalar_lea.sflag [#allocation4], 1
    %10169 = vsyncpa %s10168, 1

</llo_original>
